<compile_context>
chip_gen: v7x
topology: tpu7x:2x2x1
jax: 0.10.0
libtpu: 0.0.40
codegen_flags: <defaults>
</compile_context>

<pallas_src>
import functools

import numpy as np
import jax
import jax.numpy as jnp
from jax.experimental import pallas as pl
from jax.experimental.pallas import tpu as pltpu

KH = KW = 4      # conv kernel size everywhere
_IMG = 64        # required input spatial size (so the 4x4 valid head lands on 1x1)
_R = 80          # fixed per-sample row stride of the a-trous buffers (multiple of 8)
_TAIL = 24       # extra zero rows so every tap slice reads exactly batch*_R rows (3*d_max)


def _build_row_toeplitz(w, w_in, stride, pad):
    """w: (KH,KW,Cin,Cout) -> (KH, W_in*Cin, OW*Cout) W-axis block-Toeplitz matrices."""
    kh, kw, cin, cout = w.shape
    ow_out = (w_in + 2 * pad - kw) // stride + 1
    t = np.zeros((kh, w_in * cin, ow_out * cout), np.float32)
    for ki in range(kh):
        for ow in range(ow_out):
            for kj in range(kw):
                col = stride * ow - pad + kj
                if 0 <= col < w_in:
                    t[ki, col * cin:(col + 1) * cin, ow * cout:(ow + 1) * cout] = w[ki, kj]
    return t


def _disc_kernel(x_ref, t1_ref, t2_ref, t3_ref, t4_ref, s5_ref, ind_ref,
                 cmask_ref, b1_ref, b2_ref, b3_ref, o_ref, buf_ref,
                 *, couts, inv_counts):
    t_refs = (t1_ref, t2_ref, t3_ref, t4_ref)
    bn_refs = (None, b1_ref, b2_ref, b3_ref)
    m_rows = cmask_ref.shape[0]          # batch * _R
    lanes = t1_ref.shape[2]              # 32*ndf (== 256 for ndf=8)
    cmask = cmask_ref[...]               # (m_rows, 1) {0,1}: rows copied to next layer

    src = x_ref                           # layer-0 input operand (bf16, already padded)
    act = None
    for idx in range(4):
        d = 1 << idx                      # a-trous dilation of this layer

        # Dilated row-convolution: 4 kernel-row taps = 4 static ref-slice loads of the
        # bf16 buffer + MXU matmuls with f32 accumulation (no casts inside the loop).
        y = jnp.dot(src[pl.ds(0, m_rows), :], t_refs[idx][0],
                    preferred_element_type=jnp.float32)
        for ki in range(1, KH):
            y = y + jnp.dot(src[pl.ds(d * ki, m_rows), :], t_refs[idx][ki],
                            preferred_element_type=jnp.float32)

        if idx > 0:
            # Training-mode BatchNorm2d over the real output rows only.
            cout = couts[idx]
            mask = bn_refs[idx][...]                          # (m_rows, 1) {0,1}
            ym = y * mask                                     # reused for s1 and s2
            s1 = jnp.sum(ym, axis=0, keepdims=True)           # (1, lanes)
            s2 = jnp.sum(ym * y, axis=0, keepdims=True)       # (1, lanes)
            st = jnp.concatenate([s1, s2], axis=0)            # (2, lanes) -> one matmul
            # Channel-grouping matrix Q generated in-kernel (lane % cout equality);
            # one MXU op both sums over the OW groups and broadcasts back to lanes.
            li = jax.lax.broadcasted_iota(jnp.int32, (lanes, lanes), 0) % cout
            lj = jax.lax.broadcasted_iota(jnp.int32, (lanes, lanes), 1) % cout
            q = (li == lj).astype(jnp.float32)
            g = jnp.dot(st, q, preferred_element_type=jnp.float32) * inv_counts[idx - 1]
            mean = g[0:1, :]
            var = g[1:2, :] - mean * mean                     # biased variance
            y = (y - mean) * jax.lax.rsqrt(var + 1e-5)

        act = jnp.maximum(y, 0.2 * y)                         # LeakyReLU(0.2), f32

        if idx < 3:
            # Rebuild the next layer's padded dilated input in the bf16 scratch:
            # zero the buffer, then ONE shifted masked store (the copy mask zeroes
            # the rows that must act as H padding / cross-sample garbage).
            d_next = 2 * d
            buf_ref[...] = jnp.zeros(buf_ref.shape, buf_ref.dtype)
            buf_ref[pl.ds(d_next, m_rows), :] = (act * cmask).astype(jnp.bfloat16)
            src = buf_ref

    # Head: Conv(ndf*8, 1, 4, 1, 0) + sigmoid, vectorized.
    # s5 places w5[kh] on the real rows of the last activation; ind sums per sample.
    prod = act * s5_ref[...]                                             # (m_rows, lanes)
    per_lane = jnp.dot(ind_ref[...], prod, preferred_element_type=jnp.float32)  # (B, lanes)
    logits = jnp.sum(per_lane, axis=1, keepdims=True)                    # (B, 1)
    o_ref[...] = jax.nn.sigmoid(logits)


def _full_spec(shape):
    idx = (0,) * len(shape)
    return pl.BlockSpec(tuple(shape), lambda *_: idx)


def make_discriminator(weights, batch):
    """weights: 5 conv weights in (KH,KW,Cin,Cout) layout (PyTorch OIHW -> HWIO).
    Returns (jitted forward(x_nchw, operands) -> (N,), operands)."""
    ws = [np.asarray(w, np.float32) for w in weights]
    assert len(ws) == 5
    ndf = ws[0].shape[3]
    lanes = 32 * ndf                      # every layer's OW*Cout
    num_channel = ws[0].shape[2]
    assert _IMG * num_channel <= lanes, "layer-1 K must fit the lane width"
    m_rows = batch * _R

    # Block-Toeplitz W-axis matrices, bf16, K padded to `lanes`.
    ts, couts = [], []
    w_in = _IMG
    for idx in range(4):
        kh, kw, cin, cout = ws[idx].shape
        assert kh == KH and kw == KW
        t = _build_row_toeplitz(ws[idx], w_in, 2, 1)      # (4, w_in*cin, ow*cout)
        ow = w_in // 2
        assert ow * cout == lanes
        if t.shape[1] < lanes:
            t = np.pad(t, ((0, 0), (0, lanes - t.shape[1]), (0, 0)))
        ts.append(jnp.asarray(t, jnp.bfloat16))
        couts.append(cout)
        w_in = ow
    for c in couts[1:]:
        assert c & (c - 1) == 0, "BN channel counts must be powers of two"

    # Row masks (tiny f32 operands): copy mask and per-BN-layer real-row masks.
    rs = np.arange(m_rows) % _R
    cmask = (rs < _IMG).astype(np.float32)[:, None]
    bn_masks, counts = [], []
    for idx in range(1, 4):
        d2 = 2 << idx                                      # 2 * dilation of layer idx
        bn_masks.append((((rs % d2) == 0) & (rs < _IMG)).astype(np.float32)[:, None])
        h_out = _IMG // d2
        counts.append(batch * h_out * h_out)

    # Head: weight-placement matrix (w5[kh] on rows rs == 16*kh) + per-sample indicator.
    w5 = ws[4].reshape(KH, -1)                             # (4, lanes)
    s5 = np.zeros((m_rows, lanes), np.float32)
    ind = np.zeros((batch, m_rows), np.float32)
    for nb in range(batch):
        for khi in range(KH):
            s5[nb * _R + 16 * khi, :] = w5[khi]
        ind[nb, nb * _R:(nb + 1) * _R] = 1.0

    operands = tuple(ts) + (jnp.asarray(s5), jnp.asarray(ind), jnp.asarray(cmask)) \
        + tuple(jnp.asarray(m) for m in bn_masks)

    kernel = functools.partial(_disc_kernel, couts=tuple(couts),
                               inv_counts=tuple(1.0 / c for c in counts))

    def forward(x_nchw, ops):
        n, c, h, w = x_nchw.shape
        assert n == batch and h == _IMG and w == _IMG
        # NCHW -> per-sample (H, W*C) rows at a fixed 80-row stride, bf16, lane-padded.
        xr = jnp.transpose(x_nchw, (0, 2, 3, 1)).reshape(n, _IMG, _IMG * c)
        xr = jnp.pad(xr, ((0, 0), (1, _R - 1 - _IMG), (0, lanes - _IMG * c)))
        xr = xr.reshape(n * _R, lanes)
        xr = jnp.pad(xr, ((0, _TAIL), (0, 0))).astype(jnp.bfloat16)
        all_ops = (xr,) + tuple(ops)
        out = pl.pallas_call(
            kernel,
            out_shape=jax.ShapeDtypeStruct((n, 1), jnp.float32),
            in_specs=[_full_spec(a.shape) for a in all_ops],
            out_specs=_full_spec((n, 1)),
            scratch_shapes=[pltpu.VMEM((n * _R + _TAIL, lanes), jnp.bfloat16)],
        )(*all_ops)
        return out.reshape(-1)    # matches output.view(-1, 1).squeeze(1)

    return jax.jit(forward), operands


def _reference_forward(x_nchw, weights):
    """Pure-JAX reference (lax conv + training-mode BN) for validation."""
    x = jnp.transpose(x_nchw, (0, 2, 3, 1)).astype(jnp.float32)
    cfg = [(2, 1)] * 4 + [(1, 0)]
    for i, (w, (s, p)) in enumerate(zip(weights, cfg)):
        y = jax.lax.conv_general_dilated(
            x, jnp.asarray(w, jnp.float32), window_strides=(s, s),
            padding=[(p, p), (p, p)], dimension_numbers=("NHWC", "HWIO", "NHWC"))
        if i in (1, 2, 3):
            mean = jnp.mean(y, axis=(0, 1, 2), keepdims=True)
            var = jnp.mean((y - mean) ** 2, axis=(0, 1, 2), keepdims=True)
            y = (y - mean) * jax.lax.rsqrt(var + 1e-5)
        x = jnp.where(y >= 0.0, y, 0.2 * y) if i < 4 else jax.nn.sigmoid(y)
    return x.reshape(-1)


if __name__ == "__main__":
    num_channel, ndf, batch = 3, 8, 2
    H = W = 64   # 64x64 input is required so the final 4x4 stride-1 valid conv hits 1x1

    key = jax.random.PRNGKey(0)
    weight_shapes = [
        (4, 4, num_channel, ndf),
        (4, 4, ndf, ndf * 2),
        (4, 4, ndf * 2, ndf * 4),
        (4, 4, ndf * 4, ndf * 8),
        (4, 4, ndf * 8, 1),
    ]
    keys = jax.random.split(key, len(weight_shapes) + 1)
    # DCGAN-style init N(0, 0.02); BatchNorm affine is identity (weight=1, bias=0).
    weights = [0.02 * jax.random.normal(k, s, dtype=jnp.float32)
               for k, s in zip(keys[:-1], weight_shapes)]
    x = jax.random.normal(keys[-1], (batch, num_channel, H, W), dtype=jnp.float32)

    fwd, operands = make_discriminator(weights, batch)
    out = jax.block_until_ready(fwd(x, operands))

    assert out.shape == (batch,), out.shape
    assert bool(jnp.all((out >= 0.0) & (out <= 1.0)))
    ref = _reference_forward(x, weights)
    max_err = float(jnp.max(jnp.abs(out - ref)))
    assert max_err < 5e-2, (max_err, out, ref)   # bf16 matmuls; typically ~1e-3
    print("KERNEL_OK")
</pallas_src>

<mosaic_0001>
module attributes {stable_mosaic.version = 11 : i64} {
  func.func @_disc_kernel(%arg0: memref<184x256xbf16, #tpu.memory_space<vmem>>, %arg1: memref<4x256x256xbf16, #tpu.memory_space<vmem>>, %arg2: memref<4x256x256xbf16, #tpu.memory_space<vmem>>, %arg3: memref<4x256x256xbf16, #tpu.memory_space<vmem>>, %arg4: memref<4x256x256xbf16, #tpu.memory_space<vmem>>, %arg5: memref<160x256xf32, #tpu.memory_space<vmem>>, %arg6: memref<2x160xf32, #tpu.memory_space<vmem>>, %arg7: memref<160x1xf32, #tpu.memory_space<vmem>>, %arg8: memref<160x1xf32, #tpu.memory_space<vmem>>, %arg9: memref<160x1xf32, #tpu.memory_space<vmem>>, %arg10: memref<160x1xf32, #tpu.memory_space<vmem>>, %arg11: memref<2x1xf32, #tpu.memory_space<vmem>>, %arg12: memref<184x256xbf16, #tpu.memory_space<vmem>>) attributes {dimension_semantics = [], scalar_prefetch = 0 : i64, scratch_operands = 1 : i64, tpu.core_type = #tpu.core_type<tc>} {
    %c0 = arith.constant 0 : index
    %c0_0 = arith.constant 0 : index
    %0 = vector.load %arg7[%c0, %c0_0] : memref<160x1xf32, #tpu.memory_space<vmem>>, vector<160x1xf32>
    %c0_1 = arith.constant 0 : index
    %c0_2 = arith.constant 0 : index
    %1 = vector.load %arg0[%c0_1, %c0_2] : memref<184x256xbf16, #tpu.memory_space<vmem>>, vector<160x256xbf16>
    %c0_3 = arith.constant 0 : index
    %c0_4 = arith.constant 0 : index
    %c0_5 = arith.constant 0 : index
    %2 = vector.load %arg1[%c0_3, %c0_4, %c0_5] : memref<4x256x256xbf16, #tpu.memory_space<vmem>>, vector<1x256x256xbf16>
    %3 = vector.shape_cast %2 : vector<1x256x256xbf16> to vector<256x256xbf16>
    %cst = arith.constant dense<0.000000e+00> : vector<160x256xf32>
    %4 = tpu.matmul %1, %3, %cst {dimension_numbers = #tpu.dot_dimension_numbers<[1], [0], [0], [1], [0, 0, 1, 1], [], []>} : vector<160x256xbf16>, vector<256x256xbf16>, vector<160x256xf32> -> vector<160x256xf32>
    %c1 = arith.constant 1 : index
    %c0_6 = arith.constant 0 : index
    %5 = vector.load %arg0[%c1, %c0_6] : memref<184x256xbf16, #tpu.memory_space<vmem>>, vector<160x256xbf16>
    %c1_7 = arith.constant 1 : index
    %c0_8 = arith.constant 0 : index
    %c0_9 = arith.constant 0 : index
    %6 = vector.load %arg1[%c1_7, %c0_8, %c0_9] : memref<4x256x256xbf16, #tpu.memory_space<vmem>>, vector<1x256x256xbf16>
    %7 = vector.shape_cast %6 : vector<1x256x256xbf16> to vector<256x256xbf16>
    %cst_10 = arith.constant dense<0.000000e+00> : vector<160x256xf32>
    %8 = tpu.matmul %5, %7, %cst_10 {dimension_numbers = #tpu.dot_dimension_numbers<[1], [0], [0], [1], [0, 0, 1, 1], [], []>} : vector<160x256xbf16>, vector<256x256xbf16>, vector<160x256xf32> -> vector<160x256xf32>
    %9 = arith.addf %4, %8 : vector<160x256xf32>
    %c2 = arith.constant 2 : index
    %c0_11 = arith.constant 0 : index
    %10 = vector.load %arg0[%c2, %c0_11] : memref<184x256xbf16, #tpu.memory_space<vmem>>, vector<160x256xbf16>
    %c2_12 = arith.constant 2 : index
    %c0_13 = arith.constant 0 : index
    %c0_14 = arith.constant 0 : index
    %11 = vector.load %arg1[%c2_12, %c0_13, %c0_14] : memref<4x256x256xbf16, #tpu.memory_space<vmem>>, vector<1x256x256xbf16>
    %12 = vector.shape_cast %11 : vector<1x256x256xbf16> to vector<256x256xbf16>
    %cst_15 = arith.constant dense<0.000000e+00> : vector<160x256xf32>
    %13 = tpu.matmul %10, %12, %cst_15 {dimension_numbers = #tpu.dot_dimension_numbers<[1], [0], [0], [1], [0, 0, 1, 1], [], []>} : vector<160x256xbf16>, vector<256x256xbf16>, vector<160x256xf32> -> vector<160x256xf32>
    %14 = arith.addf %9, %13 : vector<160x256xf32>
    %c3 = arith.constant 3 : index
    %c0_16 = arith.constant 0 : index
    %15 = vector.load %arg0[%c3, %c0_16] : memref<184x256xbf16, #tpu.memory_space<vmem>>, vector<160x256xbf16>
    %c3_17 = arith.constant 3 : index
    %c0_18 = arith.constant 0 : index
    %c0_19 = arith.constant 0 : index
    %16 = vector.load %arg1[%c3_17, %c0_18, %c0_19] : memref<4x256x256xbf16, #tpu.memory_space<vmem>>, vector<1x256x256xbf16>
    %17 = vector.shape_cast %16 : vector<1x256x256xbf16> to vector<256x256xbf16>
    %cst_20 = arith.constant dense<0.000000e+00> : vector<160x256xf32>
    %18 = tpu.matmul %15, %17, %cst_20 {dimension_numbers = #tpu.dot_dimension_numbers<[1], [0], [0], [1], [0, 0, 1, 1], [], []>} : vector<160x256xbf16>, vector<256x256xbf16>, vector<160x256xf32> -> vector<160x256xf32>
    %19 = arith.addf %14, %18 : vector<160x256xf32>
    %cst_21 = arith.constant 2.000000e-01 : f32
    %20 = vector.broadcast %cst_21 : f32 to vector<160x256xf32>
    %21 = arith.mulf %20, %19 : vector<160x256xf32>
    %22 = arith.maximumf %19, %21 : vector<160x256xf32>
    %cst_22 = arith.constant 0.000000e+00 : bf16
    %23 = vector.broadcast %cst_22 : bf16 to vector<184x256xbf16>
    %c0_23 = arith.constant 0 : index
    %c0_24 = arith.constant 0 : index
    %24 = vector.load %arg12[%c0_23, %c0_24] : memref<184x256xbf16, #tpu.memory_space<vmem>>, vector<184x256xbf16>
    tpu.vector_store %arg12[%c0_23, %c0_24], %23 {strides = array<i32>} : memref<184x256xbf16, #tpu.memory_space<vmem>>, vector<184x256xbf16>,
    %25 = vector.broadcast %0 : vector<160x1xf32> to vector<160x256xf32>
    %26 = arith.mulf %22, %25 : vector<160x256xf32>
    %27 = arith.truncf %26 : vector<160x256xf32> to vector<160x256xbf16>
    %c2_25 = arith.constant 2 : index
    %c0_26 = arith.constant 0 : index
    %28 = vector.load %arg12[%c2_25, %c0_26] : memref<184x256xbf16, #tpu.memory_space<vmem>>, vector<160x256xbf16>
    tpu.vector_store %arg12[%c2_25, %c0_26], %27 {strides = array<i32>} : memref<184x256xbf16, #tpu.memory_space<vmem>>, vector<160x256xbf16>,
    %c0_27 = arith.constant 0 : index
    %c0_28 = arith.constant 0 : index
    %29 = vector.load %arg12[%c0_27, %c0_28] : memref<184x256xbf16, #tpu.memory_space<vmem>>, vector<160x256xbf16>
    %c0_29 = arith.constant 0 : index
    %c0_30 = arith.constant 0 : index
    %c0_31 = arith.constant 0 : index
    %30 = vector.load %arg2[%c0_29, %c0_30, %c0_31] : memref<4x256x256xbf16, #tpu.memory_space<vmem>>, vector<1x256x256xbf16>
    %31 = vector.shape_cast %30 : vector<1x256x256xbf16> to vector<256x256xbf16>
    %cst_32 = arith.constant dense<0.000000e+00> : vector<160x256xf32>
    %32 = tpu.matmul %29, %31, %cst_32 {dimension_numbers = #tpu.dot_dimension_numbers<[1], [0], [0], [1], [0, 0, 1, 1], [], []>} : vector<160x256xbf16>, vector<256x256xbf16>, vector<160x256xf32> -> vector<160x256xf32>
    %c2_33 = arith.constant 2 : index
    %c0_34 = arith.constant 0 : index
    %33 = vector.load %arg12[%c2_33, %c0_34] : memref<184x256xbf16, #tpu.memory_space<vmem>>, vector<160x256xbf16>
    %c1_35 = arith.constant 1 : index
    %c0_36 = arith.constant 0 : index
    %c0_37 = arith.constant 0 : index
    %34 = vector.load %arg2[%c1_35, %c0_36, %c0_37] : memref<4x256x256xbf16, #tpu.memory_space<vmem>>, vector<1x256x256xbf16>
    %35 = vector.shape_cast %34 : vector<1x256x256xbf16> to vector<256x256xbf16>
    %cst_38 = arith.constant dense<0.000000e+00> : vector<160x256xf32>
    %36 = tpu.matmul %33, %35, %cst_38 {dimension_numbers = #tpu.dot_dimension_numbers<[1], [0], [0], [1], [0, 0, 1, 1], [], []>} : vector<160x256xbf16>, vector<256x256xbf16>, vector<160x256xf32> -> vector<160x256xf32>
    %37 = arith.addf %32, %36 : vector<160x256xf32>
    %c4 = arith.constant 4 : index
    %c0_39 = arith.constant 0 : index
    %38 = vector.load %arg12[%c4, %c0_39] : memref<184x256xbf16, #tpu.memory_space<vmem>>, vector<160x256xbf16>
    %c2_40 = arith.constant 2 : index
    %c0_41 = arith.constant 0 : index
    %c0_42 = arith.constant 0 : index
    %39 = vector.load %arg2[%c2_40, %c0_41, %c0_42] : memref<4x256x256xbf16, #tpu.memory_space<vmem>>, vector<1x256x256xbf16>
    %40 = vector.shape_cast %39 : vector<1x256x256xbf16> to vector<256x256xbf16>
    %cst_43 = arith.constant dense<0.000000e+00> : vector<160x256xf32>
    %41 = tpu.matmul %38, %40, %cst_43 {dimension_numbers = #tpu.dot_dimension_numbers<[1], [0], [0], [1], [0, 0, 1, 1], [], []>} : vector<160x256xbf16>, vector<256x256xbf16>, vector<160x256xf32> -> vector<160x256xf32>
    %42 = arith.addf %37, %41 : vector<160x256xf32>
    %c6 = arith.constant 6 : index
    %c0_44 = arith.constant 0 : index
    %43 = vector.load %arg12[%c6, %c0_44] : memref<184x256xbf16, #tpu.memory_space<vmem>>, vector<160x256xbf16>
    %c3_45 = arith.constant 3 : index
    %c0_46 = arith.constant 0 : index
    %c0_47 = arith.constant 0 : index
    %44 = vector.load %arg2[%c3_45, %c0_46, %c0_47] : memref<4x256x256xbf16, #tpu.memory_space<vmem>>, vector<1x256x256xbf16>
    %45 = vector.shape_cast %44 : vector<1x256x256xbf16> to vector<256x256xbf16>
    %cst_48 = arith.constant dense<0.000000e+00> : vector<160x256xf32>
    %46 = tpu.matmul %43, %45, %cst_48 {dimension_numbers = #tpu.dot_dimension_numbers<[1], [0], [0], [1], [0, 0, 1, 1], [], []>} : vector<160x256xbf16>, vector<256x256xbf16>, vector<160x256xf32> -> vector<160x256xf32>
    %47 = arith.addf %42, %46 : vector<160x256xf32>
    %c0_49 = arith.constant 0 : index
    %c0_50 = arith.constant 0 : index
    %48 = vector.load %arg8[%c0_49, %c0_50] : memref<160x1xf32, #tpu.memory_space<vmem>>, vector<160x1xf32>
    %49 = vector.broadcast %48 : vector<160x1xf32> to vector<160x256xf32>
    %50 = arith.mulf %47, %49 : vector<160x256xf32>
    %cst_51 = arith.constant dense<0.000000e+00> : vector<256xf32>
    %51 = vector.multi_reduction <add>, %50, %cst_51 [0] : vector<160x256xf32> to vector<256xf32>
    %52 = vector.shape_cast %51 : vector<256xf32> to vector<1x256xf32>
    %53 = arith.mulf %50, %47 : vector<160x256xf32>
    %cst_52 = arith.constant dense<0.000000e+00> : vector<256xf32>
    %54 = vector.multi_reduction <add>, %53, %cst_52 [0] : vector<160x256xf32> to vector<256xf32>
    %55 = vector.shape_cast %54 : vector<256xf32> to vector<1x256xf32>
    %56 = tpu.concatenate %52, %55 in 0 : vector<1x256xf32>, vector<1x256xf32> -> vector<2x256xf32>
    %57 = tpu.iota {dimensions = array<i32: 0>} : vector<256x256xi32>
    %c16_i32 = arith.constant 16 : i32
    %c0_i32 = arith.constant 0 : i32
    %58 = arith.cmpi eq, %c16_i32, %c0_i32 : i32
    %c1_i32 = arith.constant 1 : i32
    %59 = arith.select %58, %c1_i32, %c16_i32 : i32
    %60 = vector.broadcast %59 : i32 to vector<256x256xi32>
    %61 = arith.remsi %57, %60 : vector<256x256xi32>
    %c0_i32_53 = arith.constant 0 : i32
    %62 = vector.broadcast %c0_i32_53 : i32 to vector<256x256xi32>
    %63 = arith.cmpi ne, %61, %62 : vector<256x256xi32>
    %c0_i32_54 = arith.constant 0 : i32
    %64 = vector.broadcast %c0_i32_54 : i32 to vector<256x256xi32>
    %65 = arith.cmpi slt, %61, %64 : vector<256x256xi32>
    %c0_i32_55 = arith.constant 0 : i32
    %66 = arith.cmpi slt, %59, %c0_i32_55 : i32
    %67 = vector.broadcast %66 : i1 to vector<256x256xi1>
    %68 = vector.broadcast %67 : vector<256x256xi1> to vector<256x256xi1>
    %69 = arith.xori %65, %68 : vector<256x256xi1>
    %70 = arith.andi %69, %63 : vector<256x256xi1>
    %71 = vector.broadcast %59 : i32 to vector<256x256xi32>
    %72 = arith.addi %61, %71 : vector<256x256xi32>
    %73 = arith.select %70, %72, %61 : vector<256x256xi1>, vector<256x256xi32>
    %74 = tpu.iota {dimensions = array<i32: 1>} : vector<256x256xi32>
    %c16_i32_56 = arith.constant 16 : i32
    %c0_i32_57 = arith.constant 0 : i32
    %75 = arith.cmpi eq, %c16_i32_56, %c0_i32_57 : i32
    %c1_i32_58 = arith.constant 1 : i32
    %76 = arith.select %75, %c1_i32_58, %c16_i32_56 : i32
    %77 = vector.broadcast %76 : i32 to vector<256x256xi32>
    %78 = arith.remsi %74, %77 : vector<256x256xi32>
    %c0_i32_59 = arith.constant 0 : i32
    %79 = vector.broadcast %c0_i32_59 : i32 to vector<256x256xi32>
    %80 = arith.cmpi ne, %78, %79 : vector<256x256xi32>
    %c0_i32_60 = arith.constant 0 : i32
    %81 = vector.broadcast %c0_i32_60 : i32 to vector<256x256xi32>
    %82 = arith.cmpi slt, %78, %81 : vector<256x256xi32>
    %c0_i32_61 = arith.constant 0 : i32
    %83 = arith.cmpi slt, %76, %c0_i32_61 : i32
    %84 = vector.broadcast %83 : i1 to vector<256x256xi1>
    %85 = vector.broadcast %84 : vector<256x256xi1> to vector<256x256xi1>
    %86 = arith.xori %82, %85 : vector<256x256xi1>
    %87 = arith.andi %86, %80 : vector<256x256xi1>
    %88 = vector.broadcast %76 : i32 to vector<256x256xi32>
    %89 = arith.addi %78, %88 : vector<256x256xi32>
    %90 = arith.select %87, %89, %78 : vector<256x256xi1>, vector<256x256xi32>
    %91 = arith.cmpi eq, %73, %90 : vector<256x256xi32>
    %92 = arith.extui %91 : vector<256x256xi1> to vector<256x256xi32>
    %93 = arith.sitofp %92 : vector<256x256xi32> to vector<256x256xf32>
    %cst_62 = arith.constant dense<0.000000e+00> : vector<2x256xf32>
    %94 = tpu.matmul %56, %93, %cst_62 {dimension_numbers = #tpu.dot_dimension_numbers<[1], [0], [0], [1], [0, 0, 1, 1], [], []>} : vector<2x256xf32>, vector<256x256xf32>, vector<2x256xf32> -> vector<2x256xf32>
    %cst_63 = arith.constant 0.001953125 : f32
    %95 = vector.broadcast %cst_63 : f32 to vector<2x256xf32>
    %96 = arith.mulf %94, %95 : vector<2x256xf32>
    %97 = vector.extract_strided_slice %96 {offsets = [0, 0], sizes = [1, 256], strides = [1, 1]} : vector<2x256xf32> to vector<1x256xf32>
    %98 = vector.extract_strided_slice %96 {offsets = [1, 0], sizes = [1, 256], strides = [1, 1]} : vector<2x256xf32> to vector<1x256xf32>
    %99 = arith.mulf %97, %97 : vector<1x256xf32>
    %100 = arith.subf %98, %99 : vector<1x256xf32>
    %101 = vector.broadcast %97 : vector<1x256xf32> to vector<160x256xf32>
    %102 = arith.subf %47, %101 : vector<160x256xf32>
    %cst_64 = arith.constant 9.99999974E-6 : f32
    %103 = vector.broadcast %cst_64 : f32 to vector<1x256xf32>
    %104 = arith.addf %100, %103 : vector<1x256xf32>
    %105 = math.rsqrt %104 : vector<1x256xf32>
    %106 = vector.broadcast %105 : vector<1x256xf32> to vector<160x256xf32>
    %107 = arith.mulf %102, %106 : vector<160x256xf32>
    %cst_65 = arith.constant 2.000000e-01 : f32
    %108 = vector.broadcast %cst_65 : f32 to vector<160x256xf32>
    %109 = arith.mulf %108, %107 : vector<160x256xf32>
    %110 = arith.maximumf %107, %109 : vector<160x256xf32>
    %cst_66 = arith.constant 0.000000e+00 : bf16
    %111 = vector.broadcast %cst_66 : bf16 to vector<184x256xbf16>
    %c0_67 = arith.constant 0 : index
    %c0_68 = arith.constant 0 : index
    %112 = vector.load %arg12[%c0_67, %c0_68] : memref<184x256xbf16, #tpu.memory_space<vmem>>, vector<184x256xbf16>
    tpu.vector_store %arg12[%c0_67, %c0_68], %111 {strides = array<i32>} : memref<184x256xbf16, #tpu.memory_space<vmem>>, vector<184x256xbf16>,
    %113 = vector.broadcast %0 : vector<160x1xf32> to vector<160x256xf32>
    %114 = arith.mulf %110, %113 : vector<160x256xf32>
    %115 = arith.truncf %114 : vector<160x256xf32> to vector<160x256xbf16>
    %c4_69 = arith.constant 4 : index
    %c0_70 = arith.constant 0 : index
    %116 = vector.load %arg12[%c4_69, %c0_70] : memref<184x256xbf16, #tpu.memory_space<vmem>>, vector<160x256xbf16>
    tpu.vector_store %arg12[%c4_69, %c0_70], %115 {strides = array<i32>} : memref<184x256xbf16, #tpu.memory_space<vmem>>, vector<160x256xbf16>,
    %c0_71 = arith.constant 0 : index
    %c0_72 = arith.constant 0 : index
    %117 = vector.load %arg12[%c0_71, %c0_72] : memref<184x256xbf16, #tpu.memory_space<vmem>>, vector<160x256xbf16>
    %c0_73 = arith.constant 0 : index
    %c0_74 = arith.constant 0 : index
    %c0_75 = arith.constant 0 : index
    %118 = vector.load %arg3[%c0_73, %c0_74, %c0_75] : memref<4x256x256xbf16, #tpu.memory_space<vmem>>, vector<1x256x256xbf16>
    %119 = vector.shape_cast %118 : vector<1x256x256xbf16> to vector<256x256xbf16>
    %cst_76 = arith.constant dense<0.000000e+00> : vector<160x256xf32>
    %120 = tpu.matmul %117, %119, %cst_76 {dimension_numbers = #tpu.dot_dimension_numbers<[1], [0], [0], [1], [0, 0, 1, 1], [], []>} : vector<160x256xbf16>, vector<256x256xbf16>, vector<160x256xf32> -> vector<160x256xf32>
    %c4_77 = arith.constant 4 : index
    %c0_78 = arith.constant 0 : index
    %121 = vector.load %arg12[%c4_77, %c0_78] : memref<184x256xbf16, #tpu.memory_space<vmem>>, vector<160x256xbf16>
    %c1_79 = arith.constant 1 : index
    %c0_80 = arith.constant 0 : index
    %c0_81 = arith.constant 0 : index
    %122 = vector.load %arg3[%c1_79, %c0_80, %c0_81] : memref<4x256x256xbf16, #tpu.memory_space<vmem>>, vector<1x256x256xbf16>
    %123 = vector.shape_cast %122 : vector<1x256x256xbf16> to vector<256x256xbf16>
    %cst_82 = arith.constant dense<0.000000e+00> : vector<160x256xf32>
    %124 = tpu.matmul %121, %123, %cst_82 {dimension_numbers = #tpu.dot_dimension_numbers<[1], [0], [0], [1], [0, 0, 1, 1], [], []>} : vector<160x256xbf16>, vector<256x256xbf16>, vector<160x256xf32> -> vector<160x256xf32>
    %125 = arith.addf %120, %124 : vector<160x256xf32>
    %c8 = arith.constant 8 : index
    %c0_83 = arith.constant 0 : index
    %126 = vector.load %arg12[%c8, %c0_83] : memref<184x256xbf16, #tpu.memory_space<vmem>>, vector<160x256xbf16>
    %c2_84 = arith.constant 2 : index
    %c0_85 = arith.constant 0 : index
    %c0_86 = arith.constant 0 : index
    %127 = vector.load %arg3[%c2_84, %c0_85, %c0_86] : memref<4x256x256xbf16, #tpu.memory_space<vmem>>, vector<1x256x256xbf16>
    %128 = vector.shape_cast %127 : vector<1x256x256xbf16> to vector<256x256xbf16>
    %cst_87 = arith.constant dense<0.000000e+00> : vector<160x256xf32>
    %129 = tpu.matmul %126, %128, %cst_87 {dimension_numbers = #tpu.dot_dimension_numbers<[1], [0], [0], [1], [0, 0, 1, 1], [], []>} : vector<160x256xbf16>, vector<256x256xbf16>, vector<160x256xf32> -> vector<160x256xf32>
    %130 = arith.addf %125, %129 : vector<160x256xf32>
    %c12 = arith.constant 12 : index
    %c0_88 = arith.constant 0 : index
    %131 = vector.load %arg12[%c12, %c0_88] : memref<184x256xbf16, #tpu.memory_space<vmem>>, vector<160x256xbf16>
    %c3_89 = arith.constant 3 : index
    %c0_90 = arith.constant 0 : index
    %c0_91 = arith.constant 0 : index
    %132 = vector.load %arg3[%c3_89, %c0_90, %c0_91] : memref<4x256x256xbf16, #tpu.memory_space<vmem>>, vector<1x256x256xbf16>
    %133 = vector.shape_cast %132 : vector<1x256x256xbf16> to vector<256x256xbf16>
    %cst_92 = arith.constant dense<0.000000e+00> : vector<160x256xf32>
    %134 = tpu.matmul %131, %133, %cst_92 {dimension_numbers = #tpu.dot_dimension_numbers<[1], [0], [0], [1], [0, 0, 1, 1], [], []>} : vector<160x256xbf16>, vector<256x256xbf16>, vector<160x256xf32> -> vector<160x256xf32>
    %135 = arith.addf %130, %134 : vector<160x256xf32>
    %c0_93 = arith.constant 0 : index
    %c0_94 = arith.constant 0 : index
    %136 = vector.load %arg9[%c0_93, %c0_94] : memref<160x1xf32, #tpu.memory_space<vmem>>, vector<160x1xf32>
    %137 = vector.broadcast %136 : vector<160x1xf32> to vector<160x256xf32>
    %138 = arith.mulf %135, %137 : vector<160x256xf32>
    %cst_95 = arith.constant dense<0.000000e+00> : vector<256xf32>
    %139 = vector.multi_reduction <add>, %138, %cst_95 [0] : vector<160x256xf32> to vector<256xf32>
    %140 = vector.shape_cast %139 : vector<256xf32> to vector<1x256xf32>
    %141 = arith.mulf %138, %135 : vector<160x256xf32>
    %cst_96 = arith.constant dense<0.000000e+00> : vector<256xf32>
    %142 = vector.multi_reduction <add>, %141, %cst_96 [0] : vector<160x256xf32> to vector<256xf32>
    %143 = vector.shape_cast %142 : vector<256xf32> to vector<1x256xf32>
    %144 = tpu.concatenate %140, %143 in 0 : vector<1x256xf32>, vector<1x256xf32> -> vector<2x256xf32>
    %145 = tpu.iota {dimensions = array<i32: 0>} : vector<256x256xi32>
    %c32_i32 = arith.constant 32 : i32
    %c0_i32_97 = arith.constant 0 : i32
    %146 = arith.cmpi eq, %c32_i32, %c0_i32_97 : i32
    %c1_i32_98 = arith.constant 1 : i32
    %147 = arith.select %146, %c1_i32_98, %c32_i32 : i32
    %148 = vector.broadcast %147 : i32 to vector<256x256xi32>
    %149 = arith.remsi %145, %148 : vector<256x256xi32>
    %c0_i32_99 = arith.constant 0 : i32
    %150 = vector.broadcast %c0_i32_99 : i32 to vector<256x256xi32>
    %151 = arith.cmpi ne, %149, %150 : vector<256x256xi32>
    %c0_i32_100 = arith.constant 0 : i32
    %152 = vector.broadcast %c0_i32_100 : i32 to vector<256x256xi32>
    %153 = arith.cmpi slt, %149, %152 : vector<256x256xi32>
    %c0_i32_101 = arith.constant 0 : i32
    %154 = arith.cmpi slt, %147, %c0_i32_101 : i32
    %155 = vector.broadcast %154 : i1 to vector<256x256xi1>
    %156 = vector.broadcast %155 : vector<256x256xi1> to vector<256x256xi1>
    %157 = arith.xori %153, %156 : vector<256x256xi1>
    %158 = arith.andi %157, %151 : vector<256x256xi1>
    %159 = vector.broadcast %147 : i32 to vector<256x256xi32>
    %160 = arith.addi %149, %159 : vector<256x256xi32>
    %161 = arith.select %158, %160, %149 : vector<256x256xi1>, vector<256x256xi32>
    %162 = tpu.iota {dimensions = array<i32: 1>} : vector<256x256xi32>
    %c32_i32_102 = arith.constant 32 : i32
    %c0_i32_103 = arith.constant 0 : i32
    %163 = arith.cmpi eq, %c32_i32_102, %c0_i32_103 : i32
    %c1_i32_104 = arith.constant 1 : i32
    %164 = arith.select %163, %c1_i32_104, %c32_i32_102 : i32
    %165 = vector.broadcast %164 : i32 to vector<256x256xi32>
    %166 = arith.remsi %162, %165 : vector<256x256xi32>
    %c0_i32_105 = arith.constant 0 : i32
    %167 = vector.broadcast %c0_i32_105 : i32 to vector<256x256xi32>
    %168 = arith.cmpi ne, %166, %167 : vector<256x256xi32>
    %c0_i32_106 = arith.constant 0 : i32
    %169 = vector.broadcast %c0_i32_106 : i32 to vector<256x256xi32>
    %170 = arith.cmpi slt, %166, %169 : vector<256x256xi32>
    %c0_i32_107 = arith.constant 0 : i32
    %171 = arith.cmpi slt, %164, %c0_i32_107 : i32
    %172 = vector.broadcast %171 : i1 to vector<256x256xi1>
    %173 = vector.broadcast %172 : vector<256x256xi1> to vector<256x256xi1>
    %174 = arith.xori %170, %173 : vector<256x256xi1>
    %175 = arith.andi %174, %168 : vector<256x256xi1>
    %176 = vector.broadcast %164 : i32 to vector<256x256xi32>
    %177 = arith.addi %166, %176 : vector<256x256xi32>
    %178 = arith.select %175, %177, %166 : vector<256x256xi1>, vector<256x256xi32>
    %179 = arith.cmpi eq, %161, %178 : vector<256x256xi32>
    %180 = arith.extui %179 : vector<256x256xi1> to vector<256x256xi32>
    %181 = arith.sitofp %180 : vector<256x256xi32> to vector<256x256xf32>
    %cst_108 = arith.constant dense<0.000000e+00> : vector<2x256xf32>
    %182 = tpu.matmul %144, %181, %cst_108 {dimension_numbers = #tpu.dot_dimension_numbers<[1], [0], [0], [1], [0, 0, 1, 1], [], []>} : vector<2x256xf32>, vector<256x256xf32>, vector<2x256xf32> -> vector<2x256xf32>
    %cst_109 = arith.constant 7.812500e-03 : f32
    %183 = vector.broadcast %cst_109 : f32 to vector<2x256xf32>
    %184 = arith.mulf %182, %183 : vector<2x256xf32>
    %185 = vector.extract_strided_slice %184 {offsets = [0, 0], sizes = [1, 256], strides = [1, 1]} : vector<2x256xf32> to vector<1x256xf32>
    %186 = vector.extract_strided_slice %184 {offsets = [1, 0], sizes = [1, 256], strides = [1, 1]} : vector<2x256xf32> to vector<1x256xf32>
    %187 = arith.mulf %185, %185 : vector<1x256xf32>
    %188 = arith.subf %186, %187 : vector<1x256xf32>
    %189 = vector.broadcast %185 : vector<1x256xf32> to vector<160x256xf32>
    %190 = arith.subf %135, %189 : vector<160x256xf32>
    %cst_110 = arith.constant 9.99999974E-6 : f32
    %191 = vector.broadcast %cst_110 : f32 to vector<1x256xf32>
    %192 = arith.addf %188, %191 : vector<1x256xf32>
    %193 = math.rsqrt %192 : vector<1x256xf32>
    %194 = vector.broadcast %193 : vector<1x256xf32> to vector<160x256xf32>
    %195 = arith.mulf %190, %194 : vector<160x256xf32>
    %cst_111 = arith.constant 2.000000e-01 : f32
    %196 = vector.broadcast %cst_111 : f32 to vector<160x256xf32>
    %197 = arith.mulf %196, %195 : vector<160x256xf32>
    %198 = arith.maximumf %195, %197 : vector<160x256xf32>
    %cst_112 = arith.constant 0.000000e+00 : bf16
    %199 = vector.broadcast %cst_112 : bf16 to vector<184x256xbf16>
    %c0_113 = arith.constant 0 : index
    %c0_114 = arith.constant 0 : index
    %200 = vector.load %arg12[%c0_113, %c0_114] : memref<184x256xbf16, #tpu.memory_space<vmem>>, vector<184x256xbf16>
    tpu.vector_store %arg12[%c0_113, %c0_114], %199 {strides = array<i32>} : memref<184x256xbf16, #tpu.memory_space<vmem>>, vector<184x256xbf16>,
    %201 = vector.broadcast %0 : vector<160x1xf32> to vector<160x256xf32>
    %202 = arith.mulf %198, %201 : vector<160x256xf32>
    %203 = arith.truncf %202 : vector<160x256xf32> to vector<160x256xbf16>
    %c8_115 = arith.constant 8 : index
    %c0_116 = arith.constant 0 : index
    %204 = vector.load %arg12[%c8_115, %c0_116] : memref<184x256xbf16, #tpu.memory_space<vmem>>, vector<160x256xbf16>
    tpu.vector_store %arg12[%c8_115, %c0_116], %203 {strides = array<i32>} : memref<184x256xbf16, #tpu.memory_space<vmem>>, vector<160x256xbf16>,
    %c0_117 = arith.constant 0 : index
    %c0_118 = arith.constant 0 : index
    %205 = vector.load %arg12[%c0_117, %c0_118] : memref<184x256xbf16, #tpu.memory_space<vmem>>, vector<160x256xbf16>
    %c0_119 = arith.constant 0 : index
    %c0_120 = arith.constant 0 : index
    %c0_121 = arith.constant 0 : index
    %206 = vector.load %arg4[%c0_119, %c0_120, %c0_121] : memref<4x256x256xbf16, #tpu.memory_space<vmem>>, vector<1x256x256xbf16>
    %207 = vector.shape_cast %206 : vector<1x256x256xbf16> to vector<256x256xbf16>
    %cst_122 = arith.constant dense<0.000000e+00> : vector<160x256xf32>
    %208 = tpu.matmul %205, %207, %cst_122 {dimension_numbers = #tpu.dot_dimension_numbers<[1], [0], [0], [1], [0, 0, 1, 1], [], []>} : vector<160x256xbf16>, vector<256x256xbf16>, vector<160x256xf32> -> vector<160x256xf32>
    %c8_123 = arith.constant 8 : index
    %c0_124 = arith.constant 0 : index
    %209 = vector.load %arg12[%c8_123, %c0_124] : memref<184x256xbf16, #tpu.memory_space<vmem>>, vector<160x256xbf16>
    %c1_125 = arith.constant 1 : index
    %c0_126 = arith.constant 0 : index
    %c0_127 = arith.constant 0 : index
    %210 = vector.load %arg4[%c1_125, %c0_126, %c0_127] : memref<4x256x256xbf16, #tpu.memory_space<vmem>>, vector<1x256x256xbf16>
    %211 = vector.shape_cast %210 : vector<1x256x256xbf16> to vector<256x256xbf16>
    %cst_128 = arith.constant dense<0.000000e+00> : vector<160x256xf32>
    %212 = tpu.matmul %209, %211, %cst_128 {dimension_numbers = #tpu.dot_dimension_numbers<[1], [0], [0], [1], [0, 0, 1, 1], [], []>} : vector<160x256xbf16>, vector<256x256xbf16>, vector<160x256xf32> -> vector<160x256xf32>
    %213 = arith.addf %208, %212 : vector<160x256xf32>
    %c16 = arith.constant 16 : index
    %c0_129 = arith.constant 0 : index
    %214 = vector.load %arg12[%c16, %c0_129] : memref<184x256xbf16, #tpu.memory_space<vmem>>, vector<160x256xbf16>
    %c2_130 = arith.constant 2 : index
    %c0_131 = arith.constant 0 : index
    %c0_132 = arith.constant 0 : index
    %215 = vector.load %arg4[%c2_130, %c0_131, %c0_132] : memref<4x256x256xbf16, #tpu.memory_space<vmem>>, vector<1x256x256xbf16>
    %216 = vector.shape_cast %215 : vector<1x256x256xbf16> to vector<256x256xbf16>
    %cst_133 = arith.constant dense<0.000000e+00> : vector<160x256xf32>
    %217 = tpu.matmul %214, %216, %cst_133 {dimension_numbers = #tpu.dot_dimension_numbers<[1], [0], [0], [1], [0, 0, 1, 1], [], []>} : vector<160x256xbf16>, vector<256x256xbf16>, vector<160x256xf32> -> vector<160x256xf32>
    %218 = arith.addf %213, %217 : vector<160x256xf32>
    %c24 = arith.constant 24 : index
    %c0_134 = arith.constant 0 : index
    %219 = vector.load %arg12[%c24, %c0_134] : memref<184x256xbf16, #tpu.memory_space<vmem>>, vector<160x256xbf16>
    %c3_135 = arith.constant 3 : index
    %c0_136 = arith.constant 0 : index
    %c0_137 = arith.constant 0 : index
    %220 = vector.load %arg4[%c3_135, %c0_136, %c0_137] : memref<4x256x256xbf16, #tpu.memory_space<vmem>>, vector<1x256x256xbf16>
    %221 = vector.shape_cast %220 : vector<1x256x256xbf16> to vector<256x256xbf16>
    %cst_138 = arith.constant dense<0.000000e+00> : vector<160x256xf32>
    %222 = tpu.matmul %219, %221, %cst_138 {dimension_numbers = #tpu.dot_dimension_numbers<[1], [0], [0], [1], [0, 0, 1, 1], [], []>} : vector<160x256xbf16>, vector<256x256xbf16>, vector<160x256xf32> -> vector<160x256xf32>
    %223 = arith.addf %218, %222 : vector<160x256xf32>
    %c0_139 = arith.constant 0 : index
    %c0_140 = arith.constant 0 : index
    %224 = vector.load %arg10[%c0_139, %c0_140] : memref<160x1xf32, #tpu.memory_space<vmem>>, vector<160x1xf32>
    %225 = vector.broadcast %224 : vector<160x1xf32> to vector<160x256xf32>
    %226 = arith.mulf %223, %225 : vector<160x256xf32>
    %cst_141 = arith.constant dense<0.000000e+00> : vector<256xf32>
    %227 = vector.multi_reduction <add>, %226, %cst_141 [0] : vector<160x256xf32> to vector<256xf32>
    %228 = vector.shape_cast %227 : vector<256xf32> to vector<1x256xf32>
    %229 = arith.mulf %226, %223 : vector<160x256xf32>
    %cst_142 = arith.constant dense<0.000000e+00> : vector<256xf32>
    %230 = vector.multi_reduction <add>, %229, %cst_142 [0] : vector<160x256xf32> to vector<256xf32>
    %231 = vector.shape_cast %230 : vector<256xf32> to vector<1x256xf32>
    %232 = tpu.concatenate %228, %231 in 0 : vector<1x256xf32>, vector<1x256xf32> -> vector<2x256xf32>
    %233 = tpu.iota {dimensions = array<i32: 0>} : vector<256x256xi32>
    %c64_i32 = arith.constant 64 : i32
    %c0_i32_143 = arith.constant 0 : i32
    %234 = arith.cmpi eq, %c64_i32, %c0_i32_143 : i32
    %c1_i32_144 = arith.constant 1 : i32
    %235 = arith.select %234, %c1_i32_144, %c64_i32 : i32
    %236 = vector.broadcast %235 : i32 to vector<256x256xi32>
    %237 = arith.remsi %233, %236 : vector<256x256xi32>
    %c0_i32_145 = arith.constant 0 : i32
    %238 = vector.broadcast %c0_i32_145 : i32 to vector<256x256xi32>
    %239 = arith.cmpi ne, %237, %238 : vector<256x256xi32>
    %c0_i32_146 = arith.constant 0 : i32
    %240 = vector.broadcast %c0_i32_146 : i32 to vector<256x256xi32>
    %241 = arith.cmpi slt, %237, %240 : vector<256x256xi32>
    %c0_i32_147 = arith.constant 0 : i32
    %242 = arith.cmpi slt, %235, %c0_i32_147 : i32
    %243 = vector.broadcast %242 : i1 to vector<256x256xi1>
    %244 = vector.broadcast %243 : vector<256x256xi1> to vector<256x256xi1>
    %245 = arith.xori %241, %244 : vector<256x256xi1>
    %246 = arith.andi %245, %239 : vector<256x256xi1>
    %247 = vector.broadcast %235 : i32 to vector<256x256xi32>
    %248 = arith.addi %237, %247 : vector<256x256xi32>
    %249 = arith.select %246, %248, %237 : vector<256x256xi1>, vector<256x256xi32>
    %250 = tpu.iota {dimensions = array<i32: 1>} : vector<256x256xi32>
    %c64_i32_148 = arith.constant 64 : i32
    %c0_i32_149 = arith.constant 0 : i32
    %251 = arith.cmpi eq, %c64_i32_148, %c0_i32_149 : i32
    %c1_i32_150 = arith.constant 1 : i32
    %252 = arith.select %251, %c1_i32_150, %c64_i32_148 : i32
    %253 = vector.broadcast %252 : i32 to vector<256x256xi32>
    %254 = arith.remsi %250, %253 : vector<256x256xi32>
    %c0_i32_151 = arith.constant 0 : i32
    %255 = vector.broadcast %c0_i32_151 : i32 to vector<256x256xi32>
    %256 = arith.cmpi ne, %254, %255 : vector<256x256xi32>
    %c0_i32_152 = arith.constant 0 : i32
    %257 = vector.broadcast %c0_i32_152 : i32 to vector<256x256xi32>
    %258 = arith.cmpi slt, %254, %257 : vector<256x256xi32>
    %c0_i32_153 = arith.constant 0 : i32
    %259 = arith.cmpi slt, %252, %c0_i32_153 : i32
    %260 = vector.broadcast %259 : i1 to vector<256x256xi1>
    %261 = vector.broadcast %260 : vector<256x256xi1> to vector<256x256xi1>
    %262 = arith.xori %258, %261 : vector<256x256xi1>
    %263 = arith.andi %262, %256 : vector<256x256xi1>
    %264 = vector.broadcast %252 : i32 to vector<256x256xi32>
    %265 = arith.addi %254, %264 : vector<256x256xi32>
    %266 = arith.select %263, %265, %254 : vector<256x256xi1>, vector<256x256xi32>
    %267 = arith.cmpi eq, %249, %266 : vector<256x256xi32>
    %268 = arith.extui %267 : vector<256x256xi1> to vector<256x256xi32>
    %269 = arith.sitofp %268 : vector<256x256xi32> to vector<256x256xf32>
    %cst_154 = arith.constant dense<0.000000e+00> : vector<2x256xf32>
    %270 = tpu.matmul %232, %269, %cst_154 {dimension_numbers = #tpu.dot_dimension_numbers<[1], [0], [0], [1], [0, 0, 1, 1], [], []>} : vector<2x256xf32>, vector<256x256xf32>, vector<2x256xf32> -> vector<2x256xf32>
    %cst_155 = arith.constant 3.125000e-02 : f32
    %271 = vector.broadcast %cst_155 : f32 to vector<2x256xf32>
    %272 = arith.mulf %270, %271 : vector<2x256xf32>
    %273 = vector.extract_strided_slice %272 {offsets = [0, 0], sizes = [1, 256], strides = [1, 1]} : vector<2x256xf32> to vector<1x256xf32>
    %274 = vector.extract_strided_slice %272 {offsets = [1, 0], sizes = [1, 256], strides = [1, 1]} : vector<2x256xf32> to vector<1x256xf32>
    %275 = arith.mulf %273, %273 : vector<1x256xf32>
    %276 = arith.subf %274, %275 : vector<1x256xf32>
    %277 = vector.broadcast %273 : vector<1x256xf32> to vector<160x256xf32>
    %278 = arith.subf %223, %277 : vector<160x256xf32>
    %cst_156 = arith.constant 9.99999974E-6 : f32
    %279 = vector.broadcast %cst_156 : f32 to vector<1x256xf32>
    %280 = arith.addf %276, %279 : vector<1x256xf32>
    %281 = math.rsqrt %280 : vector<1x256xf32>
    %282 = vector.broadcast %281 : vector<1x256xf32> to vector<160x256xf32>
    %283 = arith.mulf %278, %282 : vector<160x256xf32>
    %cst_157 = arith.constant 2.000000e-01 : f32
    %284 = vector.broadcast %cst_157 : f32 to vector<160x256xf32>
    %285 = arith.mulf %284, %283 : vector<160x256xf32>
    %286 = arith.maximumf %283, %285 : vector<160x256xf32>
    %c0_158 = arith.constant 0 : index
    %c0_159 = arith.constant 0 : index
    %287 = vector.load %arg5[%c0_158, %c0_159] : memref<160x256xf32, #tpu.memory_space<vmem>>, vector<160x256xf32>
    %288 = arith.mulf %286, %287 : vector<160x256xf32>
    %c0_160 = arith.constant 0 : index
    %c0_161 = arith.constant 0 : index
    %289 = vector.load %arg6[%c0_160, %c0_161] : memref<2x160xf32, #tpu.memory_space<vmem>>, vector<2x160xf32>
    %cst_162 = arith.constant dense<0.000000e+00> : vector<2x256xf32>
    %290 = tpu.matmul %289, %288, %cst_162 {dimension_numbers = #tpu.dot_dimension_numbers<[1], [0], [0], [1], [0, 0, 1, 1], [], []>} : vector<2x160xf32>, vector<160x256xf32>, vector<2x256xf32> -> vector<2x256xf32>
    %cst_163 = arith.constant dense<0.000000e+00> : vector<2xf32>
    %291 = vector.multi_reduction <add>, %290, %cst_163 [1] : vector<2x256xf32> to vector<2xf32>
    %292 = vector.shape_cast %291 : vector<2xf32> to vector<2x1xf32>
    %293 = arith.negf %292 : vector<2x1xf32>
    %294 = math.exp %293 : vector<2x1xf32>
    %cst_164 = arith.constant 1.000000e+00 : f32
    %295 = vector.broadcast %cst_164 : f32 to vector<2x1xf32>
    %296 = arith.addf %295, %294 : vector<2x1xf32>
    %297 = arith.divf %295, %296 : vector<2x1xf32>
    %c0_165 = arith.constant 0 : index
    %c0_166 = arith.constant 0 : index
    %298 = vector.load %arg11[%c0_165, %c0_166] : memref<2x1xf32, #tpu.memory_space<vmem>>, vector<2x1xf32>
    tpu.vector_store %arg11[%c0_165, %c0_166], %297 {strides = array<i32>} : memref<2x1xf32, #tpu.memory_space<vmem>>, vector<2x1xf32>,
    return
  }
}

</mosaic_0001>

<llo_original>
// kernel: forward.1
$region0: #{forward.1}
  #allocation0 [shape = 'u32[]', space=smem, size = 0x4, offset = 0x4, fixed_abs, tag = 'smem constant byte address 0x4 - core index']
  #allocation1 [shape = 'u32[144,128]{1,0:T(1,128)}', space=vmem, size = 0x12000, scoped, tag = 'internal scratch']
  #allocation2 [shape = 'bf16[184,256]{1,0:T(8,128)(2,1)}', space=vmem, size = 0x17000, scoped, tag = 'scratch operand']
  %s0 = inlined_call_operand.vmem [shape: bf16[184,256], index: 0, kind: input, shape index: {}]
  %s1 = inlined_call_operand.vmem [shape: bf16[4,256,256], index: 1, kind: input, shape index: {}]
  %s2 = inlined_call_operand.vmem [shape: bf16[4,256,256], index: 2, kind: input, shape index: {}]
  %s3 = inlined_call_operand.hbm [shape: bf16[4,256,256], index: 3, kind: input, shape index: {}]
  %s4 = inlined_call_operand.hbm [shape: bf16[4,256,256], index: 4, kind: input, shape index: {}]
  %s5 = inlined_call_operand.vmem [shape: f32[160,256], index: 5, kind: input, shape index: {}]
  %s6 = inlined_call_operand.vmem [shape: f32[2,160], index: 6, kind: input, shape index: {}]
  %s7 = inlined_call_operand.vmem [shape: f32[160,1], index: 7, kind: input, shape index: {}]
  %s8 = inlined_call_operand.vmem [shape: f32[160,1], index: 8, kind: input, shape index: {}]
  %s9 = inlined_call_operand.vmem [shape: f32[160,1], index: 9, kind: input, shape index: {}]
  %s10 = inlined_call_operand.vmem [shape: f32[160,1], index: 10, kind: input, shape index: {}]
  %s11 = inlined_call_operand.vmem [shape: f32[2,1], index: 11, kind: output, shape index: {}]
  %s12 = sld [smem:[#allocation0]]
  $region62: #{forward.1} parent=0
    _
  %s14 = ssub.s32 1, %s12
  %s15 = scalar_select 0, %s14, %s12
  $region1: #{forward.1} parent=0
    #allocation3 [shape = 'u8[524288]{0}', space=vmem, size = 0x80000, scoped, tag = 'input window, operand 3, single buffered']
    #allocation4 [shape = 's32[1]{0}', space=sflag, size = 0x4, scoped, tag = 'scoped memory for forward.1']
    #allocation5 [shape = 'u8[524288]{0}', space=vmem, size = 0x80000, scoped, tag = 'input window, operand 4, single buffered']
    #allocation6 [shape = 's32[1]{0}', space=sflag, size = 0x4, scoped, tag = 'scoped memory for forward.1']
    %16 = vsyncpa [#allocation4], 0
    %17 = vsyncpa [#allocation6], 0
    // Predicated region
    $region2: #{forward.1} parent=1 // pred_check
      _
    $region3: #{forward.1} parent=1 // pred_check_branch
      %19 = sbr.rel (0) target = $region5
    $region4: #{forward.1} parent=1 // pred_region
      _
    $region5: #{forward.1} parent=1 // pred_fallthru
      _
    // Predicated region
    $region6: #{forward.1} parent=1 // pred_check
      _
    $region7: #{forward.1} parent=1 // pred_check_branch
      %21 = sbr.rel (0) target = $region9
    $region8: #{forward.1} parent=1 // pred_region
      _
    $region9: #{forward.1} parent=1 // pred_fallthru
      _
    // Predicated region
    $region10: #{forward.1} parent=1 // pred_check
      _
    $region11: #{forward.1} parent=1 // pred_check_branch
      %23 = sbr.rel (0) target = $region13
    $region12: #{forward.1} parent=1 // pred_region
      _
    $region13: #{forward.1} parent=1 // pred_fallthru
      _
    // Predicated region
    $region14: #{forward.1} parent=1 // pred_check
      _
    $region15: #{forward.1} parent=1 // pred_check_branch
      %25 = sbr.rel (0) target = $region17
    $region16: #{forward.1} parent=1 // pred_region
      %s27 = ssub.s32 16384, 16384
      %28 = vsyncadd [#allocation4], %s27
      %s29 = sshll.u32 [#allocation3], 4
      %s30 = int_to_ptr.vmem [resolvable:$true] %s29
      %35 = dma.hbm_to_vmem [thread:$0]  %s3, 16384, %s30, [#allocation4], 128, 128, 8
    $region17: #{forward.1} parent=1 // pred_fallthru
      _
    // Predicated region
    $region18: #{forward.1} parent=1 // pred_check
      _
    $region19: #{forward.1} parent=1 // pred_check_branch
      %37 = sbr.rel (0) target = $region21
    $region20: #{forward.1} parent=1 // pred_region
      %s39 = ssub.s32 16384, 16384
      %40 = vsyncadd [#allocation6], %s39
      %s41 = sshll.u32 [#allocation5], 4
      %s42 = int_to_ptr.vmem [resolvable:$true] %s41
      %47 = dma.hbm_to_vmem [thread:$0]  %s4, 16384, %s42, [#allocation6], 128, 128, 8
    $region21: #{forward.1} parent=1 // pred_fallthru
      _
    // Predicated region
    $region22: #{forward.1} parent=1 // pred_check
      _
    $region23: #{forward.1} parent=1 // pred_check_branch
      %49 = sbr.rel (0) target = $region25
    $region24: #{forward.1} parent=1 // pred_region
      _
    $region25: #{forward.1} parent=1 // pred_fallthru
      _
    // Predicated region
    $region26: #{forward.1} parent=1 // pred_check
      _
    $region27: #{forward.1} parent=1 // pred_check_branch
      %51 = sbr.rel (0) target = $region29
    $region28: #{forward.1} parent=1 // pred_region
      _
    $region29: #{forward.1} parent=1 // pred_fallthru
      _
    // Predicated region
    $region30: #{forward.1} parent=1 // pred_check
      _
    $region31: #{forward.1} parent=1 // pred_check_branch
      %53 = sbr.rel (0) target = $region33
    $region32: #{forward.1} parent=1 // pred_region
      _
    $region33: #{forward.1} parent=1 // pred_fallthru
      _
    // Predicated region
    $region34: #{forward.1} parent=1 // pred_check
      _
    $region35: #{forward.1} parent=1 // pred_check_branch
      %55 = sbr.rel (0) target = $region37
    $region36: #{forward.1} parent=1 // pred_region
      _
    $region37: #{forward.1} parent=1 // pred_fallthru
      _
    // Predicated region
    $region38: #{forward.1} parent=1 // pred_check
      _
    $region39: #{forward.1} parent=1 // pred_check_branch
      %57 = sbr.rel (0) target = $region41
    $region40: #{forward.1} parent=1 // pred_region
      _
    $region41: #{forward.1} parent=1 // pred_fallthru
      _
    // Predicated region
    $region42: #{forward.1} parent=1 // pred_check
      _
    $region43: #{forward.1} parent=1 // pred_check_branch
      %59 = sbr.rel (0) target = $region45
    $region44: #{forward.1} parent=1 // pred_region
      _
    $region45: #{forward.1} parent=1 // pred_fallthru
      _
    // Predicated region
    $region46: #{forward.1} parent=1 // pred_check
      _
    $region47: #{forward.1} parent=1 // pred_check_branch
      %61 = sbr.rel (0) target = $region49
    $region48: #{forward.1} parent=1 // pred_region
      %62 = dma.done [#allocation4], 16384
    $region49: #{forward.1} parent=1 // pred_fallthru
      _
    // Predicated region
    $region50: #{forward.1} parent=1 // pred_check
      _
    $region51: #{forward.1} parent=1 // pred_check_branch
      %64 = sbr.rel (0) target = $region53
    $region52: #{forward.1} parent=1 // pred_region
      %65 = dma.done [#allocation6], 16384
    $region53: #{forward.1} parent=1 // pred_fallthru
      _
    %v67 = vld [vmem:[%s7] sm:$0xff]
    %v68 = vld [vmem:[%s7 + $0x8] sm:$0xff]
    %v69 = vld [vmem:[%s7 + $0x10] sm:$0xff]
    %v70 = vld [vmem:[%s7 + $0x18] sm:$0xff]
    %v71 = vld [vmem:[%s7 + $0x20] sm:$0xff]
    %v72 = vld [vmem:[%s7 + $0x28] sm:$0xff]
    %v73 = vld [vmem:[%s7 + $0x30] sm:$0xff]
    %v74 = vld [vmem:[%s7 + $0x38] sm:$0xff]
    %v75 = vld [vmem:[%s7 + $0x40] sm:$0xff]
    %v76 = vld [vmem:[%s7 + $0x48] sm:$0xff]
    %v77 = vld [vmem:[%s7 + $0x50] sm:$0xff]
    %v78 = vld [vmem:[%s7 + $0x58] sm:$0xff]
    %v79 = vld [vmem:[%s7 + $0x60] sm:$0xff]
    %v80 = vld [vmem:[%s7 + $0x68] sm:$0xff]
    %v81 = vld [vmem:[%s7 + $0x70] sm:$0xff]
    %v82 = vld [vmem:[%s7 + $0x78] sm:$0xff]
    %v83 = vld [vmem:[%s7 + $0x80] sm:$0xff]
    %v84 = vld [vmem:[%s7 + $0x88] sm:$0xff]
    %v85 = vld [vmem:[%s7 + $0x90] sm:$0xff]
    %v86 = vld [vmem:[%s7 + $0x98] sm:$0xff]
    %v87 = vld [vmem:[%s0] sm:$0xff]
    %v88 = vld [vmem:[%s0 + $0x8] sm:$0xff]
    %v89 = vld [vmem:[%s0 + $0x10] sm:$0xff]
    %v90 = vld [vmem:[%s0 + $0x18] sm:$0xff]
    %v91 = vld [vmem:[%s0 + $0x20] sm:$0xff]
    %v92 = vld [vmem:[%s0 + $0x28] sm:$0xff]
    %v93 = vld [vmem:[%s0 + $0x30] sm:$0xff]
    %v94 = vld [vmem:[%s0 + $0x38] sm:$0xff]
    %v95 = vld [vmem:[%s0 + $0x40] sm:$0xff]
    %v96 = vld [vmem:[%s0 + $0x48] sm:$0xff]
    %v97 = vld [vmem:[%s0 + $0x50] sm:$0xff]
    %v98 = vld [vmem:[%s0 + $0x58] sm:$0xff]
    %v99 = vld [vmem:[%s0 + $0x60] sm:$0xff]
    %v100 = vld [vmem:[%s0 + $0x68] sm:$0xff]
    %v101 = vld [vmem:[%s0 + $0x70] sm:$0xff]
    %v102 = vld [vmem:[%s0 + $0x78] sm:$0xff]
    %v103 = vld [vmem:[%s0 + $0x80] sm:$0xff]
    %v104 = vld [vmem:[%s0 + $0x88] sm:$0xff]
    %v105 = vld [vmem:[%s0 + $0x90] sm:$0xff]
    %v106 = vld [vmem:[%s0 + $0x98] sm:$0xff]
    %v107 = vld [vmem:[%s1] sm:$0xff]
    %v108 = vld [vmem:[%s1 + $0x8] sm:$0xff]
    %v109 = vld [vmem:[%s1 + $0x10] sm:$0xff]
    %v110 = vld [vmem:[%s1 + $0x18] sm:$0xff]
    %v111 = vld [vmem:[%s1 + $0x20] sm:$0xff]
    %v112 = vld [vmem:[%s1 + $0x28] sm:$0xff]
    %v113 = vld [vmem:[%s1 + $0x30] sm:$0xff]
    %v114 = vld [vmem:[%s1 + $0x38] sm:$0xff]
    %v115 = vld [vmem:[%s1 + $0x40] sm:$0xff]
    %v116 = vld [vmem:[%s1 + $0x48] sm:$0xff]
    %v117 = vld [vmem:[%s1 + $0x50] sm:$0xff]
    %v118 = vld [vmem:[%s1 + $0x58] sm:$0xff]
    %v119 = vld [vmem:[%s1 + $0x60] sm:$0xff]
    %v120 = vld [vmem:[%s1 + $0x68] sm:$0xff]
    %v121 = vld [vmem:[%s1 + $0x70] sm:$0xff]
    %v122 = vld [vmem:[%s1 + $0x78] sm:$0xff]
    %v123 = vld [vmem:[%s1 + $0x80] sm:$0xff]
    %v124 = vld [vmem:[%s1 + $0x88] sm:$0xff]
    %v125 = vld [vmem:[%s1 + $0x90] sm:$0xff]
    %v126 = vld [vmem:[%s1 + $0x98] sm:$0xff]
    %v127 = vld [vmem:[%s1 + $0xa0] sm:$0xff]
    %v128 = vld [vmem:[%s1 + $0xa8] sm:$0xff]
    %v129 = vld [vmem:[%s1 + $0xb0] sm:$0xff]
    %v130 = vld [vmem:[%s1 + $0xb8] sm:$0xff]
    %v131 = vld [vmem:[%s1 + $0xc0] sm:$0xff]
    %v132 = vld [vmem:[%s1 + $0xc8] sm:$0xff]
    %v133 = vld [vmem:[%s1 + $0xd0] sm:$0xff]
    %v134 = vld [vmem:[%s1 + $0xd8] sm:$0xff]
    %v135 = vld [vmem:[%s1 + $0xe0] sm:$0xff]
    %v136 = vld [vmem:[%s1 + $0xe8] sm:$0xff]
    %v137 = vld [vmem:[%s1 + $0xf0] sm:$0xff]
    %v138 = vld [vmem:[%s1 + $0xf8] sm:$0xff]
    %v139 = vld [vmem:[%s0 + $0xa0] sm:$0x11]
    %s140 = scalar_lea.vmem %s1, 256
    %v141 = vld [vmem:[%s140] sm:$0xff]
    %v142 = vld [vmem:[%s140 + $0x8] sm:$0xff]
    %v143 = vld [vmem:[%s140 + $0x10] sm:$0xff]
    %v144 = vld [vmem:[%s140 + $0x18] sm:$0xff]
    %v145 = vld [vmem:[%s140 + $0x20] sm:$0xff]
    %v146 = vld [vmem:[%s140 + $0x28] sm:$0xff]
    %v147 = vld [vmem:[%s140 + $0x30] sm:$0xff]
    %v148 = vld [vmem:[%s140 + $0x38] sm:$0xff]
    %v149 = vld [vmem:[%s140 + $0x40] sm:$0xff]
    %v150 = vld [vmem:[%s140 + $0x48] sm:$0xff]
    %v151 = vld [vmem:[%s140 + $0x50] sm:$0xff]
    %v152 = vld [vmem:[%s140 + $0x58] sm:$0xff]
    %v153 = vld [vmem:[%s140 + $0x60] sm:$0xff]
    %v154 = vld [vmem:[%s140 + $0x68] sm:$0xff]
    %v155 = vld [vmem:[%s140 + $0x70] sm:$0xff]
    %v156 = vld [vmem:[%s140 + $0x78] sm:$0xff]
    %v157 = vld [vmem:[%s140 + $0x80] sm:$0xff]
    %v158 = vld [vmem:[%s140 + $0x88] sm:$0xff]
    %v159 = vld [vmem:[%s140 + $0x90] sm:$0xff]
    %v160 = vld [vmem:[%s140 + $0x98] sm:$0xff]
    %v161 = vld [vmem:[%s140 + $0xa0] sm:$0xff]
    %v162 = vld [vmem:[%s140 + $0xa8] sm:$0xff]
    %v163 = vld [vmem:[%s140 + $0xb0] sm:$0xff]
    %v164 = vld [vmem:[%s140 + $0xb8] sm:$0xff]
    %v165 = vld [vmem:[%s140 + $0xc0] sm:$0xff]
    %v166 = vld [vmem:[%s140 + $0xc8] sm:$0xff]
    %v167 = vld [vmem:[%s140 + $0xd0] sm:$0xff]
    %v168 = vld [vmem:[%s140 + $0xd8] sm:$0xff]
    %v169 = vld [vmem:[%s140 + $0xe0] sm:$0xff]
    %v170 = vld [vmem:[%s140 + $0xe8] sm:$0xff]
    %v171 = vld [vmem:[%s140 + $0xf0] sm:$0xff]
    %v172 = vld [vmem:[%s140 + $0xf8] sm:$0xff]
    %v194 = vunpack.c.l.b16 %v87
    %v195 = vunpack.c.h.b16 %v87
    %v196 = vunpack.c.l.b16 %v88
    %v197 = vunpack.c.h.b16 %v88
    %v198 = vunpack.c.l.b16 %v89
    %v199 = vunpack.c.h.b16 %v89
    %v200 = vunpack.c.l.b16 %v90
    %v201 = vunpack.c.h.b16 %v90
    %v202 = vunpack.c.l.b16 %v91
    %v203 = vunpack.c.h.b16 %v91
    %v204 = vunpack.c.l.b16 %v92
    %v205 = vunpack.c.h.b16 %v92
    %v206 = vunpack.c.l.b16 %v93
    %v207 = vunpack.c.h.b16 %v93
    %v208 = vunpack.c.l.b16 %v94
    %v209 = vunpack.c.h.b16 %v94
    %v210 = vunpack.c.l.b16 %v95
    %v211 = vunpack.c.h.b16 %v95
    %v212 = vunpack.c.l.b16 %v96
    %v213 = vunpack.c.h.b16 %v96
    %v214 = vunpack.c.l.b16 %v97
    %v215 = vunpack.c.h.b16 %v97
    %v216 = vunpack.c.l.b16 %v98
    %v217 = vunpack.c.h.b16 %v98
    %v218 = vunpack.c.l.b16 %v99
    %v219 = vunpack.c.h.b16 %v99
    %v220 = vunpack.c.l.b16 %v100
    %v221 = vunpack.c.h.b16 %v100
    %v222 = vunpack.c.l.b16 %v101
    %v223 = vunpack.c.h.b16 %v101
    %v224 = vunpack.c.l.b16 %v102
    %v225 = vunpack.c.h.b16 %v102
    %v226 = vunpack.c.l.b16 %v103
    %v227 = vunpack.c.h.b16 %v103
    %v228 = vunpack.c.l.b16 %v104
    %v229 = vunpack.c.h.b16 %v104
    %v230 = vunpack.c.l.b16 %v105
    %v231 = vunpack.c.h.b16 %v105
    %v232 = vunpack.c.l.b16 %v106
    %v233 = vunpack.c.h.b16 %v106
    %v234 = vunpack.c.l.b16 %v139
    %v235 = vunpack.c.h.b16 %v139
    %v236 = vpack.c.b16 %v196, %v194
    %v237 = vpack.c.b16 %v197, %v195
    %v238 = vpack.c.b16 %v200, %v198
    %v239 = vpack.c.b16 %v201, %v199
    %v240 = vpack.c.b16 %v204, %v202
    %v241 = vpack.c.b16 %v205, %v203
    %v242 = vpack.c.b16 %v208, %v206
    %v243 = vpack.c.b16 %v209, %v207
    %v244 = vpack.c.b16 %v212, %v210
    %v245 = vpack.c.b16 %v213, %v211
    %v246 = vpack.c.b16 %v216, %v214
    %v247 = vpack.c.b16 %v217, %v215
    %v248 = vpack.c.b16 %v220, %v218
    %v249 = vpack.c.b16 %v221, %v219
    %v250 = vpack.c.b16 %v224, %v222
    %v251 = vpack.c.b16 %v225, %v223
    %v252 = vpack.c.b16 %v228, %v226
    %v253 = vpack.c.b16 %v229, %v227
    %v254 = vpack.c.b16 %v232, %v230
    %v255 = vpack.c.b16 %v233, %v231
    %v256 = vpack.c.b16 %v234, %v234
    %v257 = vpack.c.b16 %v235, %v235
    %vm258 = vsmask.f32 7424
    %v260 = vshrl.u32 %v236, 16
    %v262 = vshll.u32 %v236, 16
    %v264 = vrot.slane %v262, 1
    %v265 = vor.u32 %v260, %v264
    %v267 = vshll.u32 %v238, 16
    %v269 = vrot.slane %v267, 1
    %v270 = vsel %vm258, %v265, %v269
    %v272 = vshrl.u32 %v237, 16
    %v274 = vshll.u32 %v237, 16
    %v276 = vrot.slane %v274, 1
    %v277 = vor.u32 %v272, %v276
    %v279 = vshll.u32 %v239, 16
    %v281 = vrot.slane %v279, 1
    %v282 = vsel %vm258, %v277, %v281
    %v283 = vshrl.u32 %v238, 16
    %v285 = vor.u32 %v283, %v269
    %v287 = vshll.u32 %v240, 16
    %v289 = vrot.slane %v287, 1
    %v290 = vsel %vm258, %v285, %v289
    %v291 = vshrl.u32 %v239, 16
    %v293 = vor.u32 %v291, %v281
    %v295 = vshll.u32 %v241, 16
    %v297 = vrot.slane %v295, 1
    %v298 = vsel %vm258, %v293, %v297
    %v299 = vshrl.u32 %v240, 16
    %v301 = vor.u32 %v299, %v289
    %v303 = vshll.u32 %v242, 16
    %v305 = vrot.slane %v303, 1
    %v306 = vsel %vm258, %v301, %v305
    %v307 = vshrl.u32 %v241, 16
    %v309 = vor.u32 %v307, %v297
    %v311 = vshll.u32 %v243, 16
    %v313 = vrot.slane %v311, 1
    %v314 = vsel %vm258, %v309, %v313
    %v315 = vshrl.u32 %v242, 16
    %v317 = vor.u32 %v315, %v305
    %v319 = vshll.u32 %v244, 16
    %v321 = vrot.slane %v319, 1
    %v322 = vsel %vm258, %v317, %v321
    %v323 = vshrl.u32 %v243, 16
    %v325 = vor.u32 %v323, %v313
    %v327 = vshll.u32 %v245, 16
    %v329 = vrot.slane %v327, 1
    %v330 = vsel %vm258, %v325, %v329
    %v331 = vshrl.u32 %v244, 16
    %v333 = vor.u32 %v331, %v321
    %v335 = vshll.u32 %v246, 16
    %v337 = vrot.slane %v335, 1
    %v338 = vsel %vm258, %v333, %v337
    %v339 = vshrl.u32 %v245, 16
    %v341 = vor.u32 %v339, %v329
    %v343 = vshll.u32 %v247, 16
    %v345 = vrot.slane %v343, 1
    %v346 = vsel %vm258, %v341, %v345
    %v347 = vshrl.u32 %v246, 16
    %v349 = vor.u32 %v347, %v337
    %v351 = vshll.u32 %v248, 16
    %v353 = vrot.slane %v351, 1
    %v354 = vsel %vm258, %v349, %v353
    %v355 = vshrl.u32 %v247, 16
    %v357 = vor.u32 %v355, %v345
    %v359 = vshll.u32 %v249, 16
    %v361 = vrot.slane %v359, 1
    %v362 = vsel %vm258, %v357, %v361
    %v363 = vshrl.u32 %v248, 16
    %v365 = vor.u32 %v363, %v353
    %v367 = vshll.u32 %v250, 16
    %v369 = vrot.slane %v367, 1
    %v370 = vsel %vm258, %v365, %v369
    %v371 = vshrl.u32 %v249, 16
    %v373 = vor.u32 %v371, %v361
    %v375 = vshll.u32 %v251, 16
    %v377 = vrot.slane %v375, 1
    %v378 = vsel %vm258, %v373, %v377
    %v379 = vshrl.u32 %v250, 16
    %v381 = vor.u32 %v379, %v369
    %v383 = vshll.u32 %v252, 16
    %v385 = vrot.slane %v383, 1
    %v386 = vsel %vm258, %v381, %v385
    %v387 = vshrl.u32 %v251, 16
    %v389 = vor.u32 %v387, %v377
    %v391 = vshll.u32 %v253, 16
    %v393 = vrot.slane %v391, 1
    %v394 = vsel %vm258, %v389, %v393
    %v395 = vshrl.u32 %v252, 16
    %v397 = vor.u32 %v395, %v385
    %v399 = vshll.u32 %v254, 16
    %v401 = vrot.slane %v399, 1
    %v402 = vsel %vm258, %v397, %v401
    %v403 = vshrl.u32 %v253, 16
    %v405 = vor.u32 %v403, %v393
    %v407 = vshll.u32 %v255, 16
    %v409 = vrot.slane %v407, 1
    %v410 = vsel %vm258, %v405, %v409
    %v411 = vshrl.u32 %v254, 16
    %v413 = vor.u32 %v411, %v401
    %v415 = vshll.u32 %v256, 16
    %v417 = vrot.slane %v415, 1
    %v418 = vsel %vm258, %v413, %v417
    %v419 = vshrl.u32 %v255, 16
    %v421 = vor.u32 %v419, %v409
    %v423 = vshll.u32 %v257, 16
    %v425 = vrot.slane %v423, 1
    %v426 = vsel %vm258, %v421, %v425
    %v479 = vunpack.c.l.b16 %v141
    %v480 = vunpack.c.h.b16 %v141
    %v481 = vunpack.c.l.b16 %v142
    %v482 = vunpack.c.h.b16 %v142
    %v483 = vunpack.c.l.b16 %v143
    %v484 = vunpack.c.h.b16 %v143
    %v485 = vunpack.c.l.b16 %v144
    %v486 = vunpack.c.h.b16 %v144
    %v487 = vunpack.c.l.b16 %v145
    %v488 = vunpack.c.h.b16 %v145
    %v489 = vunpack.c.l.b16 %v146
    %v490 = vunpack.c.h.b16 %v146
    %v491 = vunpack.c.l.b16 %v147
    %v492 = vunpack.c.h.b16 %v147
    %v493 = vunpack.c.l.b16 %v148
    %v494 = vunpack.c.h.b16 %v148
    %v495 = vunpack.c.l.b16 %v149
    %v496 = vunpack.c.h.b16 %v149
    %v497 = vunpack.c.l.b16 %v150
    %v498 = vunpack.c.h.b16 %v150
    %v499 = vunpack.c.l.b16 %v151
    %v500 = vunpack.c.h.b16 %v151
    %v501 = vunpack.c.l.b16 %v152
    %v502 = vunpack.c.h.b16 %v152
    %v503 = vunpack.c.l.b16 %v153
    %v504 = vunpack.c.h.b16 %v153
    %v505 = vunpack.c.l.b16 %v154
    %v506 = vunpack.c.h.b16 %v154
    %v507 = vunpack.c.l.b16 %v155
    %v508 = vunpack.c.h.b16 %v155
    %v509 = vunpack.c.l.b16 %v156
    %v510 = vunpack.c.h.b16 %v156
    %v511 = vunpack.c.l.b16 %v157
    %v512 = vunpack.c.h.b16 %v157
    %v513 = vunpack.c.l.b16 %v158
    %v514 = vunpack.c.h.b16 %v158
    %v515 = vunpack.c.l.b16 %v159
    %v516 = vunpack.c.h.b16 %v159
    %v517 = vunpack.c.l.b16 %v160
    %v518 = vunpack.c.h.b16 %v160
    %v519 = vunpack.c.l.b16 %v161
    %v520 = vunpack.c.h.b16 %v161
    %v521 = vunpack.c.l.b16 %v162
    %v522 = vunpack.c.h.b16 %v162
    %v523 = vunpack.c.l.b16 %v163
    %v524 = vunpack.c.h.b16 %v163
    %v525 = vunpack.c.l.b16 %v164
    %v526 = vunpack.c.h.b16 %v164
    %v527 = vunpack.c.l.b16 %v165
    %v528 = vunpack.c.h.b16 %v165
    %v529 = vunpack.c.l.b16 %v166
    %v530 = vunpack.c.h.b16 %v166
    %v531 = vunpack.c.l.b16 %v167
    %v532 = vunpack.c.h.b16 %v167
    %v533 = vunpack.c.l.b16 %v168
    %v534 = vunpack.c.h.b16 %v168
    %v535 = vunpack.c.l.b16 %v169
    %v536 = vunpack.c.h.b16 %v169
    %v537 = vunpack.c.l.b16 %v170
    %v538 = vunpack.c.h.b16 %v170
    %v539 = vunpack.c.l.b16 %v171
    %v540 = vunpack.c.h.b16 %v171
    %v541 = vunpack.c.l.b16 %v172
    %v542 = vunpack.c.h.b16 %v172
    %v543 = vpack.c.b16 %v481, %v479
    %v544 = vpack.c.b16 %v482, %v480
    %v545 = vpack.c.b16 %v485, %v483
    %v546 = vpack.c.b16 %v486, %v484
    %v547 = vpack.c.b16 %v489, %v487
    %v548 = vpack.c.b16 %v490, %v488
    %v549 = vpack.c.b16 %v493, %v491
    %v550 = vpack.c.b16 %v494, %v492
    %v551 = vpack.c.b16 %v497, %v495
    %v552 = vpack.c.b16 %v498, %v496
    %v553 = vpack.c.b16 %v501, %v499
    %v554 = vpack.c.b16 %v502, %v500
    %v555 = vpack.c.b16 %v505, %v503
    %v556 = vpack.c.b16 %v506, %v504
    %v557 = vpack.c.b16 %v509, %v507
    %v558 = vpack.c.b16 %v510, %v508
    %v559 = vpack.c.b16 %v513, %v511
    %v560 = vpack.c.b16 %v514, %v512
    %v561 = vpack.c.b16 %v517, %v515
    %v562 = vpack.c.b16 %v518, %v516
    %v563 = vpack.c.b16 %v521, %v519
    %v564 = vpack.c.b16 %v522, %v520
    %v565 = vpack.c.b16 %v525, %v523
    %v566 = vpack.c.b16 %v526, %v524
    %v567 = vpack.c.b16 %v529, %v527
    %v568 = vpack.c.b16 %v530, %v528
    %v569 = vpack.c.b16 %v533, %v531
    %v570 = vpack.c.b16 %v534, %v532
    %v571 = vpack.c.b16 %v537, %v535
    %v572 = vpack.c.b16 %v538, %v536
    %v573 = vpack.c.b16 %v541, %v539
    %v574 = vpack.c.b16 %v542, %v540
    %607 = vmatprep.subr.bf16.mxu0 %v544
    %608 = vmatpush1.bf16.msra.mxu0 %v543
    %609 = vmatprep.subr.bf16.mxu0 %v546
    %610 = vmatpush1.bf16.msra.mxu0 %v545
    %611 = vmatprep.subr.bf16.mxu0 %v548
    %612 = vmatpush1.bf16.msra.mxu0 %v547
    %613 = vmatprep.subr.bf16.mxu0 %v550
    %614 = vmatpush1.bf16.msra.mxu0 %v549
    %615 = vmatprep.subr.bf16.mxu0 %v552
    %616 = vmatpush1.bf16.msra.mxu0 %v551
    %617 = vmatprep.subr.bf16.mxu0 %v554
    %618 = vmatpush1.bf16.msra.mxu0 %v553
    %619 = vmatprep.subr.bf16.mxu0 %v556
    %620 = vmatpush1.bf16.msra.mxu0 %v555
    %621 = vmatprep.subr.bf16.mxu0 %v558
    %622 = vmatpush1.bf16.msra.mxu0 %v557
    %623 = vmatprep.subr.bf16.mxu0 %v560
    %624 = vmatpush1.bf16.msra.mxu0 %v559
    %625 = vmatprep.subr.bf16.mxu0 %v562
    %626 = vmatpush1.bf16.msra.mxu0 %v561
    %627 = vmatprep.subr.bf16.mxu0 %v564
    %628 = vmatpush1.bf16.msra.mxu0 %v563
    %629 = vmatprep.subr.bf16.mxu0 %v566
    %630 = vmatpush1.bf16.msra.mxu0 %v565
    %631 = vmatprep.subr.bf16.mxu0 %v568
    %632 = vmatpush1.bf16.msra.mxu0 %v567
    %633 = vmatprep.subr.bf16.mxu0 %v570
    %634 = vmatpush1.bf16.msra.mxu0 %v569
    %635 = vmatprep.subr.bf16.mxu0 %v572
    %636 = vmatpush1.bf16.msra.mxu0 %v571
    %637 = vmatprep.subr.bf16.mxu0 %v574
    %638 = vmatpush1.bf16.msra.mxu0 %v573
    %639 = vmatprep.mubr.bf16.mxu0 %v282
    %640 = vmatmul.mubr.bf16.gmra.mrb[0].mxu0 %v270
    %v641 = vpop.f32.mrb[0].mxu0
    %v642 = vadd.f32 0.0, %v641
    %v643 = vpop.f32.mrb[0].mxu0
    %v644 = vadd.f32 0.0, %v643
    %v645 = vpop.f32.mrb[0].mxu0
    %v646 = vadd.f32 0.0, %v645
    %v647 = vpop.f32.mrb[0].mxu0
    %v648 = vadd.f32 0.0, %v647
    %649 = vmatprep.mubr.bf16.mxu0 %v298
    %650 = vmatmul.mubr.bf16.gmra.mrb[0].mxu0 %v290
    %v651 = vpop.f32.mrb[0].mxu0
    %v652 = vadd.f32 0.0, %v651
    %v653 = vpop.f32.mrb[0].mxu0
    %v654 = vadd.f32 0.0, %v653
    %v655 = vpop.f32.mrb[0].mxu0
    %v656 = vadd.f32 0.0, %v655
    %v657 = vpop.f32.mrb[0].mxu0
    %v658 = vadd.f32 0.0, %v657
    %659 = vmatprep.mubr.bf16.mxu0 %v314
    %660 = vmatmul.mubr.bf16.gmra.mrb[0].mxu0 %v306
    %v661 = vpop.f32.mrb[0].mxu0
    %v662 = vadd.f32 0.0, %v661
    %v663 = vpop.f32.mrb[0].mxu0
    %v664 = vadd.f32 0.0, %v663
    %v665 = vpop.f32.mrb[0].mxu0
    %v666 = vadd.f32 0.0, %v665
    %v667 = vpop.f32.mrb[0].mxu0
    %v668 = vadd.f32 0.0, %v667
    %669 = vmatprep.mubr.bf16.mxu0 %v330
    %670 = vmatmul.mubr.bf16.gmra.mrb[0].mxu0 %v322
    %v671 = vpop.f32.mrb[0].mxu0
    %v672 = vadd.f32 0.0, %v671
    %v673 = vpop.f32.mrb[0].mxu0
    %v674 = vadd.f32 0.0, %v673
    %v675 = vpop.f32.mrb[0].mxu0
    %v676 = vadd.f32 0.0, %v675
    %v677 = vpop.f32.mrb[0].mxu0
    %v678 = vadd.f32 0.0, %v677
    %679 = vmatprep.mubr.bf16.mxu0 %v346
    %680 = vmatmul.mubr.bf16.gmra.mrb[0].mxu0 %v338
    %v681 = vpop.f32.mrb[0].mxu0
    %v682 = vadd.f32 0.0, %v681
    %v683 = vpop.f32.mrb[0].mxu0
    %v684 = vadd.f32 0.0, %v683
    %v685 = vpop.f32.mrb[0].mxu0
    %v686 = vadd.f32 0.0, %v685
    %v687 = vpop.f32.mrb[0].mxu0
    %v688 = vadd.f32 0.0, %v687
    %689 = vmatprep.mubr.bf16.mxu0 %v362
    %690 = vmatmul.mubr.bf16.gmra.mrb[0].mxu0 %v354
    %v691 = vpop.f32.mrb[0].mxu0
    %v692 = vadd.f32 0.0, %v691
    %v693 = vpop.f32.mrb[0].mxu0
    %v694 = vadd.f32 0.0, %v693
    %v695 = vpop.f32.mrb[0].mxu0
    %v696 = vadd.f32 0.0, %v695
    %v697 = vpop.f32.mrb[0].mxu0
    %v698 = vadd.f32 0.0, %v697
    %699 = vmatprep.mubr.bf16.mxu0 %v378
    %700 = vmatmul.mubr.bf16.gmra.mrb[0].mxu0 %v370
    %v701 = vpop.f32.mrb[0].mxu0
    %v702 = vadd.f32 0.0, %v701
    %v703 = vpop.f32.mrb[0].mxu0
    %v704 = vadd.f32 0.0, %v703
    %v705 = vpop.f32.mrb[0].mxu0
    %v706 = vadd.f32 0.0, %v705
    %v707 = vpop.f32.mrb[0].mxu0
    %v708 = vadd.f32 0.0, %v707
    %709 = vmatprep.mubr.bf16.mxu0 %v394
    %710 = vmatmul.mubr.bf16.gmra.mrb[0].mxu0 %v386
    %v711 = vpop.f32.mrb[0].mxu0
    %v712 = vadd.f32 0.0, %v711
    %v713 = vpop.f32.mrb[0].mxu0
    %v714 = vadd.f32 0.0, %v713
    %v715 = vpop.f32.mrb[0].mxu0
    %v716 = vadd.f32 0.0, %v715
    %v717 = vpop.f32.mrb[0].mxu0
    %v718 = vadd.f32 0.0, %v717
    %719 = vmatprep.mubr.bf16.mxu0 %v410
    %720 = vmatmul.mubr.bf16.gmra.mrb[0].mxu0 %v402
    %v721 = vpop.f32.mrb[0].mxu0
    %v722 = vadd.f32 0.0, %v721
    %v723 = vpop.f32.mrb[0].mxu0
    %v724 = vadd.f32 0.0, %v723
    %v725 = vpop.f32.mrb[0].mxu0
    %v726 = vadd.f32 0.0, %v725
    %v727 = vpop.f32.mrb[0].mxu0
    %v728 = vadd.f32 0.0, %v727
    %729 = vmatprep.mubr.bf16.mxu0 %v426
    %730 = vmatmul.mubr.bf16.gmra.mrb[0].mxu0 %v418
    %v731 = vpop.f32.mrb[0].mxu0
    %v732 = vadd.f32 0.0, %v731
    %v733 = vpop.f32.mrb[0].mxu0
    %v734 = vadd.f32 0.0, %v733
    %v735 = vpop.f32.mrb[0].mxu0
    %v736 = vadd.f32 0.0, %v735
    %v737 = vpop.f32.mrb[0].mxu0
    %v738 = vadd.f32 0.0, %v737
    %739 = vdwg.mxu0
    %v792 = vunpack.c.l.b16 %v107
    %v793 = vunpack.c.h.b16 %v107
    %v794 = vunpack.c.l.b16 %v108
    %v795 = vunpack.c.h.b16 %v108
    %v796 = vunpack.c.l.b16 %v109
    %v797 = vunpack.c.h.b16 %v109
    %v798 = vunpack.c.l.b16 %v110
    %v799 = vunpack.c.h.b16 %v110
    %v800 = vunpack.c.l.b16 %v111
    %v801 = vunpack.c.h.b16 %v111
    %v802 = vunpack.c.l.b16 %v112
    %v803 = vunpack.c.h.b16 %v112
    %v804 = vunpack.c.l.b16 %v113
    %v805 = vunpack.c.h.b16 %v113
    %v806 = vunpack.c.l.b16 %v114
    %v807 = vunpack.c.h.b16 %v114
    %v808 = vunpack.c.l.b16 %v115
    %v809 = vunpack.c.h.b16 %v115
    %v810 = vunpack.c.l.b16 %v116
    %v811 = vunpack.c.h.b16 %v116
    %v812 = vunpack.c.l.b16 %v117
    %v813 = vunpack.c.h.b16 %v117
    %v814 = vunpack.c.l.b16 %v118
    %v815 = vunpack.c.h.b16 %v118
    %v816 = vunpack.c.l.b16 %v119
    %v817 = vunpack.c.h.b16 %v119
    %v818 = vunpack.c.l.b16 %v120
    %v819 = vunpack.c.h.b16 %v120
    %v820 = vunpack.c.l.b16 %v121
    %v821 = vunpack.c.h.b16 %v121
    %v822 = vunpack.c.l.b16 %v122
    %v823 = vunpack.c.h.b16 %v122
    %v824 = vunpack.c.l.b16 %v123
    %v825 = vunpack.c.h.b16 %v123
    %v826 = vunpack.c.l.b16 %v124
    %v827 = vunpack.c.h.b16 %v124
    %v828 = vunpack.c.l.b16 %v125
    %v829 = vunpack.c.h.b16 %v125
    %v830 = vunpack.c.l.b16 %v126
    %v831 = vunpack.c.h.b16 %v126
    %v832 = vunpack.c.l.b16 %v127
    %v833 = vunpack.c.h.b16 %v127
    %v834 = vunpack.c.l.b16 %v128
    %v835 = vunpack.c.h.b16 %v128
    %v836 = vunpack.c.l.b16 %v129
    %v837 = vunpack.c.h.b16 %v129
    %v838 = vunpack.c.l.b16 %v130
    %v839 = vunpack.c.h.b16 %v130
    %v840 = vunpack.c.l.b16 %v131
    %v841 = vunpack.c.h.b16 %v131
    %v842 = vunpack.c.l.b16 %v132
    %v843 = vunpack.c.h.b16 %v132
    %v844 = vunpack.c.l.b16 %v133
    %v845 = vunpack.c.h.b16 %v133
    %v846 = vunpack.c.l.b16 %v134
    %v847 = vunpack.c.h.b16 %v134
    %v848 = vunpack.c.l.b16 %v135
    %v849 = vunpack.c.h.b16 %v135
    %v850 = vunpack.c.l.b16 %v136
    %v851 = vunpack.c.h.b16 %v136
    %v852 = vunpack.c.l.b16 %v137
    %v853 = vunpack.c.h.b16 %v137
    %v854 = vunpack.c.l.b16 %v138
    %v855 = vunpack.c.h.b16 %v138
    %v856 = vpack.c.b16 %v794, %v792
    %v857 = vpack.c.b16 %v795, %v793
    %v858 = vpack.c.b16 %v798, %v796
    %v859 = vpack.c.b16 %v799, %v797
    %v860 = vpack.c.b16 %v802, %v800
    %v861 = vpack.c.b16 %v803, %v801
    %v862 = vpack.c.b16 %v806, %v804
    %v863 = vpack.c.b16 %v807, %v805
    %v864 = vpack.c.b16 %v810, %v808
    %v865 = vpack.c.b16 %v811, %v809
    %v866 = vpack.c.b16 %v814, %v812
    %v867 = vpack.c.b16 %v815, %v813
    %v868 = vpack.c.b16 %v818, %v816
    %v869 = vpack.c.b16 %v819, %v817
    %v870 = vpack.c.b16 %v822, %v820
    %v871 = vpack.c.b16 %v823, %v821
    %v872 = vpack.c.b16 %v826, %v824
    %v873 = vpack.c.b16 %v827, %v825
    %v874 = vpack.c.b16 %v830, %v828
    %v875 = vpack.c.b16 %v831, %v829
    %v876 = vpack.c.b16 %v834, %v832
    %v877 = vpack.c.b16 %v835, %v833
    %v878 = vpack.c.b16 %v838, %v836
    %v879 = vpack.c.b16 %v839, %v837
    %v880 = vpack.c.b16 %v842, %v840
    %v881 = vpack.c.b16 %v843, %v841
    %v882 = vpack.c.b16 %v846, %v844
    %v883 = vpack.c.b16 %v847, %v845
    %v884 = vpack.c.b16 %v850, %v848
    %v885 = vpack.c.b16 %v851, %v849
    %v886 = vpack.c.b16 %v854, %v852
    %v887 = vpack.c.b16 %v855, %v853
    %920 = vmatprep.subr.bf16.mxu0 %v857
    %921 = vmatpush1.bf16.msra.mxu0 %v856
    %922 = vmatprep.subr.bf16.mxu0 %v859
    %923 = vmatpush1.bf16.msra.mxu0 %v858
    %924 = vmatprep.subr.bf16.mxu0 %v861
    %925 = vmatpush1.bf16.msra.mxu0 %v860
    %926 = vmatprep.subr.bf16.mxu0 %v863
    %927 = vmatpush1.bf16.msra.mxu0 %v862
    %928 = vmatprep.subr.bf16.mxu0 %v865
    %929 = vmatpush1.bf16.msra.mxu0 %v864
    %930 = vmatprep.subr.bf16.mxu0 %v867
    %931 = vmatpush1.bf16.msra.mxu0 %v866
    %932 = vmatprep.subr.bf16.mxu0 %v869
    %933 = vmatpush1.bf16.msra.mxu0 %v868
    %934 = vmatprep.subr.bf16.mxu0 %v871
    %935 = vmatpush1.bf16.msra.mxu0 %v870
    %936 = vmatprep.subr.bf16.mxu0 %v873
    %937 = vmatpush1.bf16.msra.mxu0 %v872
    %938 = vmatprep.subr.bf16.mxu0 %v875
    %939 = vmatpush1.bf16.msra.mxu0 %v874
    %940 = vmatprep.subr.bf16.mxu0 %v877
    %941 = vmatpush1.bf16.msra.mxu0 %v876
    %942 = vmatprep.subr.bf16.mxu0 %v879
    %943 = vmatpush1.bf16.msra.mxu0 %v878
    %944 = vmatprep.subr.bf16.mxu0 %v881
    %945 = vmatpush1.bf16.msra.mxu0 %v880
    %946 = vmatprep.subr.bf16.mxu0 %v883
    %947 = vmatpush1.bf16.msra.mxu0 %v882
    %948 = vmatprep.subr.bf16.mxu0 %v885
    %949 = vmatpush1.bf16.msra.mxu0 %v884
    %950 = vmatprep.subr.bf16.mxu0 %v887
    %951 = vmatpush1.bf16.msra.mxu0 %v886
    %952 = vmatprep.mubr.bf16.mxu0 %v237
    %953 = vmatmul.mubr.bf16.gmra.mrb[0].mxu0 %v236
    %v954 = vpop.f32.mrb[0].mxu0
    %v955 = vadd.f32 %v642, %v954
    %v956 = vpop.f32.mrb[0].mxu0
    %v957 = vadd.f32 %v644, %v956
    %v958 = vpop.f32.mrb[0].mxu0
    %v959 = vadd.f32 %v646, %v958
    %v960 = vpop.f32.mrb[0].mxu0
    %v961 = vadd.f32 %v648, %v960
    %962 = vmatprep.mubr.bf16.mxu0 %v239
    %963 = vmatmul.mubr.bf16.gmra.mrb[0].mxu0 %v238
    %v964 = vpop.f32.mrb[0].mxu0
    %v965 = vadd.f32 %v652, %v964
    %v966 = vpop.f32.mrb[0].mxu0
    %v967 = vadd.f32 %v654, %v966
    %v968 = vpop.f32.mrb[0].mxu0
    %v969 = vadd.f32 %v656, %v968
    %v970 = vpop.f32.mrb[0].mxu0
    %v971 = vadd.f32 %v658, %v970
    %972 = vmatprep.mubr.bf16.mxu0 %v241
    %973 = vmatmul.mubr.bf16.gmra.mrb[0].mxu0 %v240
    %v974 = vpop.f32.mrb[0].mxu0
    %v975 = vadd.f32 %v662, %v974
    %v976 = vpop.f32.mrb[0].mxu0
    %v977 = vadd.f32 %v664, %v976
    %v978 = vpop.f32.mrb[0].mxu0
    %v979 = vadd.f32 %v666, %v978
    %v980 = vpop.f32.mrb[0].mxu0
    %v981 = vadd.f32 %v668, %v980
    %982 = vmatprep.mubr.bf16.mxu0 %v243
    %983 = vmatmul.mubr.bf16.gmra.mrb[0].mxu0 %v242
    %v984 = vpop.f32.mrb[0].mxu0
    %v985 = vadd.f32 %v672, %v984
    %v986 = vpop.f32.mrb[0].mxu0
    %v987 = vadd.f32 %v674, %v986
    %v988 = vpop.f32.mrb[0].mxu0
    %v989 = vadd.f32 %v676, %v988
    %v990 = vpop.f32.mrb[0].mxu0
    %v991 = vadd.f32 %v678, %v990
    %992 = vmatprep.mubr.bf16.mxu0 %v245
    %993 = vmatmul.mubr.bf16.gmra.mrb[0].mxu0 %v244
    %v994 = vpop.f32.mrb[0].mxu0
    %v995 = vadd.f32 %v682, %v994
    %v996 = vpop.f32.mrb[0].mxu0
    %v997 = vadd.f32 %v684, %v996
    %v998 = vpop.f32.mrb[0].mxu0
    %v999 = vadd.f32 %v686, %v998
    %v1000 = vpop.f32.mrb[0].mxu0
    %v1001 = vadd.f32 %v688, %v1000
    %1002 = vmatprep.mubr.bf16.mxu0 %v247
    %1003 = vmatmul.mubr.bf16.gmra.mrb[0].mxu0 %v246
    %v1004 = vpop.f32.mrb[0].mxu0
    %v1005 = vadd.f32 %v692, %v1004
    %v1006 = vpop.f32.mrb[0].mxu0
    %v1007 = vadd.f32 %v694, %v1006
    %v1008 = vpop.f32.mrb[0].mxu0
    %v1009 = vadd.f32 %v696, %v1008
    %v1010 = vpop.f32.mrb[0].mxu0
    %v1011 = vadd.f32 %v698, %v1010
    %1012 = vmatprep.mubr.bf16.mxu0 %v249
    %1013 = vmatmul.mubr.bf16.gmra.mrb[0].mxu0 %v248
    %v1014 = vpop.f32.mrb[0].mxu0
    %v1015 = vadd.f32 %v702, %v1014
    %v1016 = vpop.f32.mrb[0].mxu0
    %v1017 = vadd.f32 %v704, %v1016
    %v1018 = vpop.f32.mrb[0].mxu0
    %v1019 = vadd.f32 %v706, %v1018
    %v1020 = vpop.f32.mrb[0].mxu0
    %v1021 = vadd.f32 %v708, %v1020
    %1022 = vmatprep.mubr.bf16.mxu0 %v251
    %1023 = vmatmul.mubr.bf16.gmra.mrb[0].mxu0 %v250
    %v1024 = vpop.f32.mrb[0].mxu0
    %v1025 = vadd.f32 %v712, %v1024
    %v1026 = vpop.f32.mrb[0].mxu0
    %v1027 = vadd.f32 %v714, %v1026
    %v1028 = vpop.f32.mrb[0].mxu0
    %v1029 = vadd.f32 %v716, %v1028
    %v1030 = vpop.f32.mrb[0].mxu0
    %v1031 = vadd.f32 %v718, %v1030
    %1032 = vmatprep.mubr.bf16.mxu0 %v253
    %1033 = vmatmul.mubr.bf16.gmra.mrb[0].mxu0 %v252
    %v1034 = vpop.f32.mrb[0].mxu0
    %v1035 = vadd.f32 %v722, %v1034
    %v1036 = vpop.f32.mrb[0].mxu0
    %v1037 = vadd.f32 %v724, %v1036
    %v1038 = vpop.f32.mrb[0].mxu0
    %v1039 = vadd.f32 %v726, %v1038
    %v1040 = vpop.f32.mrb[0].mxu0
    %v1041 = vadd.f32 %v728, %v1040
    %1042 = vmatprep.mubr.bf16.mxu0 %v255
    %1043 = vmatmul.mubr.bf16.gmra.mrb[0].mxu0 %v254
    %v1044 = vpop.f32.mrb[0].mxu0
    %v1045 = vadd.f32 %v732, %v1044
    %v1046 = vpop.f32.mrb[0].mxu0
    %v1047 = vadd.f32 %v734, %v1046
    %v1048 = vpop.f32.mrb[0].mxu0
    %v1049 = vadd.f32 %v736, %v1048
    %v1050 = vpop.f32.mrb[0].mxu0
    %v1051 = vadd.f32 %v738, %v1050
    %1052 = vdwg.mxu0
    %v1053 = vld [vmem:[%s0] sm:$0xee]
    %s1054 = scalar_lea.vmem %s1, 512
    %v1055 = vld [vmem:[%s1054] sm:$0xff]
    %v1056 = vld [vmem:[%s1054 + $0x8] sm:$0xff]
    %v1057 = vld [vmem:[%s1054 + $0x10] sm:$0xff]
    %v1058 = vld [vmem:[%s1054 + $0x18] sm:$0xff]
    %v1059 = vld [vmem:[%s1054 + $0x20] sm:$0xff]
    %v1060 = vld [vmem:[%s1054 + $0x28] sm:$0xff]
    %v1061 = vld [vmem:[%s1054 + $0x30] sm:$0xff]
    %v1062 = vld [vmem:[%s1054 + $0x38] sm:$0xff]
    %v1063 = vld [vmem:[%s1054 + $0x40] sm:$0xff]
    %v1064 = vld [vmem:[%s1054 + $0x48] sm:$0xff]
    %v1065 = vld [vmem:[%s1054 + $0x50] sm:$0xff]
    %v1066 = vld [vmem:[%s1054 + $0x58] sm:$0xff]
    %v1067 = vld [vmem:[%s1054 + $0x60] sm:$0xff]
    %v1068 = vld [vmem:[%s1054 + $0x68] sm:$0xff]
    %v1069 = vld [vmem:[%s1054 + $0x70] sm:$0xff]
    %v1070 = vld [vmem:[%s1054 + $0x78] sm:$0xff]
    %v1071 = vld [vmem:[%s1054 + $0x80] sm:$0xff]
    %v1072 = vld [vmem:[%s1054 + $0x88] sm:$0xff]
    %v1073 = vld [vmem:[%s1054 + $0x90] sm:$0xff]
    %v1074 = vld [vmem:[%s1054 + $0x98] sm:$0xff]
    %v1075 = vld [vmem:[%s1054 + $0xa0] sm:$0xff]
    %v1076 = vld [vmem:[%s1054 + $0xa8] sm:$0xff]
    %v1077 = vld [vmem:[%s1054 + $0xb0] sm:$0xff]
    %v1078 = vld [vmem:[%s1054 + $0xb8] sm:$0xff]
    %v1079 = vld [vmem:[%s1054 + $0xc0] sm:$0xff]
    %v1080 = vld [vmem:[%s1054 + $0xc8] sm:$0xff]
    %v1081 = vld [vmem:[%s1054 + $0xd0] sm:$0xff]
    %v1082 = vld [vmem:[%s1054 + $0xd8] sm:$0xff]
    %v1083 = vld [vmem:[%s1054 + $0xe0] sm:$0xff]
    %v1084 = vld [vmem:[%s1054 + $0xe8] sm:$0xff]
    %v1085 = vld [vmem:[%s1054 + $0xf0] sm:$0xff]
    %v1086 = vld [vmem:[%s1054 + $0xf8] sm:$0xff]
    %v1088 = vunpack.c.l.b16 %v1053
    %v1089 = vunpack.c.h.b16 %v1053
    %v1090 = vpack.c.b16 %v196, %v1088
    %v1091 = vpack.c.b16 %v197, %v1089
    %vm1092 = vcmask 1046528
    %v1093 = vrot.slane %v1090, 1
    %v1094 = vrot.slane %v238, 1
    %v1095 = vsel %vm1092, %v1093, %v1094
    %v1096 = vrot.slane %v1091, 1
    %v1097 = vrot.slane %v239, 1
    %v1098 = vsel %vm1092, %v1096, %v1097
    %v1099 = vrot.slane %v240, 1
    %v1100 = vsel %vm1092, %v1094, %v1099
    %v1101 = vrot.slane %v241, 1
    %v1102 = vsel %vm1092, %v1097, %v1101
    %v1103 = vrot.slane %v242, 1
    %v1104 = vsel %vm1092, %v1099, %v1103
    %v1105 = vrot.slane %v243, 1
    %v1106 = vsel %vm1092, %v1101, %v1105
    %v1107 = vrot.slane %v244, 1
    %v1108 = vsel %vm1092, %v1103, %v1107
    %v1109 = vrot.slane %v245, 1
    %v1110 = vsel %vm1092, %v1105, %v1109
    %v1111 = vrot.slane %v246, 1
    %v1112 = vsel %vm1092, %v1107, %v1111
    %v1113 = vrot.slane %v247, 1
    %v1114 = vsel %vm1092, %v1109, %v1113
    %v1115 = vrot.slane %v248, 1
    %v1116 = vsel %vm1092, %v1111, %v1115
    %v1117 = vrot.slane %v249, 1
    %v1118 = vsel %vm1092, %v1113, %v1117
    %v1119 = vrot.slane %v250, 1
    %v1120 = vsel %vm1092, %v1115, %v1119
    %v1121 = vrot.slane %v251, 1
    %v1122 = vsel %vm1092, %v1117, %v1121
    %v1123 = vrot.slane %v252, 1
    %v1124 = vsel %vm1092, %v1119, %v1123
    %v1125 = vrot.slane %v253, 1
    %v1126 = vsel %vm1092, %v1121, %v1125
    %v1127 = vrot.slane %v254, 1
    %v1128 = vsel %vm1092, %v1123, %v1127
    %v1129 = vrot.slane %v255, 1
    %v1130 = vsel %vm1092, %v1125, %v1129
    %v1131 = vrot.slane %v256, 1
    %v1132 = vsel %vm1092, %v1127, %v1131
    %v1133 = vrot.slane %v257, 1
    %v1134 = vsel %vm1092, %v1129, %v1133
    %v1187 = vunpack.c.l.b16 %v1055
    %v1188 = vunpack.c.h.b16 %v1055
    %v1189 = vunpack.c.l.b16 %v1056
    %v1190 = vunpack.c.h.b16 %v1056
    %v1191 = vunpack.c.l.b16 %v1057
    %v1192 = vunpack.c.h.b16 %v1057
    %v1193 = vunpack.c.l.b16 %v1058
    %v1194 = vunpack.c.h.b16 %v1058
    %v1195 = vunpack.c.l.b16 %v1059
    %v1196 = vunpack.c.h.b16 %v1059
    %v1197 = vunpack.c.l.b16 %v1060
    %v1198 = vunpack.c.h.b16 %v1060
    %v1199 = vunpack.c.l.b16 %v1061
    %v1200 = vunpack.c.h.b16 %v1061
    %v1201 = vunpack.c.l.b16 %v1062
    %v1202 = vunpack.c.h.b16 %v1062
    %v1203 = vunpack.c.l.b16 %v1063
    %v1204 = vunpack.c.h.b16 %v1063
    %v1205 = vunpack.c.l.b16 %v1064
    %v1206 = vunpack.c.h.b16 %v1064
    %v1207 = vunpack.c.l.b16 %v1065
    %v1208 = vunpack.c.h.b16 %v1065
    %v1209 = vunpack.c.l.b16 %v1066
    %v1210 = vunpack.c.h.b16 %v1066
    %v1211 = vunpack.c.l.b16 %v1067
    %v1212 = vunpack.c.h.b16 %v1067
    %v1213 = vunpack.c.l.b16 %v1068
    %v1214 = vunpack.c.h.b16 %v1068
    %v1215 = vunpack.c.l.b16 %v1069
    %v1216 = vunpack.c.h.b16 %v1069
    %v1217 = vunpack.c.l.b16 %v1070
    %v1218 = vunpack.c.h.b16 %v1070
    %v1219 = vunpack.c.l.b16 %v1071
    %v1220 = vunpack.c.h.b16 %v1071
    %v1221 = vunpack.c.l.b16 %v1072
    %v1222 = vunpack.c.h.b16 %v1072
    %v1223 = vunpack.c.l.b16 %v1073
    %v1224 = vunpack.c.h.b16 %v1073
    %v1225 = vunpack.c.l.b16 %v1074
    %v1226 = vunpack.c.h.b16 %v1074
    %v1227 = vunpack.c.l.b16 %v1075
    %v1228 = vunpack.c.h.b16 %v1075
    %v1229 = vunpack.c.l.b16 %v1076
    %v1230 = vunpack.c.h.b16 %v1076
    %v1231 = vunpack.c.l.b16 %v1077
    %v1232 = vunpack.c.h.b16 %v1077
    %v1233 = vunpack.c.l.b16 %v1078
    %v1234 = vunpack.c.h.b16 %v1078
    %v1235 = vunpack.c.l.b16 %v1079
    %v1236 = vunpack.c.h.b16 %v1079
    %v1237 = vunpack.c.l.b16 %v1080
    %v1238 = vunpack.c.h.b16 %v1080
    %v1239 = vunpack.c.l.b16 %v1081
    %v1240 = vunpack.c.h.b16 %v1081
    %v1241 = vunpack.c.l.b16 %v1082
    %v1242 = vunpack.c.h.b16 %v1082
    %v1243 = vunpack.c.l.b16 %v1083
    %v1244 = vunpack.c.h.b16 %v1083
    %v1245 = vunpack.c.l.b16 %v1084
    %v1246 = vunpack.c.h.b16 %v1084
    %v1247 = vunpack.c.l.b16 %v1085
    %v1248 = vunpack.c.h.b16 %v1085
    %v1249 = vunpack.c.l.b16 %v1086
    %v1250 = vunpack.c.h.b16 %v1086
    %v1251 = vpack.c.b16 %v1189, %v1187
    %v1252 = vpack.c.b16 %v1190, %v1188
    %v1253 = vpack.c.b16 %v1193, %v1191
    %v1254 = vpack.c.b16 %v1194, %v1192
    %v1255 = vpack.c.b16 %v1197, %v1195
    %v1256 = vpack.c.b16 %v1198, %v1196
    %v1257 = vpack.c.b16 %v1201, %v1199
    %v1258 = vpack.c.b16 %v1202, %v1200
    %v1259 = vpack.c.b16 %v1205, %v1203
    %v1260 = vpack.c.b16 %v1206, %v1204
    %v1261 = vpack.c.b16 %v1209, %v1207
    %v1262 = vpack.c.b16 %v1210, %v1208
    %v1263 = vpack.c.b16 %v1213, %v1211
    %v1264 = vpack.c.b16 %v1214, %v1212
    %v1265 = vpack.c.b16 %v1217, %v1215
    %v1266 = vpack.c.b16 %v1218, %v1216
    %v1267 = vpack.c.b16 %v1221, %v1219
    %v1268 = vpack.c.b16 %v1222, %v1220
    %v1269 = vpack.c.b16 %v1225, %v1223
    %v1270 = vpack.c.b16 %v1226, %v1224
    %v1271 = vpack.c.b16 %v1229, %v1227
    %v1272 = vpack.c.b16 %v1230, %v1228
    %v1273 = vpack.c.b16 %v1233, %v1231
    %v1274 = vpack.c.b16 %v1234, %v1232
    %v1275 = vpack.c.b16 %v1237, %v1235
    %v1276 = vpack.c.b16 %v1238, %v1236
    %v1277 = vpack.c.b16 %v1241, %v1239
    %v1278 = vpack.c.b16 %v1242, %v1240
    %v1279 = vpack.c.b16 %v1245, %v1243
    %v1280 = vpack.c.b16 %v1246, %v1244
    %v1281 = vpack.c.b16 %v1249, %v1247
    %v1282 = vpack.c.b16 %v1250, %v1248
    %1315 = vmatprep.subr.bf16.mxu0 %v1252
    %1316 = vmatpush1.bf16.msra.mxu0 %v1251
    %1317 = vmatprep.subr.bf16.mxu0 %v1254
    %1318 = vmatpush1.bf16.msra.mxu0 %v1253
    %1319 = vmatprep.subr.bf16.mxu0 %v1256
    %1320 = vmatpush1.bf16.msra.mxu0 %v1255
    %1321 = vmatprep.subr.bf16.mxu0 %v1258
    %1322 = vmatpush1.bf16.msra.mxu0 %v1257
    %1323 = vmatprep.subr.bf16.mxu0 %v1260
    %1324 = vmatpush1.bf16.msra.mxu0 %v1259
    %1325 = vmatprep.subr.bf16.mxu0 %v1262
    %1326 = vmatpush1.bf16.msra.mxu0 %v1261
    %1327 = vmatprep.subr.bf16.mxu0 %v1264
    %1328 = vmatpush1.bf16.msra.mxu0 %v1263
    %1329 = vmatprep.subr.bf16.mxu0 %v1266
    %1330 = vmatpush1.bf16.msra.mxu0 %v1265
    %1331 = vmatprep.subr.bf16.mxu0 %v1268
    %1332 = vmatpush1.bf16.msra.mxu0 %v1267
    %1333 = vmatprep.subr.bf16.mxu0 %v1270
    %1334 = vmatpush1.bf16.msra.mxu0 %v1269
    %1335 = vmatprep.subr.bf16.mxu0 %v1272
    %1336 = vmatpush1.bf16.msra.mxu0 %v1271
    %1337 = vmatprep.subr.bf16.mxu0 %v1274
    %1338 = vmatpush1.bf16.msra.mxu0 %v1273
    %1339 = vmatprep.subr.bf16.mxu0 %v1276
    %1340 = vmatpush1.bf16.msra.mxu0 %v1275
    %1341 = vmatprep.subr.bf16.mxu0 %v1278
    %1342 = vmatpush1.bf16.msra.mxu0 %v1277
    %1343 = vmatprep.subr.bf16.mxu0 %v1280
    %1344 = vmatpush1.bf16.msra.mxu0 %v1279
    %1345 = vmatprep.subr.bf16.mxu0 %v1282
    %1346 = vmatpush1.bf16.msra.mxu0 %v1281
    %1347 = vmatprep.mubr.bf16.mxu0 %v1098
    %1348 = vmatmul.mubr.bf16.gmra.mrb[0].mxu0 %v1095
    %v1349 = vpop.f32.mrb[0].mxu0
    %v1350 = vadd.f32 0.0, %v1349
    %v1351 = vpop.f32.mrb[0].mxu0
    %v1352 = vadd.f32 0.0, %v1351
    %v1353 = vpop.f32.mrb[0].mxu0
    %v1354 = vadd.f32 0.0, %v1353
    %v1355 = vpop.f32.mrb[0].mxu0
    %v1356 = vadd.f32 0.0, %v1355
    %1357 = vmatprep.mubr.bf16.mxu0 %v1102
    %1358 = vmatmul.mubr.bf16.gmra.mrb[0].mxu0 %v1100
    %v1359 = vpop.f32.mrb[0].mxu0
    %v1360 = vadd.f32 0.0, %v1359
    %v1361 = vpop.f32.mrb[0].mxu0
    %v1362 = vadd.f32 0.0, %v1361
    %v1363 = vpop.f32.mrb[0].mxu0
    %v1364 = vadd.f32 0.0, %v1363
    %v1365 = vpop.f32.mrb[0].mxu0
    %v1366 = vadd.f32 0.0, %v1365
    %1367 = vmatprep.mubr.bf16.mxu0 %v1106
    %1368 = vmatmul.mubr.bf16.gmra.mrb[0].mxu0 %v1104
    %v1369 = vpop.f32.mrb[0].mxu0
    %v1370 = vadd.f32 0.0, %v1369
    %v1371 = vpop.f32.mrb[0].mxu0
    %v1372 = vadd.f32 0.0, %v1371
    %v1373 = vpop.f32.mrb[0].mxu0
    %v1374 = vadd.f32 0.0, %v1373
    %v1375 = vpop.f32.mrb[0].mxu0
    %v1376 = vadd.f32 0.0, %v1375
    %1377 = vmatprep.mubr.bf16.mxu0 %v1110
    %1378 = vmatmul.mubr.bf16.gmra.mrb[0].mxu0 %v1108
    %v1379 = vpop.f32.mrb[0].mxu0
    %v1380 = vadd.f32 0.0, %v1379
    %v1381 = vpop.f32.mrb[0].mxu0
    %v1382 = vadd.f32 0.0, %v1381
    %v1383 = vpop.f32.mrb[0].mxu0
    %v1384 = vadd.f32 0.0, %v1383
    %v1385 = vpop.f32.mrb[0].mxu0
    %v1386 = vadd.f32 0.0, %v1385
    %1387 = vmatprep.mubr.bf16.mxu0 %v1114
    %1388 = vmatmul.mubr.bf16.gmra.mrb[0].mxu0 %v1112
    %v1389 = vpop.f32.mrb[0].mxu0
    %v1390 = vadd.f32 0.0, %v1389
    %v1391 = vpop.f32.mrb[0].mxu0
    %v1392 = vadd.f32 0.0, %v1391
    %v1393 = vpop.f32.mrb[0].mxu0
    %v1394 = vadd.f32 0.0, %v1393
    %v1395 = vpop.f32.mrb[0].mxu0
    %v1396 = vadd.f32 0.0, %v1395
    %1397 = vmatprep.mubr.bf16.mxu0 %v1118
    %1398 = vmatmul.mubr.bf16.gmra.mrb[0].mxu0 %v1116
    %v1399 = vpop.f32.mrb[0].mxu0
    %v1400 = vadd.f32 0.0, %v1399
    %v1401 = vpop.f32.mrb[0].mxu0
    %v1402 = vadd.f32 0.0, %v1401
    %v1403 = vpop.f32.mrb[0].mxu0
    %v1404 = vadd.f32 0.0, %v1403
    %v1405 = vpop.f32.mrb[0].mxu0
    %v1406 = vadd.f32 0.0, %v1405
    %1407 = vmatprep.mubr.bf16.mxu0 %v1122
    %1408 = vmatmul.mubr.bf16.gmra.mrb[0].mxu0 %v1120
    %v1409 = vpop.f32.mrb[0].mxu0
    %v1410 = vadd.f32 0.0, %v1409
    %v1411 = vpop.f32.mrb[0].mxu0
    %v1412 = vadd.f32 0.0, %v1411
    %v1413 = vpop.f32.mrb[0].mxu0
    %v1414 = vadd.f32 0.0, %v1413
    %v1415 = vpop.f32.mrb[0].mxu0
    %v1416 = vadd.f32 0.0, %v1415
    %1417 = vmatprep.mubr.bf16.mxu0 %v1126
    %1418 = vmatmul.mubr.bf16.gmra.mrb[0].mxu0 %v1124
    %v1419 = vpop.f32.mrb[0].mxu0
    %v1420 = vadd.f32 0.0, %v1419
    %v1421 = vpop.f32.mrb[0].mxu0
    %v1422 = vadd.f32 0.0, %v1421
    %v1423 = vpop.f32.mrb[0].mxu0
    %v1424 = vadd.f32 0.0, %v1423
    %v1425 = vpop.f32.mrb[0].mxu0
    %v1426 = vadd.f32 0.0, %v1425
    %1427 = vmatprep.mubr.bf16.mxu0 %v1130
    %1428 = vmatmul.mubr.bf16.gmra.mrb[0].mxu0 %v1128
    %v1429 = vpop.f32.mrb[0].mxu0
    %v1430 = vadd.f32 0.0, %v1429
    %v1431 = vpop.f32.mrb[0].mxu0
    %v1432 = vadd.f32 0.0, %v1431
    %v1433 = vpop.f32.mrb[0].mxu0
    %v1434 = vadd.f32 0.0, %v1433
    %v1435 = vpop.f32.mrb[0].mxu0
    %v1436 = vadd.f32 0.0, %v1435
    %1437 = vmatprep.mubr.bf16.mxu0 %v1134
    %1438 = vmatmul.mubr.bf16.gmra.mrb[0].mxu0 %v1132
    %v1439 = vpop.f32.mrb[0].mxu0
    %v1440 = vadd.f32 0.0, %v1439
    %v1441 = vpop.f32.mrb[0].mxu0
    %v1442 = vadd.f32 0.0, %v1441
    %v1443 = vpop.f32.mrb[0].mxu0
    %v1444 = vadd.f32 0.0, %v1443
    %v1445 = vpop.f32.mrb[0].mxu0
    %v1446 = vadd.f32 0.0, %v1445
    %1447 = vdwg.mxu0
    %v1448 = vadd.f32 %v955, %v1350
    %v1449 = vadd.f32 %v957, %v1352
    %v1450 = vadd.f32 %v959, %v1354
    %v1451 = vadd.f32 %v961, %v1356
    %v1452 = vadd.f32 %v965, %v1360
    %v1453 = vadd.f32 %v967, %v1362
    %v1454 = vadd.f32 %v969, %v1364
    %v1455 = vadd.f32 %v971, %v1366
    %v1456 = vadd.f32 %v975, %v1370
    %v1457 = vadd.f32 %v977, %v1372
    %v1458 = vadd.f32 %v979, %v1374
    %v1459 = vadd.f32 %v981, %v1376
    %v1460 = vadd.f32 %v985, %v1380
    %v1461 = vadd.f32 %v987, %v1382
    %v1462 = vadd.f32 %v989, %v1384
    %v1463 = vadd.f32 %v991, %v1386
    %v1464 = vadd.f32 %v995, %v1390
    %v1465 = vadd.f32 %v997, %v1392
    %v1466 = vadd.f32 %v999, %v1394
    %v1467 = vadd.f32 %v1001, %v1396
    %v1468 = vadd.f32 %v1005, %v1400
    %v1469 = vadd.f32 %v1007, %v1402
    %v1470 = vadd.f32 %v1009, %v1404
    %v1471 = vadd.f32 %v1011, %v1406
    %v1472 = vadd.f32 %v1015, %v1410
    %v1473 = vadd.f32 %v1017, %v1412
    %v1474 = vadd.f32 %v1019, %v1414
    %v1475 = vadd.f32 %v1021, %v1416
    %v1476 = vadd.f32 %v1025, %v1420
    %v1477 = vadd.f32 %v1027, %v1422
    %v1478 = vadd.f32 %v1029, %v1424
    %v1479 = vadd.f32 %v1031, %v1426
    %v1480 = vadd.f32 %v1035, %v1430
    %v1481 = vadd.f32 %v1037, %v1432
    %v1482 = vadd.f32 %v1039, %v1434
    %v1483 = vadd.f32 %v1041, %v1436
    %v1484 = vadd.f32 %v1045, %v1440
    %v1485 = vadd.f32 %v1047, %v1442
    %v1486 = vadd.f32 %v1049, %v1444
    %v1487 = vadd.f32 %v1051, %v1446
    %v1488 = vld [vmem:[%s0 + $0xa0] sm:$0x33]
    %s1489 = scalar_lea.vmem %s1, 768
    %v1490 = vld [vmem:[%s1489] sm:$0xff]
    %v1491 = vld [vmem:[%s1489 + $0x8] sm:$0xff]
    %v1492 = vld [vmem:[%s1489 + $0x10] sm:$0xff]
    %v1493 = vld [vmem:[%s1489 + $0x18] sm:$0xff]
    %v1494 = vld [vmem:[%s1489 + $0x20] sm:$0xff]
    %v1495 = vld [vmem:[%s1489 + $0x28] sm:$0xff]
    %v1496 = vld [vmem:[%s1489 + $0x30] sm:$0xff]
    %v1497 = vld [vmem:[%s1489 + $0x38] sm:$0xff]
    %v1498 = vld [vmem:[%s1489 + $0x40] sm:$0xff]
    %v1499 = vld [vmem:[%s1489 + $0x48] sm:$0xff]
    %v1500 = vld [vmem:[%s1489 + $0x50] sm:$0xff]
    %v1501 = vld [vmem:[%s1489 + $0x58] sm:$0xff]
    %v1502 = vld [vmem:[%s1489 + $0x60] sm:$0xff]
    %v1503 = vld [vmem:[%s1489 + $0x68] sm:$0xff]
    %v1504 = vld [vmem:[%s1489 + $0x70] sm:$0xff]
    %v1505 = vld [vmem:[%s1489 + $0x78] sm:$0xff]
    %v1506 = vld [vmem:[%s1489 + $0x80] sm:$0xff]
    %v1507 = vld [vmem:[%s1489 + $0x88] sm:$0xff]
    %v1508 = vld [vmem:[%s1489 + $0x90] sm:$0xff]
    %v1509 = vld [vmem:[%s1489 + $0x98] sm:$0xff]
    %v1510 = vld [vmem:[%s1489 + $0xa0] sm:$0xff]
    %v1511 = vld [vmem:[%s1489 + $0xa8] sm:$0xff]
    %v1512 = vld [vmem:[%s1489 + $0xb0] sm:$0xff]
    %v1513 = vld [vmem:[%s1489 + $0xb8] sm:$0xff]
    %v1514 = vld [vmem:[%s1489 + $0xc0] sm:$0xff]
    %v1515 = vld [vmem:[%s1489 + $0xc8] sm:$0xff]
    %v1516 = vld [vmem:[%s1489 + $0xd0] sm:$0xff]
    %v1517 = vld [vmem:[%s1489 + $0xd8] sm:$0xff]
    %v1518 = vld [vmem:[%s1489 + $0xe0] sm:$0xff]
    %v1519 = vld [vmem:[%s1489 + $0xe8] sm:$0xff]
    %v1520 = vld [vmem:[%s1489 + $0xf0] sm:$0xff]
    %v1521 = vld [vmem:[%s1489 + $0xf8] sm:$0xff]
    %v1523 = vunpack.c.l.b16 %v1488
    %v1524 = vunpack.c.h.b16 %v1488
    %v1525 = vpack.c.b16 %v1523, %v1523
    %v1526 = vpack.c.b16 %v1524, %v1524
    %vm1527 = vsmask.f32 6400
    %v1529 = vshrl.u32 %v1090, 16
    %v1531 = vrot.slane %v1529, 1
    %v1532 = vshll.u32 %v1090, 16
    %v1534 = vrot.slane %v1532, 2
    %v1535 = vor.u32 %v1531, %v1534
    %v1536 = vrot.slane %v283, 1
    %v1537 = vrot.slane %v267, 2
    %v1538 = vor.u32 %v1536, %v1537
    %v1539 = vsel %vm1527, %v1535, %v1538
    %v1541 = vshrl.u32 %v1091, 16
    %v1543 = vrot.slane %v1541, 1
    %v1544 = vshll.u32 %v1091, 16
    %v1546 = vrot.slane %v1544, 2
    %v1547 = vor.u32 %v1543, %v1546
    %v1548 = vrot.slane %v291, 1
    %v1549 = vrot.slane %v279, 2
    %v1550 = vor.u32 %v1548, %v1549
    %v1551 = vsel %vm1527, %v1547, %v1550
    %v1552 = vrot.slane %v299, 1
    %v1553 = vrot.slane %v287, 2
    %v1554 = vor.u32 %v1552, %v1553
    %v1555 = vsel %vm1527, %v1538, %v1554
    %v1556 = vrot.slane %v307, 1
    %v1557 = vrot.slane %v295, 2
    %v1558 = vor.u32 %v1556, %v1557
    %v1559 = vsel %vm1527, %v1550, %v1558
    %v1560 = vrot.slane %v315, 1
    %v1561 = vrot.slane %v303, 2
    %v1562 = vor.u32 %v1560, %v1561
    %v1563 = vsel %vm1527, %v1554, %v1562
    %v1564 = vrot.slane %v323, 1
    %v1565 = vrot.slane %v311, 2
    %v1566 = vor.u32 %v1564, %v1565
    %v1567 = vsel %vm1527, %v1558, %v1566
    %v1568 = vrot.slane %v331, 1
    %v1569 = vrot.slane %v319, 2
    %v1570 = vor.u32 %v1568, %v1569
    %v1571 = vsel %vm1527, %v1562, %v1570
    %v1572 = vrot.slane %v339, 1
    %v1573 = vrot.slane %v327, 2
    %v1574 = vor.u32 %v1572, %v1573
    %v1575 = vsel %vm1527, %v1566, %v1574
    %v1576 = vrot.slane %v347, 1
    %v1577 = vrot.slane %v335, 2
    %v1578 = vor.u32 %v1576, %v1577
    %v1579 = vsel %vm1527, %v1570, %v1578
    %v1580 = vrot.slane %v355, 1
    %v1581 = vrot.slane %v343, 2
    %v1582 = vor.u32 %v1580, %v1581
    %v1583 = vsel %vm1527, %v1574, %v1582
    %v1584 = vrot.slane %v363, 1
    %v1585 = vrot.slane %v351, 2
    %v1586 = vor.u32 %v1584, %v1585
    %v1587 = vsel %vm1527, %v1578, %v1586
    %v1588 = vrot.slane %v371, 1
    %v1589 = vrot.slane %v359, 2
    %v1590 = vor.u32 %v1588, %v1589
    %v1591 = vsel %vm1527, %v1582, %v1590
    %v1592 = vrot.slane %v379, 1
    %v1593 = vrot.slane %v367, 2
    %v1594 = vor.u32 %v1592, %v1593
    %v1595 = vsel %vm1527, %v1586, %v1594
    %v1596 = vrot.slane %v387, 1
    %v1597 = vrot.slane %v375, 2
    %v1598 = vor.u32 %v1596, %v1597
    %v1599 = vsel %vm1527, %v1590, %v1598
    %v1600 = vrot.slane %v395, 1
    %v1601 = vrot.slane %v383, 2
    %v1602 = vor.u32 %v1600, %v1601
    %v1603 = vsel %vm1527, %v1594, %v1602
    %v1604 = vrot.slane %v403, 1
    %v1605 = vrot.slane %v391, 2
    %v1606 = vor.u32 %v1604, %v1605
    %v1607 = vsel %vm1527, %v1598, %v1606
    %v1608 = vrot.slane %v411, 1
    %v1609 = vrot.slane %v399, 2
    %v1610 = vor.u32 %v1608, %v1609
    %v1611 = vsel %vm1527, %v1602, %v1610
    %v1612 = vrot.slane %v419, 1
    %v1613 = vrot.slane %v407, 2
    %v1614 = vor.u32 %v1612, %v1613
    %v1615 = vsel %vm1527, %v1606, %v1614
    %v1617 = vshrl.u32 %v1525, 16
    %v1619 = vrot.slane %v1617, 1
    %v1620 = vshll.u32 %v1525, 16
    %v1622 = vrot.slane %v1620, 2
    %v1623 = vor.u32 %v1619, %v1622
    %v1624 = vsel %vm1527, %v1610, %v1623
    %v1626 = vshrl.u32 %v1526, 16
    %v1628 = vrot.slane %v1626, 1
    %v1629 = vshll.u32 %v1526, 16
    %v1631 = vrot.slane %v1629, 2
    %v1632 = vor.u32 %v1628, %v1631
    %v1633 = vsel %vm1527, %v1614, %v1632
    %v1686 = vunpack.c.l.b16 %v1490
    %v1687 = vunpack.c.h.b16 %v1490
    %v1688 = vunpack.c.l.b16 %v1491
    %v1689 = vunpack.c.h.b16 %v1491
    %v1690 = vunpack.c.l.b16 %v1492
    %v1691 = vunpack.c.h.b16 %v1492
    %v1692 = vunpack.c.l.b16 %v1493
    %v1693 = vunpack.c.h.b16 %v1493
    %v1694 = vunpack.c.l.b16 %v1494
    %v1695 = vunpack.c.h.b16 %v1494
    %v1696 = vunpack.c.l.b16 %v1495
    %v1697 = vunpack.c.h.b16 %v1495
    %v1698 = vunpack.c.l.b16 %v1496
    %v1699 = vunpack.c.h.b16 %v1496
    %v1700 = vunpack.c.l.b16 %v1497
    %v1701 = vunpack.c.h.b16 %v1497
    %v1702 = vunpack.c.l.b16 %v1498
    %v1703 = vunpack.c.h.b16 %v1498
    %v1704 = vunpack.c.l.b16 %v1499
    %v1705 = vunpack.c.h.b16 %v1499
    %v1706 = vunpack.c.l.b16 %v1500
    %v1707 = vunpack.c.h.b16 %v1500
    %v1708 = vunpack.c.l.b16 %v1501
    %v1709 = vunpack.c.h.b16 %v1501
    %v1710 = vunpack.c.l.b16 %v1502
    %v1711 = vunpack.c.h.b16 %v1502
    %v1712 = vunpack.c.l.b16 %v1503
    %v1713 = vunpack.c.h.b16 %v1503
    %v1714 = vunpack.c.l.b16 %v1504
    %v1715 = vunpack.c.h.b16 %v1504
    %v1716 = vunpack.c.l.b16 %v1505
    %v1717 = vunpack.c.h.b16 %v1505
    %v1718 = vunpack.c.l.b16 %v1506
    %v1719 = vunpack.c.h.b16 %v1506
    %v1720 = vunpack.c.l.b16 %v1507
    %v1721 = vunpack.c.h.b16 %v1507
    %v1722 = vunpack.c.l.b16 %v1508
    %v1723 = vunpack.c.h.b16 %v1508
    %v1724 = vunpack.c.l.b16 %v1509
    %v1725 = vunpack.c.h.b16 %v1509
    %v1726 = vunpack.c.l.b16 %v1510
    %v1727 = vunpack.c.h.b16 %v1510
    %v1728 = vunpack.c.l.b16 %v1511
    %v1729 = vunpack.c.h.b16 %v1511
    %v1730 = vunpack.c.l.b16 %v1512
    %v1731 = vunpack.c.h.b16 %v1512
    %v1732 = vunpack.c.l.b16 %v1513
    %v1733 = vunpack.c.h.b16 %v1513
    %v1734 = vunpack.c.l.b16 %v1514
    %v1735 = vunpack.c.h.b16 %v1514
    %v1736 = vunpack.c.l.b16 %v1515
    %v1737 = vunpack.c.h.b16 %v1515
    %v1738 = vunpack.c.l.b16 %v1516
    %v1739 = vunpack.c.h.b16 %v1516
    %v1740 = vunpack.c.l.b16 %v1517
    %v1741 = vunpack.c.h.b16 %v1517
    %v1742 = vunpack.c.l.b16 %v1518
    %v1743 = vunpack.c.h.b16 %v1518
    %v1744 = vunpack.c.l.b16 %v1519
    %v1745 = vunpack.c.h.b16 %v1519
    %v1746 = vunpack.c.l.b16 %v1520
    %v1747 = vunpack.c.h.b16 %v1520
    %v1748 = vunpack.c.l.b16 %v1521
    %v1749 = vunpack.c.h.b16 %v1521
    %v1750 = vpack.c.b16 %v1688, %v1686
    %v1751 = vpack.c.b16 %v1689, %v1687
    %v1752 = vpack.c.b16 %v1692, %v1690
    %v1753 = vpack.c.b16 %v1693, %v1691
    %v1754 = vpack.c.b16 %v1696, %v1694
    %v1755 = vpack.c.b16 %v1697, %v1695
    %v1756 = vpack.c.b16 %v1700, %v1698
    %v1757 = vpack.c.b16 %v1701, %v1699
    %v1758 = vpack.c.b16 %v1704, %v1702
    %v1759 = vpack.c.b16 %v1705, %v1703
    %v1760 = vpack.c.b16 %v1708, %v1706
    %v1761 = vpack.c.b16 %v1709, %v1707
    %v1762 = vpack.c.b16 %v1712, %v1710
    %v1763 = vpack.c.b16 %v1713, %v1711
    %v1764 = vpack.c.b16 %v1716, %v1714
    %v1765 = vpack.c.b16 %v1717, %v1715
    %v1766 = vpack.c.b16 %v1720, %v1718
    %v1767 = vpack.c.b16 %v1721, %v1719
    %v1768 = vpack.c.b16 %v1724, %v1722
    %v1769 = vpack.c.b16 %v1725, %v1723
    %v1770 = vpack.c.b16 %v1728, %v1726
    %v1771 = vpack.c.b16 %v1729, %v1727
    %v1772 = vpack.c.b16 %v1732, %v1730
    %v1773 = vpack.c.b16 %v1733, %v1731
    %v1774 = vpack.c.b16 %v1736, %v1734
    %v1775 = vpack.c.b16 %v1737, %v1735
    %v1776 = vpack.c.b16 %v1740, %v1738
    %v1777 = vpack.c.b16 %v1741, %v1739
    %v1778 = vpack.c.b16 %v1744, %v1742
    %v1779 = vpack.c.b16 %v1745, %v1743
    %v1780 = vpack.c.b16 %v1748, %v1746
    %v1781 = vpack.c.b16 %v1749, %v1747
    %1814 = vmatprep.subr.bf16.mxu0 %v1751
    %1815 = vmatpush1.bf16.msra.mxu0 %v1750
    %1816 = vmatprep.subr.bf16.mxu0 %v1753
    %1817 = vmatpush1.bf16.msra.mxu0 %v1752
    %1818 = vmatprep.subr.bf16.mxu0 %v1755
    %1819 = vmatpush1.bf16.msra.mxu0 %v1754
    %1820 = vmatprep.subr.bf16.mxu0 %v1757
    %1821 = vmatpush1.bf16.msra.mxu0 %v1756
    %1822 = vmatprep.subr.bf16.mxu0 %v1759
    %1823 = vmatpush1.bf16.msra.mxu0 %v1758
    %1824 = vmatprep.subr.bf16.mxu0 %v1761
    %1825 = vmatpush1.bf16.msra.mxu0 %v1760
    %1826 = vmatprep.subr.bf16.mxu0 %v1763
    %1827 = vmatpush1.bf16.msra.mxu0 %v1762
    %1828 = vmatprep.subr.bf16.mxu0 %v1765
    %1829 = vmatpush1.bf16.msra.mxu0 %v1764
    %1830 = vmatprep.subr.bf16.mxu0 %v1767
    %1831 = vmatpush1.bf16.msra.mxu0 %v1766
    %1832 = vmatprep.subr.bf16.mxu0 %v1769
    %1833 = vmatpush1.bf16.msra.mxu0 %v1768
    %1834 = vmatprep.subr.bf16.mxu0 %v1771
    %1835 = vmatpush1.bf16.msra.mxu0 %v1770
    %1836 = vmatprep.subr.bf16.mxu0 %v1773
    %1837 = vmatpush1.bf16.msra.mxu0 %v1772
    %1838 = vmatprep.subr.bf16.mxu0 %v1775
    %1839 = vmatpush1.bf16.msra.mxu0 %v1774
    %1840 = vmatprep.subr.bf16.mxu0 %v1777
    %1841 = vmatpush1.bf16.msra.mxu0 %v1776
    %1842 = vmatprep.subr.bf16.mxu0 %v1779
    %1843 = vmatpush1.bf16.msra.mxu0 %v1778
    %1844 = vmatprep.subr.bf16.mxu0 %v1781
    %1845 = vmatpush1.bf16.msra.mxu0 %v1780
    %1846 = vmatprep.mubr.bf16.mxu0 %v1551
    %1847 = vmatmul.mubr.bf16.gmra.mrb[0].mxu0 %v1539
    %v1848 = vpop.f32.mrb[0].mxu0
    %v1849 = vadd.f32 0.0, %v1848
    %v1850 = vpop.f32.mrb[0].mxu0
    %v1851 = vadd.f32 0.0, %v1850
    %v1852 = vpop.f32.mrb[0].mxu0
    %v1853 = vadd.f32 0.0, %v1852
    %v1854 = vpop.f32.mrb[0].mxu0
    %v1855 = vadd.f32 0.0, %v1854
    %1856 = vmatprep.mubr.bf16.mxu0 %v1559
    %1857 = vmatmul.mubr.bf16.gmra.mrb[0].mxu0 %v1555
    %v1858 = vpop.f32.mrb[0].mxu0
    %v1859 = vadd.f32 0.0, %v1858
    %v1860 = vpop.f32.mrb[0].mxu0
    %v1861 = vadd.f32 0.0, %v1860
    %v1862 = vpop.f32.mrb[0].mxu0
    %v1863 = vadd.f32 0.0, %v1862
    %v1864 = vpop.f32.mrb[0].mxu0
    %v1865 = vadd.f32 0.0, %v1864
    %1866 = vmatprep.mubr.bf16.mxu0 %v1567
    %1867 = vmatmul.mubr.bf16.gmra.mrb[0].mxu0 %v1563
    %v1868 = vpop.f32.mrb[0].mxu0
    %v1869 = vadd.f32 0.0, %v1868
    %v1870 = vpop.f32.mrb[0].mxu0
    %v1871 = vadd.f32 0.0, %v1870
    %v1872 = vpop.f32.mrb[0].mxu0
    %v1873 = vadd.f32 0.0, %v1872
    %v1874 = vpop.f32.mrb[0].mxu0
    %v1875 = vadd.f32 0.0, %v1874
    %1876 = vmatprep.mubr.bf16.mxu0 %v1575
    %1877 = vmatmul.mubr.bf16.gmra.mrb[0].mxu0 %v1571
    %v1878 = vpop.f32.mrb[0].mxu0
    %v1879 = vadd.f32 0.0, %v1878
    %v1880 = vpop.f32.mrb[0].mxu0
    %v1881 = vadd.f32 0.0, %v1880
    %v1882 = vpop.f32.mrb[0].mxu0
    %v1883 = vadd.f32 0.0, %v1882
    %v1884 = vpop.f32.mrb[0].mxu0
    %v1885 = vadd.f32 0.0, %v1884
    %1886 = vmatprep.mubr.bf16.mxu0 %v1583
    %1887 = vmatmul.mubr.bf16.gmra.mrb[0].mxu0 %v1579
    %v1888 = vpop.f32.mrb[0].mxu0
    %v1889 = vadd.f32 0.0, %v1888
    %v1890 = vpop.f32.mrb[0].mxu0
    %v1891 = vadd.f32 0.0, %v1890
    %v1892 = vpop.f32.mrb[0].mxu0
    %v1893 = vadd.f32 0.0, %v1892
    %v1894 = vpop.f32.mrb[0].mxu0
    %v1895 = vadd.f32 0.0, %v1894
    %1896 = vmatprep.mubr.bf16.mxu0 %v1591
    %1897 = vmatmul.mubr.bf16.gmra.mrb[0].mxu0 %v1587
    %v1898 = vpop.f32.mrb[0].mxu0
    %v1899 = vadd.f32 0.0, %v1898
    %v1900 = vpop.f32.mrb[0].mxu0
    %v1901 = vadd.f32 0.0, %v1900
    %v1902 = vpop.f32.mrb[0].mxu0
    %v1903 = vadd.f32 0.0, %v1902
    %v1904 = vpop.f32.mrb[0].mxu0
    %v1905 = vadd.f32 0.0, %v1904
    %1906 = vmatprep.mubr.bf16.mxu0 %v1599
    %1907 = vmatmul.mubr.bf16.gmra.mrb[0].mxu0 %v1595
    %v1908 = vpop.f32.mrb[0].mxu0
    %v1909 = vadd.f32 0.0, %v1908
    %v1910 = vpop.f32.mrb[0].mxu0
    %v1911 = vadd.f32 0.0, %v1910
    %v1912 = vpop.f32.mrb[0].mxu0
    %v1913 = vadd.f32 0.0, %v1912
    %v1914 = vpop.f32.mrb[0].mxu0
    %v1915 = vadd.f32 0.0, %v1914
    %1916 = vmatprep.mubr.bf16.mxu0 %v1607
    %1917 = vmatmul.mubr.bf16.gmra.mrb[0].mxu0 %v1603
    %v1918 = vpop.f32.mrb[0].mxu0
    %v1919 = vadd.f32 0.0, %v1918
    %v1920 = vpop.f32.mrb[0].mxu0
    %v1921 = vadd.f32 0.0, %v1920
    %v1922 = vpop.f32.mrb[0].mxu0
    %v1923 = vadd.f32 0.0, %v1922
    %v1924 = vpop.f32.mrb[0].mxu0
    %v1925 = vadd.f32 0.0, %v1924
    %1926 = vmatprep.mubr.bf16.mxu0 %v1615
    %1927 = vmatmul.mubr.bf16.gmra.mrb[0].mxu0 %v1611
    %v1928 = vpop.f32.mrb[0].mxu0
    %v1929 = vadd.f32 0.0, %v1928
    %v1930 = vpop.f32.mrb[0].mxu0
    %v1931 = vadd.f32 0.0, %v1930
    %v1932 = vpop.f32.mrb[0].mxu0
    %v1933 = vadd.f32 0.0, %v1932
    %v1934 = vpop.f32.mrb[0].mxu0
    %v1935 = vadd.f32 0.0, %v1934
    %1936 = vmatprep.mubr.bf16.mxu0 %v1633
    %1937 = vmatmul.mubr.bf16.gmra.mrb[0].mxu0 %v1624
    %v1938 = vpop.f32.mrb[0].mxu0
    %v1939 = vadd.f32 0.0, %v1938
    %v1940 = vpop.f32.mrb[0].mxu0
    %v1941 = vadd.f32 0.0, %v1940
    %v1942 = vpop.f32.mrb[0].mxu0
    %v1943 = vadd.f32 0.0, %v1942
    %v1944 = vpop.f32.mrb[0].mxu0
    %v1945 = vadd.f32 0.0, %v1944
    %1946 = vdwg.mxu0
    %v1947 = vadd.f32 %v1448, %v1849
    %v1948 = vadd.f32 %v1449, %v1851
    %v1949 = vadd.f32 %v1450, %v1853
    %v1950 = vadd.f32 %v1451, %v1855
    %v1951 = vadd.f32 %v1452, %v1859
    %v1952 = vadd.f32 %v1453, %v1861
    %v1953 = vadd.f32 %v1454, %v1863
    %v1954 = vadd.f32 %v1455, %v1865
    %v1955 = vadd.f32 %v1456, %v1869
    %v1956 = vadd.f32 %v1457, %v1871
    %v1957 = vadd.f32 %v1458, %v1873
    %v1958 = vadd.f32 %v1459, %v1875
    %v1959 = vadd.f32 %v1460, %v1879
    %v1960 = vadd.f32 %v1461, %v1881
    %v1961 = vadd.f32 %v1462, %v1883
    %v1962 = vadd.f32 %v1463, %v1885
    %v1963 = vadd.f32 %v1464, %v1889
    %v1964 = vadd.f32 %v1465, %v1891
    %v1965 = vadd.f32 %v1466, %v1893
    %v1966 = vadd.f32 %v1467, %v1895
    %v1967 = vadd.f32 %v1468, %v1899
    %v1968 = vadd.f32 %v1469, %v1901
    %v1969 = vadd.f32 %v1470, %v1903
    %v1970 = vadd.f32 %v1471, %v1905
    %v1971 = vadd.f32 %v1472, %v1909
    %v1972 = vadd.f32 %v1473, %v1911
    %v1973 = vadd.f32 %v1474, %v1913
    %v1974 = vadd.f32 %v1475, %v1915
    %v1975 = vadd.f32 %v1476, %v1919
    %v1976 = vadd.f32 %v1477, %v1921
    %v1977 = vadd.f32 %v1478, %v1923
    %v1978 = vadd.f32 %v1479, %v1925
    %v1979 = vadd.f32 %v1480, %v1929
    %v1980 = vadd.f32 %v1481, %v1931
    %v1981 = vadd.f32 %v1482, %v1933
    %v1982 = vadd.f32 %v1483, %v1935
    %v1983 = vadd.f32 %v1484, %v1939
    %v1984 = vadd.f32 %v1485, %v1941
    %v1985 = vadd.f32 %v1486, %v1943
    %v1986 = vadd.f32 %v1487, %v1945
    %v1987 = vmul.f32 %v1947, 0.2
    %v1988 = vmul.f32 %v1948, 0.2
    %v1989 = vmul.f32 %v1949, 0.2
    %v1990 = vmul.f32 %v1950, 0.2
    %v1991 = vmul.f32 %v1951, 0.2
    %v1992 = vmul.f32 %v1952, 0.2
    %v1993 = vmul.f32 %v1953, 0.2
    %v1994 = vmul.f32 %v1954, 0.2
    %v1995 = vmul.f32 %v1955, 0.2
    %v1996 = vmul.f32 %v1956, 0.2
    %v1997 = vmul.f32 %v1957, 0.2
    %v1998 = vmul.f32 %v1958, 0.2
    %v1999 = vmul.f32 %v1959, 0.2
    %v2000 = vmul.f32 %v1960, 0.2
    %v2001 = vmul.f32 %v1961, 0.2
    %v2002 = vmul.f32 %v1962, 0.2
    %v2003 = vmul.f32 %v1963, 0.2
    %v2004 = vmul.f32 %v1964, 0.2
    %v2005 = vmul.f32 %v1965, 0.2
    %v2006 = vmul.f32 %v1966, 0.2
    %v2007 = vmul.f32 %v1967, 0.2
    %v2008 = vmul.f32 %v1968, 0.2
    %v2009 = vmul.f32 %v1969, 0.2
    %v2010 = vmul.f32 %v1970, 0.2
    %v2011 = vmul.f32 %v1971, 0.2
    %v2012 = vmul.f32 %v1972, 0.2
    %v2013 = vmul.f32 %v1973, 0.2
    %v2014 = vmul.f32 %v1974, 0.2
    %v2015 = vmul.f32 %v1975, 0.2
    %v2016 = vmul.f32 %v1976, 0.2
    %v2017 = vmul.f32 %v1977, 0.2
    %v2018 = vmul.f32 %v1978, 0.2
    %v2019 = vmul.f32 %v1979, 0.2
    %v2020 = vmul.f32 %v1980, 0.2
    %v2021 = vmul.f32 %v1981, 0.2
    %v2022 = vmul.f32 %v1982, 0.2
    %v2023 = vmul.f32 %v1983, 0.2
    %v2024 = vmul.f32 %v1984, 0.2
    %v2025 = vmul.f32 %v1985, 0.2
    %v2026 = vmul.f32 %v1986, 0.2
    %v2027 = vmax.f32 %v1947, %v1987
    %v2028 = vmax.f32 %v1948, %v1988
    %v2029 = vmax.f32 %v1949, %v1989
    %v2030 = vmax.f32 %v1950, %v1990
    %v2031 = vmax.f32 %v1951, %v1991
    %v2032 = vmax.f32 %v1952, %v1992
    %v2033 = vmax.f32 %v1953, %v1993
    %v2034 = vmax.f32 %v1954, %v1994
    %v2035 = vmax.f32 %v1955, %v1995
    %v2036 = vmax.f32 %v1956, %v1996
    %v2037 = vmax.f32 %v1957, %v1997
    %v2038 = vmax.f32 %v1958, %v1998
    %v2039 = vmax.f32 %v1959, %v1999
    %v2040 = vmax.f32 %v1960, %v2000
    %v2041 = vmax.f32 %v1961, %v2001
    %v2042 = vmax.f32 %v1962, %v2002
    %v2043 = vmax.f32 %v1963, %v2003
    %v2044 = vmax.f32 %v1964, %v2004
    %v2045 = vmax.f32 %v1965, %v2005
    %v2046 = vmax.f32 %v1966, %v2006
    %v2047 = vmax.f32 %v1967, %v2007
    %v2048 = vmax.f32 %v1968, %v2008
    %v2049 = vmax.f32 %v1969, %v2009
    %v2050 = vmax.f32 %v1970, %v2010
    %v2051 = vmax.f32 %v1971, %v2011
    %v2052 = vmax.f32 %v1972, %v2012
    %v2053 = vmax.f32 %v1973, %v2013
    %v2054 = vmax.f32 %v1974, %v2014
    %v2055 = vmax.f32 %v1975, %v2015
    %v2056 = vmax.f32 %v1976, %v2016
    %v2057 = vmax.f32 %v1977, %v2017
    %v2058 = vmax.f32 %v1978, %v2018
    %v2059 = vmax.f32 %v1979, %v2019
    %v2060 = vmax.f32 %v1980, %v2020
    %v2061 = vmax.f32 %v1981, %v2021
    %v2062 = vmax.f32 %v1982, %v2022
    %v2063 = vmax.f32 %v1983, %v2023
    %v2064 = vmax.f32 %v1984, %v2024
    %v2065 = vmax.f32 %v1985, %v2025
    %v2066 = vmax.f32 %v1986, %v2026
    %2067 = vst [vmem:[#allocation2] sm:$0xff] 0
    %2068 = vst [vmem:[#allocation2 + $0x8] sm:$0xff] 0
    %2069 = vst [vmem:[#allocation2 + $0x10] sm:$0xff] 0
    %2070 = vst [vmem:[#allocation2 + $0x18] sm:$0xff] 0
    %2071 = vst [vmem:[#allocation2 + $0x20] sm:$0xff] 0
    %2072 = vst [vmem:[#allocation2 + $0x28] sm:$0xff] 0
    %2073 = vst [vmem:[#allocation2 + $0x30] sm:$0xff] 0
    %2074 = vst [vmem:[#allocation2 + $0x38] sm:$0xff] 0
    %2075 = vst [vmem:[#allocation2 + $0x40] sm:$0xff] 0
    %2076 = vst [vmem:[#allocation2 + $0x48] sm:$0xff] 0
    %2077 = vst [vmem:[#allocation2 + $0x50] sm:$0xff] 0
    %2078 = vst [vmem:[#allocation2 + $0x58] sm:$0xff] 0
    %2079 = vst [vmem:[#allocation2 + $0x60] sm:$0xff] 0
    %2080 = vst [vmem:[#allocation2 + $0x68] sm:$0xff] 0
    %2081 = vst [vmem:[#allocation2 + $0x70] sm:$0xff] 0
    %2082 = vst [vmem:[#allocation2 + $0x78] sm:$0xff] 0
    %2083 = vst [vmem:[#allocation2 + $0x80] sm:$0xff] 0
    %2084 = vst [vmem:[#allocation2 + $0x88] sm:$0xff] 0
    %2085 = vst [vmem:[#allocation2 + $0x90] sm:$0xff] 0
    %2086 = vst [vmem:[#allocation2 + $0x98] sm:$0xff] 0
    %2087 = vst [vmem:[#allocation2 + $0xa0] sm:$0xff] 0
    %2088 = vst [vmem:[#allocation2 + $0xa8] sm:$0xff] 0
    %2089 = vst [vmem:[#allocation2 + $0xb0] sm:$0xff] 0
    %2091 = vset.pattern.permute.xlu0 0
    %2092 = vperm.xlu0 %2091, %v67
    %v2093 = vpop.permute.xlu0 %2092
    %2096 = vset.pattern.permute.xlu0 0
    %2097 = vperm.xlu0 %2096, %v68
    %v2098 = vpop.permute.xlu0 %2097
    %2101 = vset.pattern.permute.xlu0 0
    %2102 = vperm.xlu0 %2101, %v69
    %v2103 = vpop.permute.xlu0 %2102
    %2106 = vset.pattern.permute.xlu0 0
    %2107 = vperm.xlu0 %2106, %v70
    %v2108 = vpop.permute.xlu0 %2107
    %2111 = vset.pattern.permute.xlu0 0
    %2112 = vperm.xlu0 %2111, %v71
    %v2113 = vpop.permute.xlu0 %2112
    %2116 = vset.pattern.permute.xlu0 0
    %2117 = vperm.xlu0 %2116, %v72
    %v2118 = vpop.permute.xlu0 %2117
    %2121 = vset.pattern.permute.xlu0 0
    %2122 = vperm.xlu0 %2121, %v73
    %v2123 = vpop.permute.xlu0 %2122
    %2126 = vset.pattern.permute.xlu0 0
    %2127 = vperm.xlu0 %2126, %v74
    %v2128 = vpop.permute.xlu0 %2127
    %2131 = vset.pattern.permute.xlu0 0
    %2132 = vperm.xlu0 %2131, %v75
    %v2133 = vpop.permute.xlu0 %2132
    %2136 = vset.pattern.permute.xlu0 0
    %2137 = vperm.xlu0 %2136, %v76
    %v2138 = vpop.permute.xlu0 %2137
    %2141 = vset.pattern.permute.xlu0 0
    %2142 = vperm.xlu0 %2141, %v77
    %v2143 = vpop.permute.xlu0 %2142
    %2146 = vset.pattern.permute.xlu0 0
    %2147 = vperm.xlu0 %2146, %v78
    %v2148 = vpop.permute.xlu0 %2147
    %2151 = vset.pattern.permute.xlu0 0
    %2152 = vperm.xlu0 %2151, %v79
    %v2153 = vpop.permute.xlu0 %2152
    %2156 = vset.pattern.permute.xlu0 0
    %2157 = vperm.xlu0 %2156, %v80
    %v2158 = vpop.permute.xlu0 %2157
    %2161 = vset.pattern.permute.xlu0 0
    %2162 = vperm.xlu0 %2161, %v81
    %v2163 = vpop.permute.xlu0 %2162
    %2166 = vset.pattern.permute.xlu0 0
    %2167 = vperm.xlu0 %2166, %v82
    %v2168 = vpop.permute.xlu0 %2167
    %2171 = vset.pattern.permute.xlu0 0
    %2172 = vperm.xlu0 %2171, %v83
    %v2173 = vpop.permute.xlu0 %2172
    %2176 = vset.pattern.permute.xlu0 0
    %2177 = vperm.xlu0 %2176, %v84
    %v2178 = vpop.permute.xlu0 %2177
    %2181 = vset.pattern.permute.xlu0 0
    %2182 = vperm.xlu0 %2181, %v85
    %v2183 = vpop.permute.xlu0 %2182
    %2186 = vset.pattern.permute.xlu0 0
    %2187 = vperm.xlu0 %2186, %v86
    %v2188 = vpop.permute.xlu0 %2187
    %v2190 = vmul.f32 %v2027, %v2093
    %v2191 = vmul.f32 %v2028, %v2093
    %v2192 = vmul.f32 %v2029, %v2098
    %v2193 = vmul.f32 %v2030, %v2098
    %v2194 = vmul.f32 %v2031, %v2103
    %v2195 = vmul.f32 %v2032, %v2103
    %v2196 = vmul.f32 %v2033, %v2108
    %v2197 = vmul.f32 %v2034, %v2108
    %v2198 = vmul.f32 %v2035, %v2113
    %v2199 = vmul.f32 %v2036, %v2113
    %v2200 = vmul.f32 %v2037, %v2118
    %v2201 = vmul.f32 %v2038, %v2118
    %v2202 = vmul.f32 %v2039, %v2123
    %v2203 = vmul.f32 %v2040, %v2123
    %v2204 = vmul.f32 %v2041, %v2128
    %v2205 = vmul.f32 %v2042, %v2128
    %v2206 = vmul.f32 %v2043, %v2133
    %v2207 = vmul.f32 %v2044, %v2133
    %v2208 = vmul.f32 %v2045, %v2138
    %v2209 = vmul.f32 %v2046, %v2138
    %v2210 = vmul.f32 %v2047, %v2143
    %v2211 = vmul.f32 %v2048, %v2143
    %v2212 = vmul.f32 %v2049, %v2148
    %v2213 = vmul.f32 %v2050, %v2148
    %v2214 = vmul.f32 %v2051, %v2153
    %v2215 = vmul.f32 %v2052, %v2153
    %v2216 = vmul.f32 %v2053, %v2158
    %v2217 = vmul.f32 %v2054, %v2158
    %v2218 = vmul.f32 %v2055, %v2163
    %v2219 = vmul.f32 %v2056, %v2163
    %v2220 = vmul.f32 %v2057, %v2168
    %v2221 = vmul.f32 %v2058, %v2168
    %v2222 = vmul.f32 %v2059, %v2173
    %v2223 = vmul.f32 %v2060, %v2173
    %v2224 = vmul.f32 %v2061, %v2178
    %v2225 = vmul.f32 %v2062, %v2178
    %v2226 = vmul.f32 %v2063, %v2183
    %v2227 = vmul.f32 %v2064, %v2183
    %v2228 = vmul.f32 %v2065, %v2188
    %v2229 = vmul.f32 %v2066, %v2188
    %v2230 = vpack.c.bf16 %v2192, %v2190
    %v2231 = vpack.c.bf16 %v2193, %v2191
    %v2232 = vpack.c.bf16 %v2196, %v2194
    %v2233 = vpack.c.bf16 %v2197, %v2195
    %v2234 = vpack.c.bf16 %v2200, %v2198
    %v2235 = vpack.c.bf16 %v2201, %v2199
    %v2236 = vpack.c.bf16 %v2204, %v2202
    %v2237 = vpack.c.bf16 %v2205, %v2203
    %v2238 = vpack.c.bf16 %v2208, %v2206
    %v2239 = vpack.c.bf16 %v2209, %v2207
    %v2240 = vpack.c.bf16 %v2212, %v2210
    %v2241 = vpack.c.bf16 %v2213, %v2211
    %v2242 = vpack.c.bf16 %v2216, %v2214
    %v2243 = vpack.c.bf16 %v2217, %v2215
    %v2244 = vpack.c.bf16 %v2220, %v2218
    %v2245 = vpack.c.bf16 %v2221, %v2219
    %v2246 = vpack.c.bf16 %v2224, %v2222
    %v2247 = vpack.c.bf16 %v2225, %v2223
    %v2248 = vpack.c.bf16 %v2228, %v2226
    %v2249 = vpack.c.bf16 %v2229, %v2227
    %v2270 = vunpack.c.l.b16 %v2230
    %v2271 = vunpack.c.l.b16 %v2231
    %v2272 = vunpack.c.h.b16 %v2230
    %v2273 = vunpack.c.h.b16 %v2231
    %v2274 = vunpack.c.l.b16 %v2232
    %v2275 = vunpack.c.l.b16 %v2233
    %v2276 = vunpack.c.h.b16 %v2232
    %v2277 = vunpack.c.h.b16 %v2233
    %v2278 = vunpack.c.l.b16 %v2234
    %v2279 = vunpack.c.l.b16 %v2235
    %v2280 = vunpack.c.h.b16 %v2234
    %v2281 = vunpack.c.h.b16 %v2235
    %v2282 = vunpack.c.l.b16 %v2236
    %v2283 = vunpack.c.l.b16 %v2237
    %v2284 = vunpack.c.h.b16 %v2236
    %v2285 = vunpack.c.h.b16 %v2237
    %v2286 = vunpack.c.l.b16 %v2238
    %v2287 = vunpack.c.l.b16 %v2239
    %v2288 = vunpack.c.h.b16 %v2238
    %v2289 = vunpack.c.h.b16 %v2239
    %v2290 = vunpack.c.l.b16 %v2240
    %v2291 = vunpack.c.l.b16 %v2241
    %v2292 = vunpack.c.h.b16 %v2240
    %v2293 = vunpack.c.h.b16 %v2241
    %v2294 = vunpack.c.l.b16 %v2242
    %v2295 = vunpack.c.l.b16 %v2243
    %v2296 = vunpack.c.h.b16 %v2242
    %v2297 = vunpack.c.h.b16 %v2243
    %v2298 = vunpack.c.l.b16 %v2244
    %v2299 = vunpack.c.l.b16 %v2245
    %v2300 = vunpack.c.h.b16 %v2244
    %v2301 = vunpack.c.h.b16 %v2245
    %v2302 = vunpack.c.l.b16 %v2246
    %v2303 = vunpack.c.l.b16 %v2247
    %v2304 = vunpack.c.h.b16 %v2246
    %v2305 = vunpack.c.h.b16 %v2247
    %v2306 = vunpack.c.l.b16 %v2248
    %v2307 = vunpack.c.l.b16 %v2249
    %v2308 = vunpack.c.h.b16 %v2248
    %v2309 = vunpack.c.h.b16 %v2249
    %v2310 = vpack.c.b16 %v2271, %v2270
    %v2311 = vpack.c.b16 %v2273, %v2272
    %v2312 = vpack.c.b16 %v2275, %v2274
    %v2313 = vpack.c.b16 %v2277, %v2276
    %v2314 = vpack.c.b16 %v2279, %v2278
    %v2315 = vpack.c.b16 %v2281, %v2280
    %v2316 = vpack.c.b16 %v2283, %v2282
    %v2317 = vpack.c.b16 %v2285, %v2284
    %v2318 = vpack.c.b16 %v2287, %v2286
    %v2319 = vpack.c.b16 %v2289, %v2288
    %v2320 = vpack.c.b16 %v2291, %v2290
    %v2321 = vpack.c.b16 %v2293, %v2292
    %v2322 = vpack.c.b16 %v2295, %v2294
    %v2323 = vpack.c.b16 %v2297, %v2296
    %v2324 = vpack.c.b16 %v2299, %v2298
    %v2325 = vpack.c.b16 %v2301, %v2300
    %v2326 = vpack.c.b16 %v2303, %v2302
    %v2327 = vpack.c.b16 %v2305, %v2304
    %v2328 = vpack.c.b16 %v2307, %v2306
    %v2329 = vpack.c.b16 %v2309, %v2308
    %vm2330 = vcmask 1040384
    %vm2331 = vcmask 1044484
    %vm2332 = vmor %vm2330, %vm2331
    %v2333 = vrot.slane %v2310, 7
    %v2334 = vrot.slane %v2333, 4
    %v2335 = vrot.slane %v2311, 7
    %v2336 = vsel %vm2332, %v2334, %v2335
    %v2337 = vrot.slane %v2335, 4
    %v2338 = vrot.slane %v2312, 7
    %v2339 = vsel %vm2332, %v2337, %v2338
    %v2340 = vrot.slane %v2338, 4
    %v2341 = vrot.slane %v2313, 7
    %v2342 = vsel %vm2332, %v2340, %v2341
    %v2343 = vrot.slane %v2341, 4
    %v2344 = vrot.slane %v2314, 7
    %v2345 = vsel %vm2332, %v2343, %v2344
    %v2346 = vrot.slane %v2344, 4
    %v2347 = vrot.slane %v2315, 7
    %v2348 = vsel %vm2332, %v2346, %v2347
    %v2349 = vrot.slane %v2347, 4
    %v2350 = vrot.slane %v2316, 7
    %v2351 = vsel %vm2332, %v2349, %v2350
    %v2352 = vrot.slane %v2350, 4
    %v2353 = vrot.slane %v2317, 7
    %v2354 = vsel %vm2332, %v2352, %v2353
    %v2355 = vrot.slane %v2353, 4
    %v2356 = vrot.slane %v2318, 7
    %v2357 = vsel %vm2332, %v2355, %v2356
    %v2358 = vrot.slane %v2356, 4
    %v2359 = vrot.slane %v2319, 7
    %v2360 = vsel %vm2332, %v2358, %v2359
    %v2361 = vrot.slane %v2359, 4
    %v2362 = vrot.slane %v2320, 7
    %v2363 = vsel %vm2332, %v2361, %v2362
    %v2364 = vrot.slane %v2362, 4
    %v2365 = vrot.slane %v2321, 7
    %v2366 = vsel %vm2332, %v2364, %v2365
    %v2367 = vrot.slane %v2365, 4
    %v2368 = vrot.slane %v2322, 7
    %v2369 = vsel %vm2332, %v2367, %v2368
    %v2370 = vrot.slane %v2368, 4
    %v2371 = vrot.slane %v2323, 7
    %v2372 = vsel %vm2332, %v2370, %v2371
    %v2373 = vrot.slane %v2371, 4
    %v2374 = vrot.slane %v2324, 7
    %v2375 = vsel %vm2332, %v2373, %v2374
    %v2376 = vrot.slane %v2374, 4
    %v2377 = vrot.slane %v2325, 7
    %v2378 = vsel %vm2332, %v2376, %v2377
    %v2379 = vrot.slane %v2377, 4
    %v2380 = vrot.slane %v2326, 7
    %v2381 = vsel %vm2332, %v2379, %v2380
    %v2382 = vrot.slane %v2380, 4
    %v2383 = vrot.slane %v2327, 7
    %v2384 = vsel %vm2332, %v2382, %v2383
    %v2385 = vrot.slane %v2383, 4
    %v2386 = vrot.slane %v2328, 7
    %v2387 = vsel %vm2332, %v2385, %v2386
    %v2388 = vrot.slane %v2386, 4
    %v2389 = vrot.slane %v2329, 7
    %v2390 = vsel %vm2332, %v2388, %v2389
    %v2391 = vrot.slane %v2389, 4
    %2413 = vst [vmem:[#allocation2] sm:$0xee] %v2333
    %2414 = vst [vmem:[#allocation2 + $0x8] sm:$0xff] %v2336
    %2415 = vst [vmem:[#allocation2 + $0x10] sm:$0xff] %v2339
    %2416 = vst [vmem:[#allocation2 + $0x18] sm:$0xff] %v2342
    %2417 = vst [vmem:[#allocation2 + $0x20] sm:$0xff] %v2345
    %2418 = vst [vmem:[#allocation2 + $0x28] sm:$0xff] %v2348
    %2419 = vst [vmem:[#allocation2 + $0x30] sm:$0xff] %v2351
    %2420 = vst [vmem:[#allocation2 + $0x38] sm:$0xff] %v2354
    %2421 = vst [vmem:[#allocation2 + $0x40] sm:$0xff] %v2357
    %2422 = vst [vmem:[#allocation2 + $0x48] sm:$0xff] %v2360
    %2423 = vst [vmem:[#allocation2 + $0x50] sm:$0xff] %v2363
    %2424 = vst [vmem:[#allocation2 + $0x58] sm:$0xff] %v2366
    %2425 = vst [vmem:[#allocation2 + $0x60] sm:$0xff] %v2369
    %2426 = vst [vmem:[#allocation2 + $0x68] sm:$0xff] %v2372
    %2427 = vst [vmem:[#allocation2 + $0x70] sm:$0xff] %v2375
    %2428 = vst [vmem:[#allocation2 + $0x78] sm:$0xff] %v2378
    %2429 = vst [vmem:[#allocation2 + $0x80] sm:$0xff] %v2381
    %2430 = vst [vmem:[#allocation2 + $0x88] sm:$0xff] %v2384
    %2431 = vst [vmem:[#allocation2 + $0x90] sm:$0xff] %v2387
    %2432 = vst [vmem:[#allocation2 + $0x98] sm:$0xff] %v2390
    %2433 = vst [vmem:[#allocation2 + $0xa0] sm:$0x11] %v2391
    %v2434 = vld [vmem:[#allocation2] sm:$0xff]
    %v2435 = vld [vmem:[#allocation2 + $0x8] sm:$0xff]
    %v2436 = vld [vmem:[#allocation2 + $0x10] sm:$0xff]
    %v2437 = vld [vmem:[#allocation2 + $0x18] sm:$0xff]
    %v2438 = vld [vmem:[#allocation2 + $0x20] sm:$0xff]
    %v2439 = vld [vmem:[#allocation2 + $0x28] sm:$0xff]
    %v2440 = vld [vmem:[#allocation2 + $0x30] sm:$0xff]
    %v2441 = vld [vmem:[#allocation2 + $0x38] sm:$0xff]
    %v2442 = vld [vmem:[#allocation2 + $0x40] sm:$0xff]
    %v2443 = vld [vmem:[#allocation2 + $0x48] sm:$0xff]
    %v2444 = vld [vmem:[#allocation2 + $0x50] sm:$0xff]
    %v2445 = vld [vmem:[#allocation2 + $0x58] sm:$0xff]
    %v2446 = vld [vmem:[#allocation2 + $0x60] sm:$0xff]
    %v2447 = vld [vmem:[#allocation2 + $0x68] sm:$0xff]
    %v2448 = vld [vmem:[#allocation2 + $0x70] sm:$0xff]
    %v2449 = vld [vmem:[#allocation2 + $0x78] sm:$0xff]
    %v2450 = vld [vmem:[#allocation2 + $0x80] sm:$0xff]
    %v2451 = vld [vmem:[#allocation2 + $0x88] sm:$0xff]
    %v2452 = vld [vmem:[#allocation2 + $0x90] sm:$0xff]
    %v2453 = vld [vmem:[#allocation2 + $0x98] sm:$0xff]
    %v2454 = vld [vmem:[%s2] sm:$0xff]
    %v2455 = vld [vmem:[%s2 + $0x8] sm:$0xff]
    %v2456 = vld [vmem:[%s2 + $0x10] sm:$0xff]
    %v2457 = vld [vmem:[%s2 + $0x18] sm:$0xff]
    %v2458 = vld [vmem:[%s2 + $0x20] sm:$0xff]
    %v2459 = vld [vmem:[%s2 + $0x28] sm:$0xff]
    %v2460 = vld [vmem:[%s2 + $0x30] sm:$0xff]
    %v2461 = vld [vmem:[%s2 + $0x38] sm:$0xff]
    %v2462 = vld [vmem:[%s2 + $0x40] sm:$0xff]
    %v2463 = vld [vmem:[%s2 + $0x48] sm:$0xff]
    %v2464 = vld [vmem:[%s2 + $0x50] sm:$0xff]
    %v2465 = vld [vmem:[%s2 + $0x58] sm:$0xff]
    %v2466 = vld [vmem:[%s2 + $0x60] sm:$0xff]
    %v2467 = vld [vmem:[%s2 + $0x68] sm:$0xff]
    %v2468 = vld [vmem:[%s2 + $0x70] sm:$0xff]
    %v2469 = vld [vmem:[%s2 + $0x78] sm:$0xff]
    %v2470 = vld [vmem:[%s2 + $0x80] sm:$0xff]
    %v2471 = vld [vmem:[%s2 + $0x88] sm:$0xff]
    %v2472 = vld [vmem:[%s2 + $0x90] sm:$0xff]
    %v2473 = vld [vmem:[%s2 + $0x98] sm:$0xff]
    %v2474 = vld [vmem:[%s2 + $0xa0] sm:$0xff]
    %v2475 = vld [vmem:[%s2 + $0xa8] sm:$0xff]
    %v2476 = vld [vmem:[%s2 + $0xb0] sm:$0xff]
    %v2477 = vld [vmem:[%s2 + $0xb8] sm:$0xff]
    %v2478 = vld [vmem:[%s2 + $0xc0] sm:$0xff]
    %v2479 = vld [vmem:[%s2 + $0xc8] sm:$0xff]
    %v2480 = vld [vmem:[%s2 + $0xd0] sm:$0xff]
    %v2481 = vld [vmem:[%s2 + $0xd8] sm:$0xff]
    %v2482 = vld [vmem:[%s2 + $0xe0] sm:$0xff]
    %v2483 = vld [vmem:[%s2 + $0xe8] sm:$0xff]
    %v2484 = vld [vmem:[%s2 + $0xf0] sm:$0xff]
    %v2485 = vld [vmem:[%s2 + $0xf8] sm:$0xff]
    %v2486 = vld [vmem:[#allocation2] sm:$0xee]
    %v2487 = vld [vmem:[#allocation2 + $0xa0] sm:$0x11]
    %s2488 = scalar_lea.vmem %s2, 256
    %v2489 = vld [vmem:[%s2488] sm:$0xff]
    %v2490 = vld [vmem:[%s2488 + $0x8] sm:$0xff]
    %v2491 = vld [vmem:[%s2488 + $0x10] sm:$0xff]
    %v2492 = vld [vmem:[%s2488 + $0x18] sm:$0xff]
    %v2493 = vld [vmem:[%s2488 + $0x20] sm:$0xff]
    %v2494 = vld [vmem:[%s2488 + $0x28] sm:$0xff]
    %v2495 = vld [vmem:[%s2488 + $0x30] sm:$0xff]
    %v2496 = vld [vmem:[%s2488 + $0x38] sm:$0xff]
    %v2497 = vld [vmem:[%s2488 + $0x40] sm:$0xff]
    %v2498 = vld [vmem:[%s2488 + $0x48] sm:$0xff]
    %v2499 = vld [vmem:[%s2488 + $0x50] sm:$0xff]
    %v2500 = vld [vmem:[%s2488 + $0x58] sm:$0xff]
    %v2501 = vld [vmem:[%s2488 + $0x60] sm:$0xff]
    %v2502 = vld [vmem:[%s2488 + $0x68] sm:$0xff]
    %v2503 = vld [vmem:[%s2488 + $0x70] sm:$0xff]
    %v2504 = vld [vmem:[%s2488 + $0x78] sm:$0xff]
    %v2505 = vld [vmem:[%s2488 + $0x80] sm:$0xff]
    %v2506 = vld [vmem:[%s2488 + $0x88] sm:$0xff]
    %v2507 = vld [vmem:[%s2488 + $0x90] sm:$0xff]
    %v2508 = vld [vmem:[%s2488 + $0x98] sm:$0xff]
    %v2509 = vld [vmem:[%s2488 + $0xa0] sm:$0xff]
    %v2510 = vld [vmem:[%s2488 + $0xa8] sm:$0xff]
    %v2511 = vld [vmem:[%s2488 + $0xb0] sm:$0xff]
    %v2512 = vld [vmem:[%s2488 + $0xb8] sm:$0xff]
    %v2513 = vld [vmem:[%s2488 + $0xc0] sm:$0xff]
    %v2514 = vld [vmem:[%s2488 + $0xc8] sm:$0xff]
    %v2515 = vld [vmem:[%s2488 + $0xd0] sm:$0xff]
    %v2516 = vld [vmem:[%s2488 + $0xd8] sm:$0xff]
    %v2517 = vld [vmem:[%s2488 + $0xe0] sm:$0xff]
    %v2518 = vld [vmem:[%s2488 + $0xe8] sm:$0xff]
    %v2519 = vld [vmem:[%s2488 + $0xf0] sm:$0xff]
    %v2520 = vld [vmem:[%s2488 + $0xf8] sm:$0xff]
    %v2542 = vunpack.c.l.b16 %v2486
    %v2543 = vunpack.c.h.b16 %v2486
    %v2544 = vunpack.c.l.b16 %v2435
    %v2545 = vunpack.c.h.b16 %v2435
    %v2546 = vunpack.c.l.b16 %v2436
    %v2547 = vunpack.c.h.b16 %v2436
    %v2548 = vunpack.c.l.b16 %v2437
    %v2549 = vunpack.c.h.b16 %v2437
    %v2550 = vunpack.c.l.b16 %v2438
    %v2551 = vunpack.c.h.b16 %v2438
    %v2552 = vunpack.c.l.b16 %v2439
    %v2553 = vunpack.c.h.b16 %v2439
    %v2554 = vunpack.c.l.b16 %v2440
    %v2555 = vunpack.c.h.b16 %v2440
    %v2556 = vunpack.c.l.b16 %v2441
    %v2557 = vunpack.c.h.b16 %v2441
    %v2558 = vunpack.c.l.b16 %v2442
    %v2559 = vunpack.c.h.b16 %v2442
    %v2560 = vunpack.c.l.b16 %v2443
    %v2561 = vunpack.c.h.b16 %v2443
    %v2562 = vunpack.c.l.b16 %v2444
    %v2563 = vunpack.c.h.b16 %v2444
    %v2564 = vunpack.c.l.b16 %v2445
    %v2565 = vunpack.c.h.b16 %v2445
    %v2566 = vunpack.c.l.b16 %v2446
    %v2567 = vunpack.c.h.b16 %v2446
    %v2568 = vunpack.c.l.b16 %v2447
    %v2569 = vunpack.c.h.b16 %v2447
    %v2570 = vunpack.c.l.b16 %v2448
    %v2571 = vunpack.c.h.b16 %v2448
    %v2572 = vunpack.c.l.b16 %v2449
    %v2573 = vunpack.c.h.b16 %v2449
    %v2574 = vunpack.c.l.b16 %v2450
    %v2575 = vunpack.c.h.b16 %v2450
    %v2576 = vunpack.c.l.b16 %v2451
    %v2577 = vunpack.c.h.b16 %v2451
    %v2578 = vunpack.c.l.b16 %v2452
    %v2579 = vunpack.c.h.b16 %v2452
    %v2580 = vunpack.c.l.b16 %v2453
    %v2581 = vunpack.c.h.b16 %v2453
    %v2582 = vunpack.c.l.b16 %v2487
    %v2583 = vunpack.c.h.b16 %v2487
    %v2584 = vpack.c.b16 %v2544, %v2542
    %v2585 = vpack.c.b16 %v2545, %v2543
    %v2586 = vpack.c.b16 %v2548, %v2546
    %v2587 = vpack.c.b16 %v2549, %v2547
    %v2588 = vpack.c.b16 %v2552, %v2550
    %v2589 = vpack.c.b16 %v2553, %v2551
    %v2590 = vpack.c.b16 %v2556, %v2554
    %v2591 = vpack.c.b16 %v2557, %v2555
    %v2592 = vpack.c.b16 %v2560, %v2558
    %v2593 = vpack.c.b16 %v2561, %v2559
    %v2594 = vpack.c.b16 %v2564, %v2562
    %v2595 = vpack.c.b16 %v2565, %v2563
    %v2596 = vpack.c.b16 %v2568, %v2566
    %v2597 = vpack.c.b16 %v2569, %v2567
    %v2598 = vpack.c.b16 %v2572, %v2570
    %v2599 = vpack.c.b16 %v2573, %v2571
    %v2600 = vpack.c.b16 %v2576, %v2574
    %v2601 = vpack.c.b16 %v2577, %v2575
    %v2602 = vpack.c.b16 %v2580, %v2578
    %v2603 = vpack.c.b16 %v2581, %v2579
    %v2604 = vpack.c.b16 %v2582, %v2582
    %v2605 = vpack.c.b16 %v2583, %v2583
    %v2606 = vrot.slane %v2584, 1
    %v2607 = vrot.slane %v2586, 1
    %v2608 = vsel %vm1092, %v2606, %v2607
    %v2609 = vrot.slane %v2585, 1
    %v2610 = vrot.slane %v2587, 1
    %v2611 = vsel %vm1092, %v2609, %v2610
    %v2612 = vrot.slane %v2588, 1
    %v2613 = vsel %vm1092, %v2607, %v2612
    %v2614 = vrot.slane %v2589, 1
    %v2615 = vsel %vm1092, %v2610, %v2614
    %v2616 = vrot.slane %v2590, 1
    %v2617 = vsel %vm1092, %v2612, %v2616
    %v2618 = vrot.slane %v2591, 1
    %v2619 = vsel %vm1092, %v2614, %v2618
    %v2620 = vrot.slane %v2592, 1
    %v2621 = vsel %vm1092, %v2616, %v2620
    %v2622 = vrot.slane %v2593, 1
    %v2623 = vsel %vm1092, %v2618, %v2622
    %v2624 = vrot.slane %v2594, 1
    %v2625 = vsel %vm1092, %v2620, %v2624
    %v2626 = vrot.slane %v2595, 1
    %v2627 = vsel %vm1092, %v2622, %v2626
    %v2628 = vrot.slane %v2596, 1
    %v2629 = vsel %vm1092, %v2624, %v2628
    %v2630 = vrot.slane %v2597, 1
    %v2631 = vsel %vm1092, %v2626, %v2630
    %v2632 = vrot.slane %v2598, 1
    %v2633 = vsel %vm1092, %v2628, %v2632
    %v2634 = vrot.slane %v2599, 1
    %v2635 = vsel %vm1092, %v2630, %v2634
    %v2636 = vrot.slane %v2600, 1
    %v2637 = vsel %vm1092, %v2632, %v2636
    %v2638 = vrot.slane %v2601, 1
    %v2639 = vsel %vm1092, %v2634, %v2638
    %v2640 = vrot.slane %v2602, 1
    %v2641 = vsel %vm1092, %v2636, %v2640
    %v2642 = vrot.slane %v2603, 1
    %v2643 = vsel %vm1092, %v2638, %v2642
    %v2644 = vrot.slane %v2604, 1
    %v2645 = vsel %vm1092, %v2640, %v2644
    %v2646 = vrot.slane %v2605, 1
    %v2647 = vsel %vm1092, %v2642, %v2646
    %v2700 = vunpack.c.l.b16 %v2489
    %v2701 = vunpack.c.h.b16 %v2489
    %v2702 = vunpack.c.l.b16 %v2490
    %v2703 = vunpack.c.h.b16 %v2490
    %v2704 = vunpack.c.l.b16 %v2491
    %v2705 = vunpack.c.h.b16 %v2491
    %v2706 = vunpack.c.l.b16 %v2492
    %v2707 = vunpack.c.h.b16 %v2492
    %v2708 = vunpack.c.l.b16 %v2493
    %v2709 = vunpack.c.h.b16 %v2493
    %v2710 = vunpack.c.l.b16 %v2494
    %v2711 = vunpack.c.h.b16 %v2494
    %v2712 = vunpack.c.l.b16 %v2495
    %v2713 = vunpack.c.h.b16 %v2495
    %v2714 = vunpack.c.l.b16 %v2496
    %v2715 = vunpack.c.h.b16 %v2496
    %v2716 = vunpack.c.l.b16 %v2497
    %v2717 = vunpack.c.h.b16 %v2497
    %v2718 = vunpack.c.l.b16 %v2498
    %v2719 = vunpack.c.h.b16 %v2498
    %v2720 = vunpack.c.l.b16 %v2499
    %v2721 = vunpack.c.h.b16 %v2499
    %v2722 = vunpack.c.l.b16 %v2500
    %v2723 = vunpack.c.h.b16 %v2500
    %v2724 = vunpack.c.l.b16 %v2501
    %v2725 = vunpack.c.h.b16 %v2501
    %v2726 = vunpack.c.l.b16 %v2502
    %v2727 = vunpack.c.h.b16 %v2502
    %v2728 = vunpack.c.l.b16 %v2503
    %v2729 = vunpack.c.h.b16 %v2503
    %v2730 = vunpack.c.l.b16 %v2504
    %v2731 = vunpack.c.h.b16 %v2504
    %v2732 = vunpack.c.l.b16 %v2505
    %v2733 = vunpack.c.h.b16 %v2505
    %v2734 = vunpack.c.l.b16 %v2506
    %v2735 = vunpack.c.h.b16 %v2506
    %v2736 = vunpack.c.l.b16 %v2507
    %v2737 = vunpack.c.h.b16 %v2507
    %v2738 = vunpack.c.l.b16 %v2508
    %v2739 = vunpack.c.h.b16 %v2508
    %v2740 = vunpack.c.l.b16 %v2509
    %v2741 = vunpack.c.h.b16 %v2509
    %v2742 = vunpack.c.l.b16 %v2510
    %v2743 = vunpack.c.h.b16 %v2510
    %v2744 = vunpack.c.l.b16 %v2511
    %v2745 = vunpack.c.h.b16 %v2511
    %v2746 = vunpack.c.l.b16 %v2512
    %v2747 = vunpack.c.h.b16 %v2512
    %v2748 = vunpack.c.l.b16 %v2513
    %v2749 = vunpack.c.h.b16 %v2513
    %v2750 = vunpack.c.l.b16 %v2514
    %v2751 = vunpack.c.h.b16 %v2514
    %v2752 = vunpack.c.l.b16 %v2515
    %v2753 = vunpack.c.h.b16 %v2515
    %v2754 = vunpack.c.l.b16 %v2516
    %v2755 = vunpack.c.h.b16 %v2516
    %v2756 = vunpack.c.l.b16 %v2517
    %v2757 = vunpack.c.h.b16 %v2517
    %v2758 = vunpack.c.l.b16 %v2518
    %v2759 = vunpack.c.h.b16 %v2518
    %v2760 = vunpack.c.l.b16 %v2519
    %v2761 = vunpack.c.h.b16 %v2519
    %v2762 = vunpack.c.l.b16 %v2520
    %v2763 = vunpack.c.h.b16 %v2520
    %v2764 = vpack.c.b16 %v2702, %v2700
    %v2765 = vpack.c.b16 %v2703, %v2701
    %v2766 = vpack.c.b16 %v2706, %v2704
    %v2767 = vpack.c.b16 %v2707, %v2705
    %v2768 = vpack.c.b16 %v2710, %v2708
    %v2769 = vpack.c.b16 %v2711, %v2709
    %v2770 = vpack.c.b16 %v2714, %v2712
    %v2771 = vpack.c.b16 %v2715, %v2713
    %v2772 = vpack.c.b16 %v2718, %v2716
    %v2773 = vpack.c.b16 %v2719, %v2717
    %v2774 = vpack.c.b16 %v2722, %v2720
    %v2775 = vpack.c.b16 %v2723, %v2721
    %v2776 = vpack.c.b16 %v2726, %v2724
    %v2777 = vpack.c.b16 %v2727, %v2725
    %v2778 = vpack.c.b16 %v2730, %v2728
    %v2779 = vpack.c.b16 %v2731, %v2729
    %v2780 = vpack.c.b16 %v2734, %v2732
    %v2781 = vpack.c.b16 %v2735, %v2733
    %v2782 = vpack.c.b16 %v2738, %v2736
    %v2783 = vpack.c.b16 %v2739, %v2737
    %v2784 = vpack.c.b16 %v2742, %v2740
    %v2785 = vpack.c.b16 %v2743, %v2741
    %v2786 = vpack.c.b16 %v2746, %v2744
    %v2787 = vpack.c.b16 %v2747, %v2745
    %v2788 = vpack.c.b16 %v2750, %v2748
    %v2789 = vpack.c.b16 %v2751, %v2749
    %v2790 = vpack.c.b16 %v2754, %v2752
    %v2791 = vpack.c.b16 %v2755, %v2753
    %v2792 = vpack.c.b16 %v2758, %v2756
    %v2793 = vpack.c.b16 %v2759, %v2757
    %v2794 = vpack.c.b16 %v2762, %v2760
    %v2795 = vpack.c.b16 %v2763, %v2761
    %2828 = vmatprep.subr.bf16.mxu0 %v2765
    %2829 = vmatpush1.bf16.msra.mxu0 %v2764
    %2830 = vmatprep.subr.bf16.mxu0 %v2767
    %2831 = vmatpush1.bf16.msra.mxu0 %v2766
    %2832 = vmatprep.subr.bf16.mxu0 %v2769
    %2833 = vmatpush1.bf16.msra.mxu0 %v2768
    %2834 = vmatprep.subr.bf16.mxu0 %v2771
    %2835 = vmatpush1.bf16.msra.mxu0 %v2770
    %2836 = vmatprep.subr.bf16.mxu0 %v2773
    %2837 = vmatpush1.bf16.msra.mxu0 %v2772
    %2838 = vmatprep.subr.bf16.mxu0 %v2775
    %2839 = vmatpush1.bf16.msra.mxu0 %v2774
    %2840 = vmatprep.subr.bf16.mxu0 %v2777
    %2841 = vmatpush1.bf16.msra.mxu0 %v2776
    %2842 = vmatprep.subr.bf16.mxu0 %v2779
    %2843 = vmatpush1.bf16.msra.mxu0 %v2778
    %2844 = vmatprep.subr.bf16.mxu0 %v2781
    %2845 = vmatpush1.bf16.msra.mxu0 %v2780
    %2846 = vmatprep.subr.bf16.mxu0 %v2783
    %2847 = vmatpush1.bf16.msra.mxu0 %v2782
    %2848 = vmatprep.subr.bf16.mxu0 %v2785
    %2849 = vmatpush1.bf16.msra.mxu0 %v2784
    %2850 = vmatprep.subr.bf16.mxu0 %v2787
    %2851 = vmatpush1.bf16.msra.mxu0 %v2786
    %2852 = vmatprep.subr.bf16.mxu0 %v2789
    %2853 = vmatpush1.bf16.msra.mxu0 %v2788
    %2854 = vmatprep.subr.bf16.mxu0 %v2791
    %2855 = vmatpush1.bf16.msra.mxu0 %v2790
    %2856 = vmatprep.subr.bf16.mxu0 %v2793
    %2857 = vmatpush1.bf16.msra.mxu0 %v2792
    %2858 = vmatprep.subr.bf16.mxu0 %v2795
    %2859 = vmatpush1.bf16.msra.mxu0 %v2794
    %2860 = vmatprep.mubr.bf16.mxu0 %v2611
    %2861 = vmatmul.mubr.bf16.gmra.mrb[0].mxu0 %v2608
    %v2862 = vpop.f32.mrb[0].mxu0
    %v2863 = vadd.f32 0.0, %v2862
    %v2864 = vpop.f32.mrb[0].mxu0
    %v2865 = vadd.f32 0.0, %v2864
    %v2866 = vpop.f32.mrb[0].mxu0
    %v2867 = vadd.f32 0.0, %v2866
    %v2868 = vpop.f32.mrb[0].mxu0
    %v2869 = vadd.f32 0.0, %v2868
    %2870 = vmatprep.mubr.bf16.mxu0 %v2615
    %2871 = vmatmul.mubr.bf16.gmra.mrb[0].mxu0 %v2613
    %v2872 = vpop.f32.mrb[0].mxu0
    %v2873 = vadd.f32 0.0, %v2872
    %v2874 = vpop.f32.mrb[0].mxu0
    %v2875 = vadd.f32 0.0, %v2874
    %v2876 = vpop.f32.mrb[0].mxu0
    %v2877 = vadd.f32 0.0, %v2876
    %v2878 = vpop.f32.mrb[0].mxu0
    %v2879 = vadd.f32 0.0, %v2878
    %2880 = vmatprep.mubr.bf16.mxu0 %v2619
    %2881 = vmatmul.mubr.bf16.gmra.mrb[0].mxu0 %v2617
    %v2882 = vpop.f32.mrb[0].mxu0
    %v2883 = vadd.f32 0.0, %v2882
    %v2884 = vpop.f32.mrb[0].mxu0
    %v2885 = vadd.f32 0.0, %v2884
    %v2886 = vpop.f32.mrb[0].mxu0
    %v2887 = vadd.f32 0.0, %v2886
    %v2888 = vpop.f32.mrb[0].mxu0
    %v2889 = vadd.f32 0.0, %v2888
    %2890 = vmatprep.mubr.bf16.mxu0 %v2623
    %2891 = vmatmul.mubr.bf16.gmra.mrb[0].mxu0 %v2621
    %v2892 = vpop.f32.mrb[0].mxu0
    %v2893 = vadd.f32 0.0, %v2892
    %v2894 = vpop.f32.mrb[0].mxu0
    %v2895 = vadd.f32 0.0, %v2894
    %v2896 = vpop.f32.mrb[0].mxu0
    %v2897 = vadd.f32 0.0, %v2896
    %v2898 = vpop.f32.mrb[0].mxu0
    %v2899 = vadd.f32 0.0, %v2898
    %2900 = vmatprep.mubr.bf16.mxu0 %v2627
    %2901 = vmatmul.mubr.bf16.gmra.mrb[0].mxu0 %v2625
    %v2902 = vpop.f32.mrb[0].mxu0
    %v2903 = vadd.f32 0.0, %v2902
    %v2904 = vpop.f32.mrb[0].mxu0
    %v2905 = vadd.f32 0.0, %v2904
    %v2906 = vpop.f32.mrb[0].mxu0
    %v2907 = vadd.f32 0.0, %v2906
    %v2908 = vpop.f32.mrb[0].mxu0
    %v2909 = vadd.f32 0.0, %v2908
    %2910 = vmatprep.mubr.bf16.mxu0 %v2631
    %2911 = vmatmul.mubr.bf16.gmra.mrb[0].mxu0 %v2629
    %v2912 = vpop.f32.mrb[0].mxu0
    %v2913 = vadd.f32 0.0, %v2912
    %v2914 = vpop.f32.mrb[0].mxu0
    %v2915 = vadd.f32 0.0, %v2914
    %v2916 = vpop.f32.mrb[0].mxu0
    %v2917 = vadd.f32 0.0, %v2916
    %v2918 = vpop.f32.mrb[0].mxu0
    %v2919 = vadd.f32 0.0, %v2918
    %2920 = vmatprep.mubr.bf16.mxu0 %v2635
    %2921 = vmatmul.mubr.bf16.gmra.mrb[0].mxu0 %v2633
    %v2922 = vpop.f32.mrb[0].mxu0
    %v2923 = vadd.f32 0.0, %v2922
    %v2924 = vpop.f32.mrb[0].mxu0
    %v2925 = vadd.f32 0.0, %v2924
    %v2926 = vpop.f32.mrb[0].mxu0
    %v2927 = vadd.f32 0.0, %v2926
    %v2928 = vpop.f32.mrb[0].mxu0
    %v2929 = vadd.f32 0.0, %v2928
    %2930 = vmatprep.mubr.bf16.mxu0 %v2639
    %2931 = vmatmul.mubr.bf16.gmra.mrb[0].mxu0 %v2637
    %v2932 = vpop.f32.mrb[0].mxu0
    %v2933 = vadd.f32 0.0, %v2932
    %v2934 = vpop.f32.mrb[0].mxu0
    %v2935 = vadd.f32 0.0, %v2934
    %v2936 = vpop.f32.mrb[0].mxu0
    %v2937 = vadd.f32 0.0, %v2936
    %v2938 = vpop.f32.mrb[0].mxu0
    %v2939 = vadd.f32 0.0, %v2938
    %2940 = vmatprep.mubr.bf16.mxu0 %v2643
    %2941 = vmatmul.mubr.bf16.gmra.mrb[0].mxu0 %v2641
    %v2942 = vpop.f32.mrb[0].mxu0
    %v2943 = vadd.f32 0.0, %v2942
    %v2944 = vpop.f32.mrb[0].mxu0
    %v2945 = vadd.f32 0.0, %v2944
    %v2946 = vpop.f32.mrb[0].mxu0
    %v2947 = vadd.f32 0.0, %v2946
    %v2948 = vpop.f32.mrb[0].mxu0
    %v2949 = vadd.f32 0.0, %v2948
    %2950 = vmatprep.mubr.bf16.mxu0 %v2647
    %2951 = vmatmul.mubr.bf16.gmra.mrb[0].mxu0 %v2645
    %v2952 = vpop.f32.mrb[0].mxu0
    %v2953 = vadd.f32 0.0, %v2952
    %v2954 = vpop.f32.mrb[0].mxu0
    %v2955 = vadd.f32 0.0, %v2954
    %v2956 = vpop.f32.mrb[0].mxu0
    %v2957 = vadd.f32 0.0, %v2956
    %v2958 = vpop.f32.mrb[0].mxu0
    %v2959 = vadd.f32 0.0, %v2958
    %2960 = vdwg.mxu0
    %v2962 = vunpack.c.l.b16 %v2434
    %v2963 = vunpack.c.h.b16 %v2434
    %v2964 = vpack.c.b16 %v2544, %v2962
    %v2965 = vpack.c.b16 %v2545, %v2963
    %v3018 = vunpack.c.l.b16 %v2454
    %v3019 = vunpack.c.h.b16 %v2454
    %v3020 = vunpack.c.l.b16 %v2455
    %v3021 = vunpack.c.h.b16 %v2455
    %v3022 = vunpack.c.l.b16 %v2456
    %v3023 = vunpack.c.h.b16 %v2456
    %v3024 = vunpack.c.l.b16 %v2457
    %v3025 = vunpack.c.h.b16 %v2457
    %v3026 = vunpack.c.l.b16 %v2458
    %v3027 = vunpack.c.h.b16 %v2458
    %v3028 = vunpack.c.l.b16 %v2459
    %v3029 = vunpack.c.h.b16 %v2459
    %v3030 = vunpack.c.l.b16 %v2460
    %v3031 = vunpack.c.h.b16 %v2460
    %v3032 = vunpack.c.l.b16 %v2461
    %v3033 = vunpack.c.h.b16 %v2461
    %v3034 = vunpack.c.l.b16 %v2462
    %v3035 = vunpack.c.h.b16 %v2462
    %v3036 = vunpack.c.l.b16 %v2463
    %v3037 = vunpack.c.h.b16 %v2463
    %v3038 = vunpack.c.l.b16 %v2464
    %v3039 = vunpack.c.h.b16 %v2464
    %v3040 = vunpack.c.l.b16 %v2465
    %v3041 = vunpack.c.h.b16 %v2465
    %v3042 = vunpack.c.l.b16 %v2466
    %v3043 = vunpack.c.h.b16 %v2466
    %v3044 = vunpack.c.l.b16 %v2467
    %v3045 = vunpack.c.h.b16 %v2467
    %v3046 = vunpack.c.l.b16 %v2468
    %v3047 = vunpack.c.h.b16 %v2468
    %v3048 = vunpack.c.l.b16 %v2469
    %v3049 = vunpack.c.h.b16 %v2469
    %v3050 = vunpack.c.l.b16 %v2470
    %v3051 = vunpack.c.h.b16 %v2470
    %v3052 = vunpack.c.l.b16 %v2471
    %v3053 = vunpack.c.h.b16 %v2471
    %v3054 = vunpack.c.l.b16 %v2472
    %v3055 = vunpack.c.h.b16 %v2472
    %v3056 = vunpack.c.l.b16 %v2473
    %v3057 = vunpack.c.h.b16 %v2473
    %v3058 = vunpack.c.l.b16 %v2474
    %v3059 = vunpack.c.h.b16 %v2474
    %v3060 = vunpack.c.l.b16 %v2475
    %v3061 = vunpack.c.h.b16 %v2475
    %v3062 = vunpack.c.l.b16 %v2476
    %v3063 = vunpack.c.h.b16 %v2476
    %v3064 = vunpack.c.l.b16 %v2477
    %v3065 = vunpack.c.h.b16 %v2477
    %v3066 = vunpack.c.l.b16 %v2478
    %v3067 = vunpack.c.h.b16 %v2478
    %v3068 = vunpack.c.l.b16 %v2479
    %v3069 = vunpack.c.h.b16 %v2479
    %v3070 = vunpack.c.l.b16 %v2480
    %v3071 = vunpack.c.h.b16 %v2480
    %v3072 = vunpack.c.l.b16 %v2481
    %v3073 = vunpack.c.h.b16 %v2481
    %v3074 = vunpack.c.l.b16 %v2482
    %v3075 = vunpack.c.h.b16 %v2482
    %v3076 = vunpack.c.l.b16 %v2483
    %v3077 = vunpack.c.h.b16 %v2483
    %v3078 = vunpack.c.l.b16 %v2484
    %v3079 = vunpack.c.h.b16 %v2484
    %v3080 = vunpack.c.l.b16 %v2485
    %v3081 = vunpack.c.h.b16 %v2485
    %v3082 = vpack.c.b16 %v3020, %v3018
    %v3083 = vpack.c.b16 %v3021, %v3019
    %v3084 = vpack.c.b16 %v3024, %v3022
    %v3085 = vpack.c.b16 %v3025, %v3023
    %v3086 = vpack.c.b16 %v3028, %v3026
    %v3087 = vpack.c.b16 %v3029, %v3027
    %v3088 = vpack.c.b16 %v3032, %v3030
    %v3089 = vpack.c.b16 %v3033, %v3031
    %v3090 = vpack.c.b16 %v3036, %v3034
    %v3091 = vpack.c.b16 %v3037, %v3035
    %v3092 = vpack.c.b16 %v3040, %v3038
    %v3093 = vpack.c.b16 %v3041, %v3039
    %v3094 = vpack.c.b16 %v3044, %v3042
    %v3095 = vpack.c.b16 %v3045, %v3043
    %v3096 = vpack.c.b16 %v3048, %v3046
    %v3097 = vpack.c.b16 %v3049, %v3047
    %v3098 = vpack.c.b16 %v3052, %v3050
    %v3099 = vpack.c.b16 %v3053, %v3051
    %v3100 = vpack.c.b16 %v3056, %v3054
    %v3101 = vpack.c.b16 %v3057, %v3055
    %v3102 = vpack.c.b16 %v3060, %v3058
    %v3103 = vpack.c.b16 %v3061, %v3059
    %v3104 = vpack.c.b16 %v3064, %v3062
    %v3105 = vpack.c.b16 %v3065, %v3063
    %v3106 = vpack.c.b16 %v3068, %v3066
    %v3107 = vpack.c.b16 %v3069, %v3067
    %v3108 = vpack.c.b16 %v3072, %v3070
    %v3109 = vpack.c.b16 %v3073, %v3071
    %v3110 = vpack.c.b16 %v3076, %v3074
    %v3111 = vpack.c.b16 %v3077, %v3075
    %v3112 = vpack.c.b16 %v3080, %v3078
    %v3113 = vpack.c.b16 %v3081, %v3079
    %3146 = vmatprep.subr.bf16.mxu0 %v3083
    %3147 = vmatpush1.bf16.msra.mxu0 %v3082
    %3148 = vmatprep.subr.bf16.mxu0 %v3085
    %3149 = vmatpush1.bf16.msra.mxu0 %v3084
    %3150 = vmatprep.subr.bf16.mxu0 %v3087
    %3151 = vmatpush1.bf16.msra.mxu0 %v3086
    %3152 = vmatprep.subr.bf16.mxu0 %v3089
    %3153 = vmatpush1.bf16.msra.mxu0 %v3088
    %3154 = vmatprep.subr.bf16.mxu0 %v3091
    %3155 = vmatpush1.bf16.msra.mxu0 %v3090
    %3156 = vmatprep.subr.bf16.mxu0 %v3093
    %3157 = vmatpush1.bf16.msra.mxu0 %v3092
    %3158 = vmatprep.subr.bf16.mxu0 %v3095
    %3159 = vmatpush1.bf16.msra.mxu0 %v3094
    %3160 = vmatprep.subr.bf16.mxu0 %v3097
    %3161 = vmatpush1.bf16.msra.mxu0 %v3096
    %3162 = vmatprep.subr.bf16.mxu0 %v3099
    %3163 = vmatpush1.bf16.msra.mxu0 %v3098
    %3164 = vmatprep.subr.bf16.mxu0 %v3101
    %3165 = vmatpush1.bf16.msra.mxu0 %v3100
    %3166 = vmatprep.subr.bf16.mxu0 %v3103
    %3167 = vmatpush1.bf16.msra.mxu0 %v3102
    %3168 = vmatprep.subr.bf16.mxu0 %v3105
    %3169 = vmatpush1.bf16.msra.mxu0 %v3104
    %3170 = vmatprep.subr.bf16.mxu0 %v3107
    %3171 = vmatpush1.bf16.msra.mxu0 %v3106
    %3172 = vmatprep.subr.bf16.mxu0 %v3109
    %3173 = vmatpush1.bf16.msra.mxu0 %v3108
    %3174 = vmatprep.subr.bf16.mxu0 %v3111
    %3175 = vmatpush1.bf16.msra.mxu0 %v3110
    %3176 = vmatprep.subr.bf16.mxu0 %v3113
    %3177 = vmatpush1.bf16.msra.mxu0 %v3112
    %3178 = vmatprep.mubr.bf16.mxu0 %v2965
    %3179 = vmatmul.mubr.bf16.gmra.mrb[0].mxu0 %v2964
    %v3180 = vpop.f32.mrb[0].mxu0
    %v3181 = vadd.f32 %v2863, %v3180
    %v3182 = vpop.f32.mrb[0].mxu0
    %v3183 = vadd.f32 %v2865, %v3182
    %v3184 = vpop.f32.mrb[0].mxu0
    %v3185 = vadd.f32 %v2867, %v3184
    %v3186 = vpop.f32.mrb[0].mxu0
    %v3187 = vadd.f32 %v2869, %v3186
    %3188 = vmatprep.mubr.bf16.mxu0 %v2587
    %3189 = vmatmul.mubr.bf16.gmra.mrb[0].mxu0 %v2586
    %v3190 = vpop.f32.mrb[0].mxu0
    %v3191 = vadd.f32 %v2873, %v3190
    %v3192 = vpop.f32.mrb[0].mxu0
    %v3193 = vadd.f32 %v2875, %v3192
    %v3194 = vpop.f32.mrb[0].mxu0
    %v3195 = vadd.f32 %v2877, %v3194
    %v3196 = vpop.f32.mrb[0].mxu0
    %v3197 = vadd.f32 %v2879, %v3196
    %3198 = vmatprep.mubr.bf16.mxu0 %v2589
    %3199 = vmatmul.mubr.bf16.gmra.mrb[0].mxu0 %v2588
    %v3200 = vpop.f32.mrb[0].mxu0
    %v3201 = vadd.f32 %v2883, %v3200
    %v3202 = vpop.f32.mrb[0].mxu0
    %v3203 = vadd.f32 %v2885, %v3202
    %v3204 = vpop.f32.mrb[0].mxu0
    %v3205 = vadd.f32 %v2887, %v3204
    %v3206 = vpop.f32.mrb[0].mxu0
    %v3207 = vadd.f32 %v2889, %v3206
    %3208 = vmatprep.mubr.bf16.mxu0 %v2591
    %3209 = vmatmul.mubr.bf16.gmra.mrb[0].mxu0 %v2590
    %v3210 = vpop.f32.mrb[0].mxu0
    %v3211 = vadd.f32 %v2893, %v3210
    %v3212 = vpop.f32.mrb[0].mxu0
    %v3213 = vadd.f32 %v2895, %v3212
    %v3214 = vpop.f32.mrb[0].mxu0
    %v3215 = vadd.f32 %v2897, %v3214
    %v3216 = vpop.f32.mrb[0].mxu0
    %v3217 = vadd.f32 %v2899, %v3216
    %3218 = vmatprep.mubr.bf16.mxu0 %v2593
    %3219 = vmatmul.mubr.bf16.gmra.mrb[0].mxu0 %v2592
    %v3220 = vpop.f32.mrb[0].mxu0
    %v3221 = vadd.f32 %v2903, %v3220
    %v3222 = vpop.f32.mrb[0].mxu0
    %v3223 = vadd.f32 %v2905, %v3222
    %v3224 = vpop.f32.mrb[0].mxu0
    %v3225 = vadd.f32 %v2907, %v3224
    %v3226 = vpop.f32.mrb[0].mxu0
    %v3227 = vadd.f32 %v2909, %v3226
    %3228 = vmatprep.mubr.bf16.mxu0 %v2595
    %3229 = vmatmul.mubr.bf16.gmra.mrb[0].mxu0 %v2594
    %v3230 = vpop.f32.mrb[0].mxu0
    %v3231 = vadd.f32 %v2913, %v3230
    %v3232 = vpop.f32.mrb[0].mxu0
    %v3233 = vadd.f32 %v2915, %v3232
    %v3234 = vpop.f32.mrb[0].mxu0
    %v3235 = vadd.f32 %v2917, %v3234
    %v3236 = vpop.f32.mrb[0].mxu0
    %v3237 = vadd.f32 %v2919, %v3236
    %3238 = vmatprep.mubr.bf16.mxu0 %v2597
    %3239 = vmatmul.mubr.bf16.gmra.mrb[0].mxu0 %v2596
    %v3240 = vpop.f32.mrb[0].mxu0
    %v3241 = vadd.f32 %v2923, %v3240
    %v3242 = vpop.f32.mrb[0].mxu0
    %v3243 = vadd.f32 %v2925, %v3242
    %v3244 = vpop.f32.mrb[0].mxu0
    %v3245 = vadd.f32 %v2927, %v3244
    %v3246 = vpop.f32.mrb[0].mxu0
    %v3247 = vadd.f32 %v2929, %v3246
    %3248 = vmatprep.mubr.bf16.mxu0 %v2599
    %3249 = vmatmul.mubr.bf16.gmra.mrb[0].mxu0 %v2598
    %v3250 = vpop.f32.mrb[0].mxu0
    %v3251 = vadd.f32 %v2933, %v3250
    %v3252 = vpop.f32.mrb[0].mxu0
    %v3253 = vadd.f32 %v2935, %v3252
    %v3254 = vpop.f32.mrb[0].mxu0
    %v3255 = vadd.f32 %v2937, %v3254
    %v3256 = vpop.f32.mrb[0].mxu0
    %v3257 = vadd.f32 %v2939, %v3256
    %3258 = vmatprep.mubr.bf16.mxu0 %v2601
    %3259 = vmatmul.mubr.bf16.gmra.mrb[0].mxu0 %v2600
    %v3260 = vpop.f32.mrb[0].mxu0
    %v3261 = vadd.f32 %v2943, %v3260
    %v3262 = vpop.f32.mrb[0].mxu0
    %v3263 = vadd.f32 %v2945, %v3262
    %v3264 = vpop.f32.mrb[0].mxu0
    %v3265 = vadd.f32 %v2947, %v3264
    %v3266 = vpop.f32.mrb[0].mxu0
    %v3267 = vadd.f32 %v2949, %v3266
    %3268 = vmatprep.mubr.bf16.mxu0 %v2603
    %3269 = vmatmul.mubr.bf16.gmra.mrb[0].mxu0 %v2602
    %v3270 = vpop.f32.mrb[0].mxu0
    %v3271 = vadd.f32 %v2953, %v3270
    %v3272 = vpop.f32.mrb[0].mxu0
    %v3273 = vadd.f32 %v2955, %v3272
    %v3274 = vpop.f32.mrb[0].mxu0
    %v3275 = vadd.f32 %v2957, %v3274
    %v3276 = vpop.f32.mrb[0].mxu0
    %v3277 = vadd.f32 %v2959, %v3276
    %3278 = vdwg.mxu0
    %v3279 = vld [vmem:[#allocation2] sm:$0xcc]
    %v3280 = vld [vmem:[#allocation2 + $0xa0] sm:$0x33]
    %s3281 = scalar_lea.vmem %s2, 512
    %v3282 = vld [vmem:[%s3281] sm:$0xff]
    %v3283 = vld [vmem:[%s3281 + $0x8] sm:$0xff]
    %v3284 = vld [vmem:[%s3281 + $0x10] sm:$0xff]
    %v3285 = vld [vmem:[%s3281 + $0x18] sm:$0xff]
    %v3286 = vld [vmem:[%s3281 + $0x20] sm:$0xff]
    %v3287 = vld [vmem:[%s3281 + $0x28] sm:$0xff]
    %v3288 = vld [vmem:[%s3281 + $0x30] sm:$0xff]
    %v3289 = vld [vmem:[%s3281 + $0x38] sm:$0xff]
    %v3290 = vld [vmem:[%s3281 + $0x40] sm:$0xff]
    %v3291 = vld [vmem:[%s3281 + $0x48] sm:$0xff]
    %v3292 = vld [vmem:[%s3281 + $0x50] sm:$0xff]
    %v3293 = vld [vmem:[%s3281 + $0x58] sm:$0xff]
    %v3294 = vld [vmem:[%s3281 + $0x60] sm:$0xff]
    %v3295 = vld [vmem:[%s3281 + $0x68] sm:$0xff]
    %v3296 = vld [vmem:[%s3281 + $0x70] sm:$0xff]
    %v3297 = vld [vmem:[%s3281 + $0x78] sm:$0xff]
    %v3298 = vld [vmem:[%s3281 + $0x80] sm:$0xff]
    %v3299 = vld [vmem:[%s3281 + $0x88] sm:$0xff]
    %v3300 = vld [vmem:[%s3281 + $0x90] sm:$0xff]
    %v3301 = vld [vmem:[%s3281 + $0x98] sm:$0xff]
    %v3302 = vld [vmem:[%s3281 + $0xa0] sm:$0xff]
    %v3303 = vld [vmem:[%s3281 + $0xa8] sm:$0xff]
    %v3304 = vld [vmem:[%s3281 + $0xb0] sm:$0xff]
    %v3305 = vld [vmem:[%s3281 + $0xb8] sm:$0xff]
    %v3306 = vld [vmem:[%s3281 + $0xc0] sm:$0xff]
    %v3307 = vld [vmem:[%s3281 + $0xc8] sm:$0xff]
    %v3308 = vld [vmem:[%s3281 + $0xd0] sm:$0xff]
    %v3309 = vld [vmem:[%s3281 + $0xd8] sm:$0xff]
    %v3310 = vld [vmem:[%s3281 + $0xe0] sm:$0xff]
    %v3311 = vld [vmem:[%s3281 + $0xe8] sm:$0xff]
    %v3312 = vld [vmem:[%s3281 + $0xf0] sm:$0xff]
    %v3313 = vld [vmem:[%s3281 + $0xf8] sm:$0xff]
    %v3316 = vunpack.c.l.b16 %v3279
    %v3317 = vunpack.c.h.b16 %v3279
    %v3318 = vunpack.c.l.b16 %v3280
    %v3319 = vunpack.c.h.b16 %v3280
    %v3320 = vpack.c.b16 %v2544, %v3316
    %v3321 = vpack.c.b16 %v2545, %v3317
    %v3322 = vpack.c.b16 %v3318, %v3318
    %v3323 = vpack.c.b16 %v3319, %v3319
    %vm3324 = vcmask 1045504
    %v3325 = vrot.slane %v3320, 2
    %v3326 = vrot.slane %v2586, 2
    %v3327 = vsel %vm3324, %v3325, %v3326
    %v3328 = vrot.slane %v3321, 2
    %v3329 = vrot.slane %v2587, 2
    %v3330 = vsel %vm3324, %v3328, %v3329
    %v3331 = vrot.slane %v2588, 2
    %v3332 = vsel %vm3324, %v3326, %v3331
    %v3333 = vrot.slane %v2589, 2
    %v3334 = vsel %vm3324, %v3329, %v3333
    %v3335 = vrot.slane %v2590, 2
    %v3336 = vsel %vm3324, %v3331, %v3335
    %v3337 = vrot.slane %v2591, 2
    %v3338 = vsel %vm3324, %v3333, %v3337
    %v3339 = vrot.slane %v2592, 2
    %v3340 = vsel %vm3324, %v3335, %v3339
    %v3341 = vrot.slane %v2593, 2
    %v3342 = vsel %vm3324, %v3337, %v3341
    %v3343 = vrot.slane %v2594, 2
    %v3344 = vsel %vm3324, %v3339, %v3343
    %v3345 = vrot.slane %v2595, 2
    %v3346 = vsel %vm3324, %v3341, %v3345
    %v3347 = vrot.slane %v2596, 2
    %v3348 = vsel %vm3324, %v3343, %v3347
    %v3349 = vrot.slane %v2597, 2
    %v3350 = vsel %vm3324, %v3345, %v3349
    %v3351 = vrot.slane %v2598, 2
    %v3352 = vsel %vm3324, %v3347, %v3351
    %v3353 = vrot.slane %v2599, 2
    %v3354 = vsel %vm3324, %v3349, %v3353
    %v3355 = vrot.slane %v2600, 2
    %v3356 = vsel %vm3324, %v3351, %v3355
    %v3357 = vrot.slane %v2601, 2
    %v3358 = vsel %vm3324, %v3353, %v3357
    %v3359 = vrot.slane %v2602, 2
    %v3360 = vsel %vm3324, %v3355, %v3359
    %v3361 = vrot.slane %v2603, 2
    %v3362 = vsel %vm3324, %v3357, %v3361
    %v3363 = vrot.slane %v3322, 2
    %v3364 = vsel %vm3324, %v3359, %v3363
    %v3365 = vrot.slane %v3323, 2
    %v3366 = vsel %vm3324, %v3361, %v3365
    %v3419 = vunpack.c.l.b16 %v3282
    %v3420 = vunpack.c.h.b16 %v3282
    %v3421 = vunpack.c.l.b16 %v3283
    %v3422 = vunpack.c.h.b16 %v3283
    %v3423 = vunpack.c.l.b16 %v3284
    %v3424 = vunpack.c.h.b16 %v3284
    %v3425 = vunpack.c.l.b16 %v3285
    %v3426 = vunpack.c.h.b16 %v3285
    %v3427 = vunpack.c.l.b16 %v3286
    %v3428 = vunpack.c.h.b16 %v3286
    %v3429 = vunpack.c.l.b16 %v3287
    %v3430 = vunpack.c.h.b16 %v3287
    %v3431 = vunpack.c.l.b16 %v3288
    %v3432 = vunpack.c.h.b16 %v3288
    %v3433 = vunpack.c.l.b16 %v3289
    %v3434 = vunpack.c.h.b16 %v3289
    %v3435 = vunpack.c.l.b16 %v3290
    %v3436 = vunpack.c.h.b16 %v3290
    %v3437 = vunpack.c.l.b16 %v3291
    %v3438 = vunpack.c.h.b16 %v3291
    %v3439 = vunpack.c.l.b16 %v3292
    %v3440 = vunpack.c.h.b16 %v3292
    %v3441 = vunpack.c.l.b16 %v3293
    %v3442 = vunpack.c.h.b16 %v3293
    %v3443 = vunpack.c.l.b16 %v3294
    %v3444 = vunpack.c.h.b16 %v3294
    %v3445 = vunpack.c.l.b16 %v3295
    %v3446 = vunpack.c.h.b16 %v3295
    %v3447 = vunpack.c.l.b16 %v3296
    %v3448 = vunpack.c.h.b16 %v3296
    %v3449 = vunpack.c.l.b16 %v3297
    %v3450 = vunpack.c.h.b16 %v3297
    %v3451 = vunpack.c.l.b16 %v3298
    %v3452 = vunpack.c.h.b16 %v3298
    %v3453 = vunpack.c.l.b16 %v3299
    %v3454 = vunpack.c.h.b16 %v3299
    %v3455 = vunpack.c.l.b16 %v3300
    %v3456 = vunpack.c.h.b16 %v3300
    %v3457 = vunpack.c.l.b16 %v3301
    %v3458 = vunpack.c.h.b16 %v3301
    %v3459 = vunpack.c.l.b16 %v3302
    %v3460 = vunpack.c.h.b16 %v3302
    %v3461 = vunpack.c.l.b16 %v3303
    %v3462 = vunpack.c.h.b16 %v3303
    %v3463 = vunpack.c.l.b16 %v3304
    %v3464 = vunpack.c.h.b16 %v3304
    %v3465 = vunpack.c.l.b16 %v3305
    %v3466 = vunpack.c.h.b16 %v3305
    %v3467 = vunpack.c.l.b16 %v3306
    %v3468 = vunpack.c.h.b16 %v3306
    %v3469 = vunpack.c.l.b16 %v3307
    %v3470 = vunpack.c.h.b16 %v3307
    %v3471 = vunpack.c.l.b16 %v3308
    %v3472 = vunpack.c.h.b16 %v3308
    %v3473 = vunpack.c.l.b16 %v3309
    %v3474 = vunpack.c.h.b16 %v3309
    %v3475 = vunpack.c.l.b16 %v3310
    %v3476 = vunpack.c.h.b16 %v3310
    %v3477 = vunpack.c.l.b16 %v3311
    %v3478 = vunpack.c.h.b16 %v3311
    %v3479 = vunpack.c.l.b16 %v3312
    %v3480 = vunpack.c.h.b16 %v3312
    %v3481 = vunpack.c.l.b16 %v3313
    %v3482 = vunpack.c.h.b16 %v3313
    %v3483 = vpack.c.b16 %v3421, %v3419
    %v3484 = vpack.c.b16 %v3422, %v3420
    %v3485 = vpack.c.b16 %v3425, %v3423
    %v3486 = vpack.c.b16 %v3426, %v3424
    %v3487 = vpack.c.b16 %v3429, %v3427
    %v3488 = vpack.c.b16 %v3430, %v3428
    %v3489 = vpack.c.b16 %v3433, %v3431
    %v3490 = vpack.c.b16 %v3434, %v3432
    %v3491 = vpack.c.b16 %v3437, %v3435
    %v3492 = vpack.c.b16 %v3438, %v3436
    %v3493 = vpack.c.b16 %v3441, %v3439
    %v3494 = vpack.c.b16 %v3442, %v3440
    %v3495 = vpack.c.b16 %v3445, %v3443
    %v3496 = vpack.c.b16 %v3446, %v3444
    %v3497 = vpack.c.b16 %v3449, %v3447
    %v3498 = vpack.c.b16 %v3450, %v3448
    %v3499 = vpack.c.b16 %v3453, %v3451
    %v3500 = vpack.c.b16 %v3454, %v3452
    %v3501 = vpack.c.b16 %v3457, %v3455
    %v3502 = vpack.c.b16 %v3458, %v3456
    %v3503 = vpack.c.b16 %v3461, %v3459
    %v3504 = vpack.c.b16 %v3462, %v3460
    %v3505 = vpack.c.b16 %v3465, %v3463
    %v3506 = vpack.c.b16 %v3466, %v3464
    %v3507 = vpack.c.b16 %v3469, %v3467
    %v3508 = vpack.c.b16 %v3470, %v3468
    %v3509 = vpack.c.b16 %v3473, %v3471
    %v3510 = vpack.c.b16 %v3474, %v3472
    %v3511 = vpack.c.b16 %v3477, %v3475
    %v3512 = vpack.c.b16 %v3478, %v3476
    %v3513 = vpack.c.b16 %v3481, %v3479
    %v3514 = vpack.c.b16 %v3482, %v3480
    %3547 = vmatprep.subr.bf16.mxu0 %v3484
    %3548 = vmatpush1.bf16.msra.mxu0 %v3483
    %3549 = vmatprep.subr.bf16.mxu0 %v3486
    %3550 = vmatpush1.bf16.msra.mxu0 %v3485
    %3551 = vmatprep.subr.bf16.mxu0 %v3488
    %3552 = vmatpush1.bf16.msra.mxu0 %v3487
    %3553 = vmatprep.subr.bf16.mxu0 %v3490
    %3554 = vmatpush1.bf16.msra.mxu0 %v3489
    %3555 = vmatprep.subr.bf16.mxu0 %v3492
    %3556 = vmatpush1.bf16.msra.mxu0 %v3491
    %3557 = vmatprep.subr.bf16.mxu0 %v3494
    %3558 = vmatpush1.bf16.msra.mxu0 %v3493
    %3559 = vmatprep.subr.bf16.mxu0 %v3496
    %3560 = vmatpush1.bf16.msra.mxu0 %v3495
    %3561 = vmatprep.subr.bf16.mxu0 %v3498
    %3562 = vmatpush1.bf16.msra.mxu0 %v3497
    %3563 = vmatprep.subr.bf16.mxu0 %v3500
    %3564 = vmatpush1.bf16.msra.mxu0 %v3499
    %3565 = vmatprep.subr.bf16.mxu0 %v3502
    %3566 = vmatpush1.bf16.msra.mxu0 %v3501
    %3567 = vmatprep.subr.bf16.mxu0 %v3504
    %3568 = vmatpush1.bf16.msra.mxu0 %v3503
    %3569 = vmatprep.subr.bf16.mxu0 %v3506
    %3570 = vmatpush1.bf16.msra.mxu0 %v3505
    %3571 = vmatprep.subr.bf16.mxu0 %v3508
    %3572 = vmatpush1.bf16.msra.mxu0 %v3507
    %3573 = vmatprep.subr.bf16.mxu0 %v3510
    %3574 = vmatpush1.bf16.msra.mxu0 %v3509
    %3575 = vmatprep.subr.bf16.mxu0 %v3512
    %3576 = vmatpush1.bf16.msra.mxu0 %v3511
    %3577 = vmatprep.subr.bf16.mxu0 %v3514
    %3578 = vmatpush1.bf16.msra.mxu0 %v3513
    %3579 = vmatprep.mubr.bf16.mxu0 %v3330
    %3580 = vmatmul.mubr.bf16.gmra.mrb[0].mxu0 %v3327
    %v3581 = vpop.f32.mrb[0].mxu0
    %v3582 = vadd.f32 0.0, %v3581
    %v3583 = vpop.f32.mrb[0].mxu0
    %v3584 = vadd.f32 0.0, %v3583
    %v3585 = vpop.f32.mrb[0].mxu0
    %v3586 = vadd.f32 0.0, %v3585
    %v3587 = vpop.f32.mrb[0].mxu0
    %v3588 = vadd.f32 0.0, %v3587
    %3589 = vmatprep.mubr.bf16.mxu0 %v3334
    %3590 = vmatmul.mubr.bf16.gmra.mrb[0].mxu0 %v3332
    %v3591 = vpop.f32.mrb[0].mxu0
    %v3592 = vadd.f32 0.0, %v3591
    %v3593 = vpop.f32.mrb[0].mxu0
    %v3594 = vadd.f32 0.0, %v3593
    %v3595 = vpop.f32.mrb[0].mxu0
    %v3596 = vadd.f32 0.0, %v3595
    %v3597 = vpop.f32.mrb[0].mxu0
    %v3598 = vadd.f32 0.0, %v3597
    %3599 = vmatprep.mubr.bf16.mxu0 %v3338
    %3600 = vmatmul.mubr.bf16.gmra.mrb[0].mxu0 %v3336
    %v3601 = vpop.f32.mrb[0].mxu0
    %v3602 = vadd.f32 0.0, %v3601
    %v3603 = vpop.f32.mrb[0].mxu0
    %v3604 = vadd.f32 0.0, %v3603
    %v3605 = vpop.f32.mrb[0].mxu0
    %v3606 = vadd.f32 0.0, %v3605
    %v3607 = vpop.f32.mrb[0].mxu0
    %v3608 = vadd.f32 0.0, %v3607
    %3609 = vmatprep.mubr.bf16.mxu0 %v3342
    %3610 = vmatmul.mubr.bf16.gmra.mrb[0].mxu0 %v3340
    %v3611 = vpop.f32.mrb[0].mxu0
    %v3612 = vadd.f32 0.0, %v3611
    %v3613 = vpop.f32.mrb[0].mxu0
    %v3614 = vadd.f32 0.0, %v3613
    %v3615 = vpop.f32.mrb[0].mxu0
    %v3616 = vadd.f32 0.0, %v3615
    %v3617 = vpop.f32.mrb[0].mxu0
    %v3618 = vadd.f32 0.0, %v3617
    %3619 = vmatprep.mubr.bf16.mxu0 %v3346
    %3620 = vmatmul.mubr.bf16.gmra.mrb[0].mxu0 %v3344
    %v3621 = vpop.f32.mrb[0].mxu0
    %v3622 = vadd.f32 0.0, %v3621
    %v3623 = vpop.f32.mrb[0].mxu0
    %v3624 = vadd.f32 0.0, %v3623
    %v3625 = vpop.f32.mrb[0].mxu0
    %v3626 = vadd.f32 0.0, %v3625
    %v3627 = vpop.f32.mrb[0].mxu0
    %v3628 = vadd.f32 0.0, %v3627
    %3629 = vmatprep.mubr.bf16.mxu0 %v3350
    %3630 = vmatmul.mubr.bf16.gmra.mrb[0].mxu0 %v3348
    %v3631 = vpop.f32.mrb[0].mxu0
    %v3632 = vadd.f32 0.0, %v3631
    %v3633 = vpop.f32.mrb[0].mxu0
    %v3634 = vadd.f32 0.0, %v3633
    %v3635 = vpop.f32.mrb[0].mxu0
    %v3636 = vadd.f32 0.0, %v3635
    %v3637 = vpop.f32.mrb[0].mxu0
    %v3638 = vadd.f32 0.0, %v3637
    %3639 = vmatprep.mubr.bf16.mxu0 %v3354
    %3640 = vmatmul.mubr.bf16.gmra.mrb[0].mxu0 %v3352
    %v3641 = vpop.f32.mrb[0].mxu0
    %v3642 = vadd.f32 0.0, %v3641
    %v3643 = vpop.f32.mrb[0].mxu0
    %v3644 = vadd.f32 0.0, %v3643
    %v3645 = vpop.f32.mrb[0].mxu0
    %v3646 = vadd.f32 0.0, %v3645
    %v3647 = vpop.f32.mrb[0].mxu0
    %v3648 = vadd.f32 0.0, %v3647
    %3649 = vmatprep.mubr.bf16.mxu0 %v3358
    %3650 = vmatmul.mubr.bf16.gmra.mrb[0].mxu0 %v3356
    %v3651 = vpop.f32.mrb[0].mxu0
    %v3652 = vadd.f32 0.0, %v3651
    %v3653 = vpop.f32.mrb[0].mxu0
    %v3654 = vadd.f32 0.0, %v3653
    %v3655 = vpop.f32.mrb[0].mxu0
    %v3656 = vadd.f32 0.0, %v3655
    %v3657 = vpop.f32.mrb[0].mxu0
    %v3658 = vadd.f32 0.0, %v3657
    %3659 = vmatprep.mubr.bf16.mxu0 %v3362
    %3660 = vmatmul.mubr.bf16.gmra.mrb[0].mxu0 %v3360
    %v3661 = vpop.f32.mrb[0].mxu0
    %v3662 = vadd.f32 0.0, %v3661
    %v3663 = vpop.f32.mrb[0].mxu0
    %v3664 = vadd.f32 0.0, %v3663
    %v3665 = vpop.f32.mrb[0].mxu0
    %v3666 = vadd.f32 0.0, %v3665
    %v3667 = vpop.f32.mrb[0].mxu0
    %v3668 = vadd.f32 0.0, %v3667
    %3669 = vmatprep.mubr.bf16.mxu0 %v3366
    %3670 = vmatmul.mubr.bf16.gmra.mrb[0].mxu0 %v3364
    %v3671 = vpop.f32.mrb[0].mxu0
    %v3672 = vadd.f32 0.0, %v3671
    %v3673 = vpop.f32.mrb[0].mxu0
    %v3674 = vadd.f32 0.0, %v3673
    %v3675 = vpop.f32.mrb[0].mxu0
    %v3676 = vadd.f32 0.0, %v3675
    %v3677 = vpop.f32.mrb[0].mxu0
    %v3678 = vadd.f32 0.0, %v3677
    %3679 = vdwg.mxu0
    %v3680 = vadd.f32 %v3181, %v3582
    %v3681 = vadd.f32 %v3183, %v3584
    %v3682 = vadd.f32 %v3185, %v3586
    %v3683 = vadd.f32 %v3187, %v3588
    %v3684 = vadd.f32 %v3191, %v3592
    %v3685 = vadd.f32 %v3193, %v3594
    %v3686 = vadd.f32 %v3195, %v3596
    %v3687 = vadd.f32 %v3197, %v3598
    %v3688 = vadd.f32 %v3201, %v3602
    %v3689 = vadd.f32 %v3203, %v3604
    %v3690 = vadd.f32 %v3205, %v3606
    %v3691 = vadd.f32 %v3207, %v3608
    %v3692 = vadd.f32 %v3211, %v3612
    %v3693 = vadd.f32 %v3213, %v3614
    %v3694 = vadd.f32 %v3215, %v3616
    %v3695 = vadd.f32 %v3217, %v3618
    %v3696 = vadd.f32 %v3221, %v3622
    %v3697 = vadd.f32 %v3223, %v3624
    %v3698 = vadd.f32 %v3225, %v3626
    %v3699 = vadd.f32 %v3227, %v3628
    %v3700 = vadd.f32 %v3231, %v3632
    %v3701 = vadd.f32 %v3233, %v3634
    %v3702 = vadd.f32 %v3235, %v3636
    %v3703 = vadd.f32 %v3237, %v3638
    %v3704 = vadd.f32 %v3241, %v3642
    %v3705 = vadd.f32 %v3243, %v3644
    %v3706 = vadd.f32 %v3245, %v3646
    %v3707 = vadd.f32 %v3247, %v3648
    %v3708 = vadd.f32 %v3251, %v3652
    %v3709 = vadd.f32 %v3253, %v3654
    %v3710 = vadd.f32 %v3255, %v3656
    %v3711 = vadd.f32 %v3257, %v3658
    %v3712 = vadd.f32 %v3261, %v3662
    %v3713 = vadd.f32 %v3263, %v3664
    %v3714 = vadd.f32 %v3265, %v3666
    %v3715 = vadd.f32 %v3267, %v3668
    %v3716 = vadd.f32 %v3271, %v3672
    %v3717 = vadd.f32 %v3273, %v3674
    %v3718 = vadd.f32 %v3275, %v3676
    %v3719 = vadd.f32 %v3277, %v3678
    %v3720 = vld [vmem:[#allocation2] sm:$0x88]
    %v3721 = vld [vmem:[#allocation2 + $0xa0] sm:$0x77]
    %s3722 = scalar_lea.vmem %s2, 768
    %v3723 = vld [vmem:[%s3722] sm:$0xff]
    %v3724 = vld [vmem:[%s3722 + $0x8] sm:$0xff]
    %v3725 = vld [vmem:[%s3722 + $0x10] sm:$0xff]
    %v3726 = vld [vmem:[%s3722 + $0x18] sm:$0xff]
    %v3727 = vld [vmem:[%s3722 + $0x20] sm:$0xff]
    %v3728 = vld [vmem:[%s3722 + $0x28] sm:$0xff]
    %v3729 = vld [vmem:[%s3722 + $0x30] sm:$0xff]
    %v3730 = vld [vmem:[%s3722 + $0x38] sm:$0xff]
    %v3731 = vld [vmem:[%s3722 + $0x40] sm:$0xff]
    %v3732 = vld [vmem:[%s3722 + $0x48] sm:$0xff]
    %v3733 = vld [vmem:[%s3722 + $0x50] sm:$0xff]
    %v3734 = vld [vmem:[%s3722 + $0x58] sm:$0xff]
    %v3735 = vld [vmem:[%s3722 + $0x60] sm:$0xff]
    %v3736 = vld [vmem:[%s3722 + $0x68] sm:$0xff]
    %v3737 = vld [vmem:[%s3722 + $0x70] sm:$0xff]
    %v3738 = vld [vmem:[%s3722 + $0x78] sm:$0xff]
    %v3739 = vld [vmem:[%s3722 + $0x80] sm:$0xff]
    %v3740 = vld [vmem:[%s3722 + $0x88] sm:$0xff]
    %v3741 = vld [vmem:[%s3722 + $0x90] sm:$0xff]
    %v3742 = vld [vmem:[%s3722 + $0x98] sm:$0xff]
    %v3743 = vld [vmem:[%s3722 + $0xa0] sm:$0xff]
    %v3744 = vld [vmem:[%s3722 + $0xa8] sm:$0xff]
    %v3745 = vld [vmem:[%s3722 + $0xb0] sm:$0xff]
    %v3746 = vld [vmem:[%s3722 + $0xb8] sm:$0xff]
    %v3747 = vld [vmem:[%s3722 + $0xc0] sm:$0xff]
    %v3748 = vld [vmem:[%s3722 + $0xc8] sm:$0xff]
    %v3749 = vld [vmem:[%s3722 + $0xd0] sm:$0xff]
    %v3750 = vld [vmem:[%s3722 + $0xd8] sm:$0xff]
    %v3751 = vld [vmem:[%s3722 + $0xe0] sm:$0xff]
    %v3752 = vld [vmem:[%s3722 + $0xe8] sm:$0xff]
    %v3753 = vld [vmem:[%s3722 + $0xf0] sm:$0xff]
    %v3754 = vld [vmem:[%s3722 + $0xf8] sm:$0xff]
    %v3757 = vunpack.c.l.b16 %v3720
    %v3758 = vunpack.c.h.b16 %v3720
    %v3759 = vunpack.c.l.b16 %v3721
    %v3760 = vunpack.c.h.b16 %v3721
    %v3761 = vpack.c.b16 %v2544, %v3757
    %v3762 = vpack.c.b16 %v2545, %v3758
    %v3763 = vpack.c.b16 %v3759, %v3759
    %v3764 = vpack.c.b16 %v3760, %v3760
    %vm3765 = vcmask 1044480
    %v3766 = vrot.slane %v3761, 3
    %v3767 = vrot.slane %v2586, 3
    %v3768 = vsel %vm3765, %v3766, %v3767
    %v3769 = vrot.slane %v3762, 3
    %v3770 = vrot.slane %v2587, 3
    %v3771 = vsel %vm3765, %v3769, %v3770
    %v3772 = vrot.slane %v2588, 3
    %v3773 = vsel %vm3765, %v3767, %v3772
    %v3774 = vrot.slane %v2589, 3
    %v3775 = vsel %vm3765, %v3770, %v3774
    %v3776 = vrot.slane %v2590, 3
    %v3777 = vsel %vm3765, %v3772, %v3776
    %v3778 = vrot.slane %v2591, 3
    %v3779 = vsel %vm3765, %v3774, %v3778
    %v3780 = vrot.slane %v2592, 3
    %v3781 = vsel %vm3765, %v3776, %v3780
    %v3782 = vrot.slane %v2593, 3
    %v3783 = vsel %vm3765, %v3778, %v3782
    %v3784 = vrot.slane %v2594, 3
    %v3785 = vsel %vm3765, %v3780, %v3784
    %v3786 = vrot.slane %v2595, 3
    %v3787 = vsel %vm3765, %v3782, %v3786
    %v3788 = vrot.slane %v2596, 3
    %v3789 = vsel %vm3765, %v3784, %v3788
    %v3790 = vrot.slane %v2597, 3
    %v3791 = vsel %vm3765, %v3786, %v3790
    %v3792 = vrot.slane %v2598, 3
    %v3793 = vsel %vm3765, %v3788, %v3792
    %v3794 = vrot.slane %v2599, 3
    %v3795 = vsel %vm3765, %v3790, %v3794
    %v3796 = vrot.slane %v2600, 3
    %v3797 = vsel %vm3765, %v3792, %v3796
    %v3798 = vrot.slane %v2601, 3
    %v3799 = vsel %vm3765, %v3794, %v3798
    %v3800 = vrot.slane %v2602, 3
    %v3801 = vsel %vm3765, %v3796, %v3800
    %v3802 = vrot.slane %v2603, 3
    %v3803 = vsel %vm3765, %v3798, %v3802
    %v3804 = vrot.slane %v3763, 3
    %v3805 = vsel %vm3765, %v3800, %v3804
    %v3806 = vrot.slane %v3764, 3
    %v3807 = vsel %vm3765, %v3802, %v3806
    %v3860 = vunpack.c.l.b16 %v3723
    %v3861 = vunpack.c.h.b16 %v3723
    %v3862 = vunpack.c.l.b16 %v3724
    %v3863 = vunpack.c.h.b16 %v3724
    %v3864 = vunpack.c.l.b16 %v3725
    %v3865 = vunpack.c.h.b16 %v3725
    %v3866 = vunpack.c.l.b16 %v3726
    %v3867 = vunpack.c.h.b16 %v3726
    %v3868 = vunpack.c.l.b16 %v3727
    %v3869 = vunpack.c.h.b16 %v3727
    %v3870 = vunpack.c.l.b16 %v3728
    %v3871 = vunpack.c.h.b16 %v3728
    %v3872 = vunpack.c.l.b16 %v3729
    %v3873 = vunpack.c.h.b16 %v3729
    %v3874 = vunpack.c.l.b16 %v3730
    %v3875 = vunpack.c.h.b16 %v3730
    %v3876 = vunpack.c.l.b16 %v3731
    %v3877 = vunpack.c.h.b16 %v3731
    %v3878 = vunpack.c.l.b16 %v3732
    %v3879 = vunpack.c.h.b16 %v3732
    %v3880 = vunpack.c.l.b16 %v3733
    %v3881 = vunpack.c.h.b16 %v3733
    %v3882 = vunpack.c.l.b16 %v3734
    %v3883 = vunpack.c.h.b16 %v3734
    %v3884 = vunpack.c.l.b16 %v3735
    %v3885 = vunpack.c.h.b16 %v3735
    %v3886 = vunpack.c.l.b16 %v3736
    %v3887 = vunpack.c.h.b16 %v3736
    %v3888 = vunpack.c.l.b16 %v3737
    %v3889 = vunpack.c.h.b16 %v3737
    %v3890 = vunpack.c.l.b16 %v3738
    %v3891 = vunpack.c.h.b16 %v3738
    %v3892 = vunpack.c.l.b16 %v3739
    %v3893 = vunpack.c.h.b16 %v3739
    %v3894 = vunpack.c.l.b16 %v3740
    %v3895 = vunpack.c.h.b16 %v3740
    %v3896 = vunpack.c.l.b16 %v3741
    %v3897 = vunpack.c.h.b16 %v3741
    %v3898 = vunpack.c.l.b16 %v3742
    %v3899 = vunpack.c.h.b16 %v3742
    %v3900 = vunpack.c.l.b16 %v3743
    %v3901 = vunpack.c.h.b16 %v3743
    %v3902 = vunpack.c.l.b16 %v3744
    %v3903 = vunpack.c.h.b16 %v3744
    %v3904 = vunpack.c.l.b16 %v3745
    %v3905 = vunpack.c.h.b16 %v3745
    %v3906 = vunpack.c.l.b16 %v3746
    %v3907 = vunpack.c.h.b16 %v3746
    %v3908 = vunpack.c.l.b16 %v3747
    %v3909 = vunpack.c.h.b16 %v3747
    %v3910 = vunpack.c.l.b16 %v3748
    %v3911 = vunpack.c.h.b16 %v3748
    %v3912 = vunpack.c.l.b16 %v3749
    %v3913 = vunpack.c.h.b16 %v3749
    %v3914 = vunpack.c.l.b16 %v3750
    %v3915 = vunpack.c.h.b16 %v3750
    %v3916 = vunpack.c.l.b16 %v3751
    %v3917 = vunpack.c.h.b16 %v3751
    %v3918 = vunpack.c.l.b16 %v3752
    %v3919 = vunpack.c.h.b16 %v3752
    %v3920 = vunpack.c.l.b16 %v3753
    %v3921 = vunpack.c.h.b16 %v3753
    %v3922 = vunpack.c.l.b16 %v3754
    %v3923 = vunpack.c.h.b16 %v3754
    %v3924 = vpack.c.b16 %v3862, %v3860
    %v3925 = vpack.c.b16 %v3863, %v3861
    %v3926 = vpack.c.b16 %v3866, %v3864
    %v3927 = vpack.c.b16 %v3867, %v3865
    %v3928 = vpack.c.b16 %v3870, %v3868
    %v3929 = vpack.c.b16 %v3871, %v3869
    %v3930 = vpack.c.b16 %v3874, %v3872
    %v3931 = vpack.c.b16 %v3875, %v3873
    %v3932 = vpack.c.b16 %v3878, %v3876
    %v3933 = vpack.c.b16 %v3879, %v3877
    %v3934 = vpack.c.b16 %v3882, %v3880
    %v3935 = vpack.c.b16 %v3883, %v3881
    %v3936 = vpack.c.b16 %v3886, %v3884
    %v3937 = vpack.c.b16 %v3887, %v3885
    %v3938 = vpack.c.b16 %v3890, %v3888
    %v3939 = vpack.c.b16 %v3891, %v3889
    %v3940 = vpack.c.b16 %v3894, %v3892
    %v3941 = vpack.c.b16 %v3895, %v3893
    %v3942 = vpack.c.b16 %v3898, %v3896
    %v3943 = vpack.c.b16 %v3899, %v3897
    %v3944 = vpack.c.b16 %v3902, %v3900
    %v3945 = vpack.c.b16 %v3903, %v3901
    %v3946 = vpack.c.b16 %v3906, %v3904
    %v3947 = vpack.c.b16 %v3907, %v3905
    %v3948 = vpack.c.b16 %v3910, %v3908
    %v3949 = vpack.c.b16 %v3911, %v3909
    %v3950 = vpack.c.b16 %v3914, %v3912
    %v3951 = vpack.c.b16 %v3915, %v3913
    %v3952 = vpack.c.b16 %v3918, %v3916
    %v3953 = vpack.c.b16 %v3919, %v3917
    %v3954 = vpack.c.b16 %v3922, %v3920
    %v3955 = vpack.c.b16 %v3923, %v3921
    %3988 = vmatprep.subr.bf16.mxu0 %v3925
    %3989 = vmatpush1.bf16.msra.mxu0 %v3924
    %3990 = vmatprep.subr.bf16.mxu0 %v3927
    %3991 = vmatpush1.bf16.msra.mxu0 %v3926
    %3992 = vmatprep.subr.bf16.mxu0 %v3929
    %3993 = vmatpush1.bf16.msra.mxu0 %v3928
    %3994 = vmatprep.subr.bf16.mxu0 %v3931
    %3995 = vmatpush1.bf16.msra.mxu0 %v3930
    %3996 = vmatprep.subr.bf16.mxu0 %v3933
    %3997 = vmatpush1.bf16.msra.mxu0 %v3932
    %3998 = vmatprep.subr.bf16.mxu0 %v3935
    %3999 = vmatpush1.bf16.msra.mxu0 %v3934
    %4000 = vmatprep.subr.bf16.mxu0 %v3937
    %4001 = vmatpush1.bf16.msra.mxu0 %v3936
    %4002 = vmatprep.subr.bf16.mxu0 %v3939
    %4003 = vmatpush1.bf16.msra.mxu0 %v3938
    %4004 = vmatprep.subr.bf16.mxu0 %v3941
    %4005 = vmatpush1.bf16.msra.mxu0 %v3940
    %4006 = vmatprep.subr.bf16.mxu0 %v3943
    %4007 = vmatpush1.bf16.msra.mxu0 %v3942
    %4008 = vmatprep.subr.bf16.mxu0 %v3945
    %4009 = vmatpush1.bf16.msra.mxu0 %v3944
    %4010 = vmatprep.subr.bf16.mxu0 %v3947
    %4011 = vmatpush1.bf16.msra.mxu0 %v3946
    %4012 = vmatprep.subr.bf16.mxu0 %v3949
    %4013 = vmatpush1.bf16.msra.mxu0 %v3948
    %4014 = vmatprep.subr.bf16.mxu0 %v3951
    %4015 = vmatpush1.bf16.msra.mxu0 %v3950
    %4016 = vmatprep.subr.bf16.mxu0 %v3953
    %4017 = vmatpush1.bf16.msra.mxu0 %v3952
    %4018 = vmatprep.subr.bf16.mxu0 %v3955
    %4019 = vmatpush1.bf16.msra.mxu0 %v3954
    %4020 = vmatprep.mubr.bf16.mxu0 %v3771
    %4021 = vmatmul.mubr.bf16.gmra.mrb[0].mxu0 %v3768
    %v4022 = vpop.f32.mrb[0].mxu0
    %v4023 = vadd.f32 0.0, %v4022
    %v4024 = vpop.f32.mrb[0].mxu0
    %v4025 = vadd.f32 0.0, %v4024
    %v4026 = vpop.f32.mrb[0].mxu0
    %v4027 = vadd.f32 0.0, %v4026
    %v4028 = vpop.f32.mrb[0].mxu0
    %v4029 = vadd.f32 0.0, %v4028
    %4030 = vmatprep.mubr.bf16.mxu0 %v3775
    %4031 = vmatmul.mubr.bf16.gmra.mrb[0].mxu0 %v3773
    %v4032 = vpop.f32.mrb[0].mxu0
    %v4033 = vadd.f32 0.0, %v4032
    %v4034 = vpop.f32.mrb[0].mxu0
    %v4035 = vadd.f32 0.0, %v4034
    %v4036 = vpop.f32.mrb[0].mxu0
    %v4037 = vadd.f32 0.0, %v4036
    %v4038 = vpop.f32.mrb[0].mxu0
    %v4039 = vadd.f32 0.0, %v4038
    %4040 = vmatprep.mubr.bf16.mxu0 %v3779
    %4041 = vmatmul.mubr.bf16.gmra.mrb[0].mxu0 %v3777
    %v4042 = vpop.f32.mrb[0].mxu0
    %v4043 = vadd.f32 0.0, %v4042
    %v4044 = vpop.f32.mrb[0].mxu0
    %v4045 = vadd.f32 0.0, %v4044
    %v4046 = vpop.f32.mrb[0].mxu0
    %v4047 = vadd.f32 0.0, %v4046
    %v4048 = vpop.f32.mrb[0].mxu0
    %v4049 = vadd.f32 0.0, %v4048
    %4050 = vmatprep.mubr.bf16.mxu0 %v3783
    %4051 = vmatmul.mubr.bf16.gmra.mrb[0].mxu0 %v3781
    %v4052 = vpop.f32.mrb[0].mxu0
    %v4053 = vadd.f32 0.0, %v4052
    %v4054 = vpop.f32.mrb[0].mxu0
    %v4055 = vadd.f32 0.0, %v4054
    %v4056 = vpop.f32.mrb[0].mxu0
    %v4057 = vadd.f32 0.0, %v4056
    %v4058 = vpop.f32.mrb[0].mxu0
    %v4059 = vadd.f32 0.0, %v4058
    %4060 = vmatprep.mubr.bf16.mxu0 %v3787
    %4061 = vmatmul.mubr.bf16.gmra.mrb[0].mxu0 %v3785
    %v4062 = vpop.f32.mrb[0].mxu0
    %v4063 = vadd.f32 0.0, %v4062
    %v4064 = vpop.f32.mrb[0].mxu0
    %v4065 = vadd.f32 0.0, %v4064
    %v4066 = vpop.f32.mrb[0].mxu0
    %v4067 = vadd.f32 0.0, %v4066
    %v4068 = vpop.f32.mrb[0].mxu0
    %v4069 = vadd.f32 0.0, %v4068
    %4070 = vmatprep.mubr.bf16.mxu0 %v3791
    %4071 = vmatmul.mubr.bf16.gmra.mrb[0].mxu0 %v3789
    %v4072 = vpop.f32.mrb[0].mxu0
    %v4073 = vadd.f32 0.0, %v4072
    %v4074 = vpop.f32.mrb[0].mxu0
    %v4075 = vadd.f32 0.0, %v4074
    %v4076 = vpop.f32.mrb[0].mxu0
    %v4077 = vadd.f32 0.0, %v4076
    %v4078 = vpop.f32.mrb[0].mxu0
    %v4079 = vadd.f32 0.0, %v4078
    %4080 = vmatprep.mubr.bf16.mxu0 %v3795
    %4081 = vmatmul.mubr.bf16.gmra.mrb[0].mxu0 %v3793
    %v4082 = vpop.f32.mrb[0].mxu0
    %v4083 = vadd.f32 0.0, %v4082
    %v4084 = vpop.f32.mrb[0].mxu0
    %v4085 = vadd.f32 0.0, %v4084
    %v4086 = vpop.f32.mrb[0].mxu0
    %v4087 = vadd.f32 0.0, %v4086
    %v4088 = vpop.f32.mrb[0].mxu0
    %v4089 = vadd.f32 0.0, %v4088
    %4090 = vmatprep.mubr.bf16.mxu0 %v3799
    %4091 = vmatmul.mubr.bf16.gmra.mrb[0].mxu0 %v3797
    %v4092 = vpop.f32.mrb[0].mxu0
    %v4093 = vadd.f32 0.0, %v4092
    %v4094 = vpop.f32.mrb[0].mxu0
    %v4095 = vadd.f32 0.0, %v4094
    %v4096 = vpop.f32.mrb[0].mxu0
    %v4097 = vadd.f32 0.0, %v4096
    %v4098 = vpop.f32.mrb[0].mxu0
    %v4099 = vadd.f32 0.0, %v4098
    %4100 = vmatprep.mubr.bf16.mxu0 %v3803
    %4101 = vmatmul.mubr.bf16.gmra.mrb[0].mxu0 %v3801
    %v4102 = vpop.f32.mrb[0].mxu0
    %v4103 = vadd.f32 0.0, %v4102
    %v4104 = vpop.f32.mrb[0].mxu0
    %v4105 = vadd.f32 0.0, %v4104
    %v4106 = vpop.f32.mrb[0].mxu0
    %v4107 = vadd.f32 0.0, %v4106
    %v4108 = vpop.f32.mrb[0].mxu0
    %v4109 = vadd.f32 0.0, %v4108
    %4110 = vmatprep.mubr.bf16.mxu0 %v3807
    %4111 = vmatmul.mubr.bf16.gmra.mrb[0].mxu0 %v3805
    %v4112 = vpop.f32.mrb[0].mxu0
    %v4113 = vadd.f32 0.0, %v4112
    %v4114 = vpop.f32.mrb[0].mxu0
    %v4115 = vadd.f32 0.0, %v4114
    %v4116 = vpop.f32.mrb[0].mxu0
    %v4117 = vadd.f32 0.0, %v4116
    %v4118 = vpop.f32.mrb[0].mxu0
    %v4119 = vadd.f32 0.0, %v4118
    %4120 = vdwg.mxu0
    %v4121 = vadd.f32 %v3680, %v4023
    %v4122 = vadd.f32 %v3681, %v4025
    %v4123 = vadd.f32 %v3682, %v4027
    %v4124 = vadd.f32 %v3683, %v4029
    %v4125 = vadd.f32 %v3684, %v4033
    %v4126 = vadd.f32 %v3685, %v4035
    %v4127 = vadd.f32 %v3686, %v4037
    %v4128 = vadd.f32 %v3687, %v4039
    %v4129 = vadd.f32 %v3688, %v4043
    %v4130 = vadd.f32 %v3689, %v4045
    %v4131 = vadd.f32 %v3690, %v4047
    %v4132 = vadd.f32 %v3691, %v4049
    %v4133 = vadd.f32 %v3692, %v4053
    %v4134 = vadd.f32 %v3693, %v4055
    %v4135 = vadd.f32 %v3694, %v4057
    %v4136 = vadd.f32 %v3695, %v4059
    %v4137 = vadd.f32 %v3696, %v4063
    %v4138 = vadd.f32 %v3697, %v4065
    %v4139 = vadd.f32 %v3698, %v4067
    %v4140 = vadd.f32 %v3699, %v4069
    %v4141 = vadd.f32 %v3700, %v4073
    %v4142 = vadd.f32 %v3701, %v4075
    %v4143 = vadd.f32 %v3702, %v4077
    %v4144 = vadd.f32 %v3703, %v4079
    %v4145 = vadd.f32 %v3704, %v4083
    %v4146 = vadd.f32 %v3705, %v4085
    %v4147 = vadd.f32 %v3706, %v4087
    %v4148 = vadd.f32 %v3707, %v4089
    %v4149 = vadd.f32 %v3708, %v4093
    %v4150 = vadd.f32 %v3709, %v4095
    %v4151 = vadd.f32 %v3710, %v4097
    %v4152 = vadd.f32 %v3711, %v4099
    %v4153 = vadd.f32 %v3712, %v4103
    %v4154 = vadd.f32 %v3713, %v4105
    %v4155 = vadd.f32 %v3714, %v4107
    %v4156 = vadd.f32 %v3715, %v4109
    %v4157 = vadd.f32 %v3716, %v4113
    %v4158 = vadd.f32 %v3717, %v4115
    %v4159 = vadd.f32 %v3718, %v4117
    %v4160 = vadd.f32 %v3719, %v4119
    %v4161 = vld [vmem:[%s8] sm:$0xff]
    %v4162 = vld [vmem:[%s8 + $0x8] sm:$0xff]
    %v4163 = vld [vmem:[%s8 + $0x10] sm:$0xff]
    %v4164 = vld [vmem:[%s8 + $0x18] sm:$0xff]
    %v4165 = vld [vmem:[%s8 + $0x20] sm:$0xff]
    %v4166 = vld [vmem:[%s8 + $0x28] sm:$0xff]
    %v4167 = vld [vmem:[%s8 + $0x30] sm:$0xff]
    %v4168 = vld [vmem:[%s8 + $0x38] sm:$0xff]
    %v4169 = vld [vmem:[%s8 + $0x40] sm:$0xff]
    %v4170 = vld [vmem:[%s8 + $0x48] sm:$0xff]
    %v4171 = vld [vmem:[%s8 + $0x50] sm:$0xff]
    %v4172 = vld [vmem:[%s8 + $0x58] sm:$0xff]
    %v4173 = vld [vmem:[%s8 + $0x60] sm:$0xff]
    %v4174 = vld [vmem:[%s8 + $0x68] sm:$0xff]
    %v4175 = vld [vmem:[%s8 + $0x70] sm:$0xff]
    %v4176 = vld [vmem:[%s8 + $0x78] sm:$0xff]
    %v4177 = vld [vmem:[%s8 + $0x80] sm:$0xff]
    %v4178 = vld [vmem:[%s8 + $0x88] sm:$0xff]
    %v4179 = vld [vmem:[%s8 + $0x90] sm:$0xff]
    %v4180 = vld [vmem:[%s8 + $0x98] sm:$0xff]
    %4182 = vset.pattern.permute.xlu0 0
    %4183 = vperm.xlu0 %4182, %v4161
    %v4184 = vpop.permute.xlu0 %4183
    %4187 = vset.pattern.permute.xlu0 0
    %4188 = vperm.xlu0 %4187, %v4162
    %v4189 = vpop.permute.xlu0 %4188
    %4192 = vset.pattern.permute.xlu0 0
    %4193 = vperm.xlu0 %4192, %v4163
    %v4194 = vpop.permute.xlu0 %4193
    %4197 = vset.pattern.permute.xlu0 0
    %4198 = vperm.xlu0 %4197, %v4164
    %v4199 = vpop.permute.xlu0 %4198
    %4202 = vset.pattern.permute.xlu0 0
    %4203 = vperm.xlu0 %4202, %v4165
    %v4204 = vpop.permute.xlu0 %4203
    %4207 = vset.pattern.permute.xlu0 0
    %4208 = vperm.xlu0 %4207, %v4166
    %v4209 = vpop.permute.xlu0 %4208
    %4212 = vset.pattern.permute.xlu0 0
    %4213 = vperm.xlu0 %4212, %v4167
    %v4214 = vpop.permute.xlu0 %4213
    %4217 = vset.pattern.permute.xlu0 0
    %4218 = vperm.xlu0 %4217, %v4168
    %v4219 = vpop.permute.xlu0 %4218
    %4222 = vset.pattern.permute.xlu0 0
    %4223 = vperm.xlu0 %4222, %v4169
    %v4224 = vpop.permute.xlu0 %4223
    %4227 = vset.pattern.permute.xlu0 0
    %4228 = vperm.xlu0 %4227, %v4170
    %v4229 = vpop.permute.xlu0 %4228
    %4232 = vset.pattern.permute.xlu0 0
    %4233 = vperm.xlu0 %4232, %v4171
    %v4234 = vpop.permute.xlu0 %4233
    %4237 = vset.pattern.permute.xlu0 0
    %4238 = vperm.xlu0 %4237, %v4172
    %v4239 = vpop.permute.xlu0 %4238
    %4242 = vset.pattern.permute.xlu0 0
    %4243 = vperm.xlu0 %4242, %v4173
    %v4244 = vpop.permute.xlu0 %4243
    %4247 = vset.pattern.permute.xlu0 0
    %4248 = vperm.xlu0 %4247, %v4174
    %v4249 = vpop.permute.xlu0 %4248
    %4252 = vset.pattern.permute.xlu0 0
    %4253 = vperm.xlu0 %4252, %v4175
    %v4254 = vpop.permute.xlu0 %4253
    %4257 = vset.pattern.permute.xlu0 0
    %4258 = vperm.xlu0 %4257, %v4176
    %v4259 = vpop.permute.xlu0 %4258
    %4262 = vset.pattern.permute.xlu0 0
    %4263 = vperm.xlu0 %4262, %v4177
    %v4264 = vpop.permute.xlu0 %4263
    %4267 = vset.pattern.permute.xlu0 0
    %4268 = vperm.xlu0 %4267, %v4178
    %v4269 = vpop.permute.xlu0 %4268
    %4272 = vset.pattern.permute.xlu0 0
    %4273 = vperm.xlu0 %4272, %v4179
    %v4274 = vpop.permute.xlu0 %4273
    %4277 = vset.pattern.permute.xlu0 0
    %4278 = vperm.xlu0 %4277, %v4180
    %v4279 = vpop.permute.xlu0 %4278
    %v4281 = vmul.f32 %v4121, %v4184
    %v4282 = vmul.f32 %v4122, %v4184
    %v4283 = vmul.f32 %v4123, %v4189
    %v4284 = vmul.f32 %v4124, %v4189
    %v4285 = vmul.f32 %v4125, %v4194
    %v4286 = vmul.f32 %v4126, %v4194
    %v4287 = vmul.f32 %v4127, %v4199
    %v4288 = vmul.f32 %v4128, %v4199
    %v4289 = vmul.f32 %v4129, %v4204
    %v4290 = vmul.f32 %v4130, %v4204
    %v4291 = vmul.f32 %v4131, %v4209
    %v4292 = vmul.f32 %v4132, %v4209
    %v4293 = vmul.f32 %v4133, %v4214
    %v4294 = vmul.f32 %v4134, %v4214
    %v4295 = vmul.f32 %v4135, %v4219
    %v4296 = vmul.f32 %v4136, %v4219
    %v4297 = vmul.f32 %v4137, %v4224
    %v4298 = vmul.f32 %v4138, %v4224
    %v4299 = vmul.f32 %v4139, %v4229
    %v4300 = vmul.f32 %v4140, %v4229
    %v4301 = vmul.f32 %v4141, %v4234
    %v4302 = vmul.f32 %v4142, %v4234
    %v4303 = vmul.f32 %v4143, %v4239
    %v4304 = vmul.f32 %v4144, %v4239
    %v4305 = vmul.f32 %v4145, %v4244
    %v4306 = vmul.f32 %v4146, %v4244
    %v4307 = vmul.f32 %v4147, %v4249
    %v4308 = vmul.f32 %v4148, %v4249
    %v4309 = vmul.f32 %v4149, %v4254
    %v4310 = vmul.f32 %v4150, %v4254
    %v4311 = vmul.f32 %v4151, %v4259
    %v4312 = vmul.f32 %v4152, %v4259
    %v4313 = vmul.f32 %v4153, %v4264
    %v4314 = vmul.f32 %v4154, %v4264
    %v4315 = vmul.f32 %v4155, %v4269
    %v4316 = vmul.f32 %v4156, %v4269
    %v4317 = vmul.f32 %v4157, %v4274
    %v4318 = vmul.f32 %v4158, %v4274
    %v4319 = vmul.f32 %v4159, %v4279
    %v4320 = vmul.f32 %v4160, %v4279
    %v4321 = vadd.f32 %v4281, %v4283
    %v4322 = vadd.f32 %v4321, %v4285
    %v4323 = vadd.f32 %v4322, %v4287
    %v4324 = vadd.f32 %v4323, %v4289
    %v4325 = vadd.f32 %v4324, %v4291
    %v4326 = vadd.f32 %v4325, %v4293
    %v4327 = vadd.f32 %v4326, %v4295
    %v4328 = vadd.f32 %v4327, %v4297
    %v4329 = vadd.f32 %v4328, %v4299
    %v4330 = vadd.f32 %v4329, %v4301
    %v4331 = vadd.f32 %v4330, %v4303
    %v4332 = vadd.f32 %v4331, %v4305
    %v4333 = vadd.f32 %v4332, %v4307
    %v4334 = vadd.f32 %v4333, %v4309
    %v4335 = vadd.f32 %v4334, %v4311
    %v4336 = vadd.f32 %v4335, %v4313
    %v4337 = vadd.f32 %v4336, %v4315
    %v4338 = vadd.f32 %v4337, %v4317
    %v4339 = vadd.f32 %v4338, %v4319
    %v4340 = vrot.slane %v4339, 4
    %v4341 = vadd.f32 %v4339, %v4340
    %v4342 = vrot.slane %v4341, 2
    %v4343 = vadd.f32 %v4341, %v4342
    %v4344 = vrot.slane %v4343, 1
    %v4345 = vadd.f32 %v4343, %v4344
    %v4346 = vadd.f32 %v4282, %v4284
    %v4347 = vadd.f32 %v4346, %v4286
    %v4348 = vadd.f32 %v4347, %v4288
    %v4349 = vadd.f32 %v4348, %v4290
    %v4350 = vadd.f32 %v4349, %v4292
    %v4351 = vadd.f32 %v4350, %v4294
    %v4352 = vadd.f32 %v4351, %v4296
    %v4353 = vadd.f32 %v4352, %v4298
    %v4354 = vadd.f32 %v4353, %v4300
    %v4355 = vadd.f32 %v4354, %v4302
    %v4356 = vadd.f32 %v4355, %v4304
    %v4357 = vadd.f32 %v4356, %v4306
    %v4358 = vadd.f32 %v4357, %v4308
    %v4359 = vadd.f32 %v4358, %v4310
    %v4360 = vadd.f32 %v4359, %v4312
    %v4361 = vadd.f32 %v4360, %v4314
    %v4362 = vadd.f32 %v4361, %v4316
    %v4363 = vadd.f32 %v4362, %v4318
    %v4364 = vadd.f32 %v4363, %v4320
    %v4365 = vrot.slane %v4364, 4
    %v4366 = vadd.f32 %v4364, %v4365
    %v4367 = vrot.slane %v4366, 2
    %v4368 = vadd.f32 %v4366, %v4367
    %v4369 = vrot.slane %v4368, 1
    %v4370 = vadd.f32 %v4368, %v4369
    %v4371 = vmul.f32 %v4281, %v4121
    %v4372 = vmul.f32 %v4282, %v4122
    %v4373 = vmul.f32 %v4283, %v4123
    %v4374 = vmul.f32 %v4284, %v4124
    %v4375 = vmul.f32 %v4285, %v4125
    %v4376 = vmul.f32 %v4286, %v4126
    %v4377 = vmul.f32 %v4287, %v4127
    %v4378 = vmul.f32 %v4288, %v4128
    %v4379 = vmul.f32 %v4289, %v4129
    %v4380 = vmul.f32 %v4290, %v4130
    %v4381 = vmul.f32 %v4291, %v4131
    %v4382 = vmul.f32 %v4292, %v4132
    %v4383 = vmul.f32 %v4293, %v4133
    %v4384 = vmul.f32 %v4294, %v4134
    %v4385 = vmul.f32 %v4295, %v4135
    %v4386 = vmul.f32 %v4296, %v4136
    %v4387 = vmul.f32 %v4297, %v4137
    %v4388 = vmul.f32 %v4298, %v4138
    %v4389 = vmul.f32 %v4299, %v4139
    %v4390 = vmul.f32 %v4300, %v4140
    %v4391 = vmul.f32 %v4301, %v4141
    %v4392 = vmul.f32 %v4302, %v4142
    %v4393 = vmul.f32 %v4303, %v4143
    %v4394 = vmul.f32 %v4304, %v4144
    %v4395 = vmul.f32 %v4305, %v4145
    %v4396 = vmul.f32 %v4306, %v4146
    %v4397 = vmul.f32 %v4307, %v4147
    %v4398 = vmul.f32 %v4308, %v4148
    %v4399 = vmul.f32 %v4309, %v4149
    %v4400 = vmul.f32 %v4310, %v4150
    %v4401 = vmul.f32 %v4311, %v4151
    %v4402 = vmul.f32 %v4312, %v4152
    %v4403 = vmul.f32 %v4313, %v4153
    %v4404 = vmul.f32 %v4314, %v4154
    %v4405 = vmul.f32 %v4315, %v4155
    %v4406 = vmul.f32 %v4316, %v4156
    %v4407 = vmul.f32 %v4317, %v4157
    %v4408 = vmul.f32 %v4318, %v4158
    %v4409 = vmul.f32 %v4319, %v4159
    %v4410 = vmul.f32 %v4320, %v4160
    %v4411 = vadd.f32 %v4371, %v4373
    %v4412 = vadd.f32 %v4411, %v4375
    %v4413 = vadd.f32 %v4412, %v4377
    %v4414 = vadd.f32 %v4413, %v4379
    %v4415 = vadd.f32 %v4414, %v4381
    %v4416 = vadd.f32 %v4415, %v4383
    %v4417 = vadd.f32 %v4416, %v4385
    %v4418 = vadd.f32 %v4417, %v4387
    %v4419 = vadd.f32 %v4418, %v4389
    %v4420 = vadd.f32 %v4419, %v4391
    %v4421 = vadd.f32 %v4420, %v4393
    %v4422 = vadd.f32 %v4421, %v4395
    %v4423 = vadd.f32 %v4422, %v4397
    %v4424 = vadd.f32 %v4423, %v4399
    %v4425 = vadd.f32 %v4424, %v4401
    %v4426 = vadd.f32 %v4425, %v4403
    %v4427 = vadd.f32 %v4426, %v4405
    %v4428 = vadd.f32 %v4427, %v4407
    %v4429 = vadd.f32 %v4428, %v4409
    %v4430 = vrot.slane %v4429, 4
    %v4431 = vadd.f32 %v4429, %v4430
    %v4432 = vrot.slane %v4431, 2
    %v4433 = vadd.f32 %v4431, %v4432
    %v4434 = vrot.slane %v4433, 1
    %v4435 = vadd.f32 %v4433, %v4434
    %v4436 = vadd.f32 %v4372, %v4374
    %v4437 = vadd.f32 %v4436, %v4376
    %v4438 = vadd.f32 %v4437, %v4378
    %v4439 = vadd.f32 %v4438, %v4380
    %v4440 = vadd.f32 %v4439, %v4382
    %v4441 = vadd.f32 %v4440, %v4384
    %v4442 = vadd.f32 %v4441, %v4386
    %v4443 = vadd.f32 %v4442, %v4388
    %v4444 = vadd.f32 %v4443, %v4390
    %v4445 = vadd.f32 %v4444, %v4392
    %v4446 = vadd.f32 %v4445, %v4394
    %v4447 = vadd.f32 %v4446, %v4396
    %v4448 = vadd.f32 %v4447, %v4398
    %v4449 = vadd.f32 %v4448, %v4400
    %v4450 = vadd.f32 %v4449, %v4402
    %v4451 = vadd.f32 %v4450, %v4404
    %v4452 = vadd.f32 %v4451, %v4406
    %v4453 = vadd.f32 %v4452, %v4408
    %v4454 = vadd.f32 %v4453, %v4410
    %v4455 = vrot.slane %v4454, 4
    %v4456 = vadd.f32 %v4454, %v4455
    %v4457 = vrot.slane %v4456, 2
    %v4458 = vadd.f32 %v4456, %v4457
    %v4459 = vrot.slane %v4458, 1
    %v4460 = vadd.f32 %v4458, %v4459
    %vm4461 = vcmask 1040384
    %v4462 = vsel %vm4461, %v4345, %v4435
    %v4463 = vsel %vm4461, %v4370, %v4460
    %v4464 = vlaneseq
    %v4465 = vshrl.u32 %v4464, 7
    %v4466 = vadd.s32 %v4465, 8
    %v4467 = vadd.s32 %v4465, 16
    %v4468 = vadd.s32 %v4465, 24
    %v4469 = vadd.s32 %v4465, 32
    %v4470 = vadd.s32 %v4465, 40
    %v4471 = vadd.s32 %v4465, 48
    %v4472 = vadd.s32 %v4465, 56
    %v4473 = vadd.s32 %v4465, 64
    %v4474 = vadd.s32 %v4465, 72
    %v4475 = vadd.s32 %v4465, 80
    %v4476 = vadd.s32 %v4465, 88
    %v4477 = vadd.s32 %v4465, 96
    %v4478 = vadd.s32 %v4465, 104
    %v4479 = vadd.s32 %v4465, 112
    %v4480 = vadd.s32 %v4465, 120
    %v4481 = vadd.s32 %v4465, 128
    %v4482 = vadd.s32 %v4465, 136
    %v4483 = vadd.s32 %v4465, 144
    %v4484 = vadd.s32 %v4465, 152
    %v4485 = vadd.s32 %v4465, 160
    %v4486 = vadd.s32 %v4465, 168
    %v4487 = vadd.s32 %v4465, 176
    %v4488 = vadd.s32 %v4465, 184
    %v4489 = vadd.s32 %v4465, 192
    %v4490 = vadd.s32 %v4465, 200
    %v4491 = vadd.s32 %v4465, 208
    %v4492 = vadd.s32 %v4465, 216
    %v4493 = vadd.s32 %v4465, 224
    %v4494 = vadd.s32 %v4465, 232
    %v4495 = vadd.s32 %v4465, 240
    %v4496 = vadd.s32 %v4465, 248
    %vm4497 = vcmp.lt.s32.totalorder %v4465, 0
    %v4498 = vsub.s32 0, %v4465
    %v4499 = vsel %vm4497, %v4498, %v4465
    %v4500 = vshrl.u32 %v4499, 4
    %v4501 = vand.u32 %v4499, 15
    %v4502 = vsub.s32 0, %v4501
    %v4503 = vsel %vm4497, %v4502, %v4501
    %vm4504 = vcmp.lt.s32.totalorder %v4466, 0
    %v4505 = vsub.s32 0, %v4466
    %v4506 = vsel %vm4504, %v4505, %v4466
    %v4507 = vshrl.u32 %v4506, 4
    %v4508 = vand.u32 %v4506, 15
    %v4509 = vsub.s32 0, %v4508
    %v4510 = vsel %vm4504, %v4509, %v4508
    %vm4511 = vcmp.lt.s32.totalorder %v4467, 0
    %v4512 = vsub.s32 0, %v4467
    %v4513 = vsel %vm4511, %v4512, %v4467
    %v4514 = vshrl.u32 %v4513, 4
    %v4515 = vand.u32 %v4513, 15
    %v4516 = vsub.s32 0, %v4515
    %v4517 = vsel %vm4511, %v4516, %v4515
    %vm4518 = vcmp.lt.s32.totalorder %v4468, 0
    %v4519 = vsub.s32 0, %v4468
    %v4520 = vsel %vm4518, %v4519, %v4468
    %v4521 = vshrl.u32 %v4520, 4
    %v4522 = vand.u32 %v4520, 15
    %v4523 = vsub.s32 0, %v4522
    %v4524 = vsel %vm4518, %v4523, %v4522
    %vm4525 = vcmp.lt.s32.totalorder %v4469, 0
    %v4526 = vsub.s32 0, %v4469
    %v4527 = vsel %vm4525, %v4526, %v4469
    %v4528 = vshrl.u32 %v4527, 4
    %v4529 = vand.u32 %v4527, 15
    %v4530 = vsub.s32 0, %v4529
    %v4531 = vsel %vm4525, %v4530, %v4529
    %vm4532 = vcmp.lt.s32.totalorder %v4470, 0
    %v4533 = vsub.s32 0, %v4470
    %v4534 = vsel %vm4532, %v4533, %v4470
    %v4535 = vshrl.u32 %v4534, 4
    %v4536 = vand.u32 %v4534, 15
    %v4537 = vsub.s32 0, %v4536
    %v4538 = vsel %vm4532, %v4537, %v4536
    %vm4539 = vcmp.lt.s32.totalorder %v4471, 0
    %v4540 = vsub.s32 0, %v4471
    %v4541 = vsel %vm4539, %v4540, %v4471
    %v4542 = vshrl.u32 %v4541, 4
    %v4543 = vand.u32 %v4541, 15
    %v4544 = vsub.s32 0, %v4543
    %v4545 = vsel %vm4539, %v4544, %v4543
    %vm4546 = vcmp.lt.s32.totalorder %v4472, 0
    %v4547 = vsub.s32 0, %v4472
    %v4548 = vsel %vm4546, %v4547, %v4472
    %v4549 = vshrl.u32 %v4548, 4
    %v4550 = vand.u32 %v4548, 15
    %v4551 = vsub.s32 0, %v4550
    %v4552 = vsel %vm4546, %v4551, %v4550
    %vm4553 = vcmp.lt.s32.totalorder %v4473, 0
    %v4554 = vsub.s32 0, %v4473
    %v4555 = vsel %vm4553, %v4554, %v4473
    %v4556 = vshrl.u32 %v4555, 4
    %v4557 = vand.u32 %v4555, 15
    %v4558 = vsub.s32 0, %v4557
    %v4559 = vsel %vm4553, %v4558, %v4557
    %vm4560 = vcmp.lt.s32.totalorder %v4474, 0
    %v4561 = vsub.s32 0, %v4474
    %v4562 = vsel %vm4560, %v4561, %v4474
    %v4563 = vshrl.u32 %v4562, 4
    %v4564 = vand.u32 %v4562, 15
    %v4565 = vsub.s32 0, %v4564
    %v4566 = vsel %vm4560, %v4565, %v4564
    %vm4567 = vcmp.lt.s32.totalorder %v4475, 0
    %v4568 = vsub.s32 0, %v4475
    %v4569 = vsel %vm4567, %v4568, %v4475
    %v4570 = vshrl.u32 %v4569, 4
    %v4571 = vand.u32 %v4569, 15
    %v4572 = vsub.s32 0, %v4571
    %v4573 = vsel %vm4567, %v4572, %v4571
    %vm4574 = vcmp.lt.s32.totalorder %v4476, 0
    %v4575 = vsub.s32 0, %v4476
    %v4576 = vsel %vm4574, %v4575, %v4476
    %v4577 = vshrl.u32 %v4576, 4
    %v4578 = vand.u32 %v4576, 15
    %v4579 = vsub.s32 0, %v4578
    %v4580 = vsel %vm4574, %v4579, %v4578
    %vm4581 = vcmp.lt.s32.totalorder %v4477, 0
    %v4582 = vsub.s32 0, %v4477
    %v4583 = vsel %vm4581, %v4582, %v4477
    %v4584 = vshrl.u32 %v4583, 4
    %v4585 = vand.u32 %v4583, 15
    %v4586 = vsub.s32 0, %v4585
    %v4587 = vsel %vm4581, %v4586, %v4585
    %vm4588 = vcmp.lt.s32.totalorder %v4478, 0
    %v4589 = vsub.s32 0, %v4478
    %v4590 = vsel %vm4588, %v4589, %v4478
    %v4591 = vshrl.u32 %v4590, 4
    %v4592 = vand.u32 %v4590, 15
    %v4593 = vsub.s32 0, %v4592
    %v4594 = vsel %vm4588, %v4593, %v4592
    %vm4595 = vcmp.lt.s32.totalorder %v4479, 0
    %v4596 = vsub.s32 0, %v4479
    %v4597 = vsel %vm4595, %v4596, %v4479
    %v4598 = vshrl.u32 %v4597, 4
    %v4599 = vand.u32 %v4597, 15
    %v4600 = vsub.s32 0, %v4599
    %v4601 = vsel %vm4595, %v4600, %v4599
    %vm4602 = vcmp.lt.s32.totalorder %v4480, 0
    %v4603 = vsub.s32 0, %v4480
    %v4604 = vsel %vm4602, %v4603, %v4480
    %v4605 = vshrl.u32 %v4604, 4
    %v4606 = vand.u32 %v4604, 15
    %v4607 = vsub.s32 0, %v4606
    %v4608 = vsel %vm4602, %v4607, %v4606
    %vm4609 = vcmp.lt.s32.totalorder %v4481, 0
    %v4610 = vsub.s32 0, %v4481
    %v4611 = vsel %vm4609, %v4610, %v4481
    %v4612 = vshrl.u32 %v4611, 4
    %v4613 = vand.u32 %v4611, 15
    %v4614 = vsub.s32 0, %v4613
    %v4615 = vsel %vm4609, %v4614, %v4613
    %vm4616 = vcmp.lt.s32.totalorder %v4482, 0
    %v4617 = vsub.s32 0, %v4482
    %v4618 = vsel %vm4616, %v4617, %v4482
    %v4619 = vshrl.u32 %v4618, 4
    %v4620 = vand.u32 %v4618, 15
    %v4621 = vsub.s32 0, %v4620
    %v4622 = vsel %vm4616, %v4621, %v4620
    %vm4623 = vcmp.lt.s32.totalorder %v4483, 0
    %v4624 = vsub.s32 0, %v4483
    %v4625 = vsel %vm4623, %v4624, %v4483
    %v4626 = vshrl.u32 %v4625, 4
    %v4627 = vand.u32 %v4625, 15
    %v4628 = vsub.s32 0, %v4627
    %v4629 = vsel %vm4623, %v4628, %v4627
    %vm4630 = vcmp.lt.s32.totalorder %v4484, 0
    %v4631 = vsub.s32 0, %v4484
    %v4632 = vsel %vm4630, %v4631, %v4484
    %v4633 = vshrl.u32 %v4632, 4
    %v4634 = vand.u32 %v4632, 15
    %v4635 = vsub.s32 0, %v4634
    %v4636 = vsel %vm4630, %v4635, %v4634
    %vm4637 = vcmp.lt.s32.totalorder %v4485, 0
    %v4638 = vsub.s32 0, %v4485
    %v4639 = vsel %vm4637, %v4638, %v4485
    %v4640 = vshrl.u32 %v4639, 4
    %v4641 = vand.u32 %v4639, 15
    %v4642 = vsub.s32 0, %v4641
    %v4643 = vsel %vm4637, %v4642, %v4641
    %vm4644 = vcmp.lt.s32.totalorder %v4486, 0
    %v4645 = vsub.s32 0, %v4486
    %v4646 = vsel %vm4644, %v4645, %v4486
    %v4647 = vshrl.u32 %v4646, 4
    %v4648 = vand.u32 %v4646, 15
    %v4649 = vsub.s32 0, %v4648
    %v4650 = vsel %vm4644, %v4649, %v4648
    %vm4651 = vcmp.lt.s32.totalorder %v4487, 0
    %v4652 = vsub.s32 0, %v4487
    %v4653 = vsel %vm4651, %v4652, %v4487
    %v4654 = vshrl.u32 %v4653, 4
    %v4655 = vand.u32 %v4653, 15
    %v4656 = vsub.s32 0, %v4655
    %v4657 = vsel %vm4651, %v4656, %v4655
    %vm4658 = vcmp.lt.s32.totalorder %v4488, 0
    %v4659 = vsub.s32 0, %v4488
    %v4660 = vsel %vm4658, %v4659, %v4488
    %v4661 = vshrl.u32 %v4660, 4
    %v4662 = vand.u32 %v4660, 15
    %v4663 = vsub.s32 0, %v4662
    %v4664 = vsel %vm4658, %v4663, %v4662
    %vm4665 = vcmp.lt.s32.totalorder %v4489, 0
    %v4666 = vsub.s32 0, %v4489
    %v4667 = vsel %vm4665, %v4666, %v4489
    %v4668 = vshrl.u32 %v4667, 4
    %v4669 = vand.u32 %v4667, 15
    %v4670 = vsub.s32 0, %v4669
    %v4671 = vsel %vm4665, %v4670, %v4669
    %vm4672 = vcmp.lt.s32.totalorder %v4490, 0
    %v4673 = vsub.s32 0, %v4490
    %v4674 = vsel %vm4672, %v4673, %v4490
    %v4675 = vshrl.u32 %v4674, 4
    %v4676 = vand.u32 %v4674, 15
    %v4677 = vsub.s32 0, %v4676
    %v4678 = vsel %vm4672, %v4677, %v4676
    %vm4679 = vcmp.lt.s32.totalorder %v4491, 0
    %v4680 = vsub.s32 0, %v4491
    %v4681 = vsel %vm4679, %v4680, %v4491
    %v4682 = vshrl.u32 %v4681, 4
    %v4683 = vand.u32 %v4681, 15
    %v4684 = vsub.s32 0, %v4683
    %v4685 = vsel %vm4679, %v4684, %v4683
    %vm4686 = vcmp.lt.s32.totalorder %v4492, 0
    %v4687 = vsub.s32 0, %v4492
    %v4688 = vsel %vm4686, %v4687, %v4492
    %v4689 = vshrl.u32 %v4688, 4
    %v4690 = vand.u32 %v4688, 15
    %v4691 = vsub.s32 0, %v4690
    %v4692 = vsel %vm4686, %v4691, %v4690
    %vm4693 = vcmp.lt.s32.totalorder %v4493, 0
    %v4694 = vsub.s32 0, %v4493
    %v4695 = vsel %vm4693, %v4694, %v4493
    %v4696 = vshrl.u32 %v4695, 4
    %v4697 = vand.u32 %v4695, 15
    %v4698 = vsub.s32 0, %v4697
    %v4699 = vsel %vm4693, %v4698, %v4697
    %vm4700 = vcmp.lt.s32.totalorder %v4494, 0
    %v4701 = vsub.s32 0, %v4494
    %v4702 = vsel %vm4700, %v4701, %v4494
    %v4703 = vshrl.u32 %v4702, 4
    %v4704 = vand.u32 %v4702, 15
    %v4705 = vsub.s32 0, %v4704
    %v4706 = vsel %vm4700, %v4705, %v4704
    %vm4707 = vcmp.lt.s32.totalorder %v4495, 0
    %v4708 = vsub.s32 0, %v4495
    %v4709 = vsel %vm4707, %v4708, %v4495
    %v4710 = vshrl.u32 %v4709, 4
    %v4711 = vand.u32 %v4709, 15
    %v4712 = vsub.s32 0, %v4711
    %v4713 = vsel %vm4707, %v4712, %v4711
    %vm4714 = vcmp.lt.s32.totalorder %v4496, 0
    %v4715 = vsub.s32 0, %v4496
    %v4716 = vsel %vm4714, %v4715, %v4496
    %v4717 = vshrl.u32 %v4716, 4
    %v4718 = vand.u32 %v4716, 15
    %v4719 = vsub.s32 0, %v4718
    %v4720 = vsel %vm4714, %v4719, %v4718
    %vm4721 = vcmp.ne.s32.totalorder %v4503, 0
    %vm4722 = vcmp.ne.s32.totalorder %v4510, 0
    %vm4723 = vcmp.ne.s32.totalorder %v4517, 0
    %vm4724 = vcmp.ne.s32.totalorder %v4524, 0
    %vm4725 = vcmp.ne.s32.totalorder %v4531, 0
    %vm4726 = vcmp.ne.s32.totalorder %v4538, 0
    %vm4727 = vcmp.ne.s32.totalorder %v4545, 0
    %vm4728 = vcmp.ne.s32.totalorder %v4552, 0
    %vm4729 = vcmp.ne.s32.totalorder %v4559, 0
    %vm4730 = vcmp.ne.s32.totalorder %v4566, 0
    %vm4731 = vcmp.ne.s32.totalorder %v4573, 0
    %vm4732 = vcmp.ne.s32.totalorder %v4580, 0
    %vm4733 = vcmp.ne.s32.totalorder %v4587, 0
    %vm4734 = vcmp.ne.s32.totalorder %v4594, 0
    %vm4735 = vcmp.ne.s32.totalorder %v4601, 0
    %vm4736 = vcmp.ne.s32.totalorder %v4608, 0
    %vm4737 = vcmp.ne.s32.totalorder %v4615, 0
    %vm4738 = vcmp.ne.s32.totalorder %v4622, 0
    %vm4739 = vcmp.ne.s32.totalorder %v4629, 0
    %vm4740 = vcmp.ne.s32.totalorder %v4636, 0
    %vm4741 = vcmp.ne.s32.totalorder %v4643, 0
    %vm4742 = vcmp.ne.s32.totalorder %v4650, 0
    %vm4743 = vcmp.ne.s32.totalorder %v4657, 0
    %vm4744 = vcmp.ne.s32.totalorder %v4664, 0
    %vm4745 = vcmp.ne.s32.totalorder %v4671, 0
    %vm4746 = vcmp.ne.s32.totalorder %v4678, 0
    %vm4747 = vcmp.ne.s32.totalorder %v4685, 0
    %vm4748 = vcmp.ne.s32.totalorder %v4692, 0
    %vm4749 = vcmp.ne.s32.totalorder %v4699, 0
    %vm4750 = vcmp.ne.s32.totalorder %v4706, 0
    %vm4751 = vcmp.ne.s32.totalorder %v4713, 0
    %vm4752 = vcmp.ne.s32.totalorder %v4720, 0
    %vm4753 = vcmp.lt.s32.totalorder %v4503, 0
    %vm4754 = vcmp.lt.s32.totalorder %v4510, 0
    %vm4755 = vcmp.lt.s32.totalorder %v4517, 0
    %vm4756 = vcmp.lt.s32.totalorder %v4524, 0
    %vm4757 = vcmp.lt.s32.totalorder %v4531, 0
    %vm4758 = vcmp.lt.s32.totalorder %v4538, 0
    %vm4759 = vcmp.lt.s32.totalorder %v4545, 0
    %vm4760 = vcmp.lt.s32.totalorder %v4552, 0
    %vm4761 = vcmp.lt.s32.totalorder %v4559, 0
    %vm4762 = vcmp.lt.s32.totalorder %v4566, 0
    %vm4763 = vcmp.lt.s32.totalorder %v4573, 0
    %vm4764 = vcmp.lt.s32.totalorder %v4580, 0
    %vm4765 = vcmp.lt.s32.totalorder %v4587, 0
    %vm4766 = vcmp.lt.s32.totalorder %v4594, 0
    %vm4767 = vcmp.lt.s32.totalorder %v4601, 0
    %vm4768 = vcmp.lt.s32.totalorder %v4608, 0
    %vm4769 = vcmp.lt.s32.totalorder %v4615, 0
    %vm4770 = vcmp.lt.s32.totalorder %v4622, 0
    %vm4771 = vcmp.lt.s32.totalorder %v4629, 0
    %vm4772 = vcmp.lt.s32.totalorder %v4636, 0
    %vm4773 = vcmp.lt.s32.totalorder %v4643, 0
    %vm4774 = vcmp.lt.s32.totalorder %v4650, 0
    %vm4775 = vcmp.lt.s32.totalorder %v4657, 0
    %vm4776 = vcmp.lt.s32.totalorder %v4664, 0
    %vm4777 = vcmp.lt.s32.totalorder %v4671, 0
    %vm4778 = vcmp.lt.s32.totalorder %v4678, 0
    %vm4779 = vcmp.lt.s32.totalorder %v4685, 0
    %vm4780 = vcmp.lt.s32.totalorder %v4692, 0
    %vm4781 = vcmp.lt.s32.totalorder %v4699, 0
    %vm4782 = vcmp.lt.s32.totalorder %v4706, 0
    %vm4783 = vcmp.lt.s32.totalorder %v4713, 0
    %vm4784 = vcmp.lt.s32.totalorder %v4720, 0
    %vm4785 = vmand %vm4753, %vm4721
    %vm4786 = vmand %vm4754, %vm4722
    %vm4787 = vmand %vm4755, %vm4723
    %vm4788 = vmand %vm4756, %vm4724
    %vm4789 = vmand %vm4757, %vm4725
    %vm4790 = vmand %vm4758, %vm4726
    %vm4791 = vmand %vm4759, %vm4727
    %vm4792 = vmand %vm4760, %vm4728
    %vm4793 = vmand %vm4761, %vm4729
    %vm4794 = vmand %vm4762, %vm4730
    %vm4795 = vmand %vm4763, %vm4731
    %vm4796 = vmand %vm4764, %vm4732
    %vm4797 = vmand %vm4765, %vm4733
    %vm4798 = vmand %vm4766, %vm4734
    %vm4799 = vmand %vm4767, %vm4735
    %vm4800 = vmand %vm4768, %vm4736
    %vm4801 = vmand %vm4769, %vm4737
    %vm4802 = vmand %vm4770, %vm4738
    %vm4803 = vmand %vm4771, %vm4739
    %vm4804 = vmand %vm4772, %vm4740
    %vm4805 = vmand %vm4773, %vm4741
    %vm4806 = vmand %vm4774, %vm4742
    %vm4807 = vmand %vm4775, %vm4743
    %vm4808 = vmand %vm4776, %vm4744
    %vm4809 = vmand %vm4777, %vm4745
    %vm4810 = vmand %vm4778, %vm4746
    %vm4811 = vmand %vm4779, %vm4747
    %vm4812 = vmand %vm4780, %vm4748
    %vm4813 = vmand %vm4781, %vm4749
    %vm4814 = vmand %vm4782, %vm4750
    %vm4815 = vmand %vm4783, %vm4751
    %vm4816 = vmand %vm4784, %vm4752
    %v4817 = vadd.s32 %v4503, 16
    %v4818 = vadd.s32 %v4510, 16
    %v4819 = vadd.s32 %v4517, 16
    %v4820 = vadd.s32 %v4524, 16
    %v4821 = vadd.s32 %v4531, 16
    %v4822 = vadd.s32 %v4538, 16
    %v4823 = vadd.s32 %v4545, 16
    %v4824 = vadd.s32 %v4552, 16
    %v4825 = vadd.s32 %v4559, 16
    %v4826 = vadd.s32 %v4566, 16
    %v4827 = vadd.s32 %v4573, 16
    %v4828 = vadd.s32 %v4580, 16
    %v4829 = vadd.s32 %v4587, 16
    %v4830 = vadd.s32 %v4594, 16
    %v4831 = vadd.s32 %v4601, 16
    %v4832 = vadd.s32 %v4608, 16
    %v4833 = vadd.s32 %v4615, 16
    %v4834 = vadd.s32 %v4622, 16
    %v4835 = vadd.s32 %v4629, 16
    %v4836 = vadd.s32 %v4636, 16
    %v4837 = vadd.s32 %v4643, 16
    %v4838 = vadd.s32 %v4650, 16
    %v4839 = vadd.s32 %v4657, 16
    %v4840 = vadd.s32 %v4664, 16
    %v4841 = vadd.s32 %v4671, 16
    %v4842 = vadd.s32 %v4678, 16
    %v4843 = vadd.s32 %v4685, 16
    %v4844 = vadd.s32 %v4692, 16
    %v4845 = vadd.s32 %v4699, 16
    %v4846 = vadd.s32 %v4706, 16
    %v4847 = vadd.s32 %v4713, 16
    %v4848 = vadd.s32 %v4720, 16
    %v4849 = vsel %vm4785, %v4817, %v4503
    %v4850 = vsel %vm4786, %v4818, %v4510
    %v4851 = vsel %vm4787, %v4819, %v4517
    %v4852 = vsel %vm4788, %v4820, %v4524
    %v4853 = vsel %vm4789, %v4821, %v4531
    %v4854 = vsel %vm4790, %v4822, %v4538
    %v4855 = vsel %vm4791, %v4823, %v4545
    %v4856 = vsel %vm4792, %v4824, %v4552
    %v4857 = vsel %vm4793, %v4825, %v4559
    %v4858 = vsel %vm4794, %v4826, %v4566
    %v4859 = vsel %vm4795, %v4827, %v4573
    %v4860 = vsel %vm4796, %v4828, %v4580
    %v4861 = vsel %vm4797, %v4829, %v4587
    %v4862 = vsel %vm4798, %v4830, %v4594
    %v4863 = vsel %vm4799, %v4831, %v4601
    %v4864 = vsel %vm4800, %v4832, %v4608
    %v4865 = vsel %vm4801, %v4833, %v4615
    %v4866 = vsel %vm4802, %v4834, %v4622
    %v4867 = vsel %vm4803, %v4835, %v4629
    %v4868 = vsel %vm4804, %v4836, %v4636
    %v4869 = vsel %vm4805, %v4837, %v4643
    %v4870 = vsel %vm4806, %v4838, %v4650
    %v4871 = vsel %vm4807, %v4839, %v4657
    %v4872 = vsel %vm4808, %v4840, %v4664
    %v4873 = vsel %vm4809, %v4841, %v4671
    %v4874 = vsel %vm4810, %v4842, %v4678
    %v4875 = vsel %vm4811, %v4843, %v4685
    %v4876 = vsel %vm4812, %v4844, %v4692
    %v4877 = vsel %vm4813, %v4845, %v4699
    %v4878 = vsel %vm4814, %v4846, %v4706
    %v4879 = vsel %vm4815, %v4847, %v4713
    %v4880 = vsel %vm4816, %v4848, %v4720
    %v4881 = vlaneseq
    %v4882 = vand.u32 %v4881, 127
    %v4883 = vadd.s32 %v4882, 128
    %vm4884 = vcmp.lt.s32.totalorder %v4882, 0
    %v4885 = vsub.s32 0, %v4882
    %v4886 = vsel %vm4884, %v4885, %v4882
    %v4887 = vshrl.u32 %v4886, 4
    %v4888 = vand.u32 %v4886, 15
    %v4889 = vsub.s32 0, %v4888
    %v4890 = vsel %vm4884, %v4889, %v4888
    %vm4891 = vcmp.lt.s32.totalorder %v4883, 0
    %v4892 = vsub.s32 0, %v4883
    %v4893 = vsel %vm4891, %v4892, %v4883
    %v4894 = vshrl.u32 %v4893, 4
    %v4895 = vand.u32 %v4893, 15
    %v4896 = vsub.s32 0, %v4895
    %v4897 = vsel %vm4891, %v4896, %v4895
    %vm4898 = vcmp.ne.s32.totalorder %v4890, 0
    %vm4899 = vcmp.ne.s32.totalorder %v4897, 0
    %vm4900 = vcmp.lt.s32.totalorder %v4890, 0
    %vm4901 = vcmp.lt.s32.totalorder %v4897, 0
    %vm4902 = vmand %vm4900, %vm4898
    %vm4903 = vmand %vm4901, %vm4899
    %v4904 = vadd.s32 %v4890, 16
    %v4905 = vadd.s32 %v4897, 16
    %v4906 = vsel %vm4902, %v4904, %v4890
    %v4907 = vsel %vm4903, %v4905, %v4897
    %vm4908 = vcmp.eq.s32.totalorder %v4849, %v4906
    %vm4909 = vcmp.eq.s32.totalorder %v4849, %v4907
    %vm4910 = vcmp.eq.s32.totalorder %v4850, %v4906
    %vm4911 = vcmp.eq.s32.totalorder %v4850, %v4907
    %vm4912 = vcmp.eq.s32.totalorder %v4851, %v4906
    %vm4913 = vcmp.eq.s32.totalorder %v4851, %v4907
    %vm4914 = vcmp.eq.s32.totalorder %v4852, %v4906
    %vm4915 = vcmp.eq.s32.totalorder %v4852, %v4907
    %vm4916 = vcmp.eq.s32.totalorder %v4853, %v4906
    %vm4917 = vcmp.eq.s32.totalorder %v4853, %v4907
    %vm4918 = vcmp.eq.s32.totalorder %v4854, %v4906
    %vm4919 = vcmp.eq.s32.totalorder %v4854, %v4907
    %vm4920 = vcmp.eq.s32.totalorder %v4855, %v4906
    %vm4921 = vcmp.eq.s32.totalorder %v4855, %v4907
    %vm4922 = vcmp.eq.s32.totalorder %v4856, %v4906
    %vm4923 = vcmp.eq.s32.totalorder %v4856, %v4907
    %vm4924 = vcmp.eq.s32.totalorder %v4857, %v4906
    %vm4925 = vcmp.eq.s32.totalorder %v4857, %v4907
    %vm4926 = vcmp.eq.s32.totalorder %v4858, %v4906
    %vm4927 = vcmp.eq.s32.totalorder %v4858, %v4907
    %vm4928 = vcmp.eq.s32.totalorder %v4859, %v4906
    %vm4929 = vcmp.eq.s32.totalorder %v4859, %v4907
    %vm4930 = vcmp.eq.s32.totalorder %v4860, %v4906
    %vm4931 = vcmp.eq.s32.totalorder %v4860, %v4907
    %vm4932 = vcmp.eq.s32.totalorder %v4861, %v4906
    %vm4933 = vcmp.eq.s32.totalorder %v4861, %v4907
    %vm4934 = vcmp.eq.s32.totalorder %v4862, %v4906
    %vm4935 = vcmp.eq.s32.totalorder %v4862, %v4907
    %vm4936 = vcmp.eq.s32.totalorder %v4863, %v4906
    %vm4937 = vcmp.eq.s32.totalorder %v4863, %v4907
    %vm4938 = vcmp.eq.s32.totalorder %v4864, %v4906
    %vm4939 = vcmp.eq.s32.totalorder %v4864, %v4907
    %vm4940 = vcmp.eq.s32.totalorder %v4865, %v4906
    %vm4941 = vcmp.eq.s32.totalorder %v4865, %v4907
    %vm4942 = vcmp.eq.s32.totalorder %v4866, %v4906
    %vm4943 = vcmp.eq.s32.totalorder %v4866, %v4907
    %vm4944 = vcmp.eq.s32.totalorder %v4867, %v4906
    %vm4945 = vcmp.eq.s32.totalorder %v4867, %v4907
    %vm4946 = vcmp.eq.s32.totalorder %v4868, %v4906
    %vm4947 = vcmp.eq.s32.totalorder %v4868, %v4907
    %vm4948 = vcmp.eq.s32.totalorder %v4869, %v4906
    %vm4949 = vcmp.eq.s32.totalorder %v4869, %v4907
    %vm4950 = vcmp.eq.s32.totalorder %v4870, %v4906
    %vm4951 = vcmp.eq.s32.totalorder %v4870, %v4907
    %vm4952 = vcmp.eq.s32.totalorder %v4871, %v4906
    %vm4953 = vcmp.eq.s32.totalorder %v4871, %v4907
    %vm4954 = vcmp.eq.s32.totalorder %v4872, %v4906
    %vm4955 = vcmp.eq.s32.totalorder %v4872, %v4907
    %vm4956 = vcmp.eq.s32.totalorder %v4873, %v4906
    %vm4957 = vcmp.eq.s32.totalorder %v4873, %v4907
    %vm4958 = vcmp.eq.s32.totalorder %v4874, %v4906
    %vm4959 = vcmp.eq.s32.totalorder %v4874, %v4907
    %vm4960 = vcmp.eq.s32.totalorder %v4875, %v4906
    %vm4961 = vcmp.eq.s32.totalorder %v4875, %v4907
    %vm4962 = vcmp.eq.s32.totalorder %v4876, %v4906
    %vm4963 = vcmp.eq.s32.totalorder %v4876, %v4907
    %vm4964 = vcmp.eq.s32.totalorder %v4877, %v4906
    %vm4965 = vcmp.eq.s32.totalorder %v4877, %v4907
    %vm4966 = vcmp.eq.s32.totalorder %v4878, %v4906
    %vm4967 = vcmp.eq.s32.totalorder %v4878, %v4907
    %vm4968 = vcmp.eq.s32.totalorder %v4879, %v4906
    %vm4969 = vcmp.eq.s32.totalorder %v4879, %v4907
    %vm4970 = vcmp.eq.s32.totalorder %v4880, %v4906
    %vm4971 = vcmp.eq.s32.totalorder %v4880, %v4907
    %v4972 = vsel %vm4908, 1, 0
    %v4973 = vsel %vm4909, 1, 0
    %v4974 = vsel %vm4910, 1, 0
    %v4975 = vsel %vm4911, 1, 0
    %v4976 = vsel %vm4912, 1, 0
    %v4977 = vsel %vm4913, 1, 0
    %v4978 = vsel %vm4914, 1, 0
    %v4979 = vsel %vm4915, 1, 0
    %v4980 = vsel %vm4916, 1, 0
    %v4981 = vsel %vm4917, 1, 0
    %v4982 = vsel %vm4918, 1, 0
    %v4983 = vsel %vm4919, 1, 0
    %v4984 = vsel %vm4920, 1, 0
    %v4985 = vsel %vm4921, 1, 0
    %v4986 = vsel %vm4922, 1, 0
    %v4987 = vsel %vm4923, 1, 0
    %v4988 = vsel %vm4924, 1, 0
    %v4989 = vsel %vm4925, 1, 0
    %v4990 = vsel %vm4926, 1, 0
    %v4991 = vsel %vm4927, 1, 0
    %v4992 = vsel %vm4928, 1, 0
    %v4993 = vsel %vm4929, 1, 0
    %v4994 = vsel %vm4930, 1, 0
    %v4995 = vsel %vm4931, 1, 0
    %v4996 = vsel %vm4932, 1, 0
    %v4997 = vsel %vm4933, 1, 0
    %v4998 = vsel %vm4934, 1, 0
    %v4999 = vsel %vm4935, 1, 0
    %v5000 = vsel %vm4936, 1, 0
    %v5001 = vsel %vm4937, 1, 0
    %v5002 = vsel %vm4938, 1, 0
    %v5003 = vsel %vm4939, 1, 0
    %v5004 = vsel %vm4940, 1, 0
    %v5005 = vsel %vm4941, 1, 0
    %v5006 = vsel %vm4942, 1, 0
    %v5007 = vsel %vm4943, 1, 0
    %v5008 = vsel %vm4944, 1, 0
    %v5009 = vsel %vm4945, 1, 0
    %v5010 = vsel %vm4946, 1, 0
    %v5011 = vsel %vm4947, 1, 0
    %v5012 = vsel %vm4948, 1, 0
    %v5013 = vsel %vm4949, 1, 0
    %v5014 = vsel %vm4950, 1, 0
    %v5015 = vsel %vm4951, 1, 0
    %v5016 = vsel %vm4952, 1, 0
    %v5017 = vsel %vm4953, 1, 0
    %v5018 = vsel %vm4954, 1, 0
    %v5019 = vsel %vm4955, 1, 0
    %v5020 = vsel %vm4956, 1, 0
    %v5021 = vsel %vm4957, 1, 0
    %v5022 = vsel %vm4958, 1, 0
    %v5023 = vsel %vm4959, 1, 0
    %v5024 = vsel %vm4960, 1, 0
    %v5025 = vsel %vm4961, 1, 0
    %v5026 = vsel %vm4962, 1, 0
    %v5027 = vsel %vm4963, 1, 0
    %v5028 = vsel %vm4964, 1, 0
    %v5029 = vsel %vm4965, 1, 0
    %v5030 = vsel %vm4966, 1, 0
    %v5031 = vsel %vm4967, 1, 0
    %v5032 = vsel %vm4968, 1, 0
    %v5033 = vsel %vm4969, 1, 0
    %v5034 = vsel %vm4970, 1, 0
    %v5035 = vsel %vm4971, 1, 0
    %v5036 = vcvt.s32.f32 %v4972
    %v5037 = vcvt.s32.f32 %v4973
    %v5038 = vcvt.s32.f32 %v4974
    %v5039 = vcvt.s32.f32 %v4975
    %v5040 = vcvt.s32.f32 %v4976
    %v5041 = vcvt.s32.f32 %v4977
    %v5042 = vcvt.s32.f32 %v4978
    %v5043 = vcvt.s32.f32 %v4979
    %v5044 = vcvt.s32.f32 %v4980
    %v5045 = vcvt.s32.f32 %v4981
    %v5046 = vcvt.s32.f32 %v4982
    %v5047 = vcvt.s32.f32 %v4983
    %v5048 = vcvt.s32.f32 %v4984
    %v5049 = vcvt.s32.f32 %v4985
    %v5050 = vcvt.s32.f32 %v4986
    %v5051 = vcvt.s32.f32 %v4987
    %v5052 = vcvt.s32.f32 %v4988
    %v5053 = vcvt.s32.f32 %v4989
    %v5054 = vcvt.s32.f32 %v4990
    %v5055 = vcvt.s32.f32 %v4991
    %v5056 = vcvt.s32.f32 %v4992
    %v5057 = vcvt.s32.f32 %v4993
    %v5058 = vcvt.s32.f32 %v4994
    %v5059 = vcvt.s32.f32 %v4995
    %v5060 = vcvt.s32.f32 %v4996
    %v5061 = vcvt.s32.f32 %v4997
    %v5062 = vcvt.s32.f32 %v4998
    %v5063 = vcvt.s32.f32 %v4999
    %v5064 = vcvt.s32.f32 %v5000
    %v5065 = vcvt.s32.f32 %v5001
    %v5066 = vcvt.s32.f32 %v5002
    %v5067 = vcvt.s32.f32 %v5003
    %v5068 = vcvt.s32.f32 %v5004
    %v5069 = vcvt.s32.f32 %v5005
    %v5070 = vcvt.s32.f32 %v5006
    %v5071 = vcvt.s32.f32 %v5007
    %v5072 = vcvt.s32.f32 %v5008
    %v5073 = vcvt.s32.f32 %v5009
    %v5074 = vcvt.s32.f32 %v5010
    %v5075 = vcvt.s32.f32 %v5011
    %v5076 = vcvt.s32.f32 %v5012
    %v5077 = vcvt.s32.f32 %v5013
    %v5078 = vcvt.s32.f32 %v5014
    %v5079 = vcvt.s32.f32 %v5015
    %v5080 = vcvt.s32.f32 %v5016
    %v5081 = vcvt.s32.f32 %v5017
    %v5082 = vcvt.s32.f32 %v5018
    %v5083 = vcvt.s32.f32 %v5019
    %v5084 = vcvt.s32.f32 %v5020
    %v5085 = vcvt.s32.f32 %v5021
    %v5086 = vcvt.s32.f32 %v5022
    %v5087 = vcvt.s32.f32 %v5023
    %v5088 = vcvt.s32.f32 %v5024
    %v5089 = vcvt.s32.f32 %v5025
    %v5090 = vcvt.s32.f32 %v5026
    %v5091 = vcvt.s32.f32 %v5027
    %v5092 = vcvt.s32.f32 %v5028
    %v5093 = vcvt.s32.f32 %v5029
    %v5094 = vcvt.s32.f32 %v5030
    %v5095 = vcvt.s32.f32 %v5031
    %v5096 = vcvt.s32.f32 %v5032
    %v5097 = vcvt.s32.f32 %v5033
    %v5098 = vcvt.s32.f32 %v5034
    %v5099 = vcvt.s32.f32 %v5035
    %5100 = vmatprep.subr.mxu0 %v5037
    %5101 = vmatpush1.msra.mxu0 %v5036
    %5102 = vmatprep.subr.mxu0 %v5039
    %5103 = vmatpush1.msra.mxu0 %v5038
    %5104 = vmatprep.subr.mxu0 %v5041
    %5105 = vmatpush1.msra.mxu0 %v5040
    %5106 = vmatprep.subr.mxu0 %v5043
    %5107 = vmatpush1.msra.mxu0 %v5042
    %5108 = vmatprep.subr.mxu0 %v5045
    %5109 = vmatpush1.msra.mxu0 %v5044
    %5110 = vmatprep.subr.mxu0 %v5047
    %5111 = vmatpush1.msra.mxu0 %v5046
    %5112 = vmatprep.subr.mxu0 %v5049
    %5113 = vmatpush1.msra.mxu0 %v5048
    %5114 = vmatprep.subr.mxu0 %v5051
    %5115 = vmatpush1.msra.mxu0 %v5050
    %5116 = vmatprep.subr.mxu0 %v5053
    %5117 = vmatpush1.msra.mxu0 %v5052
    %5118 = vmatprep.subr.mxu0 %v5055
    %5119 = vmatpush1.msra.mxu0 %v5054
    %5120 = vmatprep.subr.mxu0 %v5057
    %5121 = vmatpush1.msra.mxu0 %v5056
    %5122 = vmatprep.subr.mxu0 %v5059
    %5123 = vmatpush1.msra.mxu0 %v5058
    %5124 = vmatprep.subr.mxu0 %v5061
    %5125 = vmatpush1.msra.mxu0 %v5060
    %5126 = vmatprep.subr.mxu0 %v5063
    %5127 = vmatpush1.msra.mxu0 %v5062
    %5128 = vmatprep.subr.mxu0 %v5065
    %5129 = vmatpush1.msra.mxu0 %v5064
    %5130 = vmatprep.subr.mxu0 %v5067
    %5131 = vmatpush1.msra.mxu0 %v5066
    %5132 = vmatprep.subr.mxu0 %v5069
    %5133 = vmatpush1.msra.mxu0 %v5068
    %5134 = vmatprep.subr.mxu0 %v5071
    %5135 = vmatpush1.msra.mxu0 %v5070
    %5136 = vmatprep.subr.mxu0 %v5073
    %5137 = vmatpush1.msra.mxu0 %v5072
    %5138 = vmatprep.subr.mxu0 %v5075
    %5139 = vmatpush1.msra.mxu0 %v5074
    %5140 = vmatprep.subr.mxu0 %v5077
    %5141 = vmatpush1.msra.mxu0 %v5076
    %5142 = vmatprep.subr.mxu0 %v5079
    %5143 = vmatpush1.msra.mxu0 %v5078
    %5144 = vmatprep.subr.mxu0 %v5081
    %5145 = vmatpush1.msra.mxu0 %v5080
    %5146 = vmatprep.subr.mxu0 %v5083
    %5147 = vmatpush1.msra.mxu0 %v5082
    %5148 = vmatprep.subr.mxu0 %v5085
    %5149 = vmatpush1.msra.mxu0 %v5084
    %5150 = vmatprep.subr.mxu0 %v5087
    %5151 = vmatpush1.msra.mxu0 %v5086
    %5152 = vmatprep.subr.mxu0 %v5089
    %5153 = vmatpush1.msra.mxu0 %v5088
    %5154 = vmatprep.subr.mxu0 %v5091
    %5155 = vmatpush1.msra.mxu0 %v5090
    %5156 = vmatprep.subr.mxu0 %v5093
    %5157 = vmatpush1.msra.mxu0 %v5092
    %5158 = vmatprep.subr.mxu0 %v5095
    %5159 = vmatpush1.msra.mxu0 %v5094
    %5160 = vmatprep.subr.mxu0 %v5097
    %5161 = vmatpush1.msra.mxu0 %v5096
    %5162 = vmatprep.subr.mxu0 %v5099
    %5163 = vmatpush1.msra.mxu0 %v5098
    %5164 = vmatprep.mubr.f32.mxu0 %v4463
    %5165 = vmatmul.mubr.f32.gmra.mrb[0].mxu0 %v4462
    %v5166 = vpop.f32.mrb[0].mxu0
    %v5167 = vadd.f32 0.0, %v5166
    %v5168 = vpop.f32.mrb[0].mxu0
    %v5169 = vadd.f32 0.0, %v5168
    %5170 = vdwg.mxu0
    %v5171 = vmul.f32 %v5167, 0.001953125
    %v5172 = vmul.f32 %v5169, 0.001953125
    %v5173 = vmul.f32 %v5171, %v5171
    %v5174 = vmul.f32 %v5172, %v5172
    %v5177 = vrot.slane %v5173, 7
    %v5178 = vrot.slane %v5174, 7
    %v5181 = vsub.f32 %v5171, %v5177
    %v5182 = vsub.f32 %v5172, %v5178
    %v5183 = vlaneseq
    %v5184 = vshrl.u32 %v5183, 7
    %v5185 = vsub.s32 0, %v5184
    %v5186 = vrot.slane %v5171, %v5185
    %v5187 = vlaneseq
    %v5188 = vshrl.u32 %v5187, 7
    %v5189 = vsub.s32 0, %v5188
    %v5190 = vrot.slane %v5172, %v5189
    %v5191 = vsub.f32 %v4121, %v5186
    %v5192 = vsub.f32 %v4122, %v5190
    %v5193 = vsub.f32 %v4123, %v5186
    %v5194 = vsub.f32 %v4124, %v5190
    %v5195 = vsub.f32 %v4125, %v5186
    %v5196 = vsub.f32 %v4126, %v5190
    %v5197 = vsub.f32 %v4127, %v5186
    %v5198 = vsub.f32 %v4128, %v5190
    %v5199 = vsub.f32 %v4129, %v5186
    %v5200 = vsub.f32 %v4130, %v5190
    %v5201 = vsub.f32 %v4131, %v5186
    %v5202 = vsub.f32 %v4132, %v5190
    %v5203 = vsub.f32 %v4133, %v5186
    %v5204 = vsub.f32 %v4134, %v5190
    %v5205 = vsub.f32 %v4135, %v5186
    %v5206 = vsub.f32 %v4136, %v5190
    %v5207 = vsub.f32 %v4137, %v5186
    %v5208 = vsub.f32 %v4138, %v5190
    %v5209 = vsub.f32 %v4139, %v5186
    %v5210 = vsub.f32 %v4140, %v5190
    %v5211 = vsub.f32 %v4141, %v5186
    %v5212 = vsub.f32 %v4142, %v5190
    %v5213 = vsub.f32 %v4143, %v5186
    %v5214 = vsub.f32 %v4144, %v5190
    %v5215 = vsub.f32 %v4145, %v5186
    %v5216 = vsub.f32 %v4146, %v5190
    %v5217 = vsub.f32 %v4147, %v5186
    %v5218 = vsub.f32 %v4148, %v5190
    %v5219 = vsub.f32 %v4149, %v5186
    %v5220 = vsub.f32 %v4150, %v5190
    %v5221 = vsub.f32 %v4151, %v5186
    %v5222 = vsub.f32 %v4152, %v5190
    %v5223 = vsub.f32 %v4153, %v5186
    %v5224 = vsub.f32 %v4154, %v5190
    %v5225 = vsub.f32 %v4155, %v5186
    %v5226 = vsub.f32 %v4156, %v5190
    %v5227 = vsub.f32 %v4157, %v5186
    %v5228 = vsub.f32 %v4158, %v5190
    %v5229 = vsub.f32 %v4159, %v5186
    %v5230 = vsub.f32 %v4160, %v5190
    %v5231 = vadd.f32 %v5181, 1e-05
    %v5232 = vadd.f32 %v5182, 1e-05
    %v5233 = vrsqrt.pop %v5231
    %v5234 = vrsqrt.pop %v5232
    %v5235 = vlaneseq
    %v5236 = vshrl.u32 %v5235, 7
    %v5237 = vsub.s32 1, %v5236
    %v5238 = vrot.slane %v5233, %v5237
    %v5239 = vlaneseq
    %v5240 = vshrl.u32 %v5239, 7
    %v5241 = vsub.s32 1, %v5240
    %v5242 = vrot.slane %v5234, %v5241
    %v5243 = vmul.f32 %v5191, %v5238
    %v5244 = vmul.f32 %v5192, %v5242
    %v5245 = vmul.f32 %v5193, %v5238
    %v5246 = vmul.f32 %v5194, %v5242
    %v5247 = vmul.f32 %v5195, %v5238
    %v5248 = vmul.f32 %v5196, %v5242
    %v5249 = vmul.f32 %v5197, %v5238
    %v5250 = vmul.f32 %v5198, %v5242
    %v5251 = vmul.f32 %v5199, %v5238
    %v5252 = vmul.f32 %v5200, %v5242
    %v5253 = vmul.f32 %v5201, %v5238
    %v5254 = vmul.f32 %v5202, %v5242
    %v5255 = vmul.f32 %v5203, %v5238
    %v5256 = vmul.f32 %v5204, %v5242
    %v5257 = vmul.f32 %v5205, %v5238
    %v5258 = vmul.f32 %v5206, %v5242
    %v5259 = vmul.f32 %v5207, %v5238
    %v5260 = vmul.f32 %v5208, %v5242
    %v5261 = vmul.f32 %v5209, %v5238
    %v5262 = vmul.f32 %v5210, %v5242
    %v5263 = vmul.f32 %v5211, %v5238
    %v5264 = vmul.f32 %v5212, %v5242
    %v5265 = vmul.f32 %v5213, %v5238
    %v5266 = vmul.f32 %v5214, %v5242
    %v5267 = vmul.f32 %v5215, %v5238
    %v5268 = vmul.f32 %v5216, %v5242
    %v5269 = vmul.f32 %v5217, %v5238
    %v5270 = vmul.f32 %v5218, %v5242
    %v5271 = vmul.f32 %v5219, %v5238
    %v5272 = vmul.f32 %v5220, %v5242
    %v5273 = vmul.f32 %v5221, %v5238
    %v5274 = vmul.f32 %v5222, %v5242
    %v5275 = vmul.f32 %v5223, %v5238
    %v5276 = vmul.f32 %v5224, %v5242
    %v5277 = vmul.f32 %v5225, %v5238
    %v5278 = vmul.f32 %v5226, %v5242
    %v5279 = vmul.f32 %v5227, %v5238
    %v5280 = vmul.f32 %v5228, %v5242
    %v5281 = vmul.f32 %v5229, %v5238
    %v5282 = vmul.f32 %v5230, %v5242
    %v5283 = vmul.f32 %v5243, 0.2
    %v5284 = vmul.f32 %v5244, 0.2
    %v5285 = vmul.f32 %v5245, 0.2
    %v5286 = vmul.f32 %v5246, 0.2
    %v5287 = vmul.f32 %v5247, 0.2
    %v5288 = vmul.f32 %v5248, 0.2
    %v5289 = vmul.f32 %v5249, 0.2
    %v5290 = vmul.f32 %v5250, 0.2
    %v5291 = vmul.f32 %v5251, 0.2
    %v5292 = vmul.f32 %v5252, 0.2
    %v5293 = vmul.f32 %v5253, 0.2
    %v5294 = vmul.f32 %v5254, 0.2
    %v5295 = vmul.f32 %v5255, 0.2
    %v5296 = vmul.f32 %v5256, 0.2
    %v5297 = vmul.f32 %v5257, 0.2
    %v5298 = vmul.f32 %v5258, 0.2
    %v5299 = vmul.f32 %v5259, 0.2
    %v5300 = vmul.f32 %v5260, 0.2
    %v5301 = vmul.f32 %v5261, 0.2
    %v5302 = vmul.f32 %v5262, 0.2
    %v5303 = vmul.f32 %v5263, 0.2
    %v5304 = vmul.f32 %v5264, 0.2
    %v5305 = vmul.f32 %v5265, 0.2
    %v5306 = vmul.f32 %v5266, 0.2
    %v5307 = vmul.f32 %v5267, 0.2
    %v5308 = vmul.f32 %v5268, 0.2
    %v5309 = vmul.f32 %v5269, 0.2
    %v5310 = vmul.f32 %v5270, 0.2
    %v5311 = vmul.f32 %v5271, 0.2
    %v5312 = vmul.f32 %v5272, 0.2
    %v5313 = vmul.f32 %v5273, 0.2
    %v5314 = vmul.f32 %v5274, 0.2
    %v5315 = vmul.f32 %v5275, 0.2
    %v5316 = vmul.f32 %v5276, 0.2
    %v5317 = vmul.f32 %v5277, 0.2
    %v5318 = vmul.f32 %v5278, 0.2
    %v5319 = vmul.f32 %v5279, 0.2
    %v5320 = vmul.f32 %v5280, 0.2
    %v5321 = vmul.f32 %v5281, 0.2
    %v5322 = vmul.f32 %v5282, 0.2
    %v5323 = vmax.f32 %v5243, %v5283
    %v5324 = vmax.f32 %v5244, %v5284
    %v5325 = vmax.f32 %v5245, %v5285
    %v5326 = vmax.f32 %v5246, %v5286
    %v5327 = vmax.f32 %v5247, %v5287
    %v5328 = vmax.f32 %v5248, %v5288
    %v5329 = vmax.f32 %v5249, %v5289
    %v5330 = vmax.f32 %v5250, %v5290
    %v5331 = vmax.f32 %v5251, %v5291
    %v5332 = vmax.f32 %v5252, %v5292
    %v5333 = vmax.f32 %v5253, %v5293
    %v5334 = vmax.f32 %v5254, %v5294
    %v5335 = vmax.f32 %v5255, %v5295
    %v5336 = vmax.f32 %v5256, %v5296
    %v5337 = vmax.f32 %v5257, %v5297
    %v5338 = vmax.f32 %v5258, %v5298
    %v5339 = vmax.f32 %v5259, %v5299
    %v5340 = vmax.f32 %v5260, %v5300
    %v5341 = vmax.f32 %v5261, %v5301
    %v5342 = vmax.f32 %v5262, %v5302
    %v5343 = vmax.f32 %v5263, %v5303
    %v5344 = vmax.f32 %v5264, %v5304
    %v5345 = vmax.f32 %v5265, %v5305
    %v5346 = vmax.f32 %v5266, %v5306
    %v5347 = vmax.f32 %v5267, %v5307
    %v5348 = vmax.f32 %v5268, %v5308
    %v5349 = vmax.f32 %v5269, %v5309
    %v5350 = vmax.f32 %v5270, %v5310
    %v5351 = vmax.f32 %v5271, %v5311
    %v5352 = vmax.f32 %v5272, %v5312
    %v5353 = vmax.f32 %v5273, %v5313
    %v5354 = vmax.f32 %v5274, %v5314
    %v5355 = vmax.f32 %v5275, %v5315
    %v5356 = vmax.f32 %v5276, %v5316
    %v5357 = vmax.f32 %v5277, %v5317
    %v5358 = vmax.f32 %v5278, %v5318
    %v5359 = vmax.f32 %v5279, %v5319
    %v5360 = vmax.f32 %v5280, %v5320
    %v5361 = vmax.f32 %v5281, %v5321
    %v5362 = vmax.f32 %v5282, %v5322
    %5363 = vst [vmem:[#allocation2] sm:$0xff] 0
    %5364 = vst [vmem:[#allocation2 + $0x8] sm:$0xff] 0
    %5365 = vst [vmem:[#allocation2 + $0x10] sm:$0xff] 0
    %5366 = vst [vmem:[#allocation2 + $0x18] sm:$0xff] 0
    %5367 = vst [vmem:[#allocation2 + $0x20] sm:$0xff] 0
    %5368 = vst [vmem:[#allocation2 + $0x28] sm:$0xff] 0
    %5369 = vst [vmem:[#allocation2 + $0x30] sm:$0xff] 0
    %5370 = vst [vmem:[#allocation2 + $0x38] sm:$0xff] 0
    %5371 = vst [vmem:[#allocation2 + $0x40] sm:$0xff] 0
    %5372 = vst [vmem:[#allocation2 + $0x48] sm:$0xff] 0
    %5373 = vst [vmem:[#allocation2 + $0x50] sm:$0xff] 0
    %5374 = vst [vmem:[#allocation2 + $0x58] sm:$0xff] 0
    %5375 = vst [vmem:[#allocation2 + $0x60] sm:$0xff] 0
    %5376 = vst [vmem:[#allocation2 + $0x68] sm:$0xff] 0
    %5377 = vst [vmem:[#allocation2 + $0x70] sm:$0xff] 0
    %5378 = vst [vmem:[#allocation2 + $0x78] sm:$0xff] 0
    %5379 = vst [vmem:[#allocation2 + $0x80] sm:$0xff] 0
    %5380 = vst [vmem:[#allocation2 + $0x88] sm:$0xff] 0
    %5381 = vst [vmem:[#allocation2 + $0x90] sm:$0xff] 0
    %5382 = vst [vmem:[#allocation2 + $0x98] sm:$0xff] 0
    %5383 = vst [vmem:[#allocation2 + $0xa0] sm:$0xff] 0
    %5384 = vst [vmem:[#allocation2 + $0xa8] sm:$0xff] 0
    %5385 = vst [vmem:[#allocation2 + $0xb0] sm:$0xff] 0
    %v5386 = vmul.f32 %v5323, %v2093
    %v5387 = vmul.f32 %v5324, %v2093
    %v5388 = vmul.f32 %v5325, %v2098
    %v5389 = vmul.f32 %v5326, %v2098
    %v5390 = vmul.f32 %v5327, %v2103
    %v5391 = vmul.f32 %v5328, %v2103
    %v5392 = vmul.f32 %v5329, %v2108
    %v5393 = vmul.f32 %v5330, %v2108
    %v5394 = vmul.f32 %v5331, %v2113
    %v5395 = vmul.f32 %v5332, %v2113
    %v5396 = vmul.f32 %v5333, %v2118
    %v5397 = vmul.f32 %v5334, %v2118
    %v5398 = vmul.f32 %v5335, %v2123
    %v5399 = vmul.f32 %v5336, %v2123
    %v5400 = vmul.f32 %v5337, %v2128
    %v5401 = vmul.f32 %v5338, %v2128
    %v5402 = vmul.f32 %v5339, %v2133
    %v5403 = vmul.f32 %v5340, %v2133
    %v5404 = vmul.f32 %v5341, %v2138
    %v5405 = vmul.f32 %v5342, %v2138
    %v5406 = vmul.f32 %v5343, %v2143
    %v5407 = vmul.f32 %v5344, %v2143
    %v5408 = vmul.f32 %v5345, %v2148
    %v5409 = vmul.f32 %v5346, %v2148
    %v5410 = vmul.f32 %v5347, %v2153
    %v5411 = vmul.f32 %v5348, %v2153
    %v5412 = vmul.f32 %v5349, %v2158
    %v5413 = vmul.f32 %v5350, %v2158
    %v5414 = vmul.f32 %v5351, %v2163
    %v5415 = vmul.f32 %v5352, %v2163
    %v5416 = vmul.f32 %v5353, %v2168
    %v5417 = vmul.f32 %v5354, %v2168
    %v5418 = vmul.f32 %v5355, %v2173
    %v5419 = vmul.f32 %v5356, %v2173
    %v5420 = vmul.f32 %v5357, %v2178
    %v5421 = vmul.f32 %v5358, %v2178
    %v5422 = vmul.f32 %v5359, %v2183
    %v5423 = vmul.f32 %v5360, %v2183
    %v5424 = vmul.f32 %v5361, %v2188
    %v5425 = vmul.f32 %v5362, %v2188
    %v5426 = vpack.c.bf16 %v5388, %v5386
    %v5427 = vpack.c.bf16 %v5389, %v5387
    %v5428 = vpack.c.bf16 %v5392, %v5390
    %v5429 = vpack.c.bf16 %v5393, %v5391
    %v5430 = vpack.c.bf16 %v5396, %v5394
    %v5431 = vpack.c.bf16 %v5397, %v5395
    %v5432 = vpack.c.bf16 %v5400, %v5398
    %v5433 = vpack.c.bf16 %v5401, %v5399
    %v5434 = vpack.c.bf16 %v5404, %v5402
    %v5435 = vpack.c.bf16 %v5405, %v5403
    %v5436 = vpack.c.bf16 %v5408, %v5406
    %v5437 = vpack.c.bf16 %v5409, %v5407
    %v5438 = vpack.c.bf16 %v5412, %v5410
    %v5439 = vpack.c.bf16 %v5413, %v5411
    %v5440 = vpack.c.bf16 %v5416, %v5414
    %v5441 = vpack.c.bf16 %v5417, %v5415
    %v5442 = vpack.c.bf16 %v5420, %v5418
    %v5443 = vpack.c.bf16 %v5421, %v5419
    %v5444 = vpack.c.bf16 %v5424, %v5422
    %v5445 = vpack.c.bf16 %v5425, %v5423
    %v5466 = vunpack.c.l.b16 %v5426
    %v5467 = vunpack.c.l.b16 %v5427
    %v5468 = vunpack.c.h.b16 %v5426
    %v5469 = vunpack.c.h.b16 %v5427
    %v5470 = vunpack.c.l.b16 %v5428
    %v5471 = vunpack.c.l.b16 %v5429
    %v5472 = vunpack.c.h.b16 %v5428
    %v5473 = vunpack.c.h.b16 %v5429
    %v5474 = vunpack.c.l.b16 %v5430
    %v5475 = vunpack.c.l.b16 %v5431
    %v5476 = vunpack.c.h.b16 %v5430
    %v5477 = vunpack.c.h.b16 %v5431
    %v5478 = vunpack.c.l.b16 %v5432
    %v5479 = vunpack.c.l.b16 %v5433
    %v5480 = vunpack.c.h.b16 %v5432
    %v5481 = vunpack.c.h.b16 %v5433
    %v5482 = vunpack.c.l.b16 %v5434
    %v5483 = vunpack.c.l.b16 %v5435
    %v5484 = vunpack.c.h.b16 %v5434
    %v5485 = vunpack.c.h.b16 %v5435
    %v5486 = vunpack.c.l.b16 %v5436
    %v5487 = vunpack.c.l.b16 %v5437
    %v5488 = vunpack.c.h.b16 %v5436
    %v5489 = vunpack.c.h.b16 %v5437
    %v5490 = vunpack.c.l.b16 %v5438
    %v5491 = vunpack.c.l.b16 %v5439
    %v5492 = vunpack.c.h.b16 %v5438
    %v5493 = vunpack.c.h.b16 %v5439
    %v5494 = vunpack.c.l.b16 %v5440
    %v5495 = vunpack.c.l.b16 %v5441
    %v5496 = vunpack.c.h.b16 %v5440
    %v5497 = vunpack.c.h.b16 %v5441
    %v5498 = vunpack.c.l.b16 %v5442
    %v5499 = vunpack.c.l.b16 %v5443
    %v5500 = vunpack.c.h.b16 %v5442
    %v5501 = vunpack.c.h.b16 %v5443
    %v5502 = vunpack.c.l.b16 %v5444
    %v5503 = vunpack.c.l.b16 %v5445
    %v5504 = vunpack.c.h.b16 %v5444
    %v5505 = vunpack.c.h.b16 %v5445
    %v5506 = vpack.c.b16 %v5467, %v5466
    %v5507 = vpack.c.b16 %v5469, %v5468
    %v5508 = vpack.c.b16 %v5471, %v5470
    %v5509 = vpack.c.b16 %v5473, %v5472
    %v5510 = vpack.c.b16 %v5475, %v5474
    %v5511 = vpack.c.b16 %v5477, %v5476
    %v5512 = vpack.c.b16 %v5479, %v5478
    %v5513 = vpack.c.b16 %v5481, %v5480
    %v5514 = vpack.c.b16 %v5483, %v5482
    %v5515 = vpack.c.b16 %v5485, %v5484
    %v5516 = vpack.c.b16 %v5487, %v5486
    %v5517 = vpack.c.b16 %v5489, %v5488
    %v5518 = vpack.c.b16 %v5491, %v5490
    %v5519 = vpack.c.b16 %v5493, %v5492
    %v5520 = vpack.c.b16 %v5495, %v5494
    %v5521 = vpack.c.b16 %v5497, %v5496
    %v5522 = vpack.c.b16 %v5499, %v5498
    %v5523 = vpack.c.b16 %v5501, %v5500
    %v5524 = vpack.c.b16 %v5503, %v5502
    %v5525 = vpack.c.b16 %v5505, %v5504
    %vm5526 = vcmask 1041408
    %vm5527 = vcmask 1045508
    %vm5528 = vmor %vm5526, %vm5527
    %v5529 = vrot.slane %v5506, 6
    %v5530 = vrot.slane %v5529, 4
    %v5531 = vrot.slane %v5507, 6
    %v5532 = vsel %vm5528, %v5530, %v5531
    %v5533 = vrot.slane %v5531, 4
    %v5534 = vrot.slane %v5508, 6
    %v5535 = vsel %vm5528, %v5533, %v5534
    %v5536 = vrot.slane %v5534, 4
    %v5537 = vrot.slane %v5509, 6
    %v5538 = vsel %vm5528, %v5536, %v5537
    %v5539 = vrot.slane %v5537, 4
    %v5540 = vrot.slane %v5510, 6
    %v5541 = vsel %vm5528, %v5539, %v5540
    %v5542 = vrot.slane %v5540, 4
    %v5543 = vrot.slane %v5511, 6
    %v5544 = vsel %vm5528, %v5542, %v5543
    %v5545 = vrot.slane %v5543, 4
    %v5546 = vrot.slane %v5512, 6
    %v5547 = vsel %vm5528, %v5545, %v5546
    %v5548 = vrot.slane %v5546, 4
    %v5549 = vrot.slane %v5513, 6
    %v5550 = vsel %vm5528, %v5548, %v5549
    %v5551 = vrot.slane %v5549, 4
    %v5552 = vrot.slane %v5514, 6
    %v5553 = vsel %vm5528, %v5551, %v5552
    %v5554 = vrot.slane %v5552, 4
    %v5555 = vrot.slane %v5515, 6
    %v5556 = vsel %vm5528, %v5554, %v5555
    %v5557 = vrot.slane %v5555, 4
    %v5558 = vrot.slane %v5516, 6
    %v5559 = vsel %vm5528, %v5557, %v5558
    %v5560 = vrot.slane %v5558, 4
    %v5561 = vrot.slane %v5517, 6
    %v5562 = vsel %vm5528, %v5560, %v5561
    %v5563 = vrot.slane %v5561, 4
    %v5564 = vrot.slane %v5518, 6
    %v5565 = vsel %vm5528, %v5563, %v5564
    %v5566 = vrot.slane %v5564, 4
    %v5567 = vrot.slane %v5519, 6
    %v5568 = vsel %vm5528, %v5566, %v5567
    %v5569 = vrot.slane %v5567, 4
    %v5570 = vrot.slane %v5520, 6
    %v5571 = vsel %vm5528, %v5569, %v5570
    %v5572 = vrot.slane %v5570, 4
    %v5573 = vrot.slane %v5521, 6
    %v5574 = vsel %vm5528, %v5572, %v5573
    %v5575 = vrot.slane %v5573, 4
    %v5576 = vrot.slane %v5522, 6
    %v5577 = vsel %vm5528, %v5575, %v5576
    %v5578 = vrot.slane %v5576, 4
    %v5579 = vrot.slane %v5523, 6
    %v5580 = vsel %vm5528, %v5578, %v5579
    %v5581 = vrot.slane %v5579, 4
    %v5582 = vrot.slane %v5524, 6
    %v5583 = vsel %vm5528, %v5581, %v5582
    %v5584 = vrot.slane %v5582, 4
    %v5585 = vrot.slane %v5525, 6
    %v5586 = vsel %vm5528, %v5584, %v5585
    %v5587 = vrot.slane %v5585, 4
    %5609 = vst [vmem:[#allocation2] sm:$0xcc] %v5529
    %5610 = vst [vmem:[#allocation2 + $0x8] sm:$0xff] %v5532
    %5611 = vst [vmem:[#allocation2 + $0x10] sm:$0xff] %v5535
    %5612 = vst [vmem:[#allocation2 + $0x18] sm:$0xff] %v5538
    %5613 = vst [vmem:[#allocation2 + $0x20] sm:$0xff] %v5541
    %5614 = vst [vmem:[#allocation2 + $0x28] sm:$0xff] %v5544
    %5615 = vst [vmem:[#allocation2 + $0x30] sm:$0xff] %v5547
    %5616 = vst [vmem:[#allocation2 + $0x38] sm:$0xff] %v5550
    %5617 = vst [vmem:[#allocation2 + $0x40] sm:$0xff] %v5553
    %5618 = vst [vmem:[#allocation2 + $0x48] sm:$0xff] %v5556
    %5619 = vst [vmem:[#allocation2 + $0x50] sm:$0xff] %v5559
    %5620 = vst [vmem:[#allocation2 + $0x58] sm:$0xff] %v5562
    %5621 = vst [vmem:[#allocation2 + $0x60] sm:$0xff] %v5565
    %5622 = vst [vmem:[#allocation2 + $0x68] sm:$0xff] %v5568
    %5623 = vst [vmem:[#allocation2 + $0x70] sm:$0xff] %v5571
    %5624 = vst [vmem:[#allocation2 + $0x78] sm:$0xff] %v5574
    %5625 = vst [vmem:[#allocation2 + $0x80] sm:$0xff] %v5577
    %5626 = vst [vmem:[#allocation2 + $0x88] sm:$0xff] %v5580
    %5627 = vst [vmem:[#allocation2 + $0x90] sm:$0xff] %v5583
    %5628 = vst [vmem:[#allocation2 + $0x98] sm:$0xff] %v5586
    %5629 = vst [vmem:[#allocation2 + $0xa0] sm:$0x33] %v5587
    %v5630 = vld [vmem:[#allocation2] sm:$0xff]
    %v5631 = vld [vmem:[#allocation2 + $0x8] sm:$0xff]
    %v5632 = vld [vmem:[#allocation2 + $0x10] sm:$0xff]
    %v5633 = vld [vmem:[#allocation2 + $0x18] sm:$0xff]
    %v5634 = vld [vmem:[#allocation2 + $0x20] sm:$0xff]
    %v5635 = vld [vmem:[#allocation2 + $0x28] sm:$0xff]
    %v5636 = vld [vmem:[#allocation2 + $0x30] sm:$0xff]
    %v5637 = vld [vmem:[#allocation2 + $0x38] sm:$0xff]
    %v5638 = vld [vmem:[#allocation2 + $0x40] sm:$0xff]
    %v5639 = vld [vmem:[#allocation2 + $0x48] sm:$0xff]
    %v5640 = vld [vmem:[#allocation2 + $0x50] sm:$0xff]
    %v5641 = vld [vmem:[#allocation2 + $0x58] sm:$0xff]
    %v5642 = vld [vmem:[#allocation2 + $0x60] sm:$0xff]
    %v5643 = vld [vmem:[#allocation2 + $0x68] sm:$0xff]
    %v5644 = vld [vmem:[#allocation2 + $0x70] sm:$0xff]
    %v5645 = vld [vmem:[#allocation2 + $0x78] sm:$0xff]
    %v5646 = vld [vmem:[#allocation2 + $0x80] sm:$0xff]
    %v5647 = vld [vmem:[#allocation2 + $0x88] sm:$0xff]
    %v5648 = vld [vmem:[#allocation2 + $0x90] sm:$0xff]
    %v5649 = vld [vmem:[#allocation2 + $0x98] sm:$0xff]
    %v5650 = vld [vmem:[#allocation3] sm:$0xff]
    %v5651 = vld [vmem:[#allocation3 + $0x8] sm:$0xff]
    %v5652 = vld [vmem:[#allocation3 + $0x10] sm:$0xff]
    %v5653 = vld [vmem:[#allocation3 + $0x18] sm:$0xff]
    %v5654 = vld [vmem:[#allocation3 + $0x20] sm:$0xff]
    %v5655 = vld [vmem:[#allocation3 + $0x28] sm:$0xff]
    %v5656 = vld [vmem:[#allocation3 + $0x30] sm:$0xff]
    %v5657 = vld [vmem:[#allocation3 + $0x38] sm:$0xff]
    %v5658 = vld [vmem:[#allocation3 + $0x40] sm:$0xff]
    %v5659 = vld [vmem:[#allocation3 + $0x48] sm:$0xff]
    %v5660 = vld [vmem:[#allocation3 + $0x50] sm:$0xff]
    %v5661 = vld [vmem:[#allocation3 + $0x58] sm:$0xff]
    %v5662 = vld [vmem:[#allocation3 + $0x60] sm:$0xff]
    %v5663 = vld [vmem:[#allocation3 + $0x68] sm:$0xff]
    %v5664 = vld [vmem:[#allocation3 + $0x70] sm:$0xff]
    %v5665 = vld [vmem:[#allocation3 + $0x78] sm:$0xff]
    %v5666 = vld [vmem:[#allocation3 + $0x80] sm:$0xff]
    %v5667 = vld [vmem:[#allocation3 + $0x88] sm:$0xff]
    %v5668 = vld [vmem:[#allocation3 + $0x90] sm:$0xff]
    %v5669 = vld [vmem:[#allocation3 + $0x98] sm:$0xff]
    %v5670 = vld [vmem:[#allocation3 + $0xa0] sm:$0xff]
    %v5671 = vld [vmem:[#allocation3 + $0xa8] sm:$0xff]
    %v5672 = vld [vmem:[#allocation3 + $0xb0] sm:$0xff]
    %v5673 = vld [vmem:[#allocation3 + $0xb8] sm:$0xff]
    %v5674 = vld [vmem:[#allocation3 + $0xc0] sm:$0xff]
    %v5675 = vld [vmem:[#allocation3 + $0xc8] sm:$0xff]
    %v5676 = vld [vmem:[#allocation3 + $0xd0] sm:$0xff]
    %v5677 = vld [vmem:[#allocation3 + $0xd8] sm:$0xff]
    %v5678 = vld [vmem:[#allocation3 + $0xe0] sm:$0xff]
    %v5679 = vld [vmem:[#allocation3 + $0xe8] sm:$0xff]
    %v5680 = vld [vmem:[#allocation3 + $0xf0] sm:$0xff]
    %v5681 = vld [vmem:[#allocation3 + $0xf8] sm:$0xff]
    %v5682 = vld [vmem:[#allocation2] sm:$0xcc]
    %v5683 = vld [vmem:[#allocation2 + $0xa0] sm:$0x33]
    %s5684 = scalar_lea.vmem [#allocation3], 256
    %v5685 = vld [vmem:[%s5684] sm:$0xff]
    %v5686 = vld [vmem:[%s5684 + $0x8] sm:$0xff]
    %v5687 = vld [vmem:[%s5684 + $0x10] sm:$0xff]
    %v5688 = vld [vmem:[%s5684 + $0x18] sm:$0xff]
    %v5689 = vld [vmem:[%s5684 + $0x20] sm:$0xff]
    %v5690 = vld [vmem:[%s5684 + $0x28] sm:$0xff]
    %v5691 = vld [vmem:[%s5684 + $0x30] sm:$0xff]
    %v5692 = vld [vmem:[%s5684 + $0x38] sm:$0xff]
    %v5693 = vld [vmem:[%s5684 + $0x40] sm:$0xff]
    %v5694 = vld [vmem:[%s5684 + $0x48] sm:$0xff]
    %v5695 = vld [vmem:[%s5684 + $0x50] sm:$0xff]
    %v5696 = vld [vmem:[%s5684 + $0x58] sm:$0xff]
    %v5697 = vld [vmem:[%s5684 + $0x60] sm:$0xff]
    %v5698 = vld [vmem:[%s5684 + $0x68] sm:$0xff]
    %v5699 = vld [vmem:[%s5684 + $0x70] sm:$0xff]
    %v5700 = vld [vmem:[%s5684 + $0x78] sm:$0xff]
    %v5701 = vld [vmem:[%s5684 + $0x80] sm:$0xff]
    %v5702 = vld [vmem:[%s5684 + $0x88] sm:$0xff]
    %v5703 = vld [vmem:[%s5684 + $0x90] sm:$0xff]
    %v5704 = vld [vmem:[%s5684 + $0x98] sm:$0xff]
    %v5705 = vld [vmem:[%s5684 + $0xa0] sm:$0xff]
    %v5706 = vld [vmem:[%s5684 + $0xa8] sm:$0xff]
    %v5707 = vld [vmem:[%s5684 + $0xb0] sm:$0xff]
    %v5708 = vld [vmem:[%s5684 + $0xb8] sm:$0xff]
    %v5709 = vld [vmem:[%s5684 + $0xc0] sm:$0xff]
    %v5710 = vld [vmem:[%s5684 + $0xc8] sm:$0xff]
    %v5711 = vld [vmem:[%s5684 + $0xd0] sm:$0xff]
    %v5712 = vld [vmem:[%s5684 + $0xd8] sm:$0xff]
    %v5713 = vld [vmem:[%s5684 + $0xe0] sm:$0xff]
    %v5714 = vld [vmem:[%s5684 + $0xe8] sm:$0xff]
    %v5715 = vld [vmem:[%s5684 + $0xf0] sm:$0xff]
    %v5716 = vld [vmem:[%s5684 + $0xf8] sm:$0xff]
    %v5738 = vunpack.c.l.b16 %v5682
    %v5739 = vunpack.c.h.b16 %v5682
    %v5740 = vunpack.c.l.b16 %v5631
    %v5741 = vunpack.c.h.b16 %v5631
    %v5742 = vunpack.c.l.b16 %v5632
    %v5743 = vunpack.c.h.b16 %v5632
    %v5744 = vunpack.c.l.b16 %v5633
    %v5745 = vunpack.c.h.b16 %v5633
    %v5746 = vunpack.c.l.b16 %v5634
    %v5747 = vunpack.c.h.b16 %v5634
    %v5748 = vunpack.c.l.b16 %v5635
    %v5749 = vunpack.c.h.b16 %v5635
    %v5750 = vunpack.c.l.b16 %v5636
    %v5751 = vunpack.c.h.b16 %v5636
    %v5752 = vunpack.c.l.b16 %v5637
    %v5753 = vunpack.c.h.b16 %v5637
    %v5754 = vunpack.c.l.b16 %v5638
    %v5755 = vunpack.c.h.b16 %v5638
    %v5756 = vunpack.c.l.b16 %v5639
    %v5757 = vunpack.c.h.b16 %v5639
    %v5758 = vunpack.c.l.b16 %v5640
    %v5759 = vunpack.c.h.b16 %v5640
    %v5760 = vunpack.c.l.b16 %v5641
    %v5761 = vunpack.c.h.b16 %v5641
    %v5762 = vunpack.c.l.b16 %v5642
    %v5763 = vunpack.c.h.b16 %v5642
    %v5764 = vunpack.c.l.b16 %v5643
    %v5765 = vunpack.c.h.b16 %v5643
    %v5766 = vunpack.c.l.b16 %v5644
    %v5767 = vunpack.c.h.b16 %v5644
    %v5768 = vunpack.c.l.b16 %v5645
    %v5769 = vunpack.c.h.b16 %v5645
    %v5770 = vunpack.c.l.b16 %v5646
    %v5771 = vunpack.c.h.b16 %v5646
    %v5772 = vunpack.c.l.b16 %v5647
    %v5773 = vunpack.c.h.b16 %v5647
    %v5774 = vunpack.c.l.b16 %v5648
    %v5775 = vunpack.c.h.b16 %v5648
    %v5776 = vunpack.c.l.b16 %v5649
    %v5777 = vunpack.c.h.b16 %v5649
    %v5778 = vunpack.c.l.b16 %v5683
    %v5779 = vunpack.c.h.b16 %v5683
    %v5780 = vpack.c.b16 %v5740, %v5738
    %v5781 = vpack.c.b16 %v5741, %v5739
    %v5782 = vpack.c.b16 %v5744, %v5742
    %v5783 = vpack.c.b16 %v5745, %v5743
    %v5784 = vpack.c.b16 %v5748, %v5746
    %v5785 = vpack.c.b16 %v5749, %v5747
    %v5786 = vpack.c.b16 %v5752, %v5750
    %v5787 = vpack.c.b16 %v5753, %v5751
    %v5788 = vpack.c.b16 %v5756, %v5754
    %v5789 = vpack.c.b16 %v5757, %v5755
    %v5790 = vpack.c.b16 %v5760, %v5758
    %v5791 = vpack.c.b16 %v5761, %v5759
    %v5792 = vpack.c.b16 %v5764, %v5762
    %v5793 = vpack.c.b16 %v5765, %v5763
    %v5794 = vpack.c.b16 %v5768, %v5766
    %v5795 = vpack.c.b16 %v5769, %v5767
    %v5796 = vpack.c.b16 %v5772, %v5770
    %v5797 = vpack.c.b16 %v5773, %v5771
    %v5798 = vpack.c.b16 %v5776, %v5774
    %v5799 = vpack.c.b16 %v5777, %v5775
    %v5800 = vpack.c.b16 %v5778, %v5778
    %v5801 = vpack.c.b16 %v5779, %v5779
    %v5802 = vrot.slane %v5780, 2
    %v5803 = vrot.slane %v5782, 2
    %v5804 = vsel %vm3324, %v5802, %v5803
    %v5805 = vrot.slane %v5781, 2
    %v5806 = vrot.slane %v5783, 2
    %v5807 = vsel %vm3324, %v5805, %v5806
    %v5808 = vrot.slane %v5784, 2
    %v5809 = vsel %vm3324, %v5803, %v5808
    %v5810 = vrot.slane %v5785, 2
    %v5811 = vsel %vm3324, %v5806, %v5810
    %v5812 = vrot.slane %v5786, 2
    %v5813 = vsel %vm3324, %v5808, %v5812
    %v5814 = vrot.slane %v5787, 2
    %v5815 = vsel %vm3324, %v5810, %v5814
    %v5816 = vrot.slane %v5788, 2
    %v5817 = vsel %vm3324, %v5812, %v5816
    %v5818 = vrot.slane %v5789, 2
    %v5819 = vsel %vm3324, %v5814, %v5818
    %v5820 = vrot.slane %v5790, 2
    %v5821 = vsel %vm3324, %v5816, %v5820
    %v5822 = vrot.slane %v5791, 2
    %v5823 = vsel %vm3324, %v5818, %v5822
    %v5824 = vrot.slane %v5792, 2
    %v5825 = vsel %vm3324, %v5820, %v5824
    %v5826 = vrot.slane %v5793, 2
    %v5827 = vsel %vm3324, %v5822, %v5826
    %v5828 = vrot.slane %v5794, 2
    %v5829 = vsel %vm3324, %v5824, %v5828
    %v5830 = vrot.slane %v5795, 2
    %v5831 = vsel %vm3324, %v5826, %v5830
    %v5832 = vrot.slane %v5796, 2
    %v5833 = vsel %vm3324, %v5828, %v5832
    %v5834 = vrot.slane %v5797, 2
    %v5835 = vsel %vm3324, %v5830, %v5834
    %v5836 = vrot.slane %v5798, 2
    %v5837 = vsel %vm3324, %v5832, %v5836
    %v5838 = vrot.slane %v5799, 2
    %v5839 = vsel %vm3324, %v5834, %v5838
    %v5840 = vrot.slane %v5800, 2
    %v5841 = vsel %vm3324, %v5836, %v5840
    %v5842 = vrot.slane %v5801, 2
    %v5843 = vsel %vm3324, %v5838, %v5842
    %v5896 = vunpack.c.l.b16 %v5685
    %v5897 = vunpack.c.h.b16 %v5685
    %v5898 = vunpack.c.l.b16 %v5686
    %v5899 = vunpack.c.h.b16 %v5686
    %v5900 = vunpack.c.l.b16 %v5687
    %v5901 = vunpack.c.h.b16 %v5687
    %v5902 = vunpack.c.l.b16 %v5688
    %v5903 = vunpack.c.h.b16 %v5688
    %v5904 = vunpack.c.l.b16 %v5689
    %v5905 = vunpack.c.h.b16 %v5689
    %v5906 = vunpack.c.l.b16 %v5690
    %v5907 = vunpack.c.h.b16 %v5690
    %v5908 = vunpack.c.l.b16 %v5691
    %v5909 = vunpack.c.h.b16 %v5691
    %v5910 = vunpack.c.l.b16 %v5692
    %v5911 = vunpack.c.h.b16 %v5692
    %v5912 = vunpack.c.l.b16 %v5693
    %v5913 = vunpack.c.h.b16 %v5693
    %v5914 = vunpack.c.l.b16 %v5694
    %v5915 = vunpack.c.h.b16 %v5694
    %v5916 = vunpack.c.l.b16 %v5695
    %v5917 = vunpack.c.h.b16 %v5695
    %v5918 = vunpack.c.l.b16 %v5696
    %v5919 = vunpack.c.h.b16 %v5696
    %v5920 = vunpack.c.l.b16 %v5697
    %v5921 = vunpack.c.h.b16 %v5697
    %v5922 = vunpack.c.l.b16 %v5698
    %v5923 = vunpack.c.h.b16 %v5698
    %v5924 = vunpack.c.l.b16 %v5699
    %v5925 = vunpack.c.h.b16 %v5699
    %v5926 = vunpack.c.l.b16 %v5700
    %v5927 = vunpack.c.h.b16 %v5700
    %v5928 = vunpack.c.l.b16 %v5701
    %v5929 = vunpack.c.h.b16 %v5701
    %v5930 = vunpack.c.l.b16 %v5702
    %v5931 = vunpack.c.h.b16 %v5702
    %v5932 = vunpack.c.l.b16 %v5703
    %v5933 = vunpack.c.h.b16 %v5703
    %v5934 = vunpack.c.l.b16 %v5704
    %v5935 = vunpack.c.h.b16 %v5704
    %v5936 = vunpack.c.l.b16 %v5705
    %v5937 = vunpack.c.h.b16 %v5705
    %v5938 = vunpack.c.l.b16 %v5706
    %v5939 = vunpack.c.h.b16 %v5706
    %v5940 = vunpack.c.l.b16 %v5707
    %v5941 = vunpack.c.h.b16 %v5707
    %v5942 = vunpack.c.l.b16 %v5708
    %v5943 = vunpack.c.h.b16 %v5708
    %v5944 = vunpack.c.l.b16 %v5709
    %v5945 = vunpack.c.h.b16 %v5709
    %v5946 = vunpack.c.l.b16 %v5710
    %v5947 = vunpack.c.h.b16 %v5710
    %v5948 = vunpack.c.l.b16 %v5711
    %v5949 = vunpack.c.h.b16 %v5711
    %v5950 = vunpack.c.l.b16 %v5712
    %v5951 = vunpack.c.h.b16 %v5712
    %v5952 = vunpack.c.l.b16 %v5713
    %v5953 = vunpack.c.h.b16 %v5713
    %v5954 = vunpack.c.l.b16 %v5714
    %v5955 = vunpack.c.h.b16 %v5714
    %v5956 = vunpack.c.l.b16 %v5715
    %v5957 = vunpack.c.h.b16 %v5715
    %v5958 = vunpack.c.l.b16 %v5716
    %v5959 = vunpack.c.h.b16 %v5716
    %v5960 = vpack.c.b16 %v5898, %v5896
    %v5961 = vpack.c.b16 %v5899, %v5897
    %v5962 = vpack.c.b16 %v5902, %v5900
    %v5963 = vpack.c.b16 %v5903, %v5901
    %v5964 = vpack.c.b16 %v5906, %v5904
    %v5965 = vpack.c.b16 %v5907, %v5905
    %v5966 = vpack.c.b16 %v5910, %v5908
    %v5967 = vpack.c.b16 %v5911, %v5909
    %v5968 = vpack.c.b16 %v5914, %v5912
    %v5969 = vpack.c.b16 %v5915, %v5913
    %v5970 = vpack.c.b16 %v5918, %v5916
    %v5971 = vpack.c.b16 %v5919, %v5917
    %v5972 = vpack.c.b16 %v5922, %v5920
    %v5973 = vpack.c.b16 %v5923, %v5921
    %v5974 = vpack.c.b16 %v5926, %v5924
    %v5975 = vpack.c.b16 %v5927, %v5925
    %v5976 = vpack.c.b16 %v5930, %v5928
    %v5977 = vpack.c.b16 %v5931, %v5929
    %v5978 = vpack.c.b16 %v5934, %v5932
    %v5979 = vpack.c.b16 %v5935, %v5933
    %v5980 = vpack.c.b16 %v5938, %v5936
    %v5981 = vpack.c.b16 %v5939, %v5937
    %v5982 = vpack.c.b16 %v5942, %v5940
    %v5983 = vpack.c.b16 %v5943, %v5941
    %v5984 = vpack.c.b16 %v5946, %v5944
    %v5985 = vpack.c.b16 %v5947, %v5945
    %v5986 = vpack.c.b16 %v5950, %v5948
    %v5987 = vpack.c.b16 %v5951, %v5949
    %v5988 = vpack.c.b16 %v5954, %v5952
    %v5989 = vpack.c.b16 %v5955, %v5953
    %v5990 = vpack.c.b16 %v5958, %v5956
    %v5991 = vpack.c.b16 %v5959, %v5957
    %6024 = vmatprep.subr.bf16.mxu0 %v5961
    %6025 = vmatpush1.bf16.msra.mxu0 %v5960
    %6026 = vmatprep.subr.bf16.mxu0 %v5963
    %6027 = vmatpush1.bf16.msra.mxu0 %v5962
    %6028 = vmatprep.subr.bf16.mxu0 %v5965
    %6029 = vmatpush1.bf16.msra.mxu0 %v5964
    %6030 = vmatprep.subr.bf16.mxu0 %v5967
    %6031 = vmatpush1.bf16.msra.mxu0 %v5966
    %6032 = vmatprep.subr.bf16.mxu0 %v5969
    %6033 = vmatpush1.bf16.msra.mxu0 %v5968
    %6034 = vmatprep.subr.bf16.mxu0 %v5971
    %6035 = vmatpush1.bf16.msra.mxu0 %v5970
    %6036 = vmatprep.subr.bf16.mxu0 %v5973
    %6037 = vmatpush1.bf16.msra.mxu0 %v5972
    %6038 = vmatprep.subr.bf16.mxu0 %v5975
    %6039 = vmatpush1.bf16.msra.mxu0 %v5974
    %6040 = vmatprep.subr.bf16.mxu0 %v5977
    %6041 = vmatpush1.bf16.msra.mxu0 %v5976
    %6042 = vmatprep.subr.bf16.mxu0 %v5979
    %6043 = vmatpush1.bf16.msra.mxu0 %v5978
    %6044 = vmatprep.subr.bf16.mxu0 %v5981
    %6045 = vmatpush1.bf16.msra.mxu0 %v5980
    %6046 = vmatprep.subr.bf16.mxu0 %v5983
    %6047 = vmatpush1.bf16.msra.mxu0 %v5982
    %6048 = vmatprep.subr.bf16.mxu0 %v5985
    %6049 = vmatpush1.bf16.msra.mxu0 %v5984
    %6050 = vmatprep.subr.bf16.mxu0 %v5987
    %6051 = vmatpush1.bf16.msra.mxu0 %v5986
    %6052 = vmatprep.subr.bf16.mxu0 %v5989
    %6053 = vmatpush1.bf16.msra.mxu0 %v5988
    %6054 = vmatprep.subr.bf16.mxu0 %v5991
    %6055 = vmatpush1.bf16.msra.mxu0 %v5990
    %6056 = vmatprep.mubr.bf16.mxu0 %v5807
    %6057 = vmatmul.mubr.bf16.gmra.mrb[0].mxu0 %v5804
    %v6058 = vpop.f32.mrb[0].mxu0
    %v6059 = vadd.f32 0.0, %v6058
    %v6060 = vpop.f32.mrb[0].mxu0
    %v6061 = vadd.f32 0.0, %v6060
    %v6062 = vpop.f32.mrb[0].mxu0
    %v6063 = vadd.f32 0.0, %v6062
    %v6064 = vpop.f32.mrb[0].mxu0
    %v6065 = vadd.f32 0.0, %v6064
    %6066 = vmatprep.mubr.bf16.mxu0 %v5811
    %6067 = vmatmul.mubr.bf16.gmra.mrb[0].mxu0 %v5809
    %v6068 = vpop.f32.mrb[0].mxu0
    %v6069 = vadd.f32 0.0, %v6068
    %v6070 = vpop.f32.mrb[0].mxu0
    %v6071 = vadd.f32 0.0, %v6070
    %v6072 = vpop.f32.mrb[0].mxu0
    %v6073 = vadd.f32 0.0, %v6072
    %v6074 = vpop.f32.mrb[0].mxu0
    %v6075 = vadd.f32 0.0, %v6074
    %6076 = vmatprep.mubr.bf16.mxu0 %v5815
    %6077 = vmatmul.mubr.bf16.gmra.mrb[0].mxu0 %v5813
    %v6078 = vpop.f32.mrb[0].mxu0
    %v6079 = vadd.f32 0.0, %v6078
    %v6080 = vpop.f32.mrb[0].mxu0
    %v6081 = vadd.f32 0.0, %v6080
    %v6082 = vpop.f32.mrb[0].mxu0
    %v6083 = vadd.f32 0.0, %v6082
    %v6084 = vpop.f32.mrb[0].mxu0
    %v6085 = vadd.f32 0.0, %v6084
    %6086 = vmatprep.mubr.bf16.mxu0 %v5819
    %6087 = vmatmul.mubr.bf16.gmra.mrb[0].mxu0 %v5817
    %v6088 = vpop.f32.mrb[0].mxu0
    %v6089 = vadd.f32 0.0, %v6088
    %v6090 = vpop.f32.mrb[0].mxu0
    %v6091 = vadd.f32 0.0, %v6090
    %v6092 = vpop.f32.mrb[0].mxu0
    %v6093 = vadd.f32 0.0, %v6092
    %v6094 = vpop.f32.mrb[0].mxu0
    %v6095 = vadd.f32 0.0, %v6094
    %6096 = vmatprep.mubr.bf16.mxu0 %v5823
    %6097 = vmatmul.mubr.bf16.gmra.mrb[0].mxu0 %v5821
    %v6098 = vpop.f32.mrb[0].mxu0
    %v6099 = vadd.f32 0.0, %v6098
    %v6100 = vpop.f32.mrb[0].mxu0
    %v6101 = vadd.f32 0.0, %v6100
    %v6102 = vpop.f32.mrb[0].mxu0
    %v6103 = vadd.f32 0.0, %v6102
    %v6104 = vpop.f32.mrb[0].mxu0
    %v6105 = vadd.f32 0.0, %v6104
    %6106 = vmatprep.mubr.bf16.mxu0 %v5827
    %6107 = vmatmul.mubr.bf16.gmra.mrb[0].mxu0 %v5825
    %v6108 = vpop.f32.mrb[0].mxu0
    %v6109 = vadd.f32 0.0, %v6108
    %v6110 = vpop.f32.mrb[0].mxu0
    %v6111 = vadd.f32 0.0, %v6110
    %v6112 = vpop.f32.mrb[0].mxu0
    %v6113 = vadd.f32 0.0, %v6112
    %v6114 = vpop.f32.mrb[0].mxu0
    %v6115 = vadd.f32 0.0, %v6114
    %6116 = vmatprep.mubr.bf16.mxu0 %v5831
    %6117 = vmatmul.mubr.bf16.gmra.mrb[0].mxu0 %v5829
    %v6118 = vpop.f32.mrb[0].mxu0
    %v6119 = vadd.f32 0.0, %v6118
    %v6120 = vpop.f32.mrb[0].mxu0
    %v6121 = vadd.f32 0.0, %v6120
    %v6122 = vpop.f32.mrb[0].mxu0
    %v6123 = vadd.f32 0.0, %v6122
    %v6124 = vpop.f32.mrb[0].mxu0
    %v6125 = vadd.f32 0.0, %v6124
    %6126 = vmatprep.mubr.bf16.mxu0 %v5835
    %6127 = vmatmul.mubr.bf16.gmra.mrb[0].mxu0 %v5833
    %v6128 = vpop.f32.mrb[0].mxu0
    %v6129 = vadd.f32 0.0, %v6128
    %v6130 = vpop.f32.mrb[0].mxu0
    %v6131 = vadd.f32 0.0, %v6130
    %v6132 = vpop.f32.mrb[0].mxu0
    %v6133 = vadd.f32 0.0, %v6132
    %v6134 = vpop.f32.mrb[0].mxu0
    %v6135 = vadd.f32 0.0, %v6134
    %6136 = vmatprep.mubr.bf16.mxu0 %v5839
    %6137 = vmatmul.mubr.bf16.gmra.mrb[0].mxu0 %v5837
    %v6138 = vpop.f32.mrb[0].mxu0
    %v6139 = vadd.f32 0.0, %v6138
    %v6140 = vpop.f32.mrb[0].mxu0
    %v6141 = vadd.f32 0.0, %v6140
    %v6142 = vpop.f32.mrb[0].mxu0
    %v6143 = vadd.f32 0.0, %v6142
    %v6144 = vpop.f32.mrb[0].mxu0
    %v6145 = vadd.f32 0.0, %v6144
    %6146 = vmatprep.mubr.bf16.mxu0 %v5843
    %6147 = vmatmul.mubr.bf16.gmra.mrb[0].mxu0 %v5841
    %v6148 = vpop.f32.mrb[0].mxu0
    %v6149 = vadd.f32 0.0, %v6148
    %v6150 = vpop.f32.mrb[0].mxu0
    %v6151 = vadd.f32 0.0, %v6150
    %v6152 = vpop.f32.mrb[0].mxu0
    %v6153 = vadd.f32 0.0, %v6152
    %v6154 = vpop.f32.mrb[0].mxu0
    %v6155 = vadd.f32 0.0, %v6154
    %6156 = vdwg.mxu0
    %v6158 = vunpack.c.l.b16 %v5630
    %v6159 = vunpack.c.h.b16 %v5630
    %v6160 = vpack.c.b16 %v5740, %v6158
    %v6161 = vpack.c.b16 %v5741, %v6159
    %v6214 = vunpack.c.l.b16 %v5650
    %v6215 = vunpack.c.h.b16 %v5650
    %v6216 = vunpack.c.l.b16 %v5651
    %v6217 = vunpack.c.h.b16 %v5651
    %v6218 = vunpack.c.l.b16 %v5652
    %v6219 = vunpack.c.h.b16 %v5652
    %v6220 = vunpack.c.l.b16 %v5653
    %v6221 = vunpack.c.h.b16 %v5653
    %v6222 = vunpack.c.l.b16 %v5654
    %v6223 = vunpack.c.h.b16 %v5654
    %v6224 = vunpack.c.l.b16 %v5655
    %v6225 = vunpack.c.h.b16 %v5655
    %v6226 = vunpack.c.l.b16 %v5656
    %v6227 = vunpack.c.h.b16 %v5656
    %v6228 = vunpack.c.l.b16 %v5657
    %v6229 = vunpack.c.h.b16 %v5657
    %v6230 = vunpack.c.l.b16 %v5658
    %v6231 = vunpack.c.h.b16 %v5658
    %v6232 = vunpack.c.l.b16 %v5659
    %v6233 = vunpack.c.h.b16 %v5659
    %v6234 = vunpack.c.l.b16 %v5660
    %v6235 = vunpack.c.h.b16 %v5660
    %v6236 = vunpack.c.l.b16 %v5661
    %v6237 = vunpack.c.h.b16 %v5661
    %v6238 = vunpack.c.l.b16 %v5662
    %v6239 = vunpack.c.h.b16 %v5662
    %v6240 = vunpack.c.l.b16 %v5663
    %v6241 = vunpack.c.h.b16 %v5663
    %v6242 = vunpack.c.l.b16 %v5664
    %v6243 = vunpack.c.h.b16 %v5664
    %v6244 = vunpack.c.l.b16 %v5665
    %v6245 = vunpack.c.h.b16 %v5665
    %v6246 = vunpack.c.l.b16 %v5666
    %v6247 = vunpack.c.h.b16 %v5666
    %v6248 = vunpack.c.l.b16 %v5667
    %v6249 = vunpack.c.h.b16 %v5667
    %v6250 = vunpack.c.l.b16 %v5668
    %v6251 = vunpack.c.h.b16 %v5668
    %v6252 = vunpack.c.l.b16 %v5669
    %v6253 = vunpack.c.h.b16 %v5669
    %v6254 = vunpack.c.l.b16 %v5670
    %v6255 = vunpack.c.h.b16 %v5670
    %v6256 = vunpack.c.l.b16 %v5671
    %v6257 = vunpack.c.h.b16 %v5671
    %v6258 = vunpack.c.l.b16 %v5672
    %v6259 = vunpack.c.h.b16 %v5672
    %v6260 = vunpack.c.l.b16 %v5673
    %v6261 = vunpack.c.h.b16 %v5673
    %v6262 = vunpack.c.l.b16 %v5674
    %v6263 = vunpack.c.h.b16 %v5674
    %v6264 = vunpack.c.l.b16 %v5675
    %v6265 = vunpack.c.h.b16 %v5675
    %v6266 = vunpack.c.l.b16 %v5676
    %v6267 = vunpack.c.h.b16 %v5676
    %v6268 = vunpack.c.l.b16 %v5677
    %v6269 = vunpack.c.h.b16 %v5677
    %v6270 = vunpack.c.l.b16 %v5678
    %v6271 = vunpack.c.h.b16 %v5678
    %v6272 = vunpack.c.l.b16 %v5679
    %v6273 = vunpack.c.h.b16 %v5679
    %v6274 = vunpack.c.l.b16 %v5680
    %v6275 = vunpack.c.h.b16 %v5680
    %v6276 = vunpack.c.l.b16 %v5681
    %v6277 = vunpack.c.h.b16 %v5681
    %v6278 = vpack.c.b16 %v6216, %v6214
    %v6279 = vpack.c.b16 %v6217, %v6215
    %v6280 = vpack.c.b16 %v6220, %v6218
    %v6281 = vpack.c.b16 %v6221, %v6219
    %v6282 = vpack.c.b16 %v6224, %v6222
    %v6283 = vpack.c.b16 %v6225, %v6223
    %v6284 = vpack.c.b16 %v6228, %v6226
    %v6285 = vpack.c.b16 %v6229, %v6227
    %v6286 = vpack.c.b16 %v6232, %v6230
    %v6287 = vpack.c.b16 %v6233, %v6231
    %v6288 = vpack.c.b16 %v6236, %v6234
    %v6289 = vpack.c.b16 %v6237, %v6235
    %v6290 = vpack.c.b16 %v6240, %v6238
    %v6291 = vpack.c.b16 %v6241, %v6239
    %v6292 = vpack.c.b16 %v6244, %v6242
    %v6293 = vpack.c.b16 %v6245, %v6243
    %v6294 = vpack.c.b16 %v6248, %v6246
    %v6295 = vpack.c.b16 %v6249, %v6247
    %v6296 = vpack.c.b16 %v6252, %v6250
    %v6297 = vpack.c.b16 %v6253, %v6251
    %v6298 = vpack.c.b16 %v6256, %v6254
    %v6299 = vpack.c.b16 %v6257, %v6255
    %v6300 = vpack.c.b16 %v6260, %v6258
    %v6301 = vpack.c.b16 %v6261, %v6259
    %v6302 = vpack.c.b16 %v6264, %v6262
    %v6303 = vpack.c.b16 %v6265, %v6263
    %v6304 = vpack.c.b16 %v6268, %v6266
    %v6305 = vpack.c.b16 %v6269, %v6267
    %v6306 = vpack.c.b16 %v6272, %v6270
    %v6307 = vpack.c.b16 %v6273, %v6271
    %v6308 = vpack.c.b16 %v6276, %v6274
    %v6309 = vpack.c.b16 %v6277, %v6275
    %6342 = vmatprep.subr.bf16.mxu0 %v6279
    %6343 = vmatpush1.bf16.msra.mxu0 %v6278
    %6344 = vmatprep.subr.bf16.mxu0 %v6281
    %6345 = vmatpush1.bf16.msra.mxu0 %v6280
    %6346 = vmatprep.subr.bf16.mxu0 %v6283
    %6347 = vmatpush1.bf16.msra.mxu0 %v6282
    %6348 = vmatprep.subr.bf16.mxu0 %v6285
    %6349 = vmatpush1.bf16.msra.mxu0 %v6284
    %6350 = vmatprep.subr.bf16.mxu0 %v6287
    %6351 = vmatpush1.bf16.msra.mxu0 %v6286
    %6352 = vmatprep.subr.bf16.mxu0 %v6289
    %6353 = vmatpush1.bf16.msra.mxu0 %v6288
    %6354 = vmatprep.subr.bf16.mxu0 %v6291
    %6355 = vmatpush1.bf16.msra.mxu0 %v6290
    %6356 = vmatprep.subr.bf16.mxu0 %v6293
    %6357 = vmatpush1.bf16.msra.mxu0 %v6292
    %6358 = vmatprep.subr.bf16.mxu0 %v6295
    %6359 = vmatpush1.bf16.msra.mxu0 %v6294
    %6360 = vmatprep.subr.bf16.mxu0 %v6297
    %6361 = vmatpush1.bf16.msra.mxu0 %v6296
    %6362 = vmatprep.subr.bf16.mxu0 %v6299
    %6363 = vmatpush1.bf16.msra.mxu0 %v6298
    %6364 = vmatprep.subr.bf16.mxu0 %v6301
    %6365 = vmatpush1.bf16.msra.mxu0 %v6300
    %6366 = vmatprep.subr.bf16.mxu0 %v6303
    %6367 = vmatpush1.bf16.msra.mxu0 %v6302
    %6368 = vmatprep.subr.bf16.mxu0 %v6305
    %6369 = vmatpush1.bf16.msra.mxu0 %v6304
    %6370 = vmatprep.subr.bf16.mxu0 %v6307
    %6371 = vmatpush1.bf16.msra.mxu0 %v6306
    %6372 = vmatprep.subr.bf16.mxu0 %v6309
    %6373 = vmatpush1.bf16.msra.mxu0 %v6308
    %6374 = vmatprep.mubr.bf16.mxu0 %v6161
    %6375 = vmatmul.mubr.bf16.gmra.mrb[0].mxu0 %v6160
    %v6376 = vpop.f32.mrb[0].mxu0
    %v6377 = vadd.f32 %v6059, %v6376
    %v6378 = vpop.f32.mrb[0].mxu0
    %v6379 = vadd.f32 %v6061, %v6378
    %v6380 = vpop.f32.mrb[0].mxu0
    %v6381 = vadd.f32 %v6063, %v6380
    %v6382 = vpop.f32.mrb[0].mxu0
    %v6383 = vadd.f32 %v6065, %v6382
    %6384 = vmatprep.mubr.bf16.mxu0 %v5783
    %6385 = vmatmul.mubr.bf16.gmra.mrb[0].mxu0 %v5782
    %v6386 = vpop.f32.mrb[0].mxu0
    %v6387 = vadd.f32 %v6069, %v6386
    %v6388 = vpop.f32.mrb[0].mxu0
    %v6389 = vadd.f32 %v6071, %v6388
    %v6390 = vpop.f32.mrb[0].mxu0
    %v6391 = vadd.f32 %v6073, %v6390
    %v6392 = vpop.f32.mrb[0].mxu0
    %v6393 = vadd.f32 %v6075, %v6392
    %6394 = vmatprep.mubr.bf16.mxu0 %v5785
    %6395 = vmatmul.mubr.bf16.gmra.mrb[0].mxu0 %v5784
    %v6396 = vpop.f32.mrb[0].mxu0
    %v6397 = vadd.f32 %v6079, %v6396
    %v6398 = vpop.f32.mrb[0].mxu0
    %v6399 = vadd.f32 %v6081, %v6398
    %v6400 = vpop.f32.mrb[0].mxu0
    %v6401 = vadd.f32 %v6083, %v6400
    %v6402 = vpop.f32.mrb[0].mxu0
    %v6403 = vadd.f32 %v6085, %v6402
    %6404 = vmatprep.mubr.bf16.mxu0 %v5787
    %6405 = vmatmul.mubr.bf16.gmra.mrb[0].mxu0 %v5786
    %v6406 = vpop.f32.mrb[0].mxu0
    %v6407 = vadd.f32 %v6089, %v6406
    %v6408 = vpop.f32.mrb[0].mxu0
    %v6409 = vadd.f32 %v6091, %v6408
    %v6410 = vpop.f32.mrb[0].mxu0
    %v6411 = vadd.f32 %v6093, %v6410
    %v6412 = vpop.f32.mrb[0].mxu0
    %v6413 = vadd.f32 %v6095, %v6412
    %6414 = vmatprep.mubr.bf16.mxu0 %v5789
    %6415 = vmatmul.mubr.bf16.gmra.mrb[0].mxu0 %v5788
    %v6416 = vpop.f32.mrb[0].mxu0
    %v6417 = vadd.f32 %v6099, %v6416
    %v6418 = vpop.f32.mrb[0].mxu0
    %v6419 = vadd.f32 %v6101, %v6418
    %v6420 = vpop.f32.mrb[0].mxu0
    %v6421 = vadd.f32 %v6103, %v6420
    %v6422 = vpop.f32.mrb[0].mxu0
    %v6423 = vadd.f32 %v6105, %v6422
    %6424 = vmatprep.mubr.bf16.mxu0 %v5791
    %6425 = vmatmul.mubr.bf16.gmra.mrb[0].mxu0 %v5790
    %v6426 = vpop.f32.mrb[0].mxu0
    %v6427 = vadd.f32 %v6109, %v6426
    %v6428 = vpop.f32.mrb[0].mxu0
    %v6429 = vadd.f32 %v6111, %v6428
    %v6430 = vpop.f32.mrb[0].mxu0
    %v6431 = vadd.f32 %v6113, %v6430
    %v6432 = vpop.f32.mrb[0].mxu0
    %v6433 = vadd.f32 %v6115, %v6432
    %6434 = vmatprep.mubr.bf16.mxu0 %v5793
    %6435 = vmatmul.mubr.bf16.gmra.mrb[0].mxu0 %v5792
    %v6436 = vpop.f32.mrb[0].mxu0
    %v6437 = vadd.f32 %v6119, %v6436
    %v6438 = vpop.f32.mrb[0].mxu0
    %v6439 = vadd.f32 %v6121, %v6438
    %v6440 = vpop.f32.mrb[0].mxu0
    %v6441 = vadd.f32 %v6123, %v6440
    %v6442 = vpop.f32.mrb[0].mxu0
    %v6443 = vadd.f32 %v6125, %v6442
    %6444 = vmatprep.mubr.bf16.mxu0 %v5795
    %6445 = vmatmul.mubr.bf16.gmra.mrb[0].mxu0 %v5794
    %v6446 = vpop.f32.mrb[0].mxu0
    %v6447 = vadd.f32 %v6129, %v6446
    %v6448 = vpop.f32.mrb[0].mxu0
    %v6449 = vadd.f32 %v6131, %v6448
    %v6450 = vpop.f32.mrb[0].mxu0
    %v6451 = vadd.f32 %v6133, %v6450
    %v6452 = vpop.f32.mrb[0].mxu0
    %v6453 = vadd.f32 %v6135, %v6452
    %6454 = vmatprep.mubr.bf16.mxu0 %v5797
    %6455 = vmatmul.mubr.bf16.gmra.mrb[0].mxu0 %v5796
    %v6456 = vpop.f32.mrb[0].mxu0
    %v6457 = vadd.f32 %v6139, %v6456
    %v6458 = vpop.f32.mrb[0].mxu0
    %v6459 = vadd.f32 %v6141, %v6458
    %v6460 = vpop.f32.mrb[0].mxu0
    %v6461 = vadd.f32 %v6143, %v6460
    %v6462 = vpop.f32.mrb[0].mxu0
    %v6463 = vadd.f32 %v6145, %v6462
    %6464 = vmatprep.mubr.bf16.mxu0 %v5799
    %6465 = vmatmul.mubr.bf16.gmra.mrb[0].mxu0 %v5798
    %v6466 = vpop.f32.mrb[0].mxu0
    %v6467 = vadd.f32 %v6149, %v6466
    %v6468 = vpop.f32.mrb[0].mxu0
    %v6469 = vadd.f32 %v6151, %v6468
    %v6470 = vpop.f32.mrb[0].mxu0
    %v6471 = vadd.f32 %v6153, %v6470
    %v6472 = vpop.f32.mrb[0].mxu0
    %v6473 = vadd.f32 %v6155, %v6472
    %6474 = vdwg.mxu0
    %v6475 = vld [vmem:[#allocation2 + $0xa0] sm:$0xff]
    %s6476 = scalar_lea.vmem [#allocation3], 512
    %v6477 = vld [vmem:[%s6476] sm:$0xff]
    %v6478 = vld [vmem:[%s6476 + $0x8] sm:$0xff]
    %v6479 = vld [vmem:[%s6476 + $0x10] sm:$0xff]
    %v6480 = vld [vmem:[%s6476 + $0x18] sm:$0xff]
    %v6481 = vld [vmem:[%s6476 + $0x20] sm:$0xff]
    %v6482 = vld [vmem:[%s6476 + $0x28] sm:$0xff]
    %v6483 = vld [vmem:[%s6476 + $0x30] sm:$0xff]
    %v6484 = vld [vmem:[%s6476 + $0x38] sm:$0xff]
    %v6485 = vld [vmem:[%s6476 + $0x40] sm:$0xff]
    %v6486 = vld [vmem:[%s6476 + $0x48] sm:$0xff]
    %v6487 = vld [vmem:[%s6476 + $0x50] sm:$0xff]
    %v6488 = vld [vmem:[%s6476 + $0x58] sm:$0xff]
    %v6489 = vld [vmem:[%s6476 + $0x60] sm:$0xff]
    %v6490 = vld [vmem:[%s6476 + $0x68] sm:$0xff]
    %v6491 = vld [vmem:[%s6476 + $0x70] sm:$0xff]
    %v6492 = vld [vmem:[%s6476 + $0x78] sm:$0xff]
    %v6493 = vld [vmem:[%s6476 + $0x80] sm:$0xff]
    %v6494 = vld [vmem:[%s6476 + $0x88] sm:$0xff]
    %v6495 = vld [vmem:[%s6476 + $0x90] sm:$0xff]
    %v6496 = vld [vmem:[%s6476 + $0x98] sm:$0xff]
    %v6497 = vld [vmem:[%s6476 + $0xa0] sm:$0xff]
    %v6498 = vld [vmem:[%s6476 + $0xa8] sm:$0xff]
    %v6499 = vld [vmem:[%s6476 + $0xb0] sm:$0xff]
    %v6500 = vld [vmem:[%s6476 + $0xb8] sm:$0xff]
    %v6501 = vld [vmem:[%s6476 + $0xc0] sm:$0xff]
    %v6502 = vld [vmem:[%s6476 + $0xc8] sm:$0xff]
    %v6503 = vld [vmem:[%s6476 + $0xd0] sm:$0xff]
    %v6504 = vld [vmem:[%s6476 + $0xd8] sm:$0xff]
    %v6505 = vld [vmem:[%s6476 + $0xe0] sm:$0xff]
    %v6506 = vld [vmem:[%s6476 + $0xe8] sm:$0xff]
    %v6507 = vld [vmem:[%s6476 + $0xf0] sm:$0xff]
    %v6508 = vld [vmem:[%s6476 + $0xf8] sm:$0xff]
    %v6510 = vunpack.c.l.b16 %v6475
    %v6511 = vunpack.c.h.b16 %v6475
    %v6512 = vpack.c.b16 %v5742, %v5740
    %v6513 = vpack.c.b16 %v5743, %v5741
    %v6514 = vpack.c.b16 %v5746, %v5744
    %v6515 = vpack.c.b16 %v5747, %v5745
    %v6516 = vpack.c.b16 %v5750, %v5748
    %v6517 = vpack.c.b16 %v5751, %v5749
    %v6518 = vpack.c.b16 %v5754, %v5752
    %v6519 = vpack.c.b16 %v5755, %v5753
    %v6520 = vpack.c.b16 %v5758, %v5756
    %v6521 = vpack.c.b16 %v5759, %v5757
    %v6522 = vpack.c.b16 %v5762, %v5760
    %v6523 = vpack.c.b16 %v5763, %v5761
    %v6524 = vpack.c.b16 %v5766, %v5764
    %v6525 = vpack.c.b16 %v5767, %v5765
    %v6526 = vpack.c.b16 %v5770, %v5768
    %v6527 = vpack.c.b16 %v5771, %v5769
    %v6528 = vpack.c.b16 %v5774, %v5772
    %v6529 = vpack.c.b16 %v5775, %v5773
    %v6530 = vpack.c.b16 %v6510, %v5776
    %v6531 = vpack.c.b16 %v6511, %v5777
    %v6584 = vunpack.c.l.b16 %v6477
    %v6585 = vunpack.c.h.b16 %v6477
    %v6586 = vunpack.c.l.b16 %v6478
    %v6587 = vunpack.c.h.b16 %v6478
    %v6588 = vunpack.c.l.b16 %v6479
    %v6589 = vunpack.c.h.b16 %v6479
    %v6590 = vunpack.c.l.b16 %v6480
    %v6591 = vunpack.c.h.b16 %v6480
    %v6592 = vunpack.c.l.b16 %v6481
    %v6593 = vunpack.c.h.b16 %v6481
    %v6594 = vunpack.c.l.b16 %v6482
    %v6595 = vunpack.c.h.b16 %v6482
    %v6596 = vunpack.c.l.b16 %v6483
    %v6597 = vunpack.c.h.b16 %v6483
    %v6598 = vunpack.c.l.b16 %v6484
    %v6599 = vunpack.c.h.b16 %v6484
    %v6600 = vunpack.c.l.b16 %v6485
    %v6601 = vunpack.c.h.b16 %v6485
    %v6602 = vunpack.c.l.b16 %v6486
    %v6603 = vunpack.c.h.b16 %v6486
    %v6604 = vunpack.c.l.b16 %v6487
    %v6605 = vunpack.c.h.b16 %v6487
    %v6606 = vunpack.c.l.b16 %v6488
    %v6607 = vunpack.c.h.b16 %v6488
    %v6608 = vunpack.c.l.b16 %v6489
    %v6609 = vunpack.c.h.b16 %v6489
    %v6610 = vunpack.c.l.b16 %v6490
    %v6611 = vunpack.c.h.b16 %v6490
    %v6612 = vunpack.c.l.b16 %v6491
    %v6613 = vunpack.c.h.b16 %v6491
    %v6614 = vunpack.c.l.b16 %v6492
    %v6615 = vunpack.c.h.b16 %v6492
    %v6616 = vunpack.c.l.b16 %v6493
    %v6617 = vunpack.c.h.b16 %v6493
    %v6618 = vunpack.c.l.b16 %v6494
    %v6619 = vunpack.c.h.b16 %v6494
    %v6620 = vunpack.c.l.b16 %v6495
    %v6621 = vunpack.c.h.b16 %v6495
    %v6622 = vunpack.c.l.b16 %v6496
    %v6623 = vunpack.c.h.b16 %v6496
    %v6624 = vunpack.c.l.b16 %v6497
    %v6625 = vunpack.c.h.b16 %v6497
    %v6626 = vunpack.c.l.b16 %v6498
    %v6627 = vunpack.c.h.b16 %v6498
    %v6628 = vunpack.c.l.b16 %v6499
    %v6629 = vunpack.c.h.b16 %v6499
    %v6630 = vunpack.c.l.b16 %v6500
    %v6631 = vunpack.c.h.b16 %v6500
    %v6632 = vunpack.c.l.b16 %v6501
    %v6633 = vunpack.c.h.b16 %v6501
    %v6634 = vunpack.c.l.b16 %v6502
    %v6635 = vunpack.c.h.b16 %v6502
    %v6636 = vunpack.c.l.b16 %v6503
    %v6637 = vunpack.c.h.b16 %v6503
    %v6638 = vunpack.c.l.b16 %v6504
    %v6639 = vunpack.c.h.b16 %v6504
    %v6640 = vunpack.c.l.b16 %v6505
    %v6641 = vunpack.c.h.b16 %v6505
    %v6642 = vunpack.c.l.b16 %v6506
    %v6643 = vunpack.c.h.b16 %v6506
    %v6644 = vunpack.c.l.b16 %v6507
    %v6645 = vunpack.c.h.b16 %v6507
    %v6646 = vunpack.c.l.b16 %v6508
    %v6647 = vunpack.c.h.b16 %v6508
    %v6648 = vpack.c.b16 %v6586, %v6584
    %v6649 = vpack.c.b16 %v6587, %v6585
    %v6650 = vpack.c.b16 %v6590, %v6588
    %v6651 = vpack.c.b16 %v6591, %v6589
    %v6652 = vpack.c.b16 %v6594, %v6592
    %v6653 = vpack.c.b16 %v6595, %v6593
    %v6654 = vpack.c.b16 %v6598, %v6596
    %v6655 = vpack.c.b16 %v6599, %v6597
    %v6656 = vpack.c.b16 %v6602, %v6600
    %v6657 = vpack.c.b16 %v6603, %v6601
    %v6658 = vpack.c.b16 %v6606, %v6604
    %v6659 = vpack.c.b16 %v6607, %v6605
    %v6660 = vpack.c.b16 %v6610, %v6608
    %v6661 = vpack.c.b16 %v6611, %v6609
    %v6662 = vpack.c.b16 %v6614, %v6612
    %v6663 = vpack.c.b16 %v6615, %v6613
    %v6664 = vpack.c.b16 %v6618, %v6616
    %v6665 = vpack.c.b16 %v6619, %v6617
    %v6666 = vpack.c.b16 %v6622, %v6620
    %v6667 = vpack.c.b16 %v6623, %v6621
    %v6668 = vpack.c.b16 %v6626, %v6624
    %v6669 = vpack.c.b16 %v6627, %v6625
    %v6670 = vpack.c.b16 %v6630, %v6628
    %v6671 = vpack.c.b16 %v6631, %v6629
    %v6672 = vpack.c.b16 %v6634, %v6632
    %v6673 = vpack.c.b16 %v6635, %v6633
    %v6674 = vpack.c.b16 %v6638, %v6636
    %v6675 = vpack.c.b16 %v6639, %v6637
    %v6676 = vpack.c.b16 %v6642, %v6640
    %v6677 = vpack.c.b16 %v6643, %v6641
    %v6678 = vpack.c.b16 %v6646, %v6644
    %v6679 = vpack.c.b16 %v6647, %v6645
    %6712 = vmatprep.subr.bf16.mxu0 %v6649
    %6713 = vmatpush1.bf16.msra.mxu0 %v6648
    %6714 = vmatprep.subr.bf16.mxu0 %v6651
    %6715 = vmatpush1.bf16.msra.mxu0 %v6650
    %6716 = vmatprep.subr.bf16.mxu0 %v6653
    %6717 = vmatpush1.bf16.msra.mxu0 %v6652
    %6718 = vmatprep.subr.bf16.mxu0 %v6655
    %6719 = vmatpush1.bf16.msra.mxu0 %v6654
    %6720 = vmatprep.subr.bf16.mxu0 %v6657
    %6721 = vmatpush1.bf16.msra.mxu0 %v6656
    %6722 = vmatprep.subr.bf16.mxu0 %v6659
    %6723 = vmatpush1.bf16.msra.mxu0 %v6658
    %6724 = vmatprep.subr.bf16.mxu0 %v6661
    %6725 = vmatpush1.bf16.msra.mxu0 %v6660
    %6726 = vmatprep.subr.bf16.mxu0 %v6663
    %6727 = vmatpush1.bf16.msra.mxu0 %v6662
    %6728 = vmatprep.subr.bf16.mxu0 %v6665
    %6729 = vmatpush1.bf16.msra.mxu0 %v6664
    %6730 = vmatprep.subr.bf16.mxu0 %v6667
    %6731 = vmatpush1.bf16.msra.mxu0 %v6666
    %6732 = vmatprep.subr.bf16.mxu0 %v6669
    %6733 = vmatpush1.bf16.msra.mxu0 %v6668
    %6734 = vmatprep.subr.bf16.mxu0 %v6671
    %6735 = vmatpush1.bf16.msra.mxu0 %v6670
    %6736 = vmatprep.subr.bf16.mxu0 %v6673
    %6737 = vmatpush1.bf16.msra.mxu0 %v6672
    %6738 = vmatprep.subr.bf16.mxu0 %v6675
    %6739 = vmatpush1.bf16.msra.mxu0 %v6674
    %6740 = vmatprep.subr.bf16.mxu0 %v6677
    %6741 = vmatpush1.bf16.msra.mxu0 %v6676
    %6742 = vmatprep.subr.bf16.mxu0 %v6679
    %6743 = vmatpush1.bf16.msra.mxu0 %v6678
    %6744 = vmatprep.mubr.bf16.mxu0 %v6513
    %6745 = vmatmul.mubr.bf16.gmra.mrb[0].mxu0 %v6512
    %v6746 = vpop.f32.mrb[0].mxu0
    %v6747 = vadd.f32 0.0, %v6746
    %v6748 = vpop.f32.mrb[0].mxu0
    %v6749 = vadd.f32 0.0, %v6748
    %v6750 = vpop.f32.mrb[0].mxu0
    %v6751 = vadd.f32 0.0, %v6750
    %v6752 = vpop.f32.mrb[0].mxu0
    %v6753 = vadd.f32 0.0, %v6752
    %6754 = vmatprep.mubr.bf16.mxu0 %v6515
    %6755 = vmatmul.mubr.bf16.gmra.mrb[0].mxu0 %v6514
    %v6756 = vpop.f32.mrb[0].mxu0
    %v6757 = vadd.f32 0.0, %v6756
    %v6758 = vpop.f32.mrb[0].mxu0
    %v6759 = vadd.f32 0.0, %v6758
    %v6760 = vpop.f32.mrb[0].mxu0
    %v6761 = vadd.f32 0.0, %v6760
    %v6762 = vpop.f32.mrb[0].mxu0
    %v6763 = vadd.f32 0.0, %v6762
    %6764 = vmatprep.mubr.bf16.mxu0 %v6517
    %6765 = vmatmul.mubr.bf16.gmra.mrb[0].mxu0 %v6516
    %v6766 = vpop.f32.mrb[0].mxu0
    %v6767 = vadd.f32 0.0, %v6766
    %v6768 = vpop.f32.mrb[0].mxu0
    %v6769 = vadd.f32 0.0, %v6768
    %v6770 = vpop.f32.mrb[0].mxu0
    %v6771 = vadd.f32 0.0, %v6770
    %v6772 = vpop.f32.mrb[0].mxu0
    %v6773 = vadd.f32 0.0, %v6772
    %6774 = vmatprep.mubr.bf16.mxu0 %v6519
    %6775 = vmatmul.mubr.bf16.gmra.mrb[0].mxu0 %v6518
    %v6776 = vpop.f32.mrb[0].mxu0
    %v6777 = vadd.f32 0.0, %v6776
    %v6778 = vpop.f32.mrb[0].mxu0
    %v6779 = vadd.f32 0.0, %v6778
    %v6780 = vpop.f32.mrb[0].mxu0
    %v6781 = vadd.f32 0.0, %v6780
    %v6782 = vpop.f32.mrb[0].mxu0
    %v6783 = vadd.f32 0.0, %v6782
    %6784 = vmatprep.mubr.bf16.mxu0 %v6521
    %6785 = vmatmul.mubr.bf16.gmra.mrb[0].mxu0 %v6520
    %v6786 = vpop.f32.mrb[0].mxu0
    %v6787 = vadd.f32 0.0, %v6786
    %v6788 = vpop.f32.mrb[0].mxu0
    %v6789 = vadd.f32 0.0, %v6788
    %v6790 = vpop.f32.mrb[0].mxu0
    %v6791 = vadd.f32 0.0, %v6790
    %v6792 = vpop.f32.mrb[0].mxu0
    %v6793 = vadd.f32 0.0, %v6792
    %6794 = vmatprep.mubr.bf16.mxu0 %v6523
    %6795 = vmatmul.mubr.bf16.gmra.mrb[0].mxu0 %v6522
    %v6796 = vpop.f32.mrb[0].mxu0
    %v6797 = vadd.f32 0.0, %v6796
    %v6798 = vpop.f32.mrb[0].mxu0
    %v6799 = vadd.f32 0.0, %v6798
    %v6800 = vpop.f32.mrb[0].mxu0
    %v6801 = vadd.f32 0.0, %v6800
    %v6802 = vpop.f32.mrb[0].mxu0
    %v6803 = vadd.f32 0.0, %v6802
    %6804 = vmatprep.mubr.bf16.mxu0 %v6525
    %6805 = vmatmul.mubr.bf16.gmra.mrb[0].mxu0 %v6524
    %v6806 = vpop.f32.mrb[0].mxu0
    %v6807 = vadd.f32 0.0, %v6806
    %v6808 = vpop.f32.mrb[0].mxu0
    %v6809 = vadd.f32 0.0, %v6808
    %v6810 = vpop.f32.mrb[0].mxu0
    %v6811 = vadd.f32 0.0, %v6810
    %v6812 = vpop.f32.mrb[0].mxu0
    %v6813 = vadd.f32 0.0, %v6812
    %6814 = vmatprep.mubr.bf16.mxu0 %v6527
    %6815 = vmatmul.mubr.bf16.gmra.mrb[0].mxu0 %v6526
    %v6816 = vpop.f32.mrb[0].mxu0
    %v6817 = vadd.f32 0.0, %v6816
    %v6818 = vpop.f32.mrb[0].mxu0
    %v6819 = vadd.f32 0.0, %v6818
    %v6820 = vpop.f32.mrb[0].mxu0
    %v6821 = vadd.f32 0.0, %v6820
    %v6822 = vpop.f32.mrb[0].mxu0
    %v6823 = vadd.f32 0.0, %v6822
    %6824 = vmatprep.mubr.bf16.mxu0 %v6529
    %6825 = vmatmul.mubr.bf16.gmra.mrb[0].mxu0 %v6528
    %v6826 = vpop.f32.mrb[0].mxu0
    %v6827 = vadd.f32 0.0, %v6826
    %v6828 = vpop.f32.mrb[0].mxu0
    %v6829 = vadd.f32 0.0, %v6828
    %v6830 = vpop.f32.mrb[0].mxu0
    %v6831 = vadd.f32 0.0, %v6830
    %v6832 = vpop.f32.mrb[0].mxu0
    %v6833 = vadd.f32 0.0, %v6832
    %6834 = vmatprep.mubr.bf16.mxu0 %v6531
    %6835 = vmatmul.mubr.bf16.gmra.mrb[0].mxu0 %v6530
    %v6836 = vpop.f32.mrb[0].mxu0
    %v6837 = vadd.f32 0.0, %v6836
    %v6838 = vpop.f32.mrb[0].mxu0
    %v6839 = vadd.f32 0.0, %v6838
    %v6840 = vpop.f32.mrb[0].mxu0
    %v6841 = vadd.f32 0.0, %v6840
    %v6842 = vpop.f32.mrb[0].mxu0
    %v6843 = vadd.f32 0.0, %v6842
    %6844 = vdwg.mxu0
    %v6845 = vadd.f32 %v6377, %v6747
    %v6846 = vadd.f32 %v6379, %v6749
    %v6847 = vadd.f32 %v6381, %v6751
    %v6848 = vadd.f32 %v6383, %v6753
    %v6849 = vadd.f32 %v6387, %v6757
    %v6850 = vadd.f32 %v6389, %v6759
    %v6851 = vadd.f32 %v6391, %v6761
    %v6852 = vadd.f32 %v6393, %v6763
    %v6853 = vadd.f32 %v6397, %v6767
    %v6854 = vadd.f32 %v6399, %v6769
    %v6855 = vadd.f32 %v6401, %v6771
    %v6856 = vadd.f32 %v6403, %v6773
    %v6857 = vadd.f32 %v6407, %v6777
    %v6858 = vadd.f32 %v6409, %v6779
    %v6859 = vadd.f32 %v6411, %v6781
    %v6860 = vadd.f32 %v6413, %v6783
    %v6861 = vadd.f32 %v6417, %v6787
    %v6862 = vadd.f32 %v6419, %v6789
    %v6863 = vadd.f32 %v6421, %v6791
    %v6864 = vadd.f32 %v6423, %v6793
    %v6865 = vadd.f32 %v6427, %v6797
    %v6866 = vadd.f32 %v6429, %v6799
    %v6867 = vadd.f32 %v6431, %v6801
    %v6868 = vadd.f32 %v6433, %v6803
    %v6869 = vadd.f32 %v6437, %v6807
    %v6870 = vadd.f32 %v6439, %v6809
    %v6871 = vadd.f32 %v6441, %v6811
    %v6872 = vadd.f32 %v6443, %v6813
    %v6873 = vadd.f32 %v6447, %v6817
    %v6874 = vadd.f32 %v6449, %v6819
    %v6875 = vadd.f32 %v6451, %v6821
    %v6876 = vadd.f32 %v6453, %v6823
    %v6877 = vadd.f32 %v6457, %v6827
    %v6878 = vadd.f32 %v6459, %v6829
    %v6879 = vadd.f32 %v6461, %v6831
    %v6880 = vadd.f32 %v6463, %v6833
    %v6881 = vadd.f32 %v6467, %v6837
    %v6882 = vadd.f32 %v6469, %v6839
    %v6883 = vadd.f32 %v6471, %v6841
    %v6884 = vadd.f32 %v6473, %v6843
    %v6885 = vld [vmem:[#allocation2 + $0x8] sm:$0xcc]
    %v6886 = vld [vmem:[#allocation2 + $0x10] sm:$0xff]
    %v6887 = vld [vmem:[#allocation2 + $0x18] sm:$0xff]
    %v6888 = vld [vmem:[#allocation2 + $0x20] sm:$0xff]
    %v6889 = vld [vmem:[#allocation2 + $0x28] sm:$0xff]
    %v6890 = vld [vmem:[#allocation2 + $0x30] sm:$0xff]
    %v6891 = vld [vmem:[#allocation2 + $0x38] sm:$0xff]
    %v6892 = vld [vmem:[#allocation2 + $0x40] sm:$0xff]
    %v6893 = vld [vmem:[#allocation2 + $0x48] sm:$0xff]
    %v6894 = vld [vmem:[#allocation2 + $0x50] sm:$0xff]
    %v6895 = vld [vmem:[#allocation2 + $0x58] sm:$0xff]
    %v6896 = vld [vmem:[#allocation2 + $0x60] sm:$0xff]
    %v6897 = vld [vmem:[#allocation2 + $0x68] sm:$0xff]
    %v6898 = vld [vmem:[#allocation2 + $0x70] sm:$0xff]
    %v6899 = vld [vmem:[#allocation2 + $0x78] sm:$0xff]
    %v6900 = vld [vmem:[#allocation2 + $0x80] sm:$0xff]
    %v6901 = vld [vmem:[#allocation2 + $0x88] sm:$0xff]
    %v6902 = vld [vmem:[#allocation2 + $0x90] sm:$0xff]
    %v6903 = vld [vmem:[#allocation2 + $0x98] sm:$0xff]
    %v6904 = vld [vmem:[#allocation2 + $0xa0] sm:$0xff]
    %v6905 = vld [vmem:[#allocation2 + $0xa8] sm:$0x33]
    %s6906 = scalar_lea.vmem [#allocation3], 768
    %v6907 = vld [vmem:[%s6906] sm:$0xff]
    %v6908 = vld [vmem:[%s6906 + $0x8] sm:$0xff]
    %v6909 = vld [vmem:[%s6906 + $0x10] sm:$0xff]
    %v6910 = vld [vmem:[%s6906 + $0x18] sm:$0xff]
    %v6911 = vld [vmem:[%s6906 + $0x20] sm:$0xff]
    %v6912 = vld [vmem:[%s6906 + $0x28] sm:$0xff]
    %v6913 = vld [vmem:[%s6906 + $0x30] sm:$0xff]
    %v6914 = vld [vmem:[%s6906 + $0x38] sm:$0xff]
    %v6915 = vld [vmem:[%s6906 + $0x40] sm:$0xff]
    %v6916 = vld [vmem:[%s6906 + $0x48] sm:$0xff]
    %v6917 = vld [vmem:[%s6906 + $0x50] sm:$0xff]
    %v6918 = vld [vmem:[%s6906 + $0x58] sm:$0xff]
    %v6919 = vld [vmem:[%s6906 + $0x60] sm:$0xff]
    %v6920 = vld [vmem:[%s6906 + $0x68] sm:$0xff]
    %v6921 = vld [vmem:[%s6906 + $0x70] sm:$0xff]
    %v6922 = vld [vmem:[%s6906 + $0x78] sm:$0xff]
    %v6923 = vld [vmem:[%s6906 + $0x80] sm:$0xff]
    %v6924 = vld [vmem:[%s6906 + $0x88] sm:$0xff]
    %v6925 = vld [vmem:[%s6906 + $0x90] sm:$0xff]
    %v6926 = vld [vmem:[%s6906 + $0x98] sm:$0xff]
    %v6927 = vld [vmem:[%s6906 + $0xa0] sm:$0xff]
    %v6928 = vld [vmem:[%s6906 + $0xa8] sm:$0xff]
    %v6929 = vld [vmem:[%s6906 + $0xb0] sm:$0xff]
    %v6930 = vld [vmem:[%s6906 + $0xb8] sm:$0xff]
    %v6931 = vld [vmem:[%s6906 + $0xc0] sm:$0xff]
    %v6932 = vld [vmem:[%s6906 + $0xc8] sm:$0xff]
    %v6933 = vld [vmem:[%s6906 + $0xd0] sm:$0xff]
    %v6934 = vld [vmem:[%s6906 + $0xd8] sm:$0xff]
    %v6935 = vld [vmem:[%s6906 + $0xe0] sm:$0xff]
    %v6936 = vld [vmem:[%s6906 + $0xe8] sm:$0xff]
    %v6937 = vld [vmem:[%s6906 + $0xf0] sm:$0xff]
    %v6938 = vld [vmem:[%s6906 + $0xf8] sm:$0xff]
    %v6960 = vunpack.c.l.b16 %v6885
    %v6961 = vunpack.c.h.b16 %v6885
    %v6962 = vunpack.c.l.b16 %v6886
    %v6963 = vunpack.c.h.b16 %v6886
    %v6964 = vunpack.c.l.b16 %v6887
    %v6965 = vunpack.c.h.b16 %v6887
    %v6966 = vunpack.c.l.b16 %v6888
    %v6967 = vunpack.c.h.b16 %v6888
    %v6968 = vunpack.c.l.b16 %v6889
    %v6969 = vunpack.c.h.b16 %v6889
    %v6970 = vunpack.c.l.b16 %v6890
    %v6971 = vunpack.c.h.b16 %v6890
    %v6972 = vunpack.c.l.b16 %v6891
    %v6973 = vunpack.c.h.b16 %v6891
    %v6974 = vunpack.c.l.b16 %v6892
    %v6975 = vunpack.c.h.b16 %v6892
    %v6976 = vunpack.c.l.b16 %v6893
    %v6977 = vunpack.c.h.b16 %v6893
    %v6978 = vunpack.c.l.b16 %v6894
    %v6979 = vunpack.c.h.b16 %v6894
    %v6980 = vunpack.c.l.b16 %v6895
    %v6981 = vunpack.c.h.b16 %v6895
    %v6982 = vunpack.c.l.b16 %v6896
    %v6983 = vunpack.c.h.b16 %v6896
    %v6984 = vunpack.c.l.b16 %v6897
    %v6985 = vunpack.c.h.b16 %v6897
    %v6986 = vunpack.c.l.b16 %v6898
    %v6987 = vunpack.c.h.b16 %v6898
    %v6988 = vunpack.c.l.b16 %v6899
    %v6989 = vunpack.c.h.b16 %v6899
    %v6990 = vunpack.c.l.b16 %v6900
    %v6991 = vunpack.c.h.b16 %v6900
    %v6992 = vunpack.c.l.b16 %v6901
    %v6993 = vunpack.c.h.b16 %v6901
    %v6994 = vunpack.c.l.b16 %v6902
    %v6995 = vunpack.c.h.b16 %v6902
    %v6996 = vunpack.c.l.b16 %v6903
    %v6997 = vunpack.c.h.b16 %v6903
    %v6998 = vunpack.c.l.b16 %v6904
    %v6999 = vunpack.c.h.b16 %v6904
    %v7000 = vunpack.c.l.b16 %v6905
    %v7001 = vunpack.c.h.b16 %v6905
    %v7002 = vpack.c.b16 %v6962, %v6960
    %v7003 = vpack.c.b16 %v6963, %v6961
    %v7004 = vpack.c.b16 %v6966, %v6964
    %v7005 = vpack.c.b16 %v6967, %v6965
    %v7006 = vpack.c.b16 %v6970, %v6968
    %v7007 = vpack.c.b16 %v6971, %v6969
    %v7008 = vpack.c.b16 %v6974, %v6972
    %v7009 = vpack.c.b16 %v6975, %v6973
    %v7010 = vpack.c.b16 %v6978, %v6976
    %v7011 = vpack.c.b16 %v6979, %v6977
    %v7012 = vpack.c.b16 %v6982, %v6980
    %v7013 = vpack.c.b16 %v6983, %v6981
    %v7014 = vpack.c.b16 %v6986, %v6984
    %v7015 = vpack.c.b16 %v6987, %v6985
    %v7016 = vpack.c.b16 %v6990, %v6988
    %v7017 = vpack.c.b16 %v6991, %v6989
    %v7018 = vpack.c.b16 %v6994, %v6992
    %v7019 = vpack.c.b16 %v6995, %v6993
    %v7020 = vpack.c.b16 %v6998, %v6996
    %v7021 = vpack.c.b16 %v6999, %v6997
    %v7022 = vpack.c.b16 %v7000, %v7000
    %v7023 = vpack.c.b16 %v7001, %v7001
    %v7024 = vrot.slane %v7002, 2
    %v7025 = vrot.slane %v7004, 2
    %v7026 = vsel %vm3324, %v7024, %v7025
    %v7027 = vrot.slane %v7003, 2
    %v7028 = vrot.slane %v7005, 2
    %v7029 = vsel %vm3324, %v7027, %v7028
    %v7030 = vrot.slane %v7006, 2
    %v7031 = vsel %vm3324, %v7025, %v7030
    %v7032 = vrot.slane %v7007, 2
    %v7033 = vsel %vm3324, %v7028, %v7032
    %v7034 = vrot.slane %v7008, 2
    %v7035 = vsel %vm3324, %v7030, %v7034
    %v7036 = vrot.slane %v7009, 2
    %v7037 = vsel %vm3324, %v7032, %v7036
    %v7038 = vrot.slane %v7010, 2
    %v7039 = vsel %vm3324, %v7034, %v7038
    %v7040 = vrot.slane %v7011, 2
    %v7041 = vsel %vm3324, %v7036, %v7040
    %v7042 = vrot.slane %v7012, 2
    %v7043 = vsel %vm3324, %v7038, %v7042
    %v7044 = vrot.slane %v7013, 2
    %v7045 = vsel %vm3324, %v7040, %v7044
    %v7046 = vrot.slane %v7014, 2
    %v7047 = vsel %vm3324, %v7042, %v7046
    %v7048 = vrot.slane %v7015, 2
    %v7049 = vsel %vm3324, %v7044, %v7048
    %v7050 = vrot.slane %v7016, 2
    %v7051 = vsel %vm3324, %v7046, %v7050
    %v7052 = vrot.slane %v7017, 2
    %v7053 = vsel %vm3324, %v7048, %v7052
    %v7054 = vrot.slane %v7018, 2
    %v7055 = vsel %vm3324, %v7050, %v7054
    %v7056 = vrot.slane %v7019, 2
    %v7057 = vsel %vm3324, %v7052, %v7056
    %v7058 = vrot.slane %v7020, 2
    %v7059 = vsel %vm3324, %v7054, %v7058
    %v7060 = vrot.slane %v7021, 2
    %v7061 = vsel %vm3324, %v7056, %v7060
    %v7062 = vrot.slane %v7022, 2
    %v7063 = vsel %vm3324, %v7058, %v7062
    %v7064 = vrot.slane %v7023, 2
    %v7065 = vsel %vm3324, %v7060, %v7064
    %v7118 = vunpack.c.l.b16 %v6907
    %v7119 = vunpack.c.h.b16 %v6907
    %v7120 = vunpack.c.l.b16 %v6908
    %v7121 = vunpack.c.h.b16 %v6908
    %v7122 = vunpack.c.l.b16 %v6909
    %v7123 = vunpack.c.h.b16 %v6909
    %v7124 = vunpack.c.l.b16 %v6910
    %v7125 = vunpack.c.h.b16 %v6910
    %v7126 = vunpack.c.l.b16 %v6911
    %v7127 = vunpack.c.h.b16 %v6911
    %v7128 = vunpack.c.l.b16 %v6912
    %v7129 = vunpack.c.h.b16 %v6912
    %v7130 = vunpack.c.l.b16 %v6913
    %v7131 = vunpack.c.h.b16 %v6913
    %v7132 = vunpack.c.l.b16 %v6914
    %v7133 = vunpack.c.h.b16 %v6914
    %v7134 = vunpack.c.l.b16 %v6915
    %v7135 = vunpack.c.h.b16 %v6915
    %v7136 = vunpack.c.l.b16 %v6916
    %v7137 = vunpack.c.h.b16 %v6916
    %v7138 = vunpack.c.l.b16 %v6917
    %v7139 = vunpack.c.h.b16 %v6917
    %v7140 = vunpack.c.l.b16 %v6918
    %v7141 = vunpack.c.h.b16 %v6918
    %v7142 = vunpack.c.l.b16 %v6919
    %v7143 = vunpack.c.h.b16 %v6919
    %v7144 = vunpack.c.l.b16 %v6920
    %v7145 = vunpack.c.h.b16 %v6920
    %v7146 = vunpack.c.l.b16 %v6921
    %v7147 = vunpack.c.h.b16 %v6921
    %v7148 = vunpack.c.l.b16 %v6922
    %v7149 = vunpack.c.h.b16 %v6922
    %v7150 = vunpack.c.l.b16 %v6923
    %v7151 = vunpack.c.h.b16 %v6923
    %v7152 = vunpack.c.l.b16 %v6924
    %v7153 = vunpack.c.h.b16 %v6924
    %v7154 = vunpack.c.l.b16 %v6925
    %v7155 = vunpack.c.h.b16 %v6925
    %v7156 = vunpack.c.l.b16 %v6926
    %v7157 = vunpack.c.h.b16 %v6926
    %v7158 = vunpack.c.l.b16 %v6927
    %v7159 = vunpack.c.h.b16 %v6927
    %v7160 = vunpack.c.l.b16 %v6928
    %v7161 = vunpack.c.h.b16 %v6928
    %v7162 = vunpack.c.l.b16 %v6929
    %v7163 = vunpack.c.h.b16 %v6929
    %v7164 = vunpack.c.l.b16 %v6930
    %v7165 = vunpack.c.h.b16 %v6930
    %v7166 = vunpack.c.l.b16 %v6931
    %v7167 = vunpack.c.h.b16 %v6931
    %v7168 = vunpack.c.l.b16 %v6932
    %v7169 = vunpack.c.h.b16 %v6932
    %v7170 = vunpack.c.l.b16 %v6933
    %v7171 = vunpack.c.h.b16 %v6933
    %v7172 = vunpack.c.l.b16 %v6934
    %v7173 = vunpack.c.h.b16 %v6934
    %v7174 = vunpack.c.l.b16 %v6935
    %v7175 = vunpack.c.h.b16 %v6935
    %v7176 = vunpack.c.l.b16 %v6936
    %v7177 = vunpack.c.h.b16 %v6936
    %v7178 = vunpack.c.l.b16 %v6937
    %v7179 = vunpack.c.h.b16 %v6937
    %v7180 = vunpack.c.l.b16 %v6938
    %v7181 = vunpack.c.h.b16 %v6938
    %v7182 = vpack.c.b16 %v7120, %v7118
    %v7183 = vpack.c.b16 %v7121, %v7119
    %v7184 = vpack.c.b16 %v7124, %v7122
    %v7185 = vpack.c.b16 %v7125, %v7123
    %v7186 = vpack.c.b16 %v7128, %v7126
    %v7187 = vpack.c.b16 %v7129, %v7127
    %v7188 = vpack.c.b16 %v7132, %v7130
    %v7189 = vpack.c.b16 %v7133, %v7131
    %v7190 = vpack.c.b16 %v7136, %v7134
    %v7191 = vpack.c.b16 %v7137, %v7135
    %v7192 = vpack.c.b16 %v7140, %v7138
    %v7193 = vpack.c.b16 %v7141, %v7139
    %v7194 = vpack.c.b16 %v7144, %v7142
    %v7195 = vpack.c.b16 %v7145, %v7143
    %v7196 = vpack.c.b16 %v7148, %v7146
    %v7197 = vpack.c.b16 %v7149, %v7147
    %v7198 = vpack.c.b16 %v7152, %v7150
    %v7199 = vpack.c.b16 %v7153, %v7151
    %v7200 = vpack.c.b16 %v7156, %v7154
    %v7201 = vpack.c.b16 %v7157, %v7155
    %v7202 = vpack.c.b16 %v7160, %v7158
    %v7203 = vpack.c.b16 %v7161, %v7159
    %v7204 = vpack.c.b16 %v7164, %v7162
    %v7205 = vpack.c.b16 %v7165, %v7163
    %v7206 = vpack.c.b16 %v7168, %v7166
    %v7207 = vpack.c.b16 %v7169, %v7167
    %v7208 = vpack.c.b16 %v7172, %v7170
    %v7209 = vpack.c.b16 %v7173, %v7171
    %v7210 = vpack.c.b16 %v7176, %v7174
    %v7211 = vpack.c.b16 %v7177, %v7175
    %v7212 = vpack.c.b16 %v7180, %v7178
    %v7213 = vpack.c.b16 %v7181, %v7179
    %7246 = vmatprep.subr.bf16.mxu0 %v7183
    %7247 = vmatpush1.bf16.msra.mxu0 %v7182
    %7248 = vmatprep.subr.bf16.mxu0 %v7185
    %7249 = vmatpush1.bf16.msra.mxu0 %v7184
    %7250 = vmatprep.subr.bf16.mxu0 %v7187
    %7251 = vmatpush1.bf16.msra.mxu0 %v7186
    %7252 = vmatprep.subr.bf16.mxu0 %v7189
    %7253 = vmatpush1.bf16.msra.mxu0 %v7188
    %7254 = vmatprep.subr.bf16.mxu0 %v7191
    %7255 = vmatpush1.bf16.msra.mxu0 %v7190
    %7256 = vmatprep.subr.bf16.mxu0 %v7193
    %7257 = vmatpush1.bf16.msra.mxu0 %v7192
    %7258 = vmatprep.subr.bf16.mxu0 %v7195
    %7259 = vmatpush1.bf16.msra.mxu0 %v7194
    %7260 = vmatprep.subr.bf16.mxu0 %v7197
    %7261 = vmatpush1.bf16.msra.mxu0 %v7196
    %7262 = vmatprep.subr.bf16.mxu0 %v7199
    %7263 = vmatpush1.bf16.msra.mxu0 %v7198
    %7264 = vmatprep.subr.bf16.mxu0 %v7201
    %7265 = vmatpush1.bf16.msra.mxu0 %v7200
    %7266 = vmatprep.subr.bf16.mxu0 %v7203
    %7267 = vmatpush1.bf16.msra.mxu0 %v7202
    %7268 = vmatprep.subr.bf16.mxu0 %v7205
    %7269 = vmatpush1.bf16.msra.mxu0 %v7204
    %7270 = vmatprep.subr.bf16.mxu0 %v7207
    %7271 = vmatpush1.bf16.msra.mxu0 %v7206
    %7272 = vmatprep.subr.bf16.mxu0 %v7209
    %7273 = vmatpush1.bf16.msra.mxu0 %v7208
    %7274 = vmatprep.subr.bf16.mxu0 %v7211
    %7275 = vmatpush1.bf16.msra.mxu0 %v7210
    %7276 = vmatprep.subr.bf16.mxu0 %v7213
    %7277 = vmatpush1.bf16.msra.mxu0 %v7212
    %7278 = vmatprep.mubr.bf16.mxu0 %v7029
    %7279 = vmatmul.mubr.bf16.gmra.mrb[0].mxu0 %v7026
    %v7280 = vpop.f32.mrb[0].mxu0
    %v7281 = vadd.f32 0.0, %v7280
    %v7282 = vpop.f32.mrb[0].mxu0
    %v7283 = vadd.f32 0.0, %v7282
    %v7284 = vpop.f32.mrb[0].mxu0
    %v7285 = vadd.f32 0.0, %v7284
    %v7286 = vpop.f32.mrb[0].mxu0
    %v7287 = vadd.f32 0.0, %v7286
    %7288 = vmatprep.mubr.bf16.mxu0 %v7033
    %7289 = vmatmul.mubr.bf16.gmra.mrb[0].mxu0 %v7031
    %v7290 = vpop.f32.mrb[0].mxu0
    %v7291 = vadd.f32 0.0, %v7290
    %v7292 = vpop.f32.mrb[0].mxu0
    %v7293 = vadd.f32 0.0, %v7292
    %v7294 = vpop.f32.mrb[0].mxu0
    %v7295 = vadd.f32 0.0, %v7294
    %v7296 = vpop.f32.mrb[0].mxu0
    %v7297 = vadd.f32 0.0, %v7296
    %7298 = vmatprep.mubr.bf16.mxu0 %v7037
    %7299 = vmatmul.mubr.bf16.gmra.mrb[0].mxu0 %v7035
    %v7300 = vpop.f32.mrb[0].mxu0
    %v7301 = vadd.f32 0.0, %v7300
    %v7302 = vpop.f32.mrb[0].mxu0
    %v7303 = vadd.f32 0.0, %v7302
    %v7304 = vpop.f32.mrb[0].mxu0
    %v7305 = vadd.f32 0.0, %v7304
    %v7306 = vpop.f32.mrb[0].mxu0
    %v7307 = vadd.f32 0.0, %v7306
    %7308 = vmatprep.mubr.bf16.mxu0 %v7041
    %7309 = vmatmul.mubr.bf16.gmra.mrb[0].mxu0 %v7039
    %v7310 = vpop.f32.mrb[0].mxu0
    %v7311 = vadd.f32 0.0, %v7310
    %v7312 = vpop.f32.mrb[0].mxu0
    %v7313 = vadd.f32 0.0, %v7312
    %v7314 = vpop.f32.mrb[0].mxu0
    %v7315 = vadd.f32 0.0, %v7314
    %v7316 = vpop.f32.mrb[0].mxu0
    %v7317 = vadd.f32 0.0, %v7316
    %7318 = vmatprep.mubr.bf16.mxu0 %v7045
    %7319 = vmatmul.mubr.bf16.gmra.mrb[0].mxu0 %v7043
    %v7320 = vpop.f32.mrb[0].mxu0
    %v7321 = vadd.f32 0.0, %v7320
    %v7322 = vpop.f32.mrb[0].mxu0
    %v7323 = vadd.f32 0.0, %v7322
    %v7324 = vpop.f32.mrb[0].mxu0
    %v7325 = vadd.f32 0.0, %v7324
    %v7326 = vpop.f32.mrb[0].mxu0
    %v7327 = vadd.f32 0.0, %v7326
    %7328 = vmatprep.mubr.bf16.mxu0 %v7049
    %7329 = vmatmul.mubr.bf16.gmra.mrb[0].mxu0 %v7047
    %v7330 = vpop.f32.mrb[0].mxu0
    %v7331 = vadd.f32 0.0, %v7330
    %v7332 = vpop.f32.mrb[0].mxu0
    %v7333 = vadd.f32 0.0, %v7332
    %v7334 = vpop.f32.mrb[0].mxu0
    %v7335 = vadd.f32 0.0, %v7334
    %v7336 = vpop.f32.mrb[0].mxu0
    %v7337 = vadd.f32 0.0, %v7336
    %7338 = vmatprep.mubr.bf16.mxu0 %v7053
    %7339 = vmatmul.mubr.bf16.gmra.mrb[0].mxu0 %v7051
    %v7340 = vpop.f32.mrb[0].mxu0
    %v7341 = vadd.f32 0.0, %v7340
    %v7342 = vpop.f32.mrb[0].mxu0
    %v7343 = vadd.f32 0.0, %v7342
    %v7344 = vpop.f32.mrb[0].mxu0
    %v7345 = vadd.f32 0.0, %v7344
    %v7346 = vpop.f32.mrb[0].mxu0
    %v7347 = vadd.f32 0.0, %v7346
    %7348 = vmatprep.mubr.bf16.mxu0 %v7057
    %7349 = vmatmul.mubr.bf16.gmra.mrb[0].mxu0 %v7055
    %v7350 = vpop.f32.mrb[0].mxu0
    %v7351 = vadd.f32 0.0, %v7350
    %v7352 = vpop.f32.mrb[0].mxu0
    %v7353 = vadd.f32 0.0, %v7352
    %v7354 = vpop.f32.mrb[0].mxu0
    %v7355 = vadd.f32 0.0, %v7354
    %v7356 = vpop.f32.mrb[0].mxu0
    %v7357 = vadd.f32 0.0, %v7356
    %7358 = vmatprep.mubr.bf16.mxu0 %v7061
    %7359 = vmatmul.mubr.bf16.gmra.mrb[0].mxu0 %v7059
    %v7360 = vpop.f32.mrb[0].mxu0
    %v7361 = vadd.f32 0.0, %v7360
    %v7362 = vpop.f32.mrb[0].mxu0
    %v7363 = vadd.f32 0.0, %v7362
    %v7364 = vpop.f32.mrb[0].mxu0
    %v7365 = vadd.f32 0.0, %v7364
    %v7366 = vpop.f32.mrb[0].mxu0
    %v7367 = vadd.f32 0.0, %v7366
    %7368 = vmatprep.mubr.bf16.mxu0 %v7065
    %7369 = vmatmul.mubr.bf16.gmra.mrb[0].mxu0 %v7063
    %v7370 = vpop.f32.mrb[0].mxu0
    %v7371 = vadd.f32 0.0, %v7370
    %v7372 = vpop.f32.mrb[0].mxu0
    %v7373 = vadd.f32 0.0, %v7372
    %v7374 = vpop.f32.mrb[0].mxu0
    %v7375 = vadd.f32 0.0, %v7374
    %v7376 = vpop.f32.mrb[0].mxu0
    %v7377 = vadd.f32 0.0, %v7376
    %7378 = vdwg.mxu0
    %v7379 = vadd.f32 %v6845, %v7281
    %v7380 = vadd.f32 %v6846, %v7283
    %v7381 = vadd.f32 %v6847, %v7285
    %v7382 = vadd.f32 %v6848, %v7287
    %v7383 = vadd.f32 %v6849, %v7291
    %v7384 = vadd.f32 %v6850, %v7293
    %v7385 = vadd.f32 %v6851, %v7295
    %v7386 = vadd.f32 %v6852, %v7297
    %v7387 = vadd.f32 %v6853, %v7301
    %v7388 = vadd.f32 %v6854, %v7303
    %v7389 = vadd.f32 %v6855, %v7305
    %v7390 = vadd.f32 %v6856, %v7307
    %v7391 = vadd.f32 %v6857, %v7311
    %v7392 = vadd.f32 %v6858, %v7313
    %v7393 = vadd.f32 %v6859, %v7315
    %v7394 = vadd.f32 %v6860, %v7317
    %v7395 = vadd.f32 %v6861, %v7321
    %v7396 = vadd.f32 %v6862, %v7323
    %v7397 = vadd.f32 %v6863, %v7325
    %v7398 = vadd.f32 %v6864, %v7327
    %v7399 = vadd.f32 %v6865, %v7331
    %v7400 = vadd.f32 %v6866, %v7333
    %v7401 = vadd.f32 %v6867, %v7335
    %v7402 = vadd.f32 %v6868, %v7337
    %v7403 = vadd.f32 %v6869, %v7341
    %v7404 = vadd.f32 %v6870, %v7343
    %v7405 = vadd.f32 %v6871, %v7345
    %v7406 = vadd.f32 %v6872, %v7347
    %v7407 = vadd.f32 %v6873, %v7351
    %v7408 = vadd.f32 %v6874, %v7353
    %v7409 = vadd.f32 %v6875, %v7355
    %v7410 = vadd.f32 %v6876, %v7357
    %v7411 = vadd.f32 %v6877, %v7361
    %v7412 = vadd.f32 %v6878, %v7363
    %v7413 = vadd.f32 %v6879, %v7365
    %v7414 = vadd.f32 %v6880, %v7367
    %v7415 = vadd.f32 %v6881, %v7371
    %v7416 = vadd.f32 %v6882, %v7373
    %v7417 = vadd.f32 %v6883, %v7375
    %v7418 = vadd.f32 %v6884, %v7377
    %v7419 = vld [vmem:[%s9] sm:$0xff]
    %v7420 = vld [vmem:[%s9 + $0x8] sm:$0xff]
    %v7421 = vld [vmem:[%s9 + $0x10] sm:$0xff]
    %v7422 = vld [vmem:[%s9 + $0x18] sm:$0xff]
    %v7423 = vld [vmem:[%s9 + $0x20] sm:$0xff]
    %v7424 = vld [vmem:[%s9 + $0x28] sm:$0xff]
    %v7425 = vld [vmem:[%s9 + $0x30] sm:$0xff]
    %v7426 = vld [vmem:[%s9 + $0x38] sm:$0xff]
    %v7427 = vld [vmem:[%s9 + $0x40] sm:$0xff]
    %v7428 = vld [vmem:[%s9 + $0x48] sm:$0xff]
    %v7429 = vld [vmem:[%s9 + $0x50] sm:$0xff]
    %v7430 = vld [vmem:[%s9 + $0x58] sm:$0xff]
    %v7431 = vld [vmem:[%s9 + $0x60] sm:$0xff]
    %v7432 = vld [vmem:[%s9 + $0x68] sm:$0xff]
    %v7433 = vld [vmem:[%s9 + $0x70] sm:$0xff]
    %v7434 = vld [vmem:[%s9 + $0x78] sm:$0xff]
    %v7435 = vld [vmem:[%s9 + $0x80] sm:$0xff]
    %v7436 = vld [vmem:[%s9 + $0x88] sm:$0xff]
    %v7437 = vld [vmem:[%s9 + $0x90] sm:$0xff]
    %v7438 = vld [vmem:[%s9 + $0x98] sm:$0xff]
    %7440 = vset.pattern.permute.xlu0 0
    %7441 = vperm.xlu0 %7440, %v7419
    %v7442 = vpop.permute.xlu0 %7441
    %7445 = vset.pattern.permute.xlu0 0
    %7446 = vperm.xlu0 %7445, %v7420
    %v7447 = vpop.permute.xlu0 %7446
    %7450 = vset.pattern.permute.xlu0 0
    %7451 = vperm.xlu0 %7450, %v7421
    %v7452 = vpop.permute.xlu0 %7451
    %7455 = vset.pattern.permute.xlu0 0
    %7456 = vperm.xlu0 %7455, %v7422
    %v7457 = vpop.permute.xlu0 %7456
    %7460 = vset.pattern.permute.xlu0 0
    %7461 = vperm.xlu0 %7460, %v7423
    %v7462 = vpop.permute.xlu0 %7461
    %7465 = vset.pattern.permute.xlu0 0
    %7466 = vperm.xlu0 %7465, %v7424
    %v7467 = vpop.permute.xlu0 %7466
    %7470 = vset.pattern.permute.xlu0 0
    %7471 = vperm.xlu0 %7470, %v7425
    %v7472 = vpop.permute.xlu0 %7471
    %7475 = vset.pattern.permute.xlu0 0
    %7476 = vperm.xlu0 %7475, %v7426
    %v7477 = vpop.permute.xlu0 %7476
    %7480 = vset.pattern.permute.xlu0 0
    %7481 = vperm.xlu0 %7480, %v7427
    %v7482 = vpop.permute.xlu0 %7481
    %7485 = vset.pattern.permute.xlu0 0
    %7486 = vperm.xlu0 %7485, %v7428
    %v7487 = vpop.permute.xlu0 %7486
    %7490 = vset.pattern.permute.xlu0 0
    %7491 = vperm.xlu0 %7490, %v7429
    %v7492 = vpop.permute.xlu0 %7491
    %7495 = vset.pattern.permute.xlu0 0
    %7496 = vperm.xlu0 %7495, %v7430
    %v7497 = vpop.permute.xlu0 %7496
    %7500 = vset.pattern.permute.xlu0 0
    %7501 = vperm.xlu0 %7500, %v7431
    %v7502 = vpop.permute.xlu0 %7501
    %7505 = vset.pattern.permute.xlu0 0
    %7506 = vperm.xlu0 %7505, %v7432
    %v7507 = vpop.permute.xlu0 %7506
    %7510 = vset.pattern.permute.xlu0 0
    %7511 = vperm.xlu0 %7510, %v7433
    %v7512 = vpop.permute.xlu0 %7511
    %7515 = vset.pattern.permute.xlu0 0
    %7516 = vperm.xlu0 %7515, %v7434
    %v7517 = vpop.permute.xlu0 %7516
    %7520 = vset.pattern.permute.xlu0 0
    %7521 = vperm.xlu0 %7520, %v7435
    %v7522 = vpop.permute.xlu0 %7521
    %7525 = vset.pattern.permute.xlu0 0
    %7526 = vperm.xlu0 %7525, %v7436
    %v7527 = vpop.permute.xlu0 %7526
    %7530 = vset.pattern.permute.xlu0 0
    %7531 = vperm.xlu0 %7530, %v7437
    %v7532 = vpop.permute.xlu0 %7531
    %7535 = vset.pattern.permute.xlu0 0
    %7536 = vperm.xlu0 %7535, %v7438
    %v7537 = vpop.permute.xlu0 %7536
    %v7539 = vmul.f32 %v7379, %v7442
    %v7540 = vmul.f32 %v7380, %v7442
    %v7541 = vmul.f32 %v7381, %v7447
    %v7542 = vmul.f32 %v7382, %v7447
    %v7543 = vmul.f32 %v7383, %v7452
    %v7544 = vmul.f32 %v7384, %v7452
    %v7545 = vmul.f32 %v7385, %v7457
    %v7546 = vmul.f32 %v7386, %v7457
    %v7547 = vmul.f32 %v7387, %v7462
    %v7548 = vmul.f32 %v7388, %v7462
    %v7549 = vmul.f32 %v7389, %v7467
    %v7550 = vmul.f32 %v7390, %v7467
    %v7551 = vmul.f32 %v7391, %v7472
    %v7552 = vmul.f32 %v7392, %v7472
    %v7553 = vmul.f32 %v7393, %v7477
    %v7554 = vmul.f32 %v7394, %v7477
    %v7555 = vmul.f32 %v7395, %v7482
    %v7556 = vmul.f32 %v7396, %v7482
    %v7557 = vmul.f32 %v7397, %v7487
    %v7558 = vmul.f32 %v7398, %v7487
    %v7559 = vmul.f32 %v7399, %v7492
    %v7560 = vmul.f32 %v7400, %v7492
    %v7561 = vmul.f32 %v7401, %v7497
    %v7562 = vmul.f32 %v7402, %v7497
    %v7563 = vmul.f32 %v7403, %v7502
    %v7564 = vmul.f32 %v7404, %v7502
    %v7565 = vmul.f32 %v7405, %v7507
    %v7566 = vmul.f32 %v7406, %v7507
    %v7567 = vmul.f32 %v7407, %v7512
    %v7568 = vmul.f32 %v7408, %v7512
    %v7569 = vmul.f32 %v7409, %v7517
    %v7570 = vmul.f32 %v7410, %v7517
    %v7571 = vmul.f32 %v7411, %v7522
    %v7572 = vmul.f32 %v7412, %v7522
    %v7573 = vmul.f32 %v7413, %v7527
    %v7574 = vmul.f32 %v7414, %v7527
    %v7575 = vmul.f32 %v7415, %v7532
    %v7576 = vmul.f32 %v7416, %v7532
    %v7577 = vmul.f32 %v7417, %v7537
    %v7578 = vmul.f32 %v7418, %v7537
    %v7579 = vadd.f32 %v7539, %v7541
    %v7580 = vadd.f32 %v7579, %v7543
    %v7581 = vadd.f32 %v7580, %v7545
    %v7582 = vadd.f32 %v7581, %v7547
    %v7583 = vadd.f32 %v7582, %v7549
    %v7584 = vadd.f32 %v7583, %v7551
    %v7585 = vadd.f32 %v7584, %v7553
    %v7586 = vadd.f32 %v7585, %v7555
    %v7587 = vadd.f32 %v7586, %v7557
    %v7588 = vadd.f32 %v7587, %v7559
    %v7589 = vadd.f32 %v7588, %v7561
    %v7590 = vadd.f32 %v7589, %v7563
    %v7591 = vadd.f32 %v7590, %v7565
    %v7592 = vadd.f32 %v7591, %v7567
    %v7593 = vadd.f32 %v7592, %v7569
    %v7594 = vadd.f32 %v7593, %v7571
    %v7595 = vadd.f32 %v7594, %v7573
    %v7596 = vadd.f32 %v7595, %v7575
    %v7597 = vadd.f32 %v7596, %v7577
    %v7598 = vrot.slane %v7597, 4
    %v7599 = vadd.f32 %v7597, %v7598
    %v7600 = vrot.slane %v7599, 2
    %v7601 = vadd.f32 %v7599, %v7600
    %v7602 = vrot.slane %v7601, 1
    %v7603 = vadd.f32 %v7601, %v7602
    %v7604 = vadd.f32 %v7540, %v7542
    %v7605 = vadd.f32 %v7604, %v7544
    %v7606 = vadd.f32 %v7605, %v7546
    %v7607 = vadd.f32 %v7606, %v7548
    %v7608 = vadd.f32 %v7607, %v7550
    %v7609 = vadd.f32 %v7608, %v7552
    %v7610 = vadd.f32 %v7609, %v7554
    %v7611 = vadd.f32 %v7610, %v7556
    %v7612 = vadd.f32 %v7611, %v7558
    %v7613 = vadd.f32 %v7612, %v7560
    %v7614 = vadd.f32 %v7613, %v7562
    %v7615 = vadd.f32 %v7614, %v7564
    %v7616 = vadd.f32 %v7615, %v7566
    %v7617 = vadd.f32 %v7616, %v7568
    %v7618 = vadd.f32 %v7617, %v7570
    %v7619 = vadd.f32 %v7618, %v7572
    %v7620 = vadd.f32 %v7619, %v7574
    %v7621 = vadd.f32 %v7620, %v7576
    %v7622 = vadd.f32 %v7621, %v7578
    %v7623 = vrot.slane %v7622, 4
    %v7624 = vadd.f32 %v7622, %v7623
    %v7625 = vrot.slane %v7624, 2
    %v7626 = vadd.f32 %v7624, %v7625
    %v7627 = vrot.slane %v7626, 1
    %v7628 = vadd.f32 %v7626, %v7627
    %v7629 = vmul.f32 %v7539, %v7379
    %v7630 = vmul.f32 %v7540, %v7380
    %v7631 = vmul.f32 %v7541, %v7381
    %v7632 = vmul.f32 %v7542, %v7382
    %v7633 = vmul.f32 %v7543, %v7383
    %v7634 = vmul.f32 %v7544, %v7384
    %v7635 = vmul.f32 %v7545, %v7385
    %v7636 = vmul.f32 %v7546, %v7386
    %v7637 = vmul.f32 %v7547, %v7387
    %v7638 = vmul.f32 %v7548, %v7388
    %v7639 = vmul.f32 %v7549, %v7389
    %v7640 = vmul.f32 %v7550, %v7390
    %v7641 = vmul.f32 %v7551, %v7391
    %v7642 = vmul.f32 %v7552, %v7392
    %v7643 = vmul.f32 %v7553, %v7393
    %v7644 = vmul.f32 %v7554, %v7394
    %v7645 = vmul.f32 %v7555, %v7395
    %v7646 = vmul.f32 %v7556, %v7396
    %v7647 = vmul.f32 %v7557, %v7397
    %v7648 = vmul.f32 %v7558, %v7398
    %v7649 = vmul.f32 %v7559, %v7399
    %v7650 = vmul.f32 %v7560, %v7400
    %v7651 = vmul.f32 %v7561, %v7401
    %v7652 = vmul.f32 %v7562, %v7402
    %v7653 = vmul.f32 %v7563, %v7403
    %v7654 = vmul.f32 %v7564, %v7404
    %v7655 = vmul.f32 %v7565, %v7405
    %v7656 = vmul.f32 %v7566, %v7406
    %v7657 = vmul.f32 %v7567, %v7407
    %v7658 = vmul.f32 %v7568, %v7408
    %v7659 = vmul.f32 %v7569, %v7409
    %v7660 = vmul.f32 %v7570, %v7410
    %v7661 = vmul.f32 %v7571, %v7411
    %v7662 = vmul.f32 %v7572, %v7412
    %v7663 = vmul.f32 %v7573, %v7413
    %v7664 = vmul.f32 %v7574, %v7414
    %v7665 = vmul.f32 %v7575, %v7415
    %v7666 = vmul.f32 %v7576, %v7416
    %v7667 = vmul.f32 %v7577, %v7417
    %v7668 = vmul.f32 %v7578, %v7418
    %v7669 = vadd.f32 %v7629, %v7631
    %v7670 = vadd.f32 %v7669, %v7633
    %v7671 = vadd.f32 %v7670, %v7635
    %v7672 = vadd.f32 %v7671, %v7637
    %v7673 = vadd.f32 %v7672, %v7639
    %v7674 = vadd.f32 %v7673, %v7641
    %v7675 = vadd.f32 %v7674, %v7643
    %v7676 = vadd.f32 %v7675, %v7645
    %v7677 = vadd.f32 %v7676, %v7647
    %v7678 = vadd.f32 %v7677, %v7649
    %v7679 = vadd.f32 %v7678, %v7651
    %v7680 = vadd.f32 %v7679, %v7653
    %v7681 = vadd.f32 %v7680, %v7655
    %v7682 = vadd.f32 %v7681, %v7657
    %v7683 = vadd.f32 %v7682, %v7659
    %v7684 = vadd.f32 %v7683, %v7661
    %v7685 = vadd.f32 %v7684, %v7663
    %v7686 = vadd.f32 %v7685, %v7665
    %v7687 = vadd.f32 %v7686, %v7667
    %v7688 = vrot.slane %v7687, 4
    %v7689 = vadd.f32 %v7687, %v7688
    %v7690 = vrot.slane %v7689, 2
    %v7691 = vadd.f32 %v7689, %v7690
    %v7692 = vrot.slane %v7691, 1
    %v7693 = vadd.f32 %v7691, %v7692
    %v7694 = vadd.f32 %v7630, %v7632
    %v7695 = vadd.f32 %v7694, %v7634
    %v7696 = vadd.f32 %v7695, %v7636
    %v7697 = vadd.f32 %v7696, %v7638
    %v7698 = vadd.f32 %v7697, %v7640
    %v7699 = vadd.f32 %v7698, %v7642
    %v7700 = vadd.f32 %v7699, %v7644
    %v7701 = vadd.f32 %v7700, %v7646
    %v7702 = vadd.f32 %v7701, %v7648
    %v7703 = vadd.f32 %v7702, %v7650
    %v7704 = vadd.f32 %v7703, %v7652
    %v7705 = vadd.f32 %v7704, %v7654
    %v7706 = vadd.f32 %v7705, %v7656
    %v7707 = vadd.f32 %v7706, %v7658
    %v7708 = vadd.f32 %v7707, %v7660
    %v7709 = vadd.f32 %v7708, %v7662
    %v7710 = vadd.f32 %v7709, %v7664
    %v7711 = vadd.f32 %v7710, %v7666
    %v7712 = vadd.f32 %v7711, %v7668
    %v7713 = vrot.slane %v7712, 4
    %v7714 = vadd.f32 %v7712, %v7713
    %v7715 = vrot.slane %v7714, 2
    %v7716 = vadd.f32 %v7714, %v7715
    %v7717 = vrot.slane %v7716, 1
    %v7718 = vadd.f32 %v7716, %v7717
    %v7719 = vsel %vm4461, %v7603, %v7693
    %v7720 = vsel %vm4461, %v7628, %v7718
    %vm7721 = vcmp.lt.s32.totalorder %v4465, 0
    %v7722 = vsub.s32 0, %v4465
    %v7723 = vsel %vm7721, %v7722, %v4465
    %v7724 = vshrl.u32 %v7723, 5
    %v7725 = vand.u32 %v7723, 31
    %v7726 = vsub.s32 0, %v7725
    %v7727 = vsel %vm7721, %v7726, %v7725
    %vm7728 = vcmp.lt.s32.totalorder %v4466, 0
    %v7729 = vsub.s32 0, %v4466
    %v7730 = vsel %vm7728, %v7729, %v4466
    %v7731 = vshrl.u32 %v7730, 5
    %v7732 = vand.u32 %v7730, 31
    %v7733 = vsub.s32 0, %v7732
    %v7734 = vsel %vm7728, %v7733, %v7732
    %vm7735 = vcmp.lt.s32.totalorder %v4467, 0
    %v7736 = vsub.s32 0, %v4467
    %v7737 = vsel %vm7735, %v7736, %v4467
    %v7738 = vshrl.u32 %v7737, 5
    %v7739 = vand.u32 %v7737, 31
    %v7740 = vsub.s32 0, %v7739
    %v7741 = vsel %vm7735, %v7740, %v7739
    %vm7742 = vcmp.lt.s32.totalorder %v4468, 0
    %v7743 = vsub.s32 0, %v4468
    %v7744 = vsel %vm7742, %v7743, %v4468
    %v7745 = vshrl.u32 %v7744, 5
    %v7746 = vand.u32 %v7744, 31
    %v7747 = vsub.s32 0, %v7746
    %v7748 = vsel %vm7742, %v7747, %v7746
    %vm7749 = vcmp.lt.s32.totalorder %v4469, 0
    %v7750 = vsub.s32 0, %v4469
    %v7751 = vsel %vm7749, %v7750, %v4469
    %v7752 = vshrl.u32 %v7751, 5
    %v7753 = vand.u32 %v7751, 31
    %v7754 = vsub.s32 0, %v7753
    %v7755 = vsel %vm7749, %v7754, %v7753
    %vm7756 = vcmp.lt.s32.totalorder %v4470, 0
    %v7757 = vsub.s32 0, %v4470
    %v7758 = vsel %vm7756, %v7757, %v4470
    %v7759 = vshrl.u32 %v7758, 5
    %v7760 = vand.u32 %v7758, 31
    %v7761 = vsub.s32 0, %v7760
    %v7762 = vsel %vm7756, %v7761, %v7760
    %vm7763 = vcmp.lt.s32.totalorder %v4471, 0
    %v7764 = vsub.s32 0, %v4471
    %v7765 = vsel %vm7763, %v7764, %v4471
    %v7766 = vshrl.u32 %v7765, 5
    %v7767 = vand.u32 %v7765, 31
    %v7768 = vsub.s32 0, %v7767
    %v7769 = vsel %vm7763, %v7768, %v7767
    %vm7770 = vcmp.lt.s32.totalorder %v4472, 0
    %v7771 = vsub.s32 0, %v4472
    %v7772 = vsel %vm7770, %v7771, %v4472
    %v7773 = vshrl.u32 %v7772, 5
    %v7774 = vand.u32 %v7772, 31
    %v7775 = vsub.s32 0, %v7774
    %v7776 = vsel %vm7770, %v7775, %v7774
    %vm7777 = vcmp.lt.s32.totalorder %v4473, 0
    %v7778 = vsub.s32 0, %v4473
    %v7779 = vsel %vm7777, %v7778, %v4473
    %v7780 = vshrl.u32 %v7779, 5
    %v7781 = vand.u32 %v7779, 31
    %v7782 = vsub.s32 0, %v7781
    %v7783 = vsel %vm7777, %v7782, %v7781
    %vm7784 = vcmp.lt.s32.totalorder %v4474, 0
    %v7785 = vsub.s32 0, %v4474
    %v7786 = vsel %vm7784, %v7785, %v4474
    %v7787 = vshrl.u32 %v7786, 5
    %v7788 = vand.u32 %v7786, 31
    %v7789 = vsub.s32 0, %v7788
    %v7790 = vsel %vm7784, %v7789, %v7788
    %vm7791 = vcmp.lt.s32.totalorder %v4475, 0
    %v7792 = vsub.s32 0, %v4475
    %v7793 = vsel %vm7791, %v7792, %v4475
    %v7794 = vshrl.u32 %v7793, 5
    %v7795 = vand.u32 %v7793, 31
    %v7796 = vsub.s32 0, %v7795
    %v7797 = vsel %vm7791, %v7796, %v7795
    %vm7798 = vcmp.lt.s32.totalorder %v4476, 0
    %v7799 = vsub.s32 0, %v4476
    %v7800 = vsel %vm7798, %v7799, %v4476
    %v7801 = vshrl.u32 %v7800, 5
    %v7802 = vand.u32 %v7800, 31
    %v7803 = vsub.s32 0, %v7802
    %v7804 = vsel %vm7798, %v7803, %v7802
    %vm7805 = vcmp.lt.s32.totalorder %v4477, 0
    %v7806 = vsub.s32 0, %v4477
    %v7807 = vsel %vm7805, %v7806, %v4477
    %v7808 = vshrl.u32 %v7807, 5
    %v7809 = vand.u32 %v7807, 31
    %v7810 = vsub.s32 0, %v7809
    %v7811 = vsel %vm7805, %v7810, %v7809
    %vm7812 = vcmp.lt.s32.totalorder %v4478, 0
    %v7813 = vsub.s32 0, %v4478
    %v7814 = vsel %vm7812, %v7813, %v4478
    %v7815 = vshrl.u32 %v7814, 5
    %v7816 = vand.u32 %v7814, 31
    %v7817 = vsub.s32 0, %v7816
    %v7818 = vsel %vm7812, %v7817, %v7816
    %vm7819 = vcmp.lt.s32.totalorder %v4479, 0
    %v7820 = vsub.s32 0, %v4479
    %v7821 = vsel %vm7819, %v7820, %v4479
    %v7822 = vshrl.u32 %v7821, 5
    %v7823 = vand.u32 %v7821, 31
    %v7824 = vsub.s32 0, %v7823
    %v7825 = vsel %vm7819, %v7824, %v7823
    %vm7826 = vcmp.lt.s32.totalorder %v4480, 0
    %v7827 = vsub.s32 0, %v4480
    %v7828 = vsel %vm7826, %v7827, %v4480
    %v7829 = vshrl.u32 %v7828, 5
    %v7830 = vand.u32 %v7828, 31
    %v7831 = vsub.s32 0, %v7830
    %v7832 = vsel %vm7826, %v7831, %v7830
    %vm7833 = vcmp.lt.s32.totalorder %v4481, 0
    %v7834 = vsub.s32 0, %v4481
    %v7835 = vsel %vm7833, %v7834, %v4481
    %v7836 = vshrl.u32 %v7835, 5
    %v7837 = vand.u32 %v7835, 31
    %v7838 = vsub.s32 0, %v7837
    %v7839 = vsel %vm7833, %v7838, %v7837
    %vm7840 = vcmp.lt.s32.totalorder %v4482, 0
    %v7841 = vsub.s32 0, %v4482
    %v7842 = vsel %vm7840, %v7841, %v4482
    %v7843 = vshrl.u32 %v7842, 5
    %v7844 = vand.u32 %v7842, 31
    %v7845 = vsub.s32 0, %v7844
    %v7846 = vsel %vm7840, %v7845, %v7844
    %vm7847 = vcmp.lt.s32.totalorder %v4483, 0
    %v7848 = vsub.s32 0, %v4483
    %v7849 = vsel %vm7847, %v7848, %v4483
    %v7850 = vshrl.u32 %v7849, 5
    %v7851 = vand.u32 %v7849, 31
    %v7852 = vsub.s32 0, %v7851
    %v7853 = vsel %vm7847, %v7852, %v7851
    %vm7854 = vcmp.lt.s32.totalorder %v4484, 0
    %v7855 = vsub.s32 0, %v4484
    %v7856 = vsel %vm7854, %v7855, %v4484
    %v7857 = vshrl.u32 %v7856, 5
    %v7858 = vand.u32 %v7856, 31
    %v7859 = vsub.s32 0, %v7858
    %v7860 = vsel %vm7854, %v7859, %v7858
    %vm7861 = vcmp.lt.s32.totalorder %v4485, 0
    %v7862 = vsub.s32 0, %v4485
    %v7863 = vsel %vm7861, %v7862, %v4485
    %v7864 = vshrl.u32 %v7863, 5
    %v7865 = vand.u32 %v7863, 31
    %v7866 = vsub.s32 0, %v7865
    %v7867 = vsel %vm7861, %v7866, %v7865
    %vm7868 = vcmp.lt.s32.totalorder %v4486, 0
    %v7869 = vsub.s32 0, %v4486
    %v7870 = vsel %vm7868, %v7869, %v4486
    %v7871 = vshrl.u32 %v7870, 5
    %v7872 = vand.u32 %v7870, 31
    %v7873 = vsub.s32 0, %v7872
    %v7874 = vsel %vm7868, %v7873, %v7872
    %vm7875 = vcmp.lt.s32.totalorder %v4487, 0
    %v7876 = vsub.s32 0, %v4487
    %v7877 = vsel %vm7875, %v7876, %v4487
    %v7878 = vshrl.u32 %v7877, 5
    %v7879 = vand.u32 %v7877, 31
    %v7880 = vsub.s32 0, %v7879
    %v7881 = vsel %vm7875, %v7880, %v7879
    %vm7882 = vcmp.lt.s32.totalorder %v4488, 0
    %v7883 = vsub.s32 0, %v4488
    %v7884 = vsel %vm7882, %v7883, %v4488
    %v7885 = vshrl.u32 %v7884, 5
    %v7886 = vand.u32 %v7884, 31
    %v7887 = vsub.s32 0, %v7886
    %v7888 = vsel %vm7882, %v7887, %v7886
    %vm7889 = vcmp.lt.s32.totalorder %v4489, 0
    %v7890 = vsub.s32 0, %v4489
    %v7891 = vsel %vm7889, %v7890, %v4489
    %v7892 = vshrl.u32 %v7891, 5
    %v7893 = vand.u32 %v7891, 31
    %v7894 = vsub.s32 0, %v7893
    %v7895 = vsel %vm7889, %v7894, %v7893
    %vm7896 = vcmp.lt.s32.totalorder %v4490, 0
    %v7897 = vsub.s32 0, %v4490
    %v7898 = vsel %vm7896, %v7897, %v4490
    %v7899 = vshrl.u32 %v7898, 5
    %v7900 = vand.u32 %v7898, 31
    %v7901 = vsub.s32 0, %v7900
    %v7902 = vsel %vm7896, %v7901, %v7900
    %vm7903 = vcmp.lt.s32.totalorder %v4491, 0
    %v7904 = vsub.s32 0, %v4491
    %v7905 = vsel %vm7903, %v7904, %v4491
    %v7906 = vshrl.u32 %v7905, 5
    %v7907 = vand.u32 %v7905, 31
    %v7908 = vsub.s32 0, %v7907
    %v7909 = vsel %vm7903, %v7908, %v7907
    %vm7910 = vcmp.lt.s32.totalorder %v4492, 0
    %v7911 = vsub.s32 0, %v4492
    %v7912 = vsel %vm7910, %v7911, %v4492
    %v7913 = vshrl.u32 %v7912, 5
    %v7914 = vand.u32 %v7912, 31
    %v7915 = vsub.s32 0, %v7914
    %v7916 = vsel %vm7910, %v7915, %v7914
    %vm7917 = vcmp.lt.s32.totalorder %v4493, 0
    %v7918 = vsub.s32 0, %v4493
    %v7919 = vsel %vm7917, %v7918, %v4493
    %v7920 = vshrl.u32 %v7919, 5
    %v7921 = vand.u32 %v7919, 31
    %v7922 = vsub.s32 0, %v7921
    %v7923 = vsel %vm7917, %v7922, %v7921
    %vm7924 = vcmp.lt.s32.totalorder %v4494, 0
    %v7925 = vsub.s32 0, %v4494
    %v7926 = vsel %vm7924, %v7925, %v4494
    %v7927 = vshrl.u32 %v7926, 5
    %v7928 = vand.u32 %v7926, 31
    %v7929 = vsub.s32 0, %v7928
    %v7930 = vsel %vm7924, %v7929, %v7928
    %vm7931 = vcmp.lt.s32.totalorder %v4495, 0
    %v7932 = vsub.s32 0, %v4495
    %v7933 = vsel %vm7931, %v7932, %v4495
    %v7934 = vshrl.u32 %v7933, 5
    %v7935 = vand.u32 %v7933, 31
    %v7936 = vsub.s32 0, %v7935
    %v7937 = vsel %vm7931, %v7936, %v7935
    %vm7938 = vcmp.lt.s32.totalorder %v4496, 0
    %v7939 = vsub.s32 0, %v4496
    %v7940 = vsel %vm7938, %v7939, %v4496
    %v7941 = vshrl.u32 %v7940, 5
    %v7942 = vand.u32 %v7940, 31
    %v7943 = vsub.s32 0, %v7942
    %v7944 = vsel %vm7938, %v7943, %v7942
    %vm7945 = vcmp.ne.s32.totalorder %v7727, 0
    %vm7946 = vcmp.ne.s32.totalorder %v7734, 0
    %vm7947 = vcmp.ne.s32.totalorder %v7741, 0
    %vm7948 = vcmp.ne.s32.totalorder %v7748, 0
    %vm7949 = vcmp.ne.s32.totalorder %v7755, 0
    %vm7950 = vcmp.ne.s32.totalorder %v7762, 0
    %vm7951 = vcmp.ne.s32.totalorder %v7769, 0
    %vm7952 = vcmp.ne.s32.totalorder %v7776, 0
    %vm7953 = vcmp.ne.s32.totalorder %v7783, 0
    %vm7954 = vcmp.ne.s32.totalorder %v7790, 0
    %vm7955 = vcmp.ne.s32.totalorder %v7797, 0
    %vm7956 = vcmp.ne.s32.totalorder %v7804, 0
    %vm7957 = vcmp.ne.s32.totalorder %v7811, 0
    %vm7958 = vcmp.ne.s32.totalorder %v7818, 0
    %vm7959 = vcmp.ne.s32.totalorder %v7825, 0
    %vm7960 = vcmp.ne.s32.totalorder %v7832, 0
    %vm7961 = vcmp.ne.s32.totalorder %v7839, 0
    %vm7962 = vcmp.ne.s32.totalorder %v7846, 0
    %vm7963 = vcmp.ne.s32.totalorder %v7853, 0
    %vm7964 = vcmp.ne.s32.totalorder %v7860, 0
    %vm7965 = vcmp.ne.s32.totalorder %v7867, 0
    %vm7966 = vcmp.ne.s32.totalorder %v7874, 0
    %vm7967 = vcmp.ne.s32.totalorder %v7881, 0
    %vm7968 = vcmp.ne.s32.totalorder %v7888, 0
    %vm7969 = vcmp.ne.s32.totalorder %v7895, 0
    %vm7970 = vcmp.ne.s32.totalorder %v7902, 0
    %vm7971 = vcmp.ne.s32.totalorder %v7909, 0
    %vm7972 = vcmp.ne.s32.totalorder %v7916, 0
    %vm7973 = vcmp.ne.s32.totalorder %v7923, 0
    %vm7974 = vcmp.ne.s32.totalorder %v7930, 0
    %vm7975 = vcmp.ne.s32.totalorder %v7937, 0
    %vm7976 = vcmp.ne.s32.totalorder %v7944, 0
    %vm7977 = vcmp.lt.s32.totalorder %v7727, 0
    %vm7978 = vcmp.lt.s32.totalorder %v7734, 0
    %vm7979 = vcmp.lt.s32.totalorder %v7741, 0
    %vm7980 = vcmp.lt.s32.totalorder %v7748, 0
    %vm7981 = vcmp.lt.s32.totalorder %v7755, 0
    %vm7982 = vcmp.lt.s32.totalorder %v7762, 0
    %vm7983 = vcmp.lt.s32.totalorder %v7769, 0
    %vm7984 = vcmp.lt.s32.totalorder %v7776, 0
    %vm7985 = vcmp.lt.s32.totalorder %v7783, 0
    %vm7986 = vcmp.lt.s32.totalorder %v7790, 0
    %vm7987 = vcmp.lt.s32.totalorder %v7797, 0
    %vm7988 = vcmp.lt.s32.totalorder %v7804, 0
    %vm7989 = vcmp.lt.s32.totalorder %v7811, 0
    %vm7990 = vcmp.lt.s32.totalorder %v7818, 0
    %vm7991 = vcmp.lt.s32.totalorder %v7825, 0
    %vm7992 = vcmp.lt.s32.totalorder %v7832, 0
    %vm7993 = vcmp.lt.s32.totalorder %v7839, 0
    %vm7994 = vcmp.lt.s32.totalorder %v7846, 0
    %vm7995 = vcmp.lt.s32.totalorder %v7853, 0
    %vm7996 = vcmp.lt.s32.totalorder %v7860, 0
    %vm7997 = vcmp.lt.s32.totalorder %v7867, 0
    %vm7998 = vcmp.lt.s32.totalorder %v7874, 0
    %vm7999 = vcmp.lt.s32.totalorder %v7881, 0
    %vm8000 = vcmp.lt.s32.totalorder %v7888, 0
    %vm8001 = vcmp.lt.s32.totalorder %v7895, 0
    %vm8002 = vcmp.lt.s32.totalorder %v7902, 0
    %vm8003 = vcmp.lt.s32.totalorder %v7909, 0
    %vm8004 = vcmp.lt.s32.totalorder %v7916, 0
    %vm8005 = vcmp.lt.s32.totalorder %v7923, 0
    %vm8006 = vcmp.lt.s32.totalorder %v7930, 0
    %vm8007 = vcmp.lt.s32.totalorder %v7937, 0
    %vm8008 = vcmp.lt.s32.totalorder %v7944, 0
    %vm8009 = vmand %vm7977, %vm7945
    %vm8010 = vmand %vm7978, %vm7946
    %vm8011 = vmand %vm7979, %vm7947
    %vm8012 = vmand %vm7980, %vm7948
    %vm8013 = vmand %vm7981, %vm7949
    %vm8014 = vmand %vm7982, %vm7950
    %vm8015 = vmand %vm7983, %vm7951
    %vm8016 = vmand %vm7984, %vm7952
    %vm8017 = vmand %vm7985, %vm7953
    %vm8018 = vmand %vm7986, %vm7954
    %vm8019 = vmand %vm7987, %vm7955
    %vm8020 = vmand %vm7988, %vm7956
    %vm8021 = vmand %vm7989, %vm7957
    %vm8022 = vmand %vm7990, %vm7958
    %vm8023 = vmand %vm7991, %vm7959
    %vm8024 = vmand %vm7992, %vm7960
    %vm8025 = vmand %vm7993, %vm7961
    %vm8026 = vmand %vm7994, %vm7962
    %vm8027 = vmand %vm7995, %vm7963
    %vm8028 = vmand %vm7996, %vm7964
    %vm8029 = vmand %vm7997, %vm7965
    %vm8030 = vmand %vm7998, %vm7966
    %vm8031 = vmand %vm7999, %vm7967
    %vm8032 = vmand %vm8000, %vm7968
    %vm8033 = vmand %vm8001, %vm7969
    %vm8034 = vmand %vm8002, %vm7970
    %vm8035 = vmand %vm8003, %vm7971
    %vm8036 = vmand %vm8004, %vm7972
    %vm8037 = vmand %vm8005, %vm7973
    %vm8038 = vmand %vm8006, %vm7974
    %vm8039 = vmand %vm8007, %vm7975
    %vm8040 = vmand %vm8008, %vm7976
    %v8041 = vadd.s32 %v7727, 32
    %v8042 = vadd.s32 %v7734, 32
    %v8043 = vadd.s32 %v7741, 32
    %v8044 = vadd.s32 %v7748, 32
    %v8045 = vadd.s32 %v7755, 32
    %v8046 = vadd.s32 %v7762, 32
    %v8047 = vadd.s32 %v7769, 32
    %v8048 = vadd.s32 %v7776, 32
    %v8049 = vadd.s32 %v7783, 32
    %v8050 = vadd.s32 %v7790, 32
    %v8051 = vadd.s32 %v7797, 32
    %v8052 = vadd.s32 %v7804, 32
    %v8053 = vadd.s32 %v7811, 32
    %v8054 = vadd.s32 %v7818, 32
    %v8055 = vadd.s32 %v7825, 32
    %v8056 = vadd.s32 %v7832, 32
    %v8057 = vadd.s32 %v7839, 32
    %v8058 = vadd.s32 %v7846, 32
    %v8059 = vadd.s32 %v7853, 32
    %v8060 = vadd.s32 %v7860, 32
    %v8061 = vadd.s32 %v7867, 32
    %v8062 = vadd.s32 %v7874, 32
    %v8063 = vadd.s32 %v7881, 32
    %v8064 = vadd.s32 %v7888, 32
    %v8065 = vadd.s32 %v7895, 32
    %v8066 = vadd.s32 %v7902, 32
    %v8067 = vadd.s32 %v7909, 32
    %v8068 = vadd.s32 %v7916, 32
    %v8069 = vadd.s32 %v7923, 32
    %v8070 = vadd.s32 %v7930, 32
    %v8071 = vadd.s32 %v7937, 32
    %v8072 = vadd.s32 %v7944, 32
    %v8073 = vsel %vm8009, %v8041, %v7727
    %v8074 = vsel %vm8010, %v8042, %v7734
    %v8075 = vsel %vm8011, %v8043, %v7741
    %v8076 = vsel %vm8012, %v8044, %v7748
    %v8077 = vsel %vm8013, %v8045, %v7755
    %v8078 = vsel %vm8014, %v8046, %v7762
    %v8079 = vsel %vm8015, %v8047, %v7769
    %v8080 = vsel %vm8016, %v8048, %v7776
    %v8081 = vsel %vm8017, %v8049, %v7783
    %v8082 = vsel %vm8018, %v8050, %v7790
    %v8083 = vsel %vm8019, %v8051, %v7797
    %v8084 = vsel %vm8020, %v8052, %v7804
    %v8085 = vsel %vm8021, %v8053, %v7811
    %v8086 = vsel %vm8022, %v8054, %v7818
    %v8087 = vsel %vm8023, %v8055, %v7825
    %v8088 = vsel %vm8024, %v8056, %v7832
    %v8089 = vsel %vm8025, %v8057, %v7839
    %v8090 = vsel %vm8026, %v8058, %v7846
    %v8091 = vsel %vm8027, %v8059, %v7853
    %v8092 = vsel %vm8028, %v8060, %v7860
    %v8093 = vsel %vm8029, %v8061, %v7867
    %v8094 = vsel %vm8030, %v8062, %v7874
    %v8095 = vsel %vm8031, %v8063, %v7881
    %v8096 = vsel %vm8032, %v8064, %v7888
    %v8097 = vsel %vm8033, %v8065, %v7895
    %v8098 = vsel %vm8034, %v8066, %v7902
    %v8099 = vsel %vm8035, %v8067, %v7909
    %v8100 = vsel %vm8036, %v8068, %v7916
    %v8101 = vsel %vm8037, %v8069, %v7923
    %v8102 = vsel %vm8038, %v8070, %v7930
    %v8103 = vsel %vm8039, %v8071, %v7937
    %v8104 = vsel %vm8040, %v8072, %v7944
    %vm8105 = vcmp.lt.s32.totalorder %v4882, 0
    %v8106 = vsub.s32 0, %v4882
    %v8107 = vsel %vm8105, %v8106, %v4882
    %v8108 = vshrl.u32 %v8107, 5
    %v8109 = vand.u32 %v8107, 31
    %v8110 = vsub.s32 0, %v8109
    %v8111 = vsel %vm8105, %v8110, %v8109
    %vm8112 = vcmp.lt.s32.totalorder %v4883, 0
    %v8113 = vsub.s32 0, %v4883
    %v8114 = vsel %vm8112, %v8113, %v4883
    %v8115 = vshrl.u32 %v8114, 5
    %v8116 = vand.u32 %v8114, 31
    %v8117 = vsub.s32 0, %v8116
    %v8118 = vsel %vm8112, %v8117, %v8116
    %vm8119 = vcmp.ne.s32.totalorder %v8111, 0
    %vm8120 = vcmp.ne.s32.totalorder %v8118, 0
    %vm8121 = vcmp.lt.s32.totalorder %v8111, 0
    %vm8122 = vcmp.lt.s32.totalorder %v8118, 0
    %vm8123 = vmand %vm8121, %vm8119
    %vm8124 = vmand %vm8122, %vm8120
    %v8125 = vadd.s32 %v8111, 32
    %v8126 = vadd.s32 %v8118, 32
    %v8127 = vsel %vm8123, %v8125, %v8111
    %v8128 = vsel %vm8124, %v8126, %v8118
    %vm8129 = vcmp.eq.s32.totalorder %v8073, %v8127
    %vm8130 = vcmp.eq.s32.totalorder %v8073, %v8128
    %vm8131 = vcmp.eq.s32.totalorder %v8074, %v8127
    %vm8132 = vcmp.eq.s32.totalorder %v8074, %v8128
    %vm8133 = vcmp.eq.s32.totalorder %v8075, %v8127
    %vm8134 = vcmp.eq.s32.totalorder %v8075, %v8128
    %vm8135 = vcmp.eq.s32.totalorder %v8076, %v8127
    %vm8136 = vcmp.eq.s32.totalorder %v8076, %v8128
    %vm8137 = vcmp.eq.s32.totalorder %v8077, %v8127
    %vm8138 = vcmp.eq.s32.totalorder %v8077, %v8128
    %vm8139 = vcmp.eq.s32.totalorder %v8078, %v8127
    %vm8140 = vcmp.eq.s32.totalorder %v8078, %v8128
    %vm8141 = vcmp.eq.s32.totalorder %v8079, %v8127
    %vm8142 = vcmp.eq.s32.totalorder %v8079, %v8128
    %vm8143 = vcmp.eq.s32.totalorder %v8080, %v8127
    %vm8144 = vcmp.eq.s32.totalorder %v8080, %v8128
    %vm8145 = vcmp.eq.s32.totalorder %v8081, %v8127
    %vm8146 = vcmp.eq.s32.totalorder %v8081, %v8128
    %vm8147 = vcmp.eq.s32.totalorder %v8082, %v8127
    %vm8148 = vcmp.eq.s32.totalorder %v8082, %v8128
    %vm8149 = vcmp.eq.s32.totalorder %v8083, %v8127
    %vm8150 = vcmp.eq.s32.totalorder %v8083, %v8128
    %vm8151 = vcmp.eq.s32.totalorder %v8084, %v8127
    %vm8152 = vcmp.eq.s32.totalorder %v8084, %v8128
    %vm8153 = vcmp.eq.s32.totalorder %v8085, %v8127
    %vm8154 = vcmp.eq.s32.totalorder %v8085, %v8128
    %vm8155 = vcmp.eq.s32.totalorder %v8086, %v8127
    %vm8156 = vcmp.eq.s32.totalorder %v8086, %v8128
    %vm8157 = vcmp.eq.s32.totalorder %v8087, %v8127
    %vm8158 = vcmp.eq.s32.totalorder %v8087, %v8128
    %vm8159 = vcmp.eq.s32.totalorder %v8088, %v8127
    %vm8160 = vcmp.eq.s32.totalorder %v8088, %v8128
    %vm8161 = vcmp.eq.s32.totalorder %v8089, %v8127
    %vm8162 = vcmp.eq.s32.totalorder %v8089, %v8128
    %vm8163 = vcmp.eq.s32.totalorder %v8090, %v8127
    %vm8164 = vcmp.eq.s32.totalorder %v8090, %v8128
    %vm8165 = vcmp.eq.s32.totalorder %v8091, %v8127
    %vm8166 = vcmp.eq.s32.totalorder %v8091, %v8128
    %vm8167 = vcmp.eq.s32.totalorder %v8092, %v8127
    %vm8168 = vcmp.eq.s32.totalorder %v8092, %v8128
    %vm8169 = vcmp.eq.s32.totalorder %v8093, %v8127
    %vm8170 = vcmp.eq.s32.totalorder %v8093, %v8128
    %vm8171 = vcmp.eq.s32.totalorder %v8094, %v8127
    %vm8172 = vcmp.eq.s32.totalorder %v8094, %v8128
    %vm8173 = vcmp.eq.s32.totalorder %v8095, %v8127
    %vm8174 = vcmp.eq.s32.totalorder %v8095, %v8128
    %vm8175 = vcmp.eq.s32.totalorder %v8096, %v8127
    %vm8176 = vcmp.eq.s32.totalorder %v8096, %v8128
    %vm8177 = vcmp.eq.s32.totalorder %v8097, %v8127
    %vm8178 = vcmp.eq.s32.totalorder %v8097, %v8128
    %vm8179 = vcmp.eq.s32.totalorder %v8098, %v8127
    %vm8180 = vcmp.eq.s32.totalorder %v8098, %v8128
    %vm8181 = vcmp.eq.s32.totalorder %v8099, %v8127
    %vm8182 = vcmp.eq.s32.totalorder %v8099, %v8128
    %vm8183 = vcmp.eq.s32.totalorder %v8100, %v8127
    %vm8184 = vcmp.eq.s32.totalorder %v8100, %v8128
    %vm8185 = vcmp.eq.s32.totalorder %v8101, %v8127
    %vm8186 = vcmp.eq.s32.totalorder %v8101, %v8128
    %vm8187 = vcmp.eq.s32.totalorder %v8102, %v8127
    %vm8188 = vcmp.eq.s32.totalorder %v8102, %v8128
    %vm8189 = vcmp.eq.s32.totalorder %v8103, %v8127
    %vm8190 = vcmp.eq.s32.totalorder %v8103, %v8128
    %vm8191 = vcmp.eq.s32.totalorder %v8104, %v8127
    %vm8192 = vcmp.eq.s32.totalorder %v8104, %v8128
    %v8193 = vsel %vm8129, 1, 0
    %v8194 = vsel %vm8130, 1, 0
    %v8195 = vsel %vm8131, 1, 0
    %v8196 = vsel %vm8132, 1, 0
    %v8197 = vsel %vm8133, 1, 0
    %v8198 = vsel %vm8134, 1, 0
    %v8199 = vsel %vm8135, 1, 0
    %v8200 = vsel %vm8136, 1, 0
    %v8201 = vsel %vm8137, 1, 0
    %v8202 = vsel %vm8138, 1, 0
    %v8203 = vsel %vm8139, 1, 0
    %v8204 = vsel %vm8140, 1, 0
    %v8205 = vsel %vm8141, 1, 0
    %v8206 = vsel %vm8142, 1, 0
    %v8207 = vsel %vm8143, 1, 0
    %v8208 = vsel %vm8144, 1, 0
    %v8209 = vsel %vm8145, 1, 0
    %v8210 = vsel %vm8146, 1, 0
    %v8211 = vsel %vm8147, 1, 0
    %v8212 = vsel %vm8148, 1, 0
    %v8213 = vsel %vm8149, 1, 0
    %v8214 = vsel %vm8150, 1, 0
    %v8215 = vsel %vm8151, 1, 0
    %v8216 = vsel %vm8152, 1, 0
    %v8217 = vsel %vm8153, 1, 0
    %v8218 = vsel %vm8154, 1, 0
    %v8219 = vsel %vm8155, 1, 0
    %v8220 = vsel %vm8156, 1, 0
    %v8221 = vsel %vm8157, 1, 0
    %v8222 = vsel %vm8158, 1, 0
    %v8223 = vsel %vm8159, 1, 0
    %v8224 = vsel %vm8160, 1, 0
    %v8225 = vsel %vm8161, 1, 0
    %v8226 = vsel %vm8162, 1, 0
    %v8227 = vsel %vm8163, 1, 0
    %v8228 = vsel %vm8164, 1, 0
    %v8229 = vsel %vm8165, 1, 0
    %v8230 = vsel %vm8166, 1, 0
    %v8231 = vsel %vm8167, 1, 0
    %v8232 = vsel %vm8168, 1, 0
    %v8233 = vsel %vm8169, 1, 0
    %v8234 = vsel %vm8170, 1, 0
    %v8235 = vsel %vm8171, 1, 0
    %v8236 = vsel %vm8172, 1, 0
    %v8237 = vsel %vm8173, 1, 0
    %v8238 = vsel %vm8174, 1, 0
    %v8239 = vsel %vm8175, 1, 0
    %v8240 = vsel %vm8176, 1, 0
    %v8241 = vsel %vm8177, 1, 0
    %v8242 = vsel %vm8178, 1, 0
    %v8243 = vsel %vm8179, 1, 0
    %v8244 = vsel %vm8180, 1, 0
    %v8245 = vsel %vm8181, 1, 0
    %v8246 = vsel %vm8182, 1, 0
    %v8247 = vsel %vm8183, 1, 0
    %v8248 = vsel %vm8184, 1, 0
    %v8249 = vsel %vm8185, 1, 0
    %v8250 = vsel %vm8186, 1, 0
    %v8251 = vsel %vm8187, 1, 0
    %v8252 = vsel %vm8188, 1, 0
    %v8253 = vsel %vm8189, 1, 0
    %v8254 = vsel %vm8190, 1, 0
    %v8255 = vsel %vm8191, 1, 0
    %v8256 = vsel %vm8192, 1, 0
    %v8257 = vcvt.s32.f32 %v8193
    %v8258 = vcvt.s32.f32 %v8194
    %v8259 = vcvt.s32.f32 %v8195
    %v8260 = vcvt.s32.f32 %v8196
    %v8261 = vcvt.s32.f32 %v8197
    %v8262 = vcvt.s32.f32 %v8198
    %v8263 = vcvt.s32.f32 %v8199
    %v8264 = vcvt.s32.f32 %v8200
    %v8265 = vcvt.s32.f32 %v8201
    %v8266 = vcvt.s32.f32 %v8202
    %v8267 = vcvt.s32.f32 %v8203
    %v8268 = vcvt.s32.f32 %v8204
    %v8269 = vcvt.s32.f32 %v8205
    %v8270 = vcvt.s32.f32 %v8206
    %v8271 = vcvt.s32.f32 %v8207
    %v8272 = vcvt.s32.f32 %v8208
    %v8273 = vcvt.s32.f32 %v8209
    %v8274 = vcvt.s32.f32 %v8210
    %v8275 = vcvt.s32.f32 %v8211
    %v8276 = vcvt.s32.f32 %v8212
    %v8277 = vcvt.s32.f32 %v8213
    %v8278 = vcvt.s32.f32 %v8214
    %v8279 = vcvt.s32.f32 %v8215
    %v8280 = vcvt.s32.f32 %v8216
    %v8281 = vcvt.s32.f32 %v8217
    %v8282 = vcvt.s32.f32 %v8218
    %v8283 = vcvt.s32.f32 %v8219
    %v8284 = vcvt.s32.f32 %v8220
    %v8285 = vcvt.s32.f32 %v8221
    %v8286 = vcvt.s32.f32 %v8222
    %v8287 = vcvt.s32.f32 %v8223
    %v8288 = vcvt.s32.f32 %v8224
    %v8289 = vcvt.s32.f32 %v8225
    %v8290 = vcvt.s32.f32 %v8226
    %v8291 = vcvt.s32.f32 %v8227
    %v8292 = vcvt.s32.f32 %v8228
    %v8293 = vcvt.s32.f32 %v8229
    %v8294 = vcvt.s32.f32 %v8230
    %v8295 = vcvt.s32.f32 %v8231
    %v8296 = vcvt.s32.f32 %v8232
    %v8297 = vcvt.s32.f32 %v8233
    %v8298 = vcvt.s32.f32 %v8234
    %v8299 = vcvt.s32.f32 %v8235
    %v8300 = vcvt.s32.f32 %v8236
    %v8301 = vcvt.s32.f32 %v8237
    %v8302 = vcvt.s32.f32 %v8238
    %v8303 = vcvt.s32.f32 %v8239
    %v8304 = vcvt.s32.f32 %v8240
    %v8305 = vcvt.s32.f32 %v8241
    %v8306 = vcvt.s32.f32 %v8242
    %v8307 = vcvt.s32.f32 %v8243
    %v8308 = vcvt.s32.f32 %v8244
    %v8309 = vcvt.s32.f32 %v8245
    %v8310 = vcvt.s32.f32 %v8246
    %v8311 = vcvt.s32.f32 %v8247
    %v8312 = vcvt.s32.f32 %v8248
    %v8313 = vcvt.s32.f32 %v8249
    %v8314 = vcvt.s32.f32 %v8250
    %v8315 = vcvt.s32.f32 %v8251
    %v8316 = vcvt.s32.f32 %v8252
    %v8317 = vcvt.s32.f32 %v8253
    %v8318 = vcvt.s32.f32 %v8254
    %v8319 = vcvt.s32.f32 %v8255
    %v8320 = vcvt.s32.f32 %v8256
    %8321 = vmatprep.subr.mxu0 %v8258
    %8322 = vmatpush1.msra.mxu0 %v8257
    %8323 = vmatprep.subr.mxu0 %v8260
    %8324 = vmatpush1.msra.mxu0 %v8259
    %8325 = vmatprep.subr.mxu0 %v8262
    %8326 = vmatpush1.msra.mxu0 %v8261
    %8327 = vmatprep.subr.mxu0 %v8264
    %8328 = vmatpush1.msra.mxu0 %v8263
    %8329 = vmatprep.subr.mxu0 %v8266
    %8330 = vmatpush1.msra.mxu0 %v8265
    %8331 = vmatprep.subr.mxu0 %v8268
    %8332 = vmatpush1.msra.mxu0 %v8267
    %8333 = vmatprep.subr.mxu0 %v8270
    %8334 = vmatpush1.msra.mxu0 %v8269
    %8335 = vmatprep.subr.mxu0 %v8272
    %8336 = vmatpush1.msra.mxu0 %v8271
    %8337 = vmatprep.subr.mxu0 %v8274
    %8338 = vmatpush1.msra.mxu0 %v8273
    %8339 = vmatprep.subr.mxu0 %v8276
    %8340 = vmatpush1.msra.mxu0 %v8275
    %8341 = vmatprep.subr.mxu0 %v8278
    %8342 = vmatpush1.msra.mxu0 %v8277
    %8343 = vmatprep.subr.mxu0 %v8280
    %8344 = vmatpush1.msra.mxu0 %v8279
    %8345 = vmatprep.subr.mxu0 %v8282
    %8346 = vmatpush1.msra.mxu0 %v8281
    %8347 = vmatprep.subr.mxu0 %v8284
    %8348 = vmatpush1.msra.mxu0 %v8283
    %8349 = vmatprep.subr.mxu0 %v8286
    %8350 = vmatpush1.msra.mxu0 %v8285
    %8351 = vmatprep.subr.mxu0 %v8288
    %8352 = vmatpush1.msra.mxu0 %v8287
    %8353 = vmatprep.subr.mxu0 %v8290
    %8354 = vmatpush1.msra.mxu0 %v8289
    %8355 = vmatprep.subr.mxu0 %v8292
    %8356 = vmatpush1.msra.mxu0 %v8291
    %8357 = vmatprep.subr.mxu0 %v8294
    %8358 = vmatpush1.msra.mxu0 %v8293
    %8359 = vmatprep.subr.mxu0 %v8296
    %8360 = vmatpush1.msra.mxu0 %v8295
    %8361 = vmatprep.subr.mxu0 %v8298
    %8362 = vmatpush1.msra.mxu0 %v8297
    %8363 = vmatprep.subr.mxu0 %v8300
    %8364 = vmatpush1.msra.mxu0 %v8299
    %8365 = vmatprep.subr.mxu0 %v8302
    %8366 = vmatpush1.msra.mxu0 %v8301
    %8367 = vmatprep.subr.mxu0 %v8304
    %8368 = vmatpush1.msra.mxu0 %v8303
    %8369 = vmatprep.subr.mxu0 %v8306
    %8370 = vmatpush1.msra.mxu0 %v8305
    %8371 = vmatprep.subr.mxu0 %v8308
    %8372 = vmatpush1.msra.mxu0 %v8307
    %8373 = vmatprep.subr.mxu0 %v8310
    %8374 = vmatpush1.msra.mxu0 %v8309
    %8375 = vmatprep.subr.mxu0 %v8312
    %8376 = vmatpush1.msra.mxu0 %v8311
    %8377 = vmatprep.subr.mxu0 %v8314
    %8378 = vmatpush1.msra.mxu0 %v8313
    %8379 = vmatprep.subr.mxu0 %v8316
    %8380 = vmatpush1.msra.mxu0 %v8315
    %8381 = vmatprep.subr.mxu0 %v8318
    %8382 = vmatpush1.msra.mxu0 %v8317
    %8383 = vmatprep.subr.mxu0 %v8320
    %8384 = vmatpush1.msra.mxu0 %v8319
    %8385 = vmatprep.mubr.f32.mxu0 %v7720
    %8386 = vmatmul.mubr.f32.gmra.mrb[0].mxu0 %v7719
    %v8387 = vpop.f32.mrb[0].mxu0
    %v8388 = vadd.f32 0.0, %v8387
    %v8389 = vpop.f32.mrb[0].mxu0
    %v8390 = vadd.f32 0.0, %v8389
    %8391 = vdwg.mxu0
    %v8392 = vmul.f32 %v8388, 0.0078125
    %v8393 = vmul.f32 %v8390, 0.0078125
    %v8394 = vmul.f32 %v8392, %v8392
    %v8395 = vmul.f32 %v8393, %v8393
    %v8398 = vrot.slane %v8394, 7
    %v8399 = vrot.slane %v8395, 7
    %v8402 = vsub.f32 %v8392, %v8398
    %v8403 = vsub.f32 %v8393, %v8399
    %v8404 = vlaneseq
    %v8405 = vshrl.u32 %v8404, 7
    %v8406 = vsub.s32 0, %v8405
    %v8407 = vrot.slane %v8392, %v8406
    %v8408 = vlaneseq
    %v8409 = vshrl.u32 %v8408, 7
    %v8410 = vsub.s32 0, %v8409
    %v8411 = vrot.slane %v8393, %v8410
    %v8412 = vsub.f32 %v7379, %v8407
    %v8413 = vsub.f32 %v7380, %v8411
    %v8414 = vsub.f32 %v7381, %v8407
    %v8415 = vsub.f32 %v7382, %v8411
    %v8416 = vsub.f32 %v7383, %v8407
    %v8417 = vsub.f32 %v7384, %v8411
    %v8418 = vsub.f32 %v7385, %v8407
    %v8419 = vsub.f32 %v7386, %v8411
    %v8420 = vsub.f32 %v7387, %v8407
    %v8421 = vsub.f32 %v7388, %v8411
    %v8422 = vsub.f32 %v7389, %v8407
    %v8423 = vsub.f32 %v7390, %v8411
    %v8424 = vsub.f32 %v7391, %v8407
    %v8425 = vsub.f32 %v7392, %v8411
    %v8426 = vsub.f32 %v7393, %v8407
    %v8427 = vsub.f32 %v7394, %v8411
    %v8428 = vsub.f32 %v7395, %v8407
    %v8429 = vsub.f32 %v7396, %v8411
    %v8430 = vsub.f32 %v7397, %v8407
    %v8431 = vsub.f32 %v7398, %v8411
    %v8432 = vsub.f32 %v7399, %v8407
    %v8433 = vsub.f32 %v7400, %v8411
    %v8434 = vsub.f32 %v7401, %v8407
    %v8435 = vsub.f32 %v7402, %v8411
    %v8436 = vsub.f32 %v7403, %v8407
    %v8437 = vsub.f32 %v7404, %v8411
    %v8438 = vsub.f32 %v7405, %v8407
    %v8439 = vsub.f32 %v7406, %v8411
    %v8440 = vsub.f32 %v7407, %v8407
    %v8441 = vsub.f32 %v7408, %v8411
    %v8442 = vsub.f32 %v7409, %v8407
    %v8443 = vsub.f32 %v7410, %v8411
    %v8444 = vsub.f32 %v7411, %v8407
    %v8445 = vsub.f32 %v7412, %v8411
    %v8446 = vsub.f32 %v7413, %v8407
    %v8447 = vsub.f32 %v7414, %v8411
    %v8448 = vsub.f32 %v7415, %v8407
    %v8449 = vsub.f32 %v7416, %v8411
    %v8450 = vsub.f32 %v7417, %v8407
    %v8451 = vsub.f32 %v7418, %v8411
    %v8452 = vadd.f32 %v8402, 1e-05
    %v8453 = vadd.f32 %v8403, 1e-05
    %v8454 = vrsqrt.pop %v8452
    %v8455 = vrsqrt.pop %v8453
    %v8456 = vlaneseq
    %v8457 = vshrl.u32 %v8456, 7
    %v8458 = vsub.s32 1, %v8457
    %v8459 = vrot.slane %v8454, %v8458
    %v8460 = vlaneseq
    %v8461 = vshrl.u32 %v8460, 7
    %v8462 = vsub.s32 1, %v8461
    %v8463 = vrot.slane %v8455, %v8462
    %v8464 = vmul.f32 %v8412, %v8459
    %v8465 = vmul.f32 %v8413, %v8463
    %v8466 = vmul.f32 %v8414, %v8459
    %v8467 = vmul.f32 %v8415, %v8463
    %v8468 = vmul.f32 %v8416, %v8459
    %v8469 = vmul.f32 %v8417, %v8463
    %v8470 = vmul.f32 %v8418, %v8459
    %v8471 = vmul.f32 %v8419, %v8463
    %v8472 = vmul.f32 %v8420, %v8459
    %v8473 = vmul.f32 %v8421, %v8463
    %v8474 = vmul.f32 %v8422, %v8459
    %v8475 = vmul.f32 %v8423, %v8463
    %v8476 = vmul.f32 %v8424, %v8459
    %v8477 = vmul.f32 %v8425, %v8463
    %v8478 = vmul.f32 %v8426, %v8459
    %v8479 = vmul.f32 %v8427, %v8463
    %v8480 = vmul.f32 %v8428, %v8459
    %v8481 = vmul.f32 %v8429, %v8463
    %v8482 = vmul.f32 %v8430, %v8459
    %v8483 = vmul.f32 %v8431, %v8463
    %v8484 = vmul.f32 %v8432, %v8459
    %v8485 = vmul.f32 %v8433, %v8463
    %v8486 = vmul.f32 %v8434, %v8459
    %v8487 = vmul.f32 %v8435, %v8463
    %v8488 = vmul.f32 %v8436, %v8459
    %v8489 = vmul.f32 %v8437, %v8463
    %v8490 = vmul.f32 %v8438, %v8459
    %v8491 = vmul.f32 %v8439, %v8463
    %v8492 = vmul.f32 %v8440, %v8459
    %v8493 = vmul.f32 %v8441, %v8463
    %v8494 = vmul.f32 %v8442, %v8459
    %v8495 = vmul.f32 %v8443, %v8463
    %v8496 = vmul.f32 %v8444, %v8459
    %v8497 = vmul.f32 %v8445, %v8463
    %v8498 = vmul.f32 %v8446, %v8459
    %v8499 = vmul.f32 %v8447, %v8463
    %v8500 = vmul.f32 %v8448, %v8459
    %v8501 = vmul.f32 %v8449, %v8463
    %v8502 = vmul.f32 %v8450, %v8459
    %v8503 = vmul.f32 %v8451, %v8463
    %v8504 = vmul.f32 %v8464, 0.2
    %v8505 = vmul.f32 %v8465, 0.2
    %v8506 = vmul.f32 %v8466, 0.2
    %v8507 = vmul.f32 %v8467, 0.2
    %v8508 = vmul.f32 %v8468, 0.2
    %v8509 = vmul.f32 %v8469, 0.2
    %v8510 = vmul.f32 %v8470, 0.2
    %v8511 = vmul.f32 %v8471, 0.2
    %v8512 = vmul.f32 %v8472, 0.2
    %v8513 = vmul.f32 %v8473, 0.2
    %v8514 = vmul.f32 %v8474, 0.2
    %v8515 = vmul.f32 %v8475, 0.2
    %v8516 = vmul.f32 %v8476, 0.2
    %v8517 = vmul.f32 %v8477, 0.2
    %v8518 = vmul.f32 %v8478, 0.2
    %v8519 = vmul.f32 %v8479, 0.2
    %v8520 = vmul.f32 %v8480, 0.2
    %v8521 = vmul.f32 %v8481, 0.2
    %v8522 = vmul.f32 %v8482, 0.2
    %v8523 = vmul.f32 %v8483, 0.2
    %v8524 = vmul.f32 %v8484, 0.2
    %v8525 = vmul.f32 %v8485, 0.2
    %v8526 = vmul.f32 %v8486, 0.2
    %v8527 = vmul.f32 %v8487, 0.2
    %v8528 = vmul.f32 %v8488, 0.2
    %v8529 = vmul.f32 %v8489, 0.2
    %v8530 = vmul.f32 %v8490, 0.2
    %v8531 = vmul.f32 %v8491, 0.2
    %v8532 = vmul.f32 %v8492, 0.2
    %v8533 = vmul.f32 %v8493, 0.2
    %v8534 = vmul.f32 %v8494, 0.2
    %v8535 = vmul.f32 %v8495, 0.2
    %v8536 = vmul.f32 %v8496, 0.2
    %v8537 = vmul.f32 %v8497, 0.2
    %v8538 = vmul.f32 %v8498, 0.2
    %v8539 = vmul.f32 %v8499, 0.2
    %v8540 = vmul.f32 %v8500, 0.2
    %v8541 = vmul.f32 %v8501, 0.2
    %v8542 = vmul.f32 %v8502, 0.2
    %v8543 = vmul.f32 %v8503, 0.2
    %v8544 = vmax.f32 %v8464, %v8504
    %v8545 = vmax.f32 %v8465, %v8505
    %v8546 = vmax.f32 %v8466, %v8506
    %v8547 = vmax.f32 %v8467, %v8507
    %v8548 = vmax.f32 %v8468, %v8508
    %v8549 = vmax.f32 %v8469, %v8509
    %v8550 = vmax.f32 %v8470, %v8510
    %v8551 = vmax.f32 %v8471, %v8511
    %v8552 = vmax.f32 %v8472, %v8512
    %v8553 = vmax.f32 %v8473, %v8513
    %v8554 = vmax.f32 %v8474, %v8514
    %v8555 = vmax.f32 %v8475, %v8515
    %v8556 = vmax.f32 %v8476, %v8516
    %v8557 = vmax.f32 %v8477, %v8517
    %v8558 = vmax.f32 %v8478, %v8518
    %v8559 = vmax.f32 %v8479, %v8519
    %v8560 = vmax.f32 %v8480, %v8520
    %v8561 = vmax.f32 %v8481, %v8521
    %v8562 = vmax.f32 %v8482, %v8522
    %v8563 = vmax.f32 %v8483, %v8523
    %v8564 = vmax.f32 %v8484, %v8524
    %v8565 = vmax.f32 %v8485, %v8525
    %v8566 = vmax.f32 %v8486, %v8526
    %v8567 = vmax.f32 %v8487, %v8527
    %v8568 = vmax.f32 %v8488, %v8528
    %v8569 = vmax.f32 %v8489, %v8529
    %v8570 = vmax.f32 %v8490, %v8530
    %v8571 = vmax.f32 %v8491, %v8531
    %v8572 = vmax.f32 %v8492, %v8532
    %v8573 = vmax.f32 %v8493, %v8533
    %v8574 = vmax.f32 %v8494, %v8534
    %v8575 = vmax.f32 %v8495, %v8535
    %v8576 = vmax.f32 %v8496, %v8536
    %v8577 = vmax.f32 %v8497, %v8537
    %v8578 = vmax.f32 %v8498, %v8538
    %v8579 = vmax.f32 %v8499, %v8539
    %v8580 = vmax.f32 %v8500, %v8540
    %v8581 = vmax.f32 %v8501, %v8541
    %v8582 = vmax.f32 %v8502, %v8542
    %v8583 = vmax.f32 %v8503, %v8543
    %8584 = vst [vmem:[#allocation2] sm:$0xff] 0
    %8585 = vst [vmem:[#allocation2 + $0x8] sm:$0xff] 0
    %8586 = vst [vmem:[#allocation2 + $0x10] sm:$0xff] 0
    %8587 = vst [vmem:[#allocation2 + $0x18] sm:$0xff] 0
    %8588 = vst [vmem:[#allocation2 + $0x20] sm:$0xff] 0
    %8589 = vst [vmem:[#allocation2 + $0x28] sm:$0xff] 0
    %8590 = vst [vmem:[#allocation2 + $0x30] sm:$0xff] 0
    %8591 = vst [vmem:[#allocation2 + $0x38] sm:$0xff] 0
    %8592 = vst [vmem:[#allocation2 + $0x40] sm:$0xff] 0
    %8593 = vst [vmem:[#allocation2 + $0x48] sm:$0xff] 0
    %8594 = vst [vmem:[#allocation2 + $0x50] sm:$0xff] 0
    %8595 = vst [vmem:[#allocation2 + $0x58] sm:$0xff] 0
    %8596 = vst [vmem:[#allocation2 + $0x60] sm:$0xff] 0
    %8597 = vst [vmem:[#allocation2 + $0x68] sm:$0xff] 0
    %8598 = vst [vmem:[#allocation2 + $0x70] sm:$0xff] 0
    %8599 = vst [vmem:[#allocation2 + $0x78] sm:$0xff] 0
    %8600 = vst [vmem:[#allocation2 + $0x80] sm:$0xff] 0
    %8601 = vst [vmem:[#allocation2 + $0x88] sm:$0xff] 0
    %8602 = vst [vmem:[#allocation2 + $0x90] sm:$0xff] 0
    %8603 = vst [vmem:[#allocation2 + $0x98] sm:$0xff] 0
    %8604 = vst [vmem:[#allocation2 + $0xa0] sm:$0xff] 0
    %8605 = vst [vmem:[#allocation2 + $0xa8] sm:$0xff] 0
    %8606 = vst [vmem:[#allocation2 + $0xb0] sm:$0xff] 0
    %v8607 = vmul.f32 %v8544, %v2093
    %v8608 = vmul.f32 %v8545, %v2093
    %v8609 = vmul.f32 %v8546, %v2098
    %v8610 = vmul.f32 %v8547, %v2098
    %v8611 = vmul.f32 %v8548, %v2103
    %v8612 = vmul.f32 %v8549, %v2103
    %v8613 = vmul.f32 %v8550, %v2108
    %v8614 = vmul.f32 %v8551, %v2108
    %v8615 = vmul.f32 %v8552, %v2113
    %v8616 = vmul.f32 %v8553, %v2113
    %v8617 = vmul.f32 %v8554, %v2118
    %v8618 = vmul.f32 %v8555, %v2118
    %v8619 = vmul.f32 %v8556, %v2123
    %v8620 = vmul.f32 %v8557, %v2123
    %v8621 = vmul.f32 %v8558, %v2128
    %v8622 = vmul.f32 %v8559, %v2128
    %v8623 = vmul.f32 %v8560, %v2133
    %v8624 = vmul.f32 %v8561, %v2133
    %v8625 = vmul.f32 %v8562, %v2138
    %v8626 = vmul.f32 %v8563, %v2138
    %v8627 = vmul.f32 %v8564, %v2143
    %v8628 = vmul.f32 %v8565, %v2143
    %v8629 = vmul.f32 %v8566, %v2148
    %v8630 = vmul.f32 %v8567, %v2148
    %v8631 = vmul.f32 %v8568, %v2153
    %v8632 = vmul.f32 %v8569, %v2153
    %v8633 = vmul.f32 %v8570, %v2158
    %v8634 = vmul.f32 %v8571, %v2158
    %v8635 = vmul.f32 %v8572, %v2163
    %v8636 = vmul.f32 %v8573, %v2163
    %v8637 = vmul.f32 %v8574, %v2168
    %v8638 = vmul.f32 %v8575, %v2168
    %v8639 = vmul.f32 %v8576, %v2173
    %v8640 = vmul.f32 %v8577, %v2173
    %v8641 = vmul.f32 %v8578, %v2178
    %v8642 = vmul.f32 %v8579, %v2178
    %v8643 = vmul.f32 %v8580, %v2183
    %v8644 = vmul.f32 %v8581, %v2183
    %v8645 = vmul.f32 %v8582, %v2188
    %v8646 = vmul.f32 %v8583, %v2188
    %v8647 = vpack.c.bf16 %v8609, %v8607
    %v8648 = vpack.c.bf16 %v8610, %v8608
    %v8649 = vpack.c.bf16 %v8613, %v8611
    %v8650 = vpack.c.bf16 %v8614, %v8612
    %v8651 = vpack.c.bf16 %v8617, %v8615
    %v8652 = vpack.c.bf16 %v8618, %v8616
    %v8653 = vpack.c.bf16 %v8621, %v8619
    %v8654 = vpack.c.bf16 %v8622, %v8620
    %v8655 = vpack.c.bf16 %v8625, %v8623
    %v8656 = vpack.c.bf16 %v8626, %v8624
    %v8657 = vpack.c.bf16 %v8629, %v8627
    %v8658 = vpack.c.bf16 %v8630, %v8628
    %v8659 = vpack.c.bf16 %v8633, %v8631
    %v8660 = vpack.c.bf16 %v8634, %v8632
    %v8661 = vpack.c.bf16 %v8637, %v8635
    %v8662 = vpack.c.bf16 %v8638, %v8636
    %v8663 = vpack.c.bf16 %v8641, %v8639
    %v8664 = vpack.c.bf16 %v8642, %v8640
    %v8665 = vpack.c.bf16 %v8645, %v8643
    %v8666 = vpack.c.bf16 %v8646, %v8644
    %v8687 = vunpack.c.l.b16 %v8647
    %v8688 = vunpack.c.l.b16 %v8648
    %v8689 = vunpack.c.h.b16 %v8647
    %v8690 = vunpack.c.h.b16 %v8648
    %v8691 = vunpack.c.l.b16 %v8649
    %v8692 = vunpack.c.l.b16 %v8650
    %v8693 = vunpack.c.h.b16 %v8649
    %v8694 = vunpack.c.h.b16 %v8650
    %v8695 = vunpack.c.l.b16 %v8651
    %v8696 = vunpack.c.l.b16 %v8652
    %v8697 = vunpack.c.h.b16 %v8651
    %v8698 = vunpack.c.h.b16 %v8652
    %v8699 = vunpack.c.l.b16 %v8653
    %v8700 = vunpack.c.l.b16 %v8654
    %v8701 = vunpack.c.h.b16 %v8653
    %v8702 = vunpack.c.h.b16 %v8654
    %v8703 = vunpack.c.l.b16 %v8655
    %v8704 = vunpack.c.l.b16 %v8656
    %v8705 = vunpack.c.h.b16 %v8655
    %v8706 = vunpack.c.h.b16 %v8656
    %v8707 = vunpack.c.l.b16 %v8657
    %v8708 = vunpack.c.l.b16 %v8658
    %v8709 = vunpack.c.h.b16 %v8657
    %v8710 = vunpack.c.h.b16 %v8658
    %v8711 = vunpack.c.l.b16 %v8659
    %v8712 = vunpack.c.l.b16 %v8660
    %v8713 = vunpack.c.h.b16 %v8659
    %v8714 = vunpack.c.h.b16 %v8660
    %v8715 = vunpack.c.l.b16 %v8661
    %v8716 = vunpack.c.l.b16 %v8662
    %v8717 = vunpack.c.h.b16 %v8661
    %v8718 = vunpack.c.h.b16 %v8662
    %v8719 = vunpack.c.l.b16 %v8663
    %v8720 = vunpack.c.l.b16 %v8664
    %v8721 = vunpack.c.h.b16 %v8663
    %v8722 = vunpack.c.h.b16 %v8664
    %v8723 = vunpack.c.l.b16 %v8665
    %v8724 = vunpack.c.l.b16 %v8666
    %v8725 = vunpack.c.h.b16 %v8665
    %v8726 = vunpack.c.h.b16 %v8666
    %v8727 = vpack.c.b16 %v8688, %v8687
    %v8728 = vpack.c.b16 %v8690, %v8689
    %v8729 = vpack.c.b16 %v8692, %v8691
    %v8730 = vpack.c.b16 %v8694, %v8693
    %v8731 = vpack.c.b16 %v8696, %v8695
    %v8732 = vpack.c.b16 %v8698, %v8697
    %v8733 = vpack.c.b16 %v8700, %v8699
    %v8734 = vpack.c.b16 %v8702, %v8701
    %v8735 = vpack.c.b16 %v8704, %v8703
    %v8736 = vpack.c.b16 %v8706, %v8705
    %v8737 = vpack.c.b16 %v8708, %v8707
    %v8738 = vpack.c.b16 %v8710, %v8709
    %v8739 = vpack.c.b16 %v8712, %v8711
    %v8740 = vpack.c.b16 %v8714, %v8713
    %v8741 = vpack.c.b16 %v8716, %v8715
    %v8742 = vpack.c.b16 %v8718, %v8717
    %v8743 = vpack.c.b16 %v8720, %v8719
    %v8744 = vpack.c.b16 %v8722, %v8721
    %v8745 = vpack.c.b16 %v8724, %v8723
    %v8746 = vpack.c.b16 %v8726, %v8725
    %8767 = vst [vmem:[#allocation2 + $0x8] sm:$0xff] %v8727
    %8768 = vst [vmem:[#allocation2 + $0x10] sm:$0xff] %v8728
    %8769 = vst [vmem:[#allocation2 + $0x18] sm:$0xff] %v8729
    %8770 = vst [vmem:[#allocation2 + $0x20] sm:$0xff] %v8730
    %8771 = vst [vmem:[#allocation2 + $0x28] sm:$0xff] %v8731
    %8772 = vst [vmem:[#allocation2 + $0x30] sm:$0xff] %v8732
    %8773 = vst [vmem:[#allocation2 + $0x38] sm:$0xff] %v8733
    %8774 = vst [vmem:[#allocation2 + $0x40] sm:$0xff] %v8734
    %8775 = vst [vmem:[#allocation2 + $0x48] sm:$0xff] %v8735
    %8776 = vst [vmem:[#allocation2 + $0x50] sm:$0xff] %v8736
    %8777 = vst [vmem:[#allocation2 + $0x58] sm:$0xff] %v8737
    %8778 = vst [vmem:[#allocation2 + $0x60] sm:$0xff] %v8738
    %8779 = vst [vmem:[#allocation2 + $0x68] sm:$0xff] %v8739
    %8780 = vst [vmem:[#allocation2 + $0x70] sm:$0xff] %v8740
    %8781 = vst [vmem:[#allocation2 + $0x78] sm:$0xff] %v8741
    %8782 = vst [vmem:[#allocation2 + $0x80] sm:$0xff] %v8742
    %8783 = vst [vmem:[#allocation2 + $0x88] sm:$0xff] %v8743
    %8784 = vst [vmem:[#allocation2 + $0x90] sm:$0xff] %v8744
    %8785 = vst [vmem:[#allocation2 + $0x98] sm:$0xff] %v8745
    %8786 = vst [vmem:[#allocation2 + $0xa0] sm:$0xff] %v8746
    %v8787 = vld [vmem:[#allocation2] sm:$0xff]
    %v8788 = vld [vmem:[#allocation2 + $0x8] sm:$0xff]
    %v8789 = vld [vmem:[#allocation2 + $0x10] sm:$0xff]
    %v8790 = vld [vmem:[#allocation2 + $0x18] sm:$0xff]
    %v8791 = vld [vmem:[#allocation2 + $0x20] sm:$0xff]
    %v8792 = vld [vmem:[#allocation2 + $0x28] sm:$0xff]
    %v8793 = vld [vmem:[#allocation2 + $0x30] sm:$0xff]
    %v8794 = vld [vmem:[#allocation2 + $0x38] sm:$0xff]
    %v8795 = vld [vmem:[#allocation2 + $0x40] sm:$0xff]
    %v8796 = vld [vmem:[#allocation2 + $0x48] sm:$0xff]
    %v8797 = vld [vmem:[#allocation2 + $0x50] sm:$0xff]
    %v8798 = vld [vmem:[#allocation2 + $0x58] sm:$0xff]
    %v8799 = vld [vmem:[#allocation2 + $0x60] sm:$0xff]
    %v8800 = vld [vmem:[#allocation2 + $0x68] sm:$0xff]
    %v8801 = vld [vmem:[#allocation2 + $0x70] sm:$0xff]
    %v8802 = vld [vmem:[#allocation2 + $0x78] sm:$0xff]
    %v8803 = vld [vmem:[#allocation2 + $0x80] sm:$0xff]
    %v8804 = vld [vmem:[#allocation2 + $0x88] sm:$0xff]
    %v8805 = vld [vmem:[#allocation2 + $0x90] sm:$0xff]
    %v8806 = vld [vmem:[#allocation2 + $0x98] sm:$0xff]
    %v8807 = vld [vmem:[#allocation5] sm:$0xff]
    %v8808 = vld [vmem:[#allocation5 + $0x8] sm:$0xff]
    %v8809 = vld [vmem:[#allocation5 + $0x10] sm:$0xff]
    %v8810 = vld [vmem:[#allocation5 + $0x18] sm:$0xff]
    %v8811 = vld [vmem:[#allocation5 + $0x20] sm:$0xff]
    %v8812 = vld [vmem:[#allocation5 + $0x28] sm:$0xff]
    %v8813 = vld [vmem:[#allocation5 + $0x30] sm:$0xff]
    %v8814 = vld [vmem:[#allocation5 + $0x38] sm:$0xff]
    %v8815 = vld [vmem:[#allocation5 + $0x40] sm:$0xff]
    %v8816 = vld [vmem:[#allocation5 + $0x48] sm:$0xff]
    %v8817 = vld [vmem:[#allocation5 + $0x50] sm:$0xff]
    %v8818 = vld [vmem:[#allocation5 + $0x58] sm:$0xff]
    %v8819 = vld [vmem:[#allocation5 + $0x60] sm:$0xff]
    %v8820 = vld [vmem:[#allocation5 + $0x68] sm:$0xff]
    %v8821 = vld [vmem:[#allocation5 + $0x70] sm:$0xff]
    %v8822 = vld [vmem:[#allocation5 + $0x78] sm:$0xff]
    %v8823 = vld [vmem:[#allocation5 + $0x80] sm:$0xff]
    %v8824 = vld [vmem:[#allocation5 + $0x88] sm:$0xff]
    %v8825 = vld [vmem:[#allocation5 + $0x90] sm:$0xff]
    %v8826 = vld [vmem:[#allocation5 + $0x98] sm:$0xff]
    %v8827 = vld [vmem:[#allocation5 + $0xa0] sm:$0xff]
    %v8828 = vld [vmem:[#allocation5 + $0xa8] sm:$0xff]
    %v8829 = vld [vmem:[#allocation5 + $0xb0] sm:$0xff]
    %v8830 = vld [vmem:[#allocation5 + $0xb8] sm:$0xff]
    %v8831 = vld [vmem:[#allocation5 + $0xc0] sm:$0xff]
    %v8832 = vld [vmem:[#allocation5 + $0xc8] sm:$0xff]
    %v8833 = vld [vmem:[#allocation5 + $0xd0] sm:$0xff]
    %v8834 = vld [vmem:[#allocation5 + $0xd8] sm:$0xff]
    %v8835 = vld [vmem:[#allocation5 + $0xe0] sm:$0xff]
    %v8836 = vld [vmem:[#allocation5 + $0xe8] sm:$0xff]
    %v8837 = vld [vmem:[#allocation5 + $0xf0] sm:$0xff]
    %v8838 = vld [vmem:[#allocation5 + $0xf8] sm:$0xff]
    %v8839 = vld [vmem:[#allocation2 + $0xa0] sm:$0xff]
    %s8840 = scalar_lea.vmem [#allocation5], 256
    %v8841 = vld [vmem:[%s8840] sm:$0xff]
    %v8842 = vld [vmem:[%s8840 + $0x8] sm:$0xff]
    %v8843 = vld [vmem:[%s8840 + $0x10] sm:$0xff]
    %v8844 = vld [vmem:[%s8840 + $0x18] sm:$0xff]
    %v8845 = vld [vmem:[%s8840 + $0x20] sm:$0xff]
    %v8846 = vld [vmem:[%s8840 + $0x28] sm:$0xff]
    %v8847 = vld [vmem:[%s8840 + $0x30] sm:$0xff]
    %v8848 = vld [vmem:[%s8840 + $0x38] sm:$0xff]
    %v8849 = vld [vmem:[%s8840 + $0x40] sm:$0xff]
    %v8850 = vld [vmem:[%s8840 + $0x48] sm:$0xff]
    %v8851 = vld [vmem:[%s8840 + $0x50] sm:$0xff]
    %v8852 = vld [vmem:[%s8840 + $0x58] sm:$0xff]
    %v8853 = vld [vmem:[%s8840 + $0x60] sm:$0xff]
    %v8854 = vld [vmem:[%s8840 + $0x68] sm:$0xff]
    %v8855 = vld [vmem:[%s8840 + $0x70] sm:$0xff]
    %v8856 = vld [vmem:[%s8840 + $0x78] sm:$0xff]
    %v8857 = vld [vmem:[%s8840 + $0x80] sm:$0xff]
    %v8858 = vld [vmem:[%s8840 + $0x88] sm:$0xff]
    %v8859 = vld [vmem:[%s8840 + $0x90] sm:$0xff]
    %v8860 = vld [vmem:[%s8840 + $0x98] sm:$0xff]
    %v8861 = vld [vmem:[%s8840 + $0xa0] sm:$0xff]
    %v8862 = vld [vmem:[%s8840 + $0xa8] sm:$0xff]
    %v8863 = vld [vmem:[%s8840 + $0xb0] sm:$0xff]
    %v8864 = vld [vmem:[%s8840 + $0xb8] sm:$0xff]
    %v8865 = vld [vmem:[%s8840 + $0xc0] sm:$0xff]
    %v8866 = vld [vmem:[%s8840 + $0xc8] sm:$0xff]
    %v8867 = vld [vmem:[%s8840 + $0xd0] sm:$0xff]
    %v8868 = vld [vmem:[%s8840 + $0xd8] sm:$0xff]
    %v8869 = vld [vmem:[%s8840 + $0xe0] sm:$0xff]
    %v8870 = vld [vmem:[%s8840 + $0xe8] sm:$0xff]
    %v8871 = vld [vmem:[%s8840 + $0xf0] sm:$0xff]
    %v8872 = vld [vmem:[%s8840 + $0xf8] sm:$0xff]
    %v8893 = vunpack.c.l.b16 %v8788
    %v8894 = vunpack.c.h.b16 %v8788
    %v8895 = vunpack.c.l.b16 %v8789
    %v8896 = vunpack.c.h.b16 %v8789
    %v8897 = vunpack.c.l.b16 %v8790
    %v8898 = vunpack.c.h.b16 %v8790
    %v8899 = vunpack.c.l.b16 %v8791
    %v8900 = vunpack.c.h.b16 %v8791
    %v8901 = vunpack.c.l.b16 %v8792
    %v8902 = vunpack.c.h.b16 %v8792
    %v8903 = vunpack.c.l.b16 %v8793
    %v8904 = vunpack.c.h.b16 %v8793
    %v8905 = vunpack.c.l.b16 %v8794
    %v8906 = vunpack.c.h.b16 %v8794
    %v8907 = vunpack.c.l.b16 %v8795
    %v8908 = vunpack.c.h.b16 %v8795
    %v8909 = vunpack.c.l.b16 %v8796
    %v8910 = vunpack.c.h.b16 %v8796
    %v8911 = vunpack.c.l.b16 %v8797
    %v8912 = vunpack.c.h.b16 %v8797
    %v8913 = vunpack.c.l.b16 %v8798
    %v8914 = vunpack.c.h.b16 %v8798
    %v8915 = vunpack.c.l.b16 %v8799
    %v8916 = vunpack.c.h.b16 %v8799
    %v8917 = vunpack.c.l.b16 %v8800
    %v8918 = vunpack.c.h.b16 %v8800
    %v8919 = vunpack.c.l.b16 %v8801
    %v8920 = vunpack.c.h.b16 %v8801
    %v8921 = vunpack.c.l.b16 %v8802
    %v8922 = vunpack.c.h.b16 %v8802
    %v8923 = vunpack.c.l.b16 %v8803
    %v8924 = vunpack.c.h.b16 %v8803
    %v8925 = vunpack.c.l.b16 %v8804
    %v8926 = vunpack.c.h.b16 %v8804
    %v8927 = vunpack.c.l.b16 %v8805
    %v8928 = vunpack.c.h.b16 %v8805
    %v8929 = vunpack.c.l.b16 %v8806
    %v8930 = vunpack.c.h.b16 %v8806
    %v8931 = vunpack.c.l.b16 %v8839
    %v8932 = vunpack.c.h.b16 %v8839
    %v8933 = vpack.c.b16 %v8895, %v8893
    %v8934 = vpack.c.b16 %v8896, %v8894
    %v8935 = vpack.c.b16 %v8899, %v8897
    %v8936 = vpack.c.b16 %v8900, %v8898
    %v8937 = vpack.c.b16 %v8903, %v8901
    %v8938 = vpack.c.b16 %v8904, %v8902
    %v8939 = vpack.c.b16 %v8907, %v8905
    %v8940 = vpack.c.b16 %v8908, %v8906
    %v8941 = vpack.c.b16 %v8911, %v8909
    %v8942 = vpack.c.b16 %v8912, %v8910
    %v8943 = vpack.c.b16 %v8915, %v8913
    %v8944 = vpack.c.b16 %v8916, %v8914
    %v8945 = vpack.c.b16 %v8919, %v8917
    %v8946 = vpack.c.b16 %v8920, %v8918
    %v8947 = vpack.c.b16 %v8923, %v8921
    %v8948 = vpack.c.b16 %v8924, %v8922
    %v8949 = vpack.c.b16 %v8927, %v8925
    %v8950 = vpack.c.b16 %v8928, %v8926
    %v8951 = vpack.c.b16 %v8931, %v8929
    %v8952 = vpack.c.b16 %v8932, %v8930
    %v9005 = vunpack.c.l.b16 %v8841
    %v9006 = vunpack.c.h.b16 %v8841
    %v9007 = vunpack.c.l.b16 %v8842
    %v9008 = vunpack.c.h.b16 %v8842
    %v9009 = vunpack.c.l.b16 %v8843
    %v9010 = vunpack.c.h.b16 %v8843
    %v9011 = vunpack.c.l.b16 %v8844
    %v9012 = vunpack.c.h.b16 %v8844
    %v9013 = vunpack.c.l.b16 %v8845
    %v9014 = vunpack.c.h.b16 %v8845
    %v9015 = vunpack.c.l.b16 %v8846
    %v9016 = vunpack.c.h.b16 %v8846
    %v9017 = vunpack.c.l.b16 %v8847
    %v9018 = vunpack.c.h.b16 %v8847
    %v9019 = vunpack.c.l.b16 %v8848
    %v9020 = vunpack.c.h.b16 %v8848
    %v9021 = vunpack.c.l.b16 %v8849
    %v9022 = vunpack.c.h.b16 %v8849
    %v9023 = vunpack.c.l.b16 %v8850
    %v9024 = vunpack.c.h.b16 %v8850
    %v9025 = vunpack.c.l.b16 %v8851
    %v9026 = vunpack.c.h.b16 %v8851
    %v9027 = vunpack.c.l.b16 %v8852
    %v9028 = vunpack.c.h.b16 %v8852
    %v9029 = vunpack.c.l.b16 %v8853
    %v9030 = vunpack.c.h.b16 %v8853
    %v9031 = vunpack.c.l.b16 %v8854
    %v9032 = vunpack.c.h.b16 %v8854
    %v9033 = vunpack.c.l.b16 %v8855
    %v9034 = vunpack.c.h.b16 %v8855
    %v9035 = vunpack.c.l.b16 %v8856
    %v9036 = vunpack.c.h.b16 %v8856
    %v9037 = vunpack.c.l.b16 %v8857
    %v9038 = vunpack.c.h.b16 %v8857
    %v9039 = vunpack.c.l.b16 %v8858
    %v9040 = vunpack.c.h.b16 %v8858
    %v9041 = vunpack.c.l.b16 %v8859
    %v9042 = vunpack.c.h.b16 %v8859
    %v9043 = vunpack.c.l.b16 %v8860
    %v9044 = vunpack.c.h.b16 %v8860
    %v9045 = vunpack.c.l.b16 %v8861
    %v9046 = vunpack.c.h.b16 %v8861
    %v9047 = vunpack.c.l.b16 %v8862
    %v9048 = vunpack.c.h.b16 %v8862
    %v9049 = vunpack.c.l.b16 %v8863
    %v9050 = vunpack.c.h.b16 %v8863
    %v9051 = vunpack.c.l.b16 %v8864
    %v9052 = vunpack.c.h.b16 %v8864
    %v9053 = vunpack.c.l.b16 %v8865
    %v9054 = vunpack.c.h.b16 %v8865
    %v9055 = vunpack.c.l.b16 %v8866
    %v9056 = vunpack.c.h.b16 %v8866
    %v9057 = vunpack.c.l.b16 %v8867
    %v9058 = vunpack.c.h.b16 %v8867
    %v9059 = vunpack.c.l.b16 %v8868
    %v9060 = vunpack.c.h.b16 %v8868
    %v9061 = vunpack.c.l.b16 %v8869
    %v9062 = vunpack.c.h.b16 %v8869
    %v9063 = vunpack.c.l.b16 %v8870
    %v9064 = vunpack.c.h.b16 %v8870
    %v9065 = vunpack.c.l.b16 %v8871
    %v9066 = vunpack.c.h.b16 %v8871
    %v9067 = vunpack.c.l.b16 %v8872
    %v9068 = vunpack.c.h.b16 %v8872
    %v9069 = vpack.c.b16 %v9007, %v9005
    %v9070 = vpack.c.b16 %v9008, %v9006
    %v9071 = vpack.c.b16 %v9011, %v9009
    %v9072 = vpack.c.b16 %v9012, %v9010
    %v9073 = vpack.c.b16 %v9015, %v9013
    %v9074 = vpack.c.b16 %v9016, %v9014
    %v9075 = vpack.c.b16 %v9019, %v9017
    %v9076 = vpack.c.b16 %v9020, %v9018
    %v9077 = vpack.c.b16 %v9023, %v9021
    %v9078 = vpack.c.b16 %v9024, %v9022
    %v9079 = vpack.c.b16 %v9027, %v9025
    %v9080 = vpack.c.b16 %v9028, %v9026
    %v9081 = vpack.c.b16 %v9031, %v9029
    %v9082 = vpack.c.b16 %v9032, %v9030
    %v9083 = vpack.c.b16 %v9035, %v9033
    %v9084 = vpack.c.b16 %v9036, %v9034
    %v9085 = vpack.c.b16 %v9039, %v9037
    %v9086 = vpack.c.b16 %v9040, %v9038
    %v9087 = vpack.c.b16 %v9043, %v9041
    %v9088 = vpack.c.b16 %v9044, %v9042
    %v9089 = vpack.c.b16 %v9047, %v9045
    %v9090 = vpack.c.b16 %v9048, %v9046
    %v9091 = vpack.c.b16 %v9051, %v9049
    %v9092 = vpack.c.b16 %v9052, %v9050
    %v9093 = vpack.c.b16 %v9055, %v9053
    %v9094 = vpack.c.b16 %v9056, %v9054
    %v9095 = vpack.c.b16 %v9059, %v9057
    %v9096 = vpack.c.b16 %v9060, %v9058
    %v9097 = vpack.c.b16 %v9063, %v9061
    %v9098 = vpack.c.b16 %v9064, %v9062
    %v9099 = vpack.c.b16 %v9067, %v9065
    %v9100 = vpack.c.b16 %v9068, %v9066
    %9133 = vmatprep.subr.bf16.mxu0 %v9070
    %9134 = vmatpush1.bf16.msra.mxu0 %v9069
    %9135 = vmatprep.subr.bf16.mxu0 %v9072
    %9136 = vmatpush1.bf16.msra.mxu0 %v9071
    %9137 = vmatprep.subr.bf16.mxu0 %v9074
    %9138 = vmatpush1.bf16.msra.mxu0 %v9073
    %9139 = vmatprep.subr.bf16.mxu0 %v9076
    %9140 = vmatpush1.bf16.msra.mxu0 %v9075
    %9141 = vmatprep.subr.bf16.mxu0 %v9078
    %9142 = vmatpush1.bf16.msra.mxu0 %v9077
    %9143 = vmatprep.subr.bf16.mxu0 %v9080
    %9144 = vmatpush1.bf16.msra.mxu0 %v9079
    %9145 = vmatprep.subr.bf16.mxu0 %v9082
    %9146 = vmatpush1.bf16.msra.mxu0 %v9081
    %9147 = vmatprep.subr.bf16.mxu0 %v9084
    %9148 = vmatpush1.bf16.msra.mxu0 %v9083
    %9149 = vmatprep.subr.bf16.mxu0 %v9086
    %9150 = vmatpush1.bf16.msra.mxu0 %v9085
    %9151 = vmatprep.subr.bf16.mxu0 %v9088
    %9152 = vmatpush1.bf16.msra.mxu0 %v9087
    %9153 = vmatprep.subr.bf16.mxu0 %v9090
    %9154 = vmatpush1.bf16.msra.mxu0 %v9089
    %9155 = vmatprep.subr.bf16.mxu0 %v9092
    %9156 = vmatpush1.bf16.msra.mxu0 %v9091
    %9157 = vmatprep.subr.bf16.mxu0 %v9094
    %9158 = vmatpush1.bf16.msra.mxu0 %v9093
    %9159 = vmatprep.subr.bf16.mxu0 %v9096
    %9160 = vmatpush1.bf16.msra.mxu0 %v9095
    %9161 = vmatprep.subr.bf16.mxu0 %v9098
    %9162 = vmatpush1.bf16.msra.mxu0 %v9097
    %9163 = vmatprep.subr.bf16.mxu0 %v9100
    %9164 = vmatpush1.bf16.msra.mxu0 %v9099
    %9165 = vmatprep.mubr.bf16.mxu0 %v8934
    %9166 = vmatmul.mubr.bf16.gmra.mrb[0].mxu0 %v8933
    %v9167 = vpop.f32.mrb[0].mxu0
    %v9168 = vadd.f32 0.0, %v9167
    %v9169 = vpop.f32.mrb[0].mxu0
    %v9170 = vadd.f32 0.0, %v9169
    %v9171 = vpop.f32.mrb[0].mxu0
    %v9172 = vadd.f32 0.0, %v9171
    %v9173 = vpop.f32.mrb[0].mxu0
    %v9174 = vadd.f32 0.0, %v9173
    %9175 = vmatprep.mubr.bf16.mxu0 %v8936
    %9176 = vmatmul.mubr.bf16.gmra.mrb[0].mxu0 %v8935
    %v9177 = vpop.f32.mrb[0].mxu0
    %v9178 = vadd.f32 0.0, %v9177
    %v9179 = vpop.f32.mrb[0].mxu0
    %v9180 = vadd.f32 0.0, %v9179
    %v9181 = vpop.f32.mrb[0].mxu0
    %v9182 = vadd.f32 0.0, %v9181
    %v9183 = vpop.f32.mrb[0].mxu0
    %v9184 = vadd.f32 0.0, %v9183
    %9185 = vmatprep.mubr.bf16.mxu0 %v8938
    %9186 = vmatmul.mubr.bf16.gmra.mrb[0].mxu0 %v8937
    %v9187 = vpop.f32.mrb[0].mxu0
    %v9188 = vadd.f32 0.0, %v9187
    %v9189 = vpop.f32.mrb[0].mxu0
    %v9190 = vadd.f32 0.0, %v9189
    %v9191 = vpop.f32.mrb[0].mxu0
    %v9192 = vadd.f32 0.0, %v9191
    %v9193 = vpop.f32.mrb[0].mxu0
    %v9194 = vadd.f32 0.0, %v9193
    %9195 = vmatprep.mubr.bf16.mxu0 %v8940
    %9196 = vmatmul.mubr.bf16.gmra.mrb[0].mxu0 %v8939
    %v9197 = vpop.f32.mrb[0].mxu0
    %v9198 = vadd.f32 0.0, %v9197
    %v9199 = vpop.f32.mrb[0].mxu0
    %v9200 = vadd.f32 0.0, %v9199
    %v9201 = vpop.f32.mrb[0].mxu0
    %v9202 = vadd.f32 0.0, %v9201
    %v9203 = vpop.f32.mrb[0].mxu0
    %v9204 = vadd.f32 0.0, %v9203
    %9205 = vmatprep.mubr.bf16.mxu0 %v8942
    %9206 = vmatmul.mubr.bf16.gmra.mrb[0].mxu0 %v8941
    %v9207 = vpop.f32.mrb[0].mxu0
    %v9208 = vadd.f32 0.0, %v9207
    %v9209 = vpop.f32.mrb[0].mxu0
    %v9210 = vadd.f32 0.0, %v9209
    %v9211 = vpop.f32.mrb[0].mxu0
    %v9212 = vadd.f32 0.0, %v9211
    %v9213 = vpop.f32.mrb[0].mxu0
    %v9214 = vadd.f32 0.0, %v9213
    %9215 = vmatprep.mubr.bf16.mxu0 %v8944
    %9216 = vmatmul.mubr.bf16.gmra.mrb[0].mxu0 %v8943
    %v9217 = vpop.f32.mrb[0].mxu0
    %v9218 = vadd.f32 0.0, %v9217
    %v9219 = vpop.f32.mrb[0].mxu0
    %v9220 = vadd.f32 0.0, %v9219
    %v9221 = vpop.f32.mrb[0].mxu0
    %v9222 = vadd.f32 0.0, %v9221
    %v9223 = vpop.f32.mrb[0].mxu0
    %v9224 = vadd.f32 0.0, %v9223
    %9225 = vmatprep.mubr.bf16.mxu0 %v8946
    %9226 = vmatmul.mubr.bf16.gmra.mrb[0].mxu0 %v8945
    %v9227 = vpop.f32.mrb[0].mxu0
    %v9228 = vadd.f32 0.0, %v9227
    %v9229 = vpop.f32.mrb[0].mxu0
    %v9230 = vadd.f32 0.0, %v9229
    %v9231 = vpop.f32.mrb[0].mxu0
    %v9232 = vadd.f32 0.0, %v9231
    %v9233 = vpop.f32.mrb[0].mxu0
    %v9234 = vadd.f32 0.0, %v9233
    %9235 = vmatprep.mubr.bf16.mxu0 %v8948
    %9236 = vmatmul.mubr.bf16.gmra.mrb[0].mxu0 %v8947
    %v9237 = vpop.f32.mrb[0].mxu0
    %v9238 = vadd.f32 0.0, %v9237
    %v9239 = vpop.f32.mrb[0].mxu0
    %v9240 = vadd.f32 0.0, %v9239
    %v9241 = vpop.f32.mrb[0].mxu0
    %v9242 = vadd.f32 0.0, %v9241
    %v9243 = vpop.f32.mrb[0].mxu0
    %v9244 = vadd.f32 0.0, %v9243
    %9245 = vmatprep.mubr.bf16.mxu0 %v8950
    %9246 = vmatmul.mubr.bf16.gmra.mrb[0].mxu0 %v8949
    %v9247 = vpop.f32.mrb[0].mxu0
    %v9248 = vadd.f32 0.0, %v9247
    %v9249 = vpop.f32.mrb[0].mxu0
    %v9250 = vadd.f32 0.0, %v9249
    %v9251 = vpop.f32.mrb[0].mxu0
    %v9252 = vadd.f32 0.0, %v9251
    %v9253 = vpop.f32.mrb[0].mxu0
    %v9254 = vadd.f32 0.0, %v9253
    %9255 = vmatprep.mubr.bf16.mxu0 %v8952
    %9256 = vmatmul.mubr.bf16.gmra.mrb[0].mxu0 %v8951
    %v9257 = vpop.f32.mrb[0].mxu0
    %v9258 = vadd.f32 0.0, %v9257
    %v9259 = vpop.f32.mrb[0].mxu0
    %v9260 = vadd.f32 0.0, %v9259
    %v9261 = vpop.f32.mrb[0].mxu0
    %v9262 = vadd.f32 0.0, %v9261
    %v9263 = vpop.f32.mrb[0].mxu0
    %v9264 = vadd.f32 0.0, %v9263
    %9265 = vdwg.mxu0
    %v9267 = vunpack.c.l.b16 %v8787
    %v9268 = vunpack.c.h.b16 %v8787
    %v9269 = vpack.c.b16 %v8893, %v9267
    %v9270 = vpack.c.b16 %v8894, %v9268
    %v9271 = vpack.c.b16 %v8897, %v8895
    %v9272 = vpack.c.b16 %v8898, %v8896
    %v9273 = vpack.c.b16 %v8901, %v8899
    %v9274 = vpack.c.b16 %v8902, %v8900
    %v9275 = vpack.c.b16 %v8905, %v8903
    %v9276 = vpack.c.b16 %v8906, %v8904
    %v9277 = vpack.c.b16 %v8909, %v8907
    %v9278 = vpack.c.b16 %v8910, %v8908
    %v9279 = vpack.c.b16 %v8913, %v8911
    %v9280 = vpack.c.b16 %v8914, %v8912
    %v9281 = vpack.c.b16 %v8917, %v8915
    %v9282 = vpack.c.b16 %v8918, %v8916
    %v9283 = vpack.c.b16 %v8921, %v8919
    %v9284 = vpack.c.b16 %v8922, %v8920
    %v9285 = vpack.c.b16 %v8925, %v8923
    %v9286 = vpack.c.b16 %v8926, %v8924
    %v9287 = vpack.c.b16 %v8929, %v8927
    %v9288 = vpack.c.b16 %v8930, %v8928
    %v9341 = vunpack.c.l.b16 %v8807
    %v9342 = vunpack.c.h.b16 %v8807
    %v9343 = vunpack.c.l.b16 %v8808
    %v9344 = vunpack.c.h.b16 %v8808
    %v9345 = vunpack.c.l.b16 %v8809
    %v9346 = vunpack.c.h.b16 %v8809
    %v9347 = vunpack.c.l.b16 %v8810
    %v9348 = vunpack.c.h.b16 %v8810
    %v9349 = vunpack.c.l.b16 %v8811
    %v9350 = vunpack.c.h.b16 %v8811
    %v9351 = vunpack.c.l.b16 %v8812
    %v9352 = vunpack.c.h.b16 %v8812
    %v9353 = vunpack.c.l.b16 %v8813
    %v9354 = vunpack.c.h.b16 %v8813
    %v9355 = vunpack.c.l.b16 %v8814
    %v9356 = vunpack.c.h.b16 %v8814
    %v9357 = vunpack.c.l.b16 %v8815
    %v9358 = vunpack.c.h.b16 %v8815
    %v9359 = vunpack.c.l.b16 %v8816
    %v9360 = vunpack.c.h.b16 %v8816
    %v9361 = vunpack.c.l.b16 %v8817
    %v9362 = vunpack.c.h.b16 %v8817
    %v9363 = vunpack.c.l.b16 %v8818
    %v9364 = vunpack.c.h.b16 %v8818
    %v9365 = vunpack.c.l.b16 %v8819
    %v9366 = vunpack.c.h.b16 %v8819
    %v9367 = vunpack.c.l.b16 %v8820
    %v9368 = vunpack.c.h.b16 %v8820
    %v9369 = vunpack.c.l.b16 %v8821
    %v9370 = vunpack.c.h.b16 %v8821
    %v9371 = vunpack.c.l.b16 %v8822
    %v9372 = vunpack.c.h.b16 %v8822
    %v9373 = vunpack.c.l.b16 %v8823
    %v9374 = vunpack.c.h.b16 %v8823
    %v9375 = vunpack.c.l.b16 %v8824
    %v9376 = vunpack.c.h.b16 %v8824
    %v9377 = vunpack.c.l.b16 %v8825
    %v9378 = vunpack.c.h.b16 %v8825
    %v9379 = vunpack.c.l.b16 %v8826
    %v9380 = vunpack.c.h.b16 %v8826
    %v9381 = vunpack.c.l.b16 %v8827
    %v9382 = vunpack.c.h.b16 %v8827
    %v9383 = vunpack.c.l.b16 %v8828
    %v9384 = vunpack.c.h.b16 %v8828
    %v9385 = vunpack.c.l.b16 %v8829
    %v9386 = vunpack.c.h.b16 %v8829
    %v9387 = vunpack.c.l.b16 %v8830
    %v9388 = vunpack.c.h.b16 %v8830
    %v9389 = vunpack.c.l.b16 %v8831
    %v9390 = vunpack.c.h.b16 %v8831
    %v9391 = vunpack.c.l.b16 %v8832
    %v9392 = vunpack.c.h.b16 %v8832
    %v9393 = vunpack.c.l.b16 %v8833
    %v9394 = vunpack.c.h.b16 %v8833
    %v9395 = vunpack.c.l.b16 %v8834
    %v9396 = vunpack.c.h.b16 %v8834
    %v9397 = vunpack.c.l.b16 %v8835
    %v9398 = vunpack.c.h.b16 %v8835
    %v9399 = vunpack.c.l.b16 %v8836
    %v9400 = vunpack.c.h.b16 %v8836
    %v9401 = vunpack.c.l.b16 %v8837
    %v9402 = vunpack.c.h.b16 %v8837
    %v9403 = vunpack.c.l.b16 %v8838
    %v9404 = vunpack.c.h.b16 %v8838
    %v9405 = vpack.c.b16 %v9343, %v9341
    %v9406 = vpack.c.b16 %v9344, %v9342
    %v9407 = vpack.c.b16 %v9347, %v9345
    %v9408 = vpack.c.b16 %v9348, %v9346
    %v9409 = vpack.c.b16 %v9351, %v9349
    %v9410 = vpack.c.b16 %v9352, %v9350
    %v9411 = vpack.c.b16 %v9355, %v9353
    %v9412 = vpack.c.b16 %v9356, %v9354
    %v9413 = vpack.c.b16 %v9359, %v9357
    %v9414 = vpack.c.b16 %v9360, %v9358
    %v9415 = vpack.c.b16 %v9363, %v9361
    %v9416 = vpack.c.b16 %v9364, %v9362
    %v9417 = vpack.c.b16 %v9367, %v9365
    %v9418 = vpack.c.b16 %v9368, %v9366
    %v9419 = vpack.c.b16 %v9371, %v9369
    %v9420 = vpack.c.b16 %v9372, %v9370
    %v9421 = vpack.c.b16 %v9375, %v9373
    %v9422 = vpack.c.b16 %v9376, %v9374
    %v9423 = vpack.c.b16 %v9379, %v9377
    %v9424 = vpack.c.b16 %v9380, %v9378
    %v9425 = vpack.c.b16 %v9383, %v9381
    %v9426 = vpack.c.b16 %v9384, %v9382
    %v9427 = vpack.c.b16 %v9387, %v9385
    %v9428 = vpack.c.b16 %v9388, %v9386
    %v9429 = vpack.c.b16 %v9391, %v9389
    %v9430 = vpack.c.b16 %v9392, %v9390
    %v9431 = vpack.c.b16 %v9395, %v9393
    %v9432 = vpack.c.b16 %v9396, %v9394
    %v9433 = vpack.c.b16 %v9399, %v9397
    %v9434 = vpack.c.b16 %v9400, %v9398
    %v9435 = vpack.c.b16 %v9403, %v9401
    %v9436 = vpack.c.b16 %v9404, %v9402
    %9469 = vmatprep.subr.bf16.mxu0 %v9406
    %9470 = vmatpush1.bf16.msra.mxu0 %v9405
    %9471 = vmatprep.subr.bf16.mxu0 %v9408
    %9472 = vmatpush1.bf16.msra.mxu0 %v9407
    %9473 = vmatprep.subr.bf16.mxu0 %v9410
    %9474 = vmatpush1.bf16.msra.mxu0 %v9409
    %9475 = vmatprep.subr.bf16.mxu0 %v9412
    %9476 = vmatpush1.bf16.msra.mxu0 %v9411
    %9477 = vmatprep.subr.bf16.mxu0 %v9414
    %9478 = vmatpush1.bf16.msra.mxu0 %v9413
    %9479 = vmatprep.subr.bf16.mxu0 %v9416
    %9480 = vmatpush1.bf16.msra.mxu0 %v9415
    %9481 = vmatprep.subr.bf16.mxu0 %v9418
    %9482 = vmatpush1.bf16.msra.mxu0 %v9417
    %9483 = vmatprep.subr.bf16.mxu0 %v9420
    %9484 = vmatpush1.bf16.msra.mxu0 %v9419
    %9485 = vmatprep.subr.bf16.mxu0 %v9422
    %9486 = vmatpush1.bf16.msra.mxu0 %v9421
    %9487 = vmatprep.subr.bf16.mxu0 %v9424
    %9488 = vmatpush1.bf16.msra.mxu0 %v9423
    %9489 = vmatprep.subr.bf16.mxu0 %v9426
    %9490 = vmatpush1.bf16.msra.mxu0 %v9425
    %9491 = vmatprep.subr.bf16.mxu0 %v9428
    %9492 = vmatpush1.bf16.msra.mxu0 %v9427
    %9493 = vmatprep.subr.bf16.mxu0 %v9430
    %9494 = vmatpush1.bf16.msra.mxu0 %v9429
    %9495 = vmatprep.subr.bf16.mxu0 %v9432
    %9496 = vmatpush1.bf16.msra.mxu0 %v9431
    %9497 = vmatprep.subr.bf16.mxu0 %v9434
    %9498 = vmatpush1.bf16.msra.mxu0 %v9433
    %9499 = vmatprep.subr.bf16.mxu0 %v9436
    %9500 = vmatpush1.bf16.msra.mxu0 %v9435
    %9501 = vmatprep.mubr.bf16.mxu0 %v9270
    %9502 = vmatmul.mubr.bf16.gmra.mrb[0].mxu0 %v9269
    %v9503 = vpop.f32.mrb[0].mxu0
    %v9504 = vadd.f32 %v9168, %v9503
    %v9505 = vpop.f32.mrb[0].mxu0
    %v9506 = vadd.f32 %v9170, %v9505
    %v9507 = vpop.f32.mrb[0].mxu0
    %v9508 = vadd.f32 %v9172, %v9507
    %v9509 = vpop.f32.mrb[0].mxu0
    %v9510 = vadd.f32 %v9174, %v9509
    %9511 = vmatprep.mubr.bf16.mxu0 %v9272
    %9512 = vmatmul.mubr.bf16.gmra.mrb[0].mxu0 %v9271
    %v9513 = vpop.f32.mrb[0].mxu0
    %v9514 = vadd.f32 %v9178, %v9513
    %v9515 = vpop.f32.mrb[0].mxu0
    %v9516 = vadd.f32 %v9180, %v9515
    %v9517 = vpop.f32.mrb[0].mxu0
    %v9518 = vadd.f32 %v9182, %v9517
    %v9519 = vpop.f32.mrb[0].mxu0
    %v9520 = vadd.f32 %v9184, %v9519
    %9521 = vmatprep.mubr.bf16.mxu0 %v9274
    %9522 = vmatmul.mubr.bf16.gmra.mrb[0].mxu0 %v9273
    %v9523 = vpop.f32.mrb[0].mxu0
    %v9524 = vadd.f32 %v9188, %v9523
    %v9525 = vpop.f32.mrb[0].mxu0
    %v9526 = vadd.f32 %v9190, %v9525
    %v9527 = vpop.f32.mrb[0].mxu0
    %v9528 = vadd.f32 %v9192, %v9527
    %v9529 = vpop.f32.mrb[0].mxu0
    %v9530 = vadd.f32 %v9194, %v9529
    %9531 = vmatprep.mubr.bf16.mxu0 %v9276
    %9532 = vmatmul.mubr.bf16.gmra.mrb[0].mxu0 %v9275
    %v9533 = vpop.f32.mrb[0].mxu0
    %v9534 = vadd.f32 %v9198, %v9533
    %v9535 = vpop.f32.mrb[0].mxu0
    %v9536 = vadd.f32 %v9200, %v9535
    %v9537 = vpop.f32.mrb[0].mxu0
    %v9538 = vadd.f32 %v9202, %v9537
    %v9539 = vpop.f32.mrb[0].mxu0
    %v9540 = vadd.f32 %v9204, %v9539
    %9541 = vmatprep.mubr.bf16.mxu0 %v9278
    %9542 = vmatmul.mubr.bf16.gmra.mrb[0].mxu0 %v9277
    %v9543 = vpop.f32.mrb[0].mxu0
    %v9544 = vadd.f32 %v9208, %v9543
    %v9545 = vpop.f32.mrb[0].mxu0
    %v9546 = vadd.f32 %v9210, %v9545
    %v9547 = vpop.f32.mrb[0].mxu0
    %v9548 = vadd.f32 %v9212, %v9547
    %v9549 = vpop.f32.mrb[0].mxu0
    %v9550 = vadd.f32 %v9214, %v9549
    %9551 = vmatprep.mubr.bf16.mxu0 %v9280
    %9552 = vmatmul.mubr.bf16.gmra.mrb[0].mxu0 %v9279
    %v9553 = vpop.f32.mrb[0].mxu0
    %v9554 = vadd.f32 %v9218, %v9553
    %v9555 = vpop.f32.mrb[0].mxu0
    %v9556 = vadd.f32 %v9220, %v9555
    %v9557 = vpop.f32.mrb[0].mxu0
    %v9558 = vadd.f32 %v9222, %v9557
    %v9559 = vpop.f32.mrb[0].mxu0
    %v9560 = vadd.f32 %v9224, %v9559
    %9561 = vmatprep.mubr.bf16.mxu0 %v9282
    %9562 = vmatmul.mubr.bf16.gmra.mrb[0].mxu0 %v9281
    %v9563 = vpop.f32.mrb[0].mxu0
    %v9564 = vadd.f32 %v9228, %v9563
    %v9565 = vpop.f32.mrb[0].mxu0
    %v9566 = vadd.f32 %v9230, %v9565
    %v9567 = vpop.f32.mrb[0].mxu0
    %v9568 = vadd.f32 %v9232, %v9567
    %v9569 = vpop.f32.mrb[0].mxu0
    %v9570 = vadd.f32 %v9234, %v9569
    %9571 = vmatprep.mubr.bf16.mxu0 %v9284
    %9572 = vmatmul.mubr.bf16.gmra.mrb[0].mxu0 %v9283
    %v9573 = vpop.f32.mrb[0].mxu0
    %v9574 = vadd.f32 %v9238, %v9573
    %v9575 = vpop.f32.mrb[0].mxu0
    %v9576 = vadd.f32 %v9240, %v9575
    %v9577 = vpop.f32.mrb[0].mxu0
    %v9578 = vadd.f32 %v9242, %v9577
    %v9579 = vpop.f32.mrb[0].mxu0
    %v9580 = vadd.f32 %v9244, %v9579
    %9581 = vmatprep.mubr.bf16.mxu0 %v9286
    %9582 = vmatmul.mubr.bf16.gmra.mrb[0].mxu0 %v9285
    %v9583 = vpop.f32.mrb[0].mxu0
    %v9584 = vadd.f32 %v9248, %v9583
    %v9585 = vpop.f32.mrb[0].mxu0
    %v9586 = vadd.f32 %v9250, %v9585
    %v9587 = vpop.f32.mrb[0].mxu0
    %v9588 = vadd.f32 %v9252, %v9587
    %v9589 = vpop.f32.mrb[0].mxu0
    %v9590 = vadd.f32 %v9254, %v9589
    %9591 = vmatprep.mubr.bf16.mxu0 %v9288
    %9592 = vmatmul.mubr.bf16.gmra.mrb[0].mxu0 %v9287
    %v9593 = vpop.f32.mrb[0].mxu0
    %v9594 = vadd.f32 %v9258, %v9593
    %v9595 = vpop.f32.mrb[0].mxu0
    %v9596 = vadd.f32 %v9260, %v9595
    %v9597 = vpop.f32.mrb[0].mxu0
    %v9598 = vadd.f32 %v9262, %v9597
    %v9599 = vpop.f32.mrb[0].mxu0
    %v9600 = vadd.f32 %v9264, %v9599
    %9601 = vdwg.mxu0
    %v9602 = vld [vmem:[#allocation2 + $0x10] sm:$0xff]
    %v9603 = vld [vmem:[#allocation2 + $0x18] sm:$0xff]
    %v9604 = vld [vmem:[#allocation2 + $0x20] sm:$0xff]
    %v9605 = vld [vmem:[#allocation2 + $0x28] sm:$0xff]
    %v9606 = vld [vmem:[#allocation2 + $0x30] sm:$0xff]
    %v9607 = vld [vmem:[#allocation2 + $0x38] sm:$0xff]
    %v9608 = vld [vmem:[#allocation2 + $0x40] sm:$0xff]
    %v9609 = vld [vmem:[#allocation2 + $0x48] sm:$0xff]
    %v9610 = vld [vmem:[#allocation2 + $0x50] sm:$0xff]
    %v9611 = vld [vmem:[#allocation2 + $0x58] sm:$0xff]
    %v9612 = vld [vmem:[#allocation2 + $0x60] sm:$0xff]
    %v9613 = vld [vmem:[#allocation2 + $0x68] sm:$0xff]
    %v9614 = vld [vmem:[#allocation2 + $0x70] sm:$0xff]
    %v9615 = vld [vmem:[#allocation2 + $0x78] sm:$0xff]
    %v9616 = vld [vmem:[#allocation2 + $0x80] sm:$0xff]
    %v9617 = vld [vmem:[#allocation2 + $0x88] sm:$0xff]
    %v9618 = vld [vmem:[#allocation2 + $0x90] sm:$0xff]
    %v9619 = vld [vmem:[#allocation2 + $0x98] sm:$0xff]
    %v9620 = vld [vmem:[#allocation2 + $0xa0] sm:$0xff]
    %v9621 = vld [vmem:[#allocation2 + $0xa8] sm:$0xff]
    %s9622 = scalar_lea.vmem [#allocation5], 512
    %v9623 = vld [vmem:[%s9622] sm:$0xff]
    %v9624 = vld [vmem:[%s9622 + $0x8] sm:$0xff]
    %v9625 = vld [vmem:[%s9622 + $0x10] sm:$0xff]
    %v9626 = vld [vmem:[%s9622 + $0x18] sm:$0xff]
    %v9627 = vld [vmem:[%s9622 + $0x20] sm:$0xff]
    %v9628 = vld [vmem:[%s9622 + $0x28] sm:$0xff]
    %v9629 = vld [vmem:[%s9622 + $0x30] sm:$0xff]
    %v9630 = vld [vmem:[%s9622 + $0x38] sm:$0xff]
    %v9631 = vld [vmem:[%s9622 + $0x40] sm:$0xff]
    %v9632 = vld [vmem:[%s9622 + $0x48] sm:$0xff]
    %v9633 = vld [vmem:[%s9622 + $0x50] sm:$0xff]
    %v9634 = vld [vmem:[%s9622 + $0x58] sm:$0xff]
    %v9635 = vld [vmem:[%s9622 + $0x60] sm:$0xff]
    %v9636 = vld [vmem:[%s9622 + $0x68] sm:$0xff]
    %v9637 = vld [vmem:[%s9622 + $0x70] sm:$0xff]
    %v9638 = vld [vmem:[%s9622 + $0x78] sm:$0xff]
    %v9639 = vld [vmem:[%s9622 + $0x80] sm:$0xff]
    %v9640 = vld [vmem:[%s9622 + $0x88] sm:$0xff]
    %v9641 = vld [vmem:[%s9622 + $0x90] sm:$0xff]
    %v9642 = vld [vmem:[%s9622 + $0x98] sm:$0xff]
    %v9643 = vld [vmem:[%s9622 + $0xa0] sm:$0xff]
    %v9644 = vld [vmem:[%s9622 + $0xa8] sm:$0xff]
    %v9645 = vld [vmem:[%s9622 + $0xb0] sm:$0xff]
    %v9646 = vld [vmem:[%s9622 + $0xb8] sm:$0xff]
    %v9647 = vld [vmem:[%s9622 + $0xc0] sm:$0xff]
    %v9648 = vld [vmem:[%s9622 + $0xc8] sm:$0xff]
    %v9649 = vld [vmem:[%s9622 + $0xd0] sm:$0xff]
    %v9650 = vld [vmem:[%s9622 + $0xd8] sm:$0xff]
    %v9651 = vld [vmem:[%s9622 + $0xe0] sm:$0xff]
    %v9652 = vld [vmem:[%s9622 + $0xe8] sm:$0xff]
    %v9653 = vld [vmem:[%s9622 + $0xf0] sm:$0xff]
    %v9654 = vld [vmem:[%s9622 + $0xf8] sm:$0xff]
    %v9675 = vunpack.c.l.b16 %v9602
    %v9676 = vunpack.c.h.b16 %v9602
    %v9677 = vunpack.c.l.b16 %v9603
    %v9678 = vunpack.c.h.b16 %v9603
    %v9679 = vunpack.c.l.b16 %v9604
    %v9680 = vunpack.c.h.b16 %v9604
    %v9681 = vunpack.c.l.b16 %v9605
    %v9682 = vunpack.c.h.b16 %v9605
    %v9683 = vunpack.c.l.b16 %v9606
    %v9684 = vunpack.c.h.b16 %v9606
    %v9685 = vunpack.c.l.b16 %v9607
    %v9686 = vunpack.c.h.b16 %v9607
    %v9687 = vunpack.c.l.b16 %v9608
    %v9688 = vunpack.c.h.b16 %v9608
    %v9689 = vunpack.c.l.b16 %v9609
    %v9690 = vunpack.c.h.b16 %v9609
    %v9691 = vunpack.c.l.b16 %v9610
    %v9692 = vunpack.c.h.b16 %v9610
    %v9693 = vunpack.c.l.b16 %v9611
    %v9694 = vunpack.c.h.b16 %v9611
    %v9695 = vunpack.c.l.b16 %v9612
    %v9696 = vunpack.c.h.b16 %v9612
    %v9697 = vunpack.c.l.b16 %v9613
    %v9698 = vunpack.c.h.b16 %v9613
    %v9699 = vunpack.c.l.b16 %v9614
    %v9700 = vunpack.c.h.b16 %v9614
    %v9701 = vunpack.c.l.b16 %v9615
    %v9702 = vunpack.c.h.b16 %v9615
    %v9703 = vunpack.c.l.b16 %v9616
    %v9704 = vunpack.c.h.b16 %v9616
    %v9705 = vunpack.c.l.b16 %v9617
    %v9706 = vunpack.c.h.b16 %v9617
    %v9707 = vunpack.c.l.b16 %v9618
    %v9708 = vunpack.c.h.b16 %v9618
    %v9709 = vunpack.c.l.b16 %v9619
    %v9710 = vunpack.c.h.b16 %v9619
    %v9711 = vunpack.c.l.b16 %v9620
    %v9712 = vunpack.c.h.b16 %v9620
    %v9713 = vunpack.c.l.b16 %v9621
    %v9714 = vunpack.c.h.b16 %v9621
    %v9715 = vpack.c.b16 %v9677, %v9675
    %v9716 = vpack.c.b16 %v9678, %v9676
    %v9717 = vpack.c.b16 %v9681, %v9679
    %v9718 = vpack.c.b16 %v9682, %v9680
    %v9719 = vpack.c.b16 %v9685, %v9683
    %v9720 = vpack.c.b16 %v9686, %v9684
    %v9721 = vpack.c.b16 %v9689, %v9687
    %v9722 = vpack.c.b16 %v9690, %v9688
    %v9723 = vpack.c.b16 %v9693, %v9691
    %v9724 = vpack.c.b16 %v9694, %v9692
    %v9725 = vpack.c.b16 %v9697, %v9695
    %v9726 = vpack.c.b16 %v9698, %v9696
    %v9727 = vpack.c.b16 %v9701, %v9699
    %v9728 = vpack.c.b16 %v9702, %v9700
    %v9729 = vpack.c.b16 %v9705, %v9703
    %v9730 = vpack.c.b16 %v9706, %v9704
    %v9731 = vpack.c.b16 %v9709, %v9707
    %v9732 = vpack.c.b16 %v9710, %v9708
    %v9733 = vpack.c.b16 %v9713, %v9711
    %v9734 = vpack.c.b16 %v9714, %v9712
    %v9787 = vunpack.c.l.b16 %v9623
    %v9788 = vunpack.c.h.b16 %v9623
    %v9789 = vunpack.c.l.b16 %v9624
    %v9790 = vunpack.c.h.b16 %v9624
    %v9791 = vunpack.c.l.b16 %v9625
    %v9792 = vunpack.c.h.b16 %v9625
    %v9793 = vunpack.c.l.b16 %v9626
    %v9794 = vunpack.c.h.b16 %v9626
    %v9795 = vunpack.c.l.b16 %v9627
    %v9796 = vunpack.c.h.b16 %v9627
    %v9797 = vunpack.c.l.b16 %v9628
    %v9798 = vunpack.c.h.b16 %v9628
    %v9799 = vunpack.c.l.b16 %v9629
    %v9800 = vunpack.c.h.b16 %v9629
    %v9801 = vunpack.c.l.b16 %v9630
    %v9802 = vunpack.c.h.b16 %v9630
    %v9803 = vunpack.c.l.b16 %v9631
    %v9804 = vunpack.c.h.b16 %v9631
    %v9805 = vunpack.c.l.b16 %v9632
    %v9806 = vunpack.c.h.b16 %v9632
    %v9807 = vunpack.c.l.b16 %v9633
    %v9808 = vunpack.c.h.b16 %v9633
    %v9809 = vunpack.c.l.b16 %v9634
    %v9810 = vunpack.c.h.b16 %v9634
    %v9811 = vunpack.c.l.b16 %v9635
    %v9812 = vunpack.c.h.b16 %v9635
    %v9813 = vunpack.c.l.b16 %v9636
    %v9814 = vunpack.c.h.b16 %v9636
    %v9815 = vunpack.c.l.b16 %v9637
    %v9816 = vunpack.c.h.b16 %v9637
    %v9817 = vunpack.c.l.b16 %v9638
    %v9818 = vunpack.c.h.b16 %v9638
    %v9819 = vunpack.c.l.b16 %v9639
    %v9820 = vunpack.c.h.b16 %v9639
    %v9821 = vunpack.c.l.b16 %v9640
    %v9822 = vunpack.c.h.b16 %v9640
    %v9823 = vunpack.c.l.b16 %v9641
    %v9824 = vunpack.c.h.b16 %v9641
    %v9825 = vunpack.c.l.b16 %v9642
    %v9826 = vunpack.c.h.b16 %v9642
    %v9827 = vunpack.c.l.b16 %v9643
    %v9828 = vunpack.c.h.b16 %v9643
    %v9829 = vunpack.c.l.b16 %v9644
    %v9830 = vunpack.c.h.b16 %v9644
    %v9831 = vunpack.c.l.b16 %v9645
    %v9832 = vunpack.c.h.b16 %v9645
    %v9833 = vunpack.c.l.b16 %v9646
    %v9834 = vunpack.c.h.b16 %v9646
    %v9835 = vunpack.c.l.b16 %v9647
    %v9836 = vunpack.c.h.b16 %v9647
    %v9837 = vunpack.c.l.b16 %v9648
    %v9838 = vunpack.c.h.b16 %v9648
    %v9839 = vunpack.c.l.b16 %v9649
    %v9840 = vunpack.c.h.b16 %v9649
    %v9841 = vunpack.c.l.b16 %v9650
    %v9842 = vunpack.c.h.b16 %v9650
    %v9843 = vunpack.c.l.b16 %v9651
    %v9844 = vunpack.c.h.b16 %v9651
    %v9845 = vunpack.c.l.b16 %v9652
    %v9846 = vunpack.c.h.b16 %v9652
    %v9847 = vunpack.c.l.b16 %v9653
    %v9848 = vunpack.c.h.b16 %v9653
    %v9849 = vunpack.c.l.b16 %v9654
    %v9850 = vunpack.c.h.b16 %v9654
    %v9851 = vpack.c.b16 %v9789, %v9787
    %v9852 = vpack.c.b16 %v9790, %v9788
    %v9853 = vpack.c.b16 %v9793, %v9791
    %v9854 = vpack.c.b16 %v9794, %v9792
    %v9855 = vpack.c.b16 %v9797, %v9795
    %v9856 = vpack.c.b16 %v9798, %v9796
    %v9857 = vpack.c.b16 %v9801, %v9799
    %v9858 = vpack.c.b16 %v9802, %v9800
    %v9859 = vpack.c.b16 %v9805, %v9803
    %v9860 = vpack.c.b16 %v9806, %v9804
    %v9861 = vpack.c.b16 %v9809, %v9807
    %v9862 = vpack.c.b16 %v9810, %v9808
    %v9863 = vpack.c.b16 %v9813, %v9811
    %v9864 = vpack.c.b16 %v9814, %v9812
    %v9865 = vpack.c.b16 %v9817, %v9815
    %v9866 = vpack.c.b16 %v9818, %v9816
    %v9867 = vpack.c.b16 %v9821, %v9819
    %v9868 = vpack.c.b16 %v9822, %v9820
    %v9869 = vpack.c.b16 %v9825, %v9823
    %v9870 = vpack.c.b16 %v9826, %v9824
    %v9871 = vpack.c.b16 %v9829, %v9827
    %v9872 = vpack.c.b16 %v9830, %v9828
    %v9873 = vpack.c.b16 %v9833, %v9831
    %v9874 = vpack.c.b16 %v9834, %v9832
    %v9875 = vpack.c.b16 %v9837, %v9835
    %v9876 = vpack.c.b16 %v9838, %v9836
    %v9877 = vpack.c.b16 %v9841, %v9839
    %v9878 = vpack.c.b16 %v9842, %v9840
    %v9879 = vpack.c.b16 %v9845, %v9843
    %v9880 = vpack.c.b16 %v9846, %v9844
    %v9881 = vpack.c.b16 %v9849, %v9847
    %v9882 = vpack.c.b16 %v9850, %v9848
    %9915 = vmatprep.subr.bf16.mxu0 %v9852
    %9916 = vmatpush1.bf16.msra.mxu0 %v9851
    %9917 = vmatprep.subr.bf16.mxu0 %v9854
    %9918 = vmatpush1.bf16.msra.mxu0 %v9853
    %9919 = vmatprep.subr.bf16.mxu0 %v9856
    %9920 = vmatpush1.bf16.msra.mxu0 %v9855
    %9921 = vmatprep.subr.bf16.mxu0 %v9858
    %9922 = vmatpush1.bf16.msra.mxu0 %v9857
    %9923 = vmatprep.subr.bf16.mxu0 %v9860
    %9924 = vmatpush1.bf16.msra.mxu0 %v9859
    %9925 = vmatprep.subr.bf16.mxu0 %v9862
    %9926 = vmatpush1.bf16.msra.mxu0 %v9861
    %9927 = vmatprep.subr.bf16.mxu0 %v9864
    %9928 = vmatpush1.bf16.msra.mxu0 %v9863
    %9929 = vmatprep.subr.bf16.mxu0 %v9866
    %9930 = vmatpush1.bf16.msra.mxu0 %v9865
    %9931 = vmatprep.subr.bf16.mxu0 %v9868
    %9932 = vmatpush1.bf16.msra.mxu0 %v9867
    %9933 = vmatprep.subr.bf16.mxu0 %v9870
    %9934 = vmatpush1.bf16.msra.mxu0 %v9869
    %9935 = vmatprep.subr.bf16.mxu0 %v9872
    %9936 = vmatpush1.bf16.msra.mxu0 %v9871
    %9937 = vmatprep.subr.bf16.mxu0 %v9874
    %9938 = vmatpush1.bf16.msra.mxu0 %v9873
    %9939 = vmatprep.subr.bf16.mxu0 %v9876
    %9940 = vmatpush1.bf16.msra.mxu0 %v9875
    %9941 = vmatprep.subr.bf16.mxu0 %v9878
    %9942 = vmatpush1.bf16.msra.mxu0 %v9877
    %9943 = vmatprep.subr.bf16.mxu0 %v9880
    %9944 = vmatpush1.bf16.msra.mxu0 %v9879
    %9945 = vmatprep.subr.bf16.mxu0 %v9882
    %9946 = vmatpush1.bf16.msra.mxu0 %v9881
    %9947 = vmatprep.mubr.bf16.mxu0 %v9716
    %9948 = vmatmul.mubr.bf16.gmra.mrb[0].mxu0 %v9715
    %v9949 = vpop.f32.mrb[0].mxu0
    %v9950 = vadd.f32 0.0, %v9949
    %v9951 = vpop.f32.mrb[0].mxu0
    %v9952 = vadd.f32 0.0, %v9951
    %v9953 = vpop.f32.mrb[0].mxu0
    %v9954 = vadd.f32 0.0, %v9953
    %v9955 = vpop.f32.mrb[0].mxu0
    %v9956 = vadd.f32 0.0, %v9955
    %9957 = vmatprep.mubr.bf16.mxu0 %v9718
    %9958 = vmatmul.mubr.bf16.gmra.mrb[0].mxu0 %v9717
    %v9959 = vpop.f32.mrb[0].mxu0
    %v9960 = vadd.f32 0.0, %v9959
    %v9961 = vpop.f32.mrb[0].mxu0
    %v9962 = vadd.f32 0.0, %v9961
    %v9963 = vpop.f32.mrb[0].mxu0
    %v9964 = vadd.f32 0.0, %v9963
    %v9965 = vpop.f32.mrb[0].mxu0
    %v9966 = vadd.f32 0.0, %v9965
    %9967 = vmatprep.mubr.bf16.mxu0 %v9720
    %9968 = vmatmul.mubr.bf16.gmra.mrb[0].mxu0 %v9719
    %v9969 = vpop.f32.mrb[0].mxu0
    %v9970 = vadd.f32 0.0, %v9969
    %v9971 = vpop.f32.mrb[0].mxu0
    %v9972 = vadd.f32 0.0, %v9971
    %v9973 = vpop.f32.mrb[0].mxu0
    %v9974 = vadd.f32 0.0, %v9973
    %v9975 = vpop.f32.mrb[0].mxu0
    %v9976 = vadd.f32 0.0, %v9975
    %9977 = vmatprep.mubr.bf16.mxu0 %v9722
    %9978 = vmatmul.mubr.bf16.gmra.mrb[0].mxu0 %v9721
    %v9979 = vpop.f32.mrb[0].mxu0
    %v9980 = vadd.f32 0.0, %v9979
    %v9981 = vpop.f32.mrb[0].mxu0
    %v9982 = vadd.f32 0.0, %v9981
    %v9983 = vpop.f32.mrb[0].mxu0
    %v9984 = vadd.f32 0.0, %v9983
    %v9985 = vpop.f32.mrb[0].mxu0
    %v9986 = vadd.f32 0.0, %v9985
    %9987 = vmatprep.mubr.bf16.mxu0 %v9724
    %9988 = vmatmul.mubr.bf16.gmra.mrb[0].mxu0 %v9723
    %v9989 = vpop.f32.mrb[0].mxu0
    %v9990 = vadd.f32 0.0, %v9989
    %v9991 = vpop.f32.mrb[0].mxu0
    %v9992 = vadd.f32 0.0, %v9991
    %v9993 = vpop.f32.mrb[0].mxu0
    %v9994 = vadd.f32 0.0, %v9993
    %v9995 = vpop.f32.mrb[0].mxu0
    %v9996 = vadd.f32 0.0, %v9995
    %9997 = vmatprep.mubr.bf16.mxu0 %v9726
    %9998 = vmatmul.mubr.bf16.gmra.mrb[0].mxu0 %v9725
    %v9999 = vpop.f32.mrb[0].mxu0
    %v10000 = vadd.f32 0.0, %v9999
    %v10001 = vpop.f32.mrb[0].mxu0
    %v10002 = vadd.f32 0.0, %v10001
    %v10003 = vpop.f32.mrb[0].mxu0
    %v10004 = vadd.f32 0.0, %v10003
    %v10005 = vpop.f32.mrb[0].mxu0
    %v10006 = vadd.f32 0.0, %v10005
    %10007 = vmatprep.mubr.bf16.mxu0 %v9728
    %10008 = vmatmul.mubr.bf16.gmra.mrb[0].mxu0 %v9727
    %v10009 = vpop.f32.mrb[0].mxu0
    %v10010 = vadd.f32 0.0, %v10009
    %v10011 = vpop.f32.mrb[0].mxu0
    %v10012 = vadd.f32 0.0, %v10011
    %v10013 = vpop.f32.mrb[0].mxu0
    %v10014 = vadd.f32 0.0, %v10013
    %v10015 = vpop.f32.mrb[0].mxu0
    %v10016 = vadd.f32 0.0, %v10015
    %10017 = vmatprep.mubr.bf16.mxu0 %v9730
    %10018 = vmatmul.mubr.bf16.gmra.mrb[0].mxu0 %v9729
    %v10019 = vpop.f32.mrb[0].mxu0
    %v10020 = vadd.f32 0.0, %v10019
    %v10021 = vpop.f32.mrb[0].mxu0
    %v10022 = vadd.f32 0.0, %v10021
    %v10023 = vpop.f32.mrb[0].mxu0
    %v10024 = vadd.f32 0.0, %v10023
    %v10025 = vpop.f32.mrb[0].mxu0
    %v10026 = vadd.f32 0.0, %v10025
    %10027 = vmatprep.mubr.bf16.mxu0 %v9732
    %10028 = vmatmul.mubr.bf16.gmra.mrb[0].mxu0 %v9731
    %v10029 = vpop.f32.mrb[0].mxu0
    %v10030 = vadd.f32 0.0, %v10029
    %v10031 = vpop.f32.mrb[0].mxu0
    %v10032 = vadd.f32 0.0, %v10031
    %v10033 = vpop.f32.mrb[0].mxu0
    %v10034 = vadd.f32 0.0, %v10033
    %v10035 = vpop.f32.mrb[0].mxu0
    %v10036 = vadd.f32 0.0, %v10035
    %10037 = vmatprep.mubr.bf16.mxu0 %v9734
    %10038 = vmatmul.mubr.bf16.gmra.mrb[0].mxu0 %v9733
    %v10039 = vpop.f32.mrb[0].mxu0
    %v10040 = vadd.f32 0.0, %v10039
    %v10041 = vpop.f32.mrb[0].mxu0
    %v10042 = vadd.f32 0.0, %v10041
    %v10043 = vpop.f32.mrb[0].mxu0
    %v10044 = vadd.f32 0.0, %v10043
    %v10045 = vpop.f32.mrb[0].mxu0
    %v10046 = vadd.f32 0.0, %v10045
    %10047 = vdwg.mxu0
    %v10048 = vadd.f32 %v9504, %v9950
    %v10049 = vadd.f32 %v9506, %v9952
    %v10050 = vadd.f32 %v9508, %v9954
    %v10051 = vadd.f32 %v9510, %v9956
    %v10052 = vadd.f32 %v9514, %v9960
    %v10053 = vadd.f32 %v9516, %v9962
    %v10054 = vadd.f32 %v9518, %v9964
    %v10055 = vadd.f32 %v9520, %v9966
    %v10056 = vadd.f32 %v9524, %v9970
    %v10057 = vadd.f32 %v9526, %v9972
    %v10058 = vadd.f32 %v9528, %v9974
    %v10059 = vadd.f32 %v9530, %v9976
    %v10060 = vadd.f32 %v9534, %v9980
    %v10061 = vadd.f32 %v9536, %v9982
    %v10062 = vadd.f32 %v9538, %v9984
    %v10063 = vadd.f32 %v9540, %v9986
    %v10064 = vadd.f32 %v9544, %v9990
    %v10065 = vadd.f32 %v9546, %v9992
    %v10066 = vadd.f32 %v9548, %v9994
    %v10067 = vadd.f32 %v9550, %v9996
    %v10068 = vadd.f32 %v9554, %v10000
    %v10069 = vadd.f32 %v9556, %v10002
    %v10070 = vadd.f32 %v9558, %v10004
    %v10071 = vadd.f32 %v9560, %v10006
    %v10072 = vadd.f32 %v9564, %v10010
    %v10073 = vadd.f32 %v9566, %v10012
    %v10074 = vadd.f32 %v9568, %v10014
    %v10075 = vadd.f32 %v9570, %v10016
    %v10076 = vadd.f32 %v9574, %v10020
    %v10077 = vadd.f32 %v9576, %v10022
    %v10078 = vadd.f32 %v9578, %v10024
    %v10079 = vadd.f32 %v9580, %v10026
    %v10080 = vadd.f32 %v9584, %v10030
    %v10081 = vadd.f32 %v9586, %v10032
    %v10082 = vadd.f32 %v9588, %v10034
    %v10083 = vadd.f32 %v9590, %v10036
    %v10084 = vadd.f32 %v9594, %v10040
    %v10085 = vadd.f32 %v9596, %v10042
    %v10086 = vadd.f32 %v9598, %v10044
    %v10087 = vadd.f32 %v9600, %v10046
    %v10088 = vld [vmem:[#allocation2 + $0x18] sm:$0xff]
    %v10089 = vld [vmem:[#allocation2 + $0x20] sm:$0xff]
    %v10090 = vld [vmem:[#allocation2 + $0x28] sm:$0xff]
    %v10091 = vld [vmem:[#allocation2 + $0x30] sm:$0xff]
    %v10092 = vld [vmem:[#allocation2 + $0x38] sm:$0xff]
    %v10093 = vld [vmem:[#allocation2 + $0x40] sm:$0xff]
    %v10094 = vld [vmem:[#allocation2 + $0x48] sm:$0xff]
    %v10095 = vld [vmem:[#allocation2 + $0x50] sm:$0xff]
    %v10096 = vld [vmem:[#allocation2 + $0x58] sm:$0xff]
    %v10097 = vld [vmem:[#allocation2 + $0x60] sm:$0xff]
    %v10098 = vld [vmem:[#allocation2 + $0x68] sm:$0xff]
    %v10099 = vld [vmem:[#allocation2 + $0x70] sm:$0xff]
    %v10100 = vld [vmem:[#allocation2 + $0x78] sm:$0xff]
    %v10101 = vld [vmem:[#allocation2 + $0x80] sm:$0xff]
    %v10102 = vld [vmem:[#allocation2 + $0x88] sm:$0xff]
    %v10103 = vld [vmem:[#allocation2 + $0x90] sm:$0xff]
    %v10104 = vld [vmem:[#allocation2 + $0x98] sm:$0xff]
    %v10105 = vld [vmem:[#allocation2 + $0xa0] sm:$0xff]
    %v10106 = vld [vmem:[#allocation2 + $0xa8] sm:$0xff]
    %v10107 = vld [vmem:[#allocation2 + $0xb0] sm:$0xff]
    %s10108 = scalar_lea.vmem [#allocation5], 768
    %v10109 = vld [vmem:[%s10108] sm:$0xff]
    %v10110 = vld [vmem:[%s10108 + $0x8] sm:$0xff]
    %v10111 = vld [vmem:[%s10108 + $0x10] sm:$0xff]
    %v10112 = vld [vmem:[%s10108 + $0x18] sm:$0xff]
    %v10113 = vld [vmem:[%s10108 + $0x20] sm:$0xff]
    %v10114 = vld [vmem:[%s10108 + $0x28] sm:$0xff]
    %v10115 = vld [vmem:[%s10108 + $0x30] sm:$0xff]
    %v10116 = vld [vmem:[%s10108 + $0x38] sm:$0xff]
    %v10117 = vld [vmem:[%s10108 + $0x40] sm:$0xff]
    %v10118 = vld [vmem:[%s10108 + $0x48] sm:$0xff]
    %v10119 = vld [vmem:[%s10108 + $0x50] sm:$0xff]
    %v10120 = vld [vmem:[%s10108 + $0x58] sm:$0xff]
    %v10121 = vld [vmem:[%s10108 + $0x60] sm:$0xff]
    %v10122 = vld [vmem:[%s10108 + $0x68] sm:$0xff]
    %v10123 = vld [vmem:[%s10108 + $0x70] sm:$0xff]
    %v10124 = vld [vmem:[%s10108 + $0x78] sm:$0xff]
    %v10125 = vld [vmem:[%s10108 + $0x80] sm:$0xff]
    %v10126 = vld [vmem:[%s10108 + $0x88] sm:$0xff]
    %v10127 = vld [vmem:[%s10108 + $0x90] sm:$0xff]
    %v10128 = vld [vmem:[%s10108 + $0x98] sm:$0xff]
    %v10129 = vld [vmem:[%s10108 + $0xa0] sm:$0xff]
    %v10130 = vld [vmem:[%s10108 + $0xa8] sm:$0xff]
    %v10131 = vld [vmem:[%s10108 + $0xb0] sm:$0xff]
    %v10132 = vld [vmem:[%s10108 + $0xb8] sm:$0xff]
    %v10133 = vld [vmem:[%s10108 + $0xc0] sm:$0xff]
    %v10134 = vld [vmem:[%s10108 + $0xc8] sm:$0xff]
    %v10135 = vld [vmem:[%s10108 + $0xd0] sm:$0xff]
    %v10136 = vld [vmem:[%s10108 + $0xd8] sm:$0xff]
    %v10137 = vld [vmem:[%s10108 + $0xe0] sm:$0xff]
    %v10138 = vld [vmem:[%s10108 + $0xe8] sm:$0xff]
    %v10139 = vld [vmem:[%s10108 + $0xf0] sm:$0xff]
    %v10140 = vld [vmem:[%s10108 + $0xf8] sm:$0xff]
    %v10161 = vunpack.c.l.b16 %v10088
    %v10162 = vunpack.c.h.b16 %v10088
    %v10163 = vunpack.c.l.b16 %v10089
    %v10164 = vunpack.c.h.b16 %v10089
    %v10165 = vunpack.c.l.b16 %v10090
    %v10166 = vunpack.c.h.b16 %v10090
    %v10167 = vunpack.c.l.b16 %v10091
    %v10168 = vunpack.c.h.b16 %v10091
    %v10169 = vunpack.c.l.b16 %v10092
    %v10170 = vunpack.c.h.b16 %v10092
    %v10171 = vunpack.c.l.b16 %v10093
    %v10172 = vunpack.c.h.b16 %v10093
    %v10173 = vunpack.c.l.b16 %v10094
    %v10174 = vunpack.c.h.b16 %v10094
    %v10175 = vunpack.c.l.b16 %v10095
    %v10176 = vunpack.c.h.b16 %v10095
    %v10177 = vunpack.c.l.b16 %v10096
    %v10178 = vunpack.c.h.b16 %v10096
    %v10179 = vunpack.c.l.b16 %v10097
    %v10180 = vunpack.c.h.b16 %v10097
    %v10181 = vunpack.c.l.b16 %v10098
    %v10182 = vunpack.c.h.b16 %v10098
    %v10183 = vunpack.c.l.b16 %v10099
    %v10184 = vunpack.c.h.b16 %v10099
    %v10185 = vunpack.c.l.b16 %v10100
    %v10186 = vunpack.c.h.b16 %v10100
    %v10187 = vunpack.c.l.b16 %v10101
    %v10188 = vunpack.c.h.b16 %v10101
    %v10189 = vunpack.c.l.b16 %v10102
    %v10190 = vunpack.c.h.b16 %v10102
    %v10191 = vunpack.c.l.b16 %v10103
    %v10192 = vunpack.c.h.b16 %v10103
    %v10193 = vunpack.c.l.b16 %v10104
    %v10194 = vunpack.c.h.b16 %v10104
    %v10195 = vunpack.c.l.b16 %v10105
    %v10196 = vunpack.c.h.b16 %v10105
    %v10197 = vunpack.c.l.b16 %v10106
    %v10198 = vunpack.c.h.b16 %v10106
    %v10199 = vunpack.c.l.b16 %v10107
    %v10200 = vunpack.c.h.b16 %v10107
    %v10201 = vpack.c.b16 %v10163, %v10161
    %v10202 = vpack.c.b16 %v10164, %v10162
    %v10203 = vpack.c.b16 %v10167, %v10165
    %v10204 = vpack.c.b16 %v10168, %v10166
    %v10205 = vpack.c.b16 %v10171, %v10169
    %v10206 = vpack.c.b16 %v10172, %v10170
    %v10207 = vpack.c.b16 %v10175, %v10173
    %v10208 = vpack.c.b16 %v10176, %v10174
    %v10209 = vpack.c.b16 %v10179, %v10177
    %v10210 = vpack.c.b16 %v10180, %v10178
    %v10211 = vpack.c.b16 %v10183, %v10181
    %v10212 = vpack.c.b16 %v10184, %v10182
    %v10213 = vpack.c.b16 %v10187, %v10185
    %v10214 = vpack.c.b16 %v10188, %v10186
    %v10215 = vpack.c.b16 %v10191, %v10189
    %v10216 = vpack.c.b16 %v10192, %v10190
    %v10217 = vpack.c.b16 %v10195, %v10193
    %v10218 = vpack.c.b16 %v10196, %v10194
    %v10219 = vpack.c.b16 %v10199, %v10197
    %v10220 = vpack.c.b16 %v10200, %v10198
    %v10273 = vunpack.c.l.b16 %v10109
    %v10274 = vunpack.c.h.b16 %v10109
    %v10275 = vunpack.c.l.b16 %v10110
    %v10276 = vunpack.c.h.b16 %v10110
    %v10277 = vunpack.c.l.b16 %v10111
    %v10278 = vunpack.c.h.b16 %v10111
    %v10279 = vunpack.c.l.b16 %v10112
    %v10280 = vunpack.c.h.b16 %v10112
    %v10281 = vunpack.c.l.b16 %v10113
    %v10282 = vunpack.c.h.b16 %v10113
    %v10283 = vunpack.c.l.b16 %v10114
    %v10284 = vunpack.c.h.b16 %v10114
    %v10285 = vunpack.c.l.b16 %v10115
    %v10286 = vunpack.c.h.b16 %v10115
    %v10287 = vunpack.c.l.b16 %v10116
    %v10288 = vunpack.c.h.b16 %v10116
    %v10289 = vunpack.c.l.b16 %v10117
    %v10290 = vunpack.c.h.b16 %v10117
    %v10291 = vunpack.c.l.b16 %v10118
    %v10292 = vunpack.c.h.b16 %v10118
    %v10293 = vunpack.c.l.b16 %v10119
    %v10294 = vunpack.c.h.b16 %v10119
    %v10295 = vunpack.c.l.b16 %v10120
    %v10296 = vunpack.c.h.b16 %v10120
    %v10297 = vunpack.c.l.b16 %v10121
    %v10298 = vunpack.c.h.b16 %v10121
    %v10299 = vunpack.c.l.b16 %v10122
    %v10300 = vunpack.c.h.b16 %v10122
    %v10301 = vunpack.c.l.b16 %v10123
    %v10302 = vunpack.c.h.b16 %v10123
    %v10303 = vunpack.c.l.b16 %v10124
    %v10304 = vunpack.c.h.b16 %v10124
    %v10305 = vunpack.c.l.b16 %v10125
    %v10306 = vunpack.c.h.b16 %v10125
    %v10307 = vunpack.c.l.b16 %v10126
    %v10308 = vunpack.c.h.b16 %v10126
    %v10309 = vunpack.c.l.b16 %v10127
    %v10310 = vunpack.c.h.b16 %v10127
    %v10311 = vunpack.c.l.b16 %v10128
    %v10312 = vunpack.c.h.b16 %v10128
    %v10313 = vunpack.c.l.b16 %v10129
    %v10314 = vunpack.c.h.b16 %v10129
    %v10315 = vunpack.c.l.b16 %v10130
    %v10316 = vunpack.c.h.b16 %v10130
    %v10317 = vunpack.c.l.b16 %v10131
    %v10318 = vunpack.c.h.b16 %v10131
    %v10319 = vunpack.c.l.b16 %v10132
    %v10320 = vunpack.c.h.b16 %v10132
    %v10321 = vunpack.c.l.b16 %v10133
    %v10322 = vunpack.c.h.b16 %v10133
    %v10323 = vunpack.c.l.b16 %v10134
    %v10324 = vunpack.c.h.b16 %v10134
    %v10325 = vunpack.c.l.b16 %v10135
    %v10326 = vunpack.c.h.b16 %v10135
    %v10327 = vunpack.c.l.b16 %v10136
    %v10328 = vunpack.c.h.b16 %v10136
    %v10329 = vunpack.c.l.b16 %v10137
    %v10330 = vunpack.c.h.b16 %v10137
    %v10331 = vunpack.c.l.b16 %v10138
    %v10332 = vunpack.c.h.b16 %v10138
    %v10333 = vunpack.c.l.b16 %v10139
    %v10334 = vunpack.c.h.b16 %v10139
    %v10335 = vunpack.c.l.b16 %v10140
    %v10336 = vunpack.c.h.b16 %v10140
    %v10337 = vpack.c.b16 %v10275, %v10273
    %v10338 = vpack.c.b16 %v10276, %v10274
    %v10339 = vpack.c.b16 %v10279, %v10277
    %v10340 = vpack.c.b16 %v10280, %v10278
    %v10341 = vpack.c.b16 %v10283, %v10281
    %v10342 = vpack.c.b16 %v10284, %v10282
    %v10343 = vpack.c.b16 %v10287, %v10285
    %v10344 = vpack.c.b16 %v10288, %v10286
    %v10345 = vpack.c.b16 %v10291, %v10289
    %v10346 = vpack.c.b16 %v10292, %v10290
    %v10347 = vpack.c.b16 %v10295, %v10293
    %v10348 = vpack.c.b16 %v10296, %v10294
    %v10349 = vpack.c.b16 %v10299, %v10297
    %v10350 = vpack.c.b16 %v10300, %v10298
    %v10351 = vpack.c.b16 %v10303, %v10301
    %v10352 = vpack.c.b16 %v10304, %v10302
    %v10353 = vpack.c.b16 %v10307, %v10305
    %v10354 = vpack.c.b16 %v10308, %v10306
    %v10355 = vpack.c.b16 %v10311, %v10309
    %v10356 = vpack.c.b16 %v10312, %v10310
    %v10357 = vpack.c.b16 %v10315, %v10313
    %v10358 = vpack.c.b16 %v10316, %v10314
    %v10359 = vpack.c.b16 %v10319, %v10317
    %v10360 = vpack.c.b16 %v10320, %v10318
    %v10361 = vpack.c.b16 %v10323, %v10321
    %v10362 = vpack.c.b16 %v10324, %v10322
    %v10363 = vpack.c.b16 %v10327, %v10325
    %v10364 = vpack.c.b16 %v10328, %v10326
    %v10365 = vpack.c.b16 %v10331, %v10329
    %v10366 = vpack.c.b16 %v10332, %v10330
    %v10367 = vpack.c.b16 %v10335, %v10333
    %v10368 = vpack.c.b16 %v10336, %v10334
    %10401 = vmatprep.subr.bf16.mxu0 %v10338
    %10402 = vmatpush1.bf16.msra.mxu0 %v10337
    %10403 = vmatprep.subr.bf16.mxu0 %v10340
    %10404 = vmatpush1.bf16.msra.mxu0 %v10339
    %10405 = vmatprep.subr.bf16.mxu0 %v10342
    %10406 = vmatpush1.bf16.msra.mxu0 %v10341
    %10407 = vmatprep.subr.bf16.mxu0 %v10344
    %10408 = vmatpush1.bf16.msra.mxu0 %v10343
    %10409 = vmatprep.subr.bf16.mxu0 %v10346
    %10410 = vmatpush1.bf16.msra.mxu0 %v10345
    %10411 = vmatprep.subr.bf16.mxu0 %v10348
    %10412 = vmatpush1.bf16.msra.mxu0 %v10347
    %10413 = vmatprep.subr.bf16.mxu0 %v10350
    %10414 = vmatpush1.bf16.msra.mxu0 %v10349
    %10415 = vmatprep.subr.bf16.mxu0 %v10352
    %10416 = vmatpush1.bf16.msra.mxu0 %v10351
    %10417 = vmatprep.subr.bf16.mxu0 %v10354
    %10418 = vmatpush1.bf16.msra.mxu0 %v10353
    %10419 = vmatprep.subr.bf16.mxu0 %v10356
    %10420 = vmatpush1.bf16.msra.mxu0 %v10355
    %10421 = vmatprep.subr.bf16.mxu0 %v10358
    %10422 = vmatpush1.bf16.msra.mxu0 %v10357
    %10423 = vmatprep.subr.bf16.mxu0 %v10360
    %10424 = vmatpush1.bf16.msra.mxu0 %v10359
    %10425 = vmatprep.subr.bf16.mxu0 %v10362
    %10426 = vmatpush1.bf16.msra.mxu0 %v10361
    %10427 = vmatprep.subr.bf16.mxu0 %v10364
    %10428 = vmatpush1.bf16.msra.mxu0 %v10363
    %10429 = vmatprep.subr.bf16.mxu0 %v10366
    %10430 = vmatpush1.bf16.msra.mxu0 %v10365
    %10431 = vmatprep.subr.bf16.mxu0 %v10368
    %10432 = vmatpush1.bf16.msra.mxu0 %v10367
    %10433 = vmatprep.mubr.bf16.mxu0 %v10202
    %10434 = vmatmul.mubr.bf16.gmra.mrb[0].mxu0 %v10201
    %v10435 = vpop.f32.mrb[0].mxu0
    %v10436 = vadd.f32 0.0, %v10435
    %v10437 = vpop.f32.mrb[0].mxu0
    %v10438 = vadd.f32 0.0, %v10437
    %v10439 = vpop.f32.mrb[0].mxu0
    %v10440 = vadd.f32 0.0, %v10439
    %v10441 = vpop.f32.mrb[0].mxu0
    %v10442 = vadd.f32 0.0, %v10441
    %10443 = vmatprep.mubr.bf16.mxu0 %v10204
    %10444 = vmatmul.mubr.bf16.gmra.mrb[0].mxu0 %v10203
    %v10445 = vpop.f32.mrb[0].mxu0
    %v10446 = vadd.f32 0.0, %v10445
    %v10447 = vpop.f32.mrb[0].mxu0
    %v10448 = vadd.f32 0.0, %v10447
    %v10449 = vpop.f32.mrb[0].mxu0
    %v10450 = vadd.f32 0.0, %v10449
    %v10451 = vpop.f32.mrb[0].mxu0
    %v10452 = vadd.f32 0.0, %v10451
    %10453 = vmatprep.mubr.bf16.mxu0 %v10206
    %10454 = vmatmul.mubr.bf16.gmra.mrb[0].mxu0 %v10205
    %v10455 = vpop.f32.mrb[0].mxu0
    %v10456 = vadd.f32 0.0, %v10455
    %v10457 = vpop.f32.mrb[0].mxu0
    %v10458 = vadd.f32 0.0, %v10457
    %v10459 = vpop.f32.mrb[0].mxu0
    %v10460 = vadd.f32 0.0, %v10459
    %v10461 = vpop.f32.mrb[0].mxu0
    %v10462 = vadd.f32 0.0, %v10461
    %10463 = vmatprep.mubr.bf16.mxu0 %v10208
    %10464 = vmatmul.mubr.bf16.gmra.mrb[0].mxu0 %v10207
    %v10465 = vpop.f32.mrb[0].mxu0
    %v10466 = vadd.f32 0.0, %v10465
    %v10467 = vpop.f32.mrb[0].mxu0
    %v10468 = vadd.f32 0.0, %v10467
    %v10469 = vpop.f32.mrb[0].mxu0
    %v10470 = vadd.f32 0.0, %v10469
    %v10471 = vpop.f32.mrb[0].mxu0
    %v10472 = vadd.f32 0.0, %v10471
    %10473 = vmatprep.mubr.bf16.mxu0 %v10210
    %10474 = vmatmul.mubr.bf16.gmra.mrb[0].mxu0 %v10209
    %v10475 = vpop.f32.mrb[0].mxu0
    %v10476 = vadd.f32 0.0, %v10475
    %v10477 = vpop.f32.mrb[0].mxu0
    %v10478 = vadd.f32 0.0, %v10477
    %v10479 = vpop.f32.mrb[0].mxu0
    %v10480 = vadd.f32 0.0, %v10479
    %v10481 = vpop.f32.mrb[0].mxu0
    %v10482 = vadd.f32 0.0, %v10481
    %10483 = vmatprep.mubr.bf16.mxu0 %v10212
    %10484 = vmatmul.mubr.bf16.gmra.mrb[0].mxu0 %v10211
    %v10485 = vpop.f32.mrb[0].mxu0
    %v10486 = vadd.f32 0.0, %v10485
    %v10487 = vpop.f32.mrb[0].mxu0
    %v10488 = vadd.f32 0.0, %v10487
    %v10489 = vpop.f32.mrb[0].mxu0
    %v10490 = vadd.f32 0.0, %v10489
    %v10491 = vpop.f32.mrb[0].mxu0
    %v10492 = vadd.f32 0.0, %v10491
    %10493 = vmatprep.mubr.bf16.mxu0 %v10214
    %10494 = vmatmul.mubr.bf16.gmra.mrb[0].mxu0 %v10213
    %v10495 = vpop.f32.mrb[0].mxu0
    %v10496 = vadd.f32 0.0, %v10495
    %v10497 = vpop.f32.mrb[0].mxu0
    %v10498 = vadd.f32 0.0, %v10497
    %v10499 = vpop.f32.mrb[0].mxu0
    %v10500 = vadd.f32 0.0, %v10499
    %v10501 = vpop.f32.mrb[0].mxu0
    %v10502 = vadd.f32 0.0, %v10501
    %10503 = vmatprep.mubr.bf16.mxu0 %v10216
    %10504 = vmatmul.mubr.bf16.gmra.mrb[0].mxu0 %v10215
    %v10505 = vpop.f32.mrb[0].mxu0
    %v10506 = vadd.f32 0.0, %v10505
    %v10507 = vpop.f32.mrb[0].mxu0
    %v10508 = vadd.f32 0.0, %v10507
    %v10509 = vpop.f32.mrb[0].mxu0
    %v10510 = vadd.f32 0.0, %v10509
    %v10511 = vpop.f32.mrb[0].mxu0
    %v10512 = vadd.f32 0.0, %v10511
    %10513 = vmatprep.mubr.bf16.mxu0 %v10218
    %10514 = vmatmul.mubr.bf16.gmra.mrb[0].mxu0 %v10217
    %v10515 = vpop.f32.mrb[0].mxu0
    %v10516 = vadd.f32 0.0, %v10515
    %v10517 = vpop.f32.mrb[0].mxu0
    %v10518 = vadd.f32 0.0, %v10517
    %v10519 = vpop.f32.mrb[0].mxu0
    %v10520 = vadd.f32 0.0, %v10519
    %v10521 = vpop.f32.mrb[0].mxu0
    %v10522 = vadd.f32 0.0, %v10521
    %10523 = vmatprep.mubr.bf16.mxu0 %v10220
    %10524 = vmatmul.mubr.bf16.gmra.mrb[0].mxu0 %v10219
    %v10525 = vpop.f32.mrb[0].mxu0
    %v10526 = vadd.f32 0.0, %v10525
    %v10527 = vpop.f32.mrb[0].mxu0
    %v10528 = vadd.f32 0.0, %v10527
    %v10529 = vpop.f32.mrb[0].mxu0
    %v10530 = vadd.f32 0.0, %v10529
    %v10531 = vpop.f32.mrb[0].mxu0
    %v10532 = vadd.f32 0.0, %v10531
    %10533 = vdwg.mxu0
    %v10534 = vadd.f32 %v10048, %v10436
    %v10535 = vadd.f32 %v10049, %v10438
    %v10536 = vadd.f32 %v10050, %v10440
    %v10537 = vadd.f32 %v10051, %v10442
    %v10538 = vadd.f32 %v10052, %v10446
    %v10539 = vadd.f32 %v10053, %v10448
    %v10540 = vadd.f32 %v10054, %v10450
    %v10541 = vadd.f32 %v10055, %v10452
    %v10542 = vadd.f32 %v10056, %v10456
    %v10543 = vadd.f32 %v10057, %v10458
    %v10544 = vadd.f32 %v10058, %v10460
    %v10545 = vadd.f32 %v10059, %v10462
    %v10546 = vadd.f32 %v10060, %v10466
    %v10547 = vadd.f32 %v10061, %v10468
    %v10548 = vadd.f32 %v10062, %v10470
    %v10549 = vadd.f32 %v10063, %v10472
    %v10550 = vadd.f32 %v10064, %v10476
    %v10551 = vadd.f32 %v10065, %v10478
    %v10552 = vadd.f32 %v10066, %v10480
    %v10553 = vadd.f32 %v10067, %v10482
    %v10554 = vadd.f32 %v10068, %v10486
    %v10555 = vadd.f32 %v10069, %v10488
    %v10556 = vadd.f32 %v10070, %v10490
    %v10557 = vadd.f32 %v10071, %v10492
    %v10558 = vadd.f32 %v10072, %v10496
    %v10559 = vadd.f32 %v10073, %v10498
    %v10560 = vadd.f32 %v10074, %v10500
    %v10561 = vadd.f32 %v10075, %v10502
    %v10562 = vadd.f32 %v10076, %v10506
    %v10563 = vadd.f32 %v10077, %v10508
    %v10564 = vadd.f32 %v10078, %v10510
    %v10565 = vadd.f32 %v10079, %v10512
    %v10566 = vadd.f32 %v10080, %v10516
    %v10567 = vadd.f32 %v10081, %v10518
    %v10568 = vadd.f32 %v10082, %v10520
    %v10569 = vadd.f32 %v10083, %v10522
    %v10570 = vadd.f32 %v10084, %v10526
    %v10571 = vadd.f32 %v10085, %v10528
    %v10572 = vadd.f32 %v10086, %v10530
    %v10573 = vadd.f32 %v10087, %v10532
    %v10574 = vld [vmem:[%s10] sm:$0xff]
    %v10575 = vld [vmem:[%s10 + $0x8] sm:$0xff]
    %v10576 = vld [vmem:[%s10 + $0x10] sm:$0xff]
    %v10577 = vld [vmem:[%s10 + $0x18] sm:$0xff]
    %v10578 = vld [vmem:[%s10 + $0x20] sm:$0xff]
    %v10579 = vld [vmem:[%s10 + $0x28] sm:$0xff]
    %v10580 = vld [vmem:[%s10 + $0x30] sm:$0xff]
    %v10581 = vld [vmem:[%s10 + $0x38] sm:$0xff]
    %v10582 = vld [vmem:[%s10 + $0x40] sm:$0xff]
    %v10583 = vld [vmem:[%s10 + $0x48] sm:$0xff]
    %v10584 = vld [vmem:[%s10 + $0x50] sm:$0xff]
    %v10585 = vld [vmem:[%s10 + $0x58] sm:$0xff]
    %v10586 = vld [vmem:[%s10 + $0x60] sm:$0xff]
    %v10587 = vld [vmem:[%s10 + $0x68] sm:$0xff]
    %v10588 = vld [vmem:[%s10 + $0x70] sm:$0xff]
    %v10589 = vld [vmem:[%s10 + $0x78] sm:$0xff]
    %v10590 = vld [vmem:[%s10 + $0x80] sm:$0xff]
    %v10591 = vld [vmem:[%s10 + $0x88] sm:$0xff]
    %v10592 = vld [vmem:[%s10 + $0x90] sm:$0xff]
    %v10593 = vld [vmem:[%s10 + $0x98] sm:$0xff]
    %10595 = vset.pattern.permute.xlu0 0
    %10596 = vperm.xlu0 %10595, %v10574
    %v10597 = vpop.permute.xlu0 %10596
    %10600 = vset.pattern.permute.xlu0 0
    %10601 = vperm.xlu0 %10600, %v10575
    %v10602 = vpop.permute.xlu0 %10601
    %10605 = vset.pattern.permute.xlu0 0
    %10606 = vperm.xlu0 %10605, %v10576
    %v10607 = vpop.permute.xlu0 %10606
    %10610 = vset.pattern.permute.xlu0 0
    %10611 = vperm.xlu0 %10610, %v10577
    %v10612 = vpop.permute.xlu0 %10611
    %10615 = vset.pattern.permute.xlu0 0
    %10616 = vperm.xlu0 %10615, %v10578
    %v10617 = vpop.permute.xlu0 %10616
    %10620 = vset.pattern.permute.xlu0 0
    %10621 = vperm.xlu0 %10620, %v10579
    %v10622 = vpop.permute.xlu0 %10621
    %10625 = vset.pattern.permute.xlu0 0
    %10626 = vperm.xlu0 %10625, %v10580
    %v10627 = vpop.permute.xlu0 %10626
    %10630 = vset.pattern.permute.xlu0 0
    %10631 = vperm.xlu0 %10630, %v10581
    %v10632 = vpop.permute.xlu0 %10631
    %10635 = vset.pattern.permute.xlu0 0
    %10636 = vperm.xlu0 %10635, %v10582
    %v10637 = vpop.permute.xlu0 %10636
    %10640 = vset.pattern.permute.xlu0 0
    %10641 = vperm.xlu0 %10640, %v10583
    %v10642 = vpop.permute.xlu0 %10641
    %10645 = vset.pattern.permute.xlu0 0
    %10646 = vperm.xlu0 %10645, %v10584
    %v10647 = vpop.permute.xlu0 %10646
    %10650 = vset.pattern.permute.xlu0 0
    %10651 = vperm.xlu0 %10650, %v10585
    %v10652 = vpop.permute.xlu0 %10651
    %10655 = vset.pattern.permute.xlu0 0
    %10656 = vperm.xlu0 %10655, %v10586
    %v10657 = vpop.permute.xlu0 %10656
    %10660 = vset.pattern.permute.xlu0 0
    %10661 = vperm.xlu0 %10660, %v10587
    %v10662 = vpop.permute.xlu0 %10661
    %10665 = vset.pattern.permute.xlu0 0
    %10666 = vperm.xlu0 %10665, %v10588
    %v10667 = vpop.permute.xlu0 %10666
    %10670 = vset.pattern.permute.xlu0 0
    %10671 = vperm.xlu0 %10670, %v10589
    %v10672 = vpop.permute.xlu0 %10671
    %10675 = vset.pattern.permute.xlu0 0
    %10676 = vperm.xlu0 %10675, %v10590
    %v10677 = vpop.permute.xlu0 %10676
    %10680 = vset.pattern.permute.xlu0 0
    %10681 = vperm.xlu0 %10680, %v10591
    %v10682 = vpop.permute.xlu0 %10681
    %10685 = vset.pattern.permute.xlu0 0
    %10686 = vperm.xlu0 %10685, %v10592
    %v10687 = vpop.permute.xlu0 %10686
    %10690 = vset.pattern.permute.xlu0 0
    %10691 = vperm.xlu0 %10690, %v10593
    %v10692 = vpop.permute.xlu0 %10691
    %v10694 = vmul.f32 %v10534, %v10597
    %v10695 = vmul.f32 %v10535, %v10597
    %v10696 = vmul.f32 %v10536, %v10602
    %v10697 = vmul.f32 %v10537, %v10602
    %v10698 = vmul.f32 %v10538, %v10607
    %v10699 = vmul.f32 %v10539, %v10607
    %v10700 = vmul.f32 %v10540, %v10612
    %v10701 = vmul.f32 %v10541, %v10612
    %v10702 = vmul.f32 %v10542, %v10617
    %v10703 = vmul.f32 %v10543, %v10617
    %v10704 = vmul.f32 %v10544, %v10622
    %v10705 = vmul.f32 %v10545, %v10622
    %v10706 = vmul.f32 %v10546, %v10627
    %v10707 = vmul.f32 %v10547, %v10627
    %v10708 = vmul.f32 %v10548, %v10632
    %v10709 = vmul.f32 %v10549, %v10632
    %v10710 = vmul.f32 %v10550, %v10637
    %v10711 = vmul.f32 %v10551, %v10637
    %v10712 = vmul.f32 %v10552, %v10642
    %v10713 = vmul.f32 %v10553, %v10642
    %v10714 = vmul.f32 %v10554, %v10647
    %v10715 = vmul.f32 %v10555, %v10647
    %v10716 = vmul.f32 %v10556, %v10652
    %v10717 = vmul.f32 %v10557, %v10652
    %v10718 = vmul.f32 %v10558, %v10657
    %v10719 = vmul.f32 %v10559, %v10657
    %v10720 = vmul.f32 %v10560, %v10662
    %v10721 = vmul.f32 %v10561, %v10662
    %v10722 = vmul.f32 %v10562, %v10667
    %v10723 = vmul.f32 %v10563, %v10667
    %v10724 = vmul.f32 %v10564, %v10672
    %v10725 = vmul.f32 %v10565, %v10672
    %v10726 = vmul.f32 %v10566, %v10677
    %v10727 = vmul.f32 %v10567, %v10677
    %v10728 = vmul.f32 %v10568, %v10682
    %v10729 = vmul.f32 %v10569, %v10682
    %v10730 = vmul.f32 %v10570, %v10687
    %v10731 = vmul.f32 %v10571, %v10687
    %v10732 = vmul.f32 %v10572, %v10692
    %v10733 = vmul.f32 %v10573, %v10692
    %v10734 = vadd.f32 %v10694, %v10696
    %v10735 = vadd.f32 %v10734, %v10698
    %v10736 = vadd.f32 %v10735, %v10700
    %v10737 = vadd.f32 %v10736, %v10702
    %v10738 = vadd.f32 %v10737, %v10704
    %v10739 = vadd.f32 %v10738, %v10706
    %v10740 = vadd.f32 %v10739, %v10708
    %v10741 = vadd.f32 %v10740, %v10710
    %v10742 = vadd.f32 %v10741, %v10712
    %v10743 = vadd.f32 %v10742, %v10714
    %v10744 = vadd.f32 %v10743, %v10716
    %v10745 = vadd.f32 %v10744, %v10718
    %v10746 = vadd.f32 %v10745, %v10720
    %v10747 = vadd.f32 %v10746, %v10722
    %v10748 = vadd.f32 %v10747, %v10724
    %v10749 = vadd.f32 %v10748, %v10726
    %v10750 = vadd.f32 %v10749, %v10728
    %v10751 = vadd.f32 %v10750, %v10730
    %v10752 = vadd.f32 %v10751, %v10732
    %v10753 = vrot.slane %v10752, 4
    %v10754 = vadd.f32 %v10752, %v10753
    %v10755 = vrot.slane %v10754, 2
    %v10756 = vadd.f32 %v10754, %v10755
    %v10757 = vrot.slane %v10756, 1
    %v10758 = vadd.f32 %v10756, %v10757
    %v10759 = vadd.f32 %v10695, %v10697
    %v10760 = vadd.f32 %v10759, %v10699
    %v10761 = vadd.f32 %v10760, %v10701
    %v10762 = vadd.f32 %v10761, %v10703
    %v10763 = vadd.f32 %v10762, %v10705
    %v10764 = vadd.f32 %v10763, %v10707
    %v10765 = vadd.f32 %v10764, %v10709
    %v10766 = vadd.f32 %v10765, %v10711
    %v10767 = vadd.f32 %v10766, %v10713
    %v10768 = vadd.f32 %v10767, %v10715
    %v10769 = vadd.f32 %v10768, %v10717
    %v10770 = vadd.f32 %v10769, %v10719
    %v10771 = vadd.f32 %v10770, %v10721
    %v10772 = vadd.f32 %v10771, %v10723
    %v10773 = vadd.f32 %v10772, %v10725
    %v10774 = vadd.f32 %v10773, %v10727
    %v10775 = vadd.f32 %v10774, %v10729
    %v10776 = vadd.f32 %v10775, %v10731
    %v10777 = vadd.f32 %v10776, %v10733
    %v10778 = vrot.slane %v10777, 4
    %v10779 = vadd.f32 %v10777, %v10778
    %v10780 = vrot.slane %v10779, 2
    %v10781 = vadd.f32 %v10779, %v10780
    %v10782 = vrot.slane %v10781, 1
    %v10783 = vadd.f32 %v10781, %v10782
    %v10784 = vmul.f32 %v10694, %v10534
    %v10785 = vmul.f32 %v10695, %v10535
    %v10786 = vmul.f32 %v10696, %v10536
    %v10787 = vmul.f32 %v10697, %v10537
    %v10788 = vmul.f32 %v10698, %v10538
    %v10789 = vmul.f32 %v10699, %v10539
    %v10790 = vmul.f32 %v10700, %v10540
    %v10791 = vmul.f32 %v10701, %v10541
    %v10792 = vmul.f32 %v10702, %v10542
    %v10793 = vmul.f32 %v10703, %v10543
    %v10794 = vmul.f32 %v10704, %v10544
    %v10795 = vmul.f32 %v10705, %v10545
    %v10796 = vmul.f32 %v10706, %v10546
    %v10797 = vmul.f32 %v10707, %v10547
    %v10798 = vmul.f32 %v10708, %v10548
    %v10799 = vmul.f32 %v10709, %v10549
    %v10800 = vmul.f32 %v10710, %v10550
    %v10801 = vmul.f32 %v10711, %v10551
    %v10802 = vmul.f32 %v10712, %v10552
    %v10803 = vmul.f32 %v10713, %v10553
    %v10804 = vmul.f32 %v10714, %v10554
    %v10805 = vmul.f32 %v10715, %v10555
    %v10806 = vmul.f32 %v10716, %v10556
    %v10807 = vmul.f32 %v10717, %v10557
    %v10808 = vmul.f32 %v10718, %v10558
    %v10809 = vmul.f32 %v10719, %v10559
    %v10810 = vmul.f32 %v10720, %v10560
    %v10811 = vmul.f32 %v10721, %v10561
    %v10812 = vmul.f32 %v10722, %v10562
    %v10813 = vmul.f32 %v10723, %v10563
    %v10814 = vmul.f32 %v10724, %v10564
    %v10815 = vmul.f32 %v10725, %v10565
    %v10816 = vmul.f32 %v10726, %v10566
    %v10817 = vmul.f32 %v10727, %v10567
    %v10818 = vmul.f32 %v10728, %v10568
    %v10819 = vmul.f32 %v10729, %v10569
    %v10820 = vmul.f32 %v10730, %v10570
    %v10821 = vmul.f32 %v10731, %v10571
    %v10822 = vmul.f32 %v10732, %v10572
    %v10823 = vmul.f32 %v10733, %v10573
    %v10824 = vadd.f32 %v10784, %v10786
    %v10825 = vadd.f32 %v10824, %v10788
    %v10826 = vadd.f32 %v10825, %v10790
    %v10827 = vadd.f32 %v10826, %v10792
    %v10828 = vadd.f32 %v10827, %v10794
    %v10829 = vadd.f32 %v10828, %v10796
    %v10830 = vadd.f32 %v10829, %v10798
    %v10831 = vadd.f32 %v10830, %v10800
    %v10832 = vadd.f32 %v10831, %v10802
    %v10833 = vadd.f32 %v10832, %v10804
    %v10834 = vadd.f32 %v10833, %v10806
    %v10835 = vadd.f32 %v10834, %v10808
    %v10836 = vadd.f32 %v10835, %v10810
    %v10837 = vadd.f32 %v10836, %v10812
    %v10838 = vadd.f32 %v10837, %v10814
    %v10839 = vadd.f32 %v10838, %v10816
    %v10840 = vadd.f32 %v10839, %v10818
    %v10841 = vadd.f32 %v10840, %v10820
    %v10842 = vadd.f32 %v10841, %v10822
    %v10843 = vrot.slane %v10842, 4
    %v10844 = vadd.f32 %v10842, %v10843
    %v10845 = vrot.slane %v10844, 2
    %v10846 = vadd.f32 %v10844, %v10845
    %v10847 = vrot.slane %v10846, 1
    %v10848 = vadd.f32 %v10846, %v10847
    %v10849 = vadd.f32 %v10785, %v10787
    %v10850 = vadd.f32 %v10849, %v10789
    %v10851 = vadd.f32 %v10850, %v10791
    %v10852 = vadd.f32 %v10851, %v10793
    %v10853 = vadd.f32 %v10852, %v10795
    %v10854 = vadd.f32 %v10853, %v10797
    %v10855 = vadd.f32 %v10854, %v10799
    %v10856 = vadd.f32 %v10855, %v10801
    %v10857 = vadd.f32 %v10856, %v10803
    %v10858 = vadd.f32 %v10857, %v10805
    %v10859 = vadd.f32 %v10858, %v10807
    %v10860 = vadd.f32 %v10859, %v10809
    %v10861 = vadd.f32 %v10860, %v10811
    %v10862 = vadd.f32 %v10861, %v10813
    %v10863 = vadd.f32 %v10862, %v10815
    %v10864 = vadd.f32 %v10863, %v10817
    %v10865 = vadd.f32 %v10864, %v10819
    %v10866 = vadd.f32 %v10865, %v10821
    %v10867 = vadd.f32 %v10866, %v10823
    %v10868 = vrot.slane %v10867, 4
    %v10869 = vadd.f32 %v10867, %v10868
    %v10870 = vrot.slane %v10869, 2
    %v10871 = vadd.f32 %v10869, %v10870
    %v10872 = vrot.slane %v10871, 1
    %v10873 = vadd.f32 %v10871, %v10872
    %v10874 = vsel %vm4461, %v10758, %v10848
    %v10875 = vsel %vm4461, %v10783, %v10873
    %vm10876 = vcmp.lt.s32.totalorder %v4465, 0
    %v10877 = vsub.s32 0, %v4465
    %v10878 = vsel %vm10876, %v10877, %v4465
    %v10879 = vshrl.u32 %v10878, 6
    %v10880 = vand.u32 %v10878, 63
    %v10881 = vsub.s32 0, %v10880
    %v10882 = vsel %vm10876, %v10881, %v10880
    %vm10883 = vcmp.lt.s32.totalorder %v4466, 0
    %v10884 = vsub.s32 0, %v4466
    %v10885 = vsel %vm10883, %v10884, %v4466
    %v10886 = vshrl.u32 %v10885, 6
    %v10887 = vand.u32 %v10885, 63
    %v10888 = vsub.s32 0, %v10887
    %v10889 = vsel %vm10883, %v10888, %v10887
    %vm10890 = vcmp.lt.s32.totalorder %v4467, 0
    %v10891 = vsub.s32 0, %v4467
    %v10892 = vsel %vm10890, %v10891, %v4467
    %v10893 = vshrl.u32 %v10892, 6
    %v10894 = vand.u32 %v10892, 63
    %v10895 = vsub.s32 0, %v10894
    %v10896 = vsel %vm10890, %v10895, %v10894
    %vm10897 = vcmp.lt.s32.totalorder %v4468, 0
    %v10898 = vsub.s32 0, %v4468
    %v10899 = vsel %vm10897, %v10898, %v4468
    %v10900 = vshrl.u32 %v10899, 6
    %v10901 = vand.u32 %v10899, 63
    %v10902 = vsub.s32 0, %v10901
    %v10903 = vsel %vm10897, %v10902, %v10901
    %vm10904 = vcmp.lt.s32.totalorder %v4469, 0
    %v10905 = vsub.s32 0, %v4469
    %v10906 = vsel %vm10904, %v10905, %v4469
    %v10907 = vshrl.u32 %v10906, 6
    %v10908 = vand.u32 %v10906, 63
    %v10909 = vsub.s32 0, %v10908
    %v10910 = vsel %vm10904, %v10909, %v10908
    %vm10911 = vcmp.lt.s32.totalorder %v4470, 0
    %v10912 = vsub.s32 0, %v4470
    %v10913 = vsel %vm10911, %v10912, %v4470
    %v10914 = vshrl.u32 %v10913, 6
    %v10915 = vand.u32 %v10913, 63
    %v10916 = vsub.s32 0, %v10915
    %v10917 = vsel %vm10911, %v10916, %v10915
    %vm10918 = vcmp.lt.s32.totalorder %v4471, 0
    %v10919 = vsub.s32 0, %v4471
    %v10920 = vsel %vm10918, %v10919, %v4471
    %v10921 = vshrl.u32 %v10920, 6
    %v10922 = vand.u32 %v10920, 63
    %v10923 = vsub.s32 0, %v10922
    %v10924 = vsel %vm10918, %v10923, %v10922
    %vm10925 = vcmp.lt.s32.totalorder %v4472, 0
    %v10926 = vsub.s32 0, %v4472
    %v10927 = vsel %vm10925, %v10926, %v4472
    %v10928 = vshrl.u32 %v10927, 6
    %v10929 = vand.u32 %v10927, 63
    %v10930 = vsub.s32 0, %v10929
    %v10931 = vsel %vm10925, %v10930, %v10929
    %vm10932 = vcmp.lt.s32.totalorder %v4473, 0
    %v10933 = vsub.s32 0, %v4473
    %v10934 = vsel %vm10932, %v10933, %v4473
    %v10935 = vshrl.u32 %v10934, 6
    %v10936 = vand.u32 %v10934, 63
    %v10937 = vsub.s32 0, %v10936
    %v10938 = vsel %vm10932, %v10937, %v10936
    %vm10939 = vcmp.lt.s32.totalorder %v4474, 0
    %v10940 = vsub.s32 0, %v4474
    %v10941 = vsel %vm10939, %v10940, %v4474
    %v10942 = vshrl.u32 %v10941, 6
    %v10943 = vand.u32 %v10941, 63
    %v10944 = vsub.s32 0, %v10943
    %v10945 = vsel %vm10939, %v10944, %v10943
    %vm10946 = vcmp.lt.s32.totalorder %v4475, 0
    %v10947 = vsub.s32 0, %v4475
    %v10948 = vsel %vm10946, %v10947, %v4475
    %v10949 = vshrl.u32 %v10948, 6
    %v10950 = vand.u32 %v10948, 63
    %v10951 = vsub.s32 0, %v10950
    %v10952 = vsel %vm10946, %v10951, %v10950
    %vm10953 = vcmp.lt.s32.totalorder %v4476, 0
    %v10954 = vsub.s32 0, %v4476
    %v10955 = vsel %vm10953, %v10954, %v4476
    %v10956 = vshrl.u32 %v10955, 6
    %v10957 = vand.u32 %v10955, 63
    %v10958 = vsub.s32 0, %v10957
    %v10959 = vsel %vm10953, %v10958, %v10957
    %vm10960 = vcmp.lt.s32.totalorder %v4477, 0
    %v10961 = vsub.s32 0, %v4477
    %v10962 = vsel %vm10960, %v10961, %v4477
    %v10963 = vshrl.u32 %v10962, 6
    %v10964 = vand.u32 %v10962, 63
    %v10965 = vsub.s32 0, %v10964
    %v10966 = vsel %vm10960, %v10965, %v10964
    %vm10967 = vcmp.lt.s32.totalorder %v4478, 0
    %v10968 = vsub.s32 0, %v4478
    %v10969 = vsel %vm10967, %v10968, %v4478
    %v10970 = vshrl.u32 %v10969, 6
    %v10971 = vand.u32 %v10969, 63
    %v10972 = vsub.s32 0, %v10971
    %v10973 = vsel %vm10967, %v10972, %v10971
    %vm10974 = vcmp.lt.s32.totalorder %v4479, 0
    %v10975 = vsub.s32 0, %v4479
    %v10976 = vsel %vm10974, %v10975, %v4479
    %v10977 = vshrl.u32 %v10976, 6
    %v10978 = vand.u32 %v10976, 63
    %v10979 = vsub.s32 0, %v10978
    %v10980 = vsel %vm10974, %v10979, %v10978
    %vm10981 = vcmp.lt.s32.totalorder %v4480, 0
    %v10982 = vsub.s32 0, %v4480
    %v10983 = vsel %vm10981, %v10982, %v4480
    %v10984 = vshrl.u32 %v10983, 6
    %v10985 = vand.u32 %v10983, 63
    %v10986 = vsub.s32 0, %v10985
    %v10987 = vsel %vm10981, %v10986, %v10985
    %vm10988 = vcmp.lt.s32.totalorder %v4481, 0
    %v10989 = vsub.s32 0, %v4481
    %v10990 = vsel %vm10988, %v10989, %v4481
    %v10991 = vshrl.u32 %v10990, 6
    %v10992 = vand.u32 %v10990, 63
    %v10993 = vsub.s32 0, %v10992
    %v10994 = vsel %vm10988, %v10993, %v10992
    %vm10995 = vcmp.lt.s32.totalorder %v4482, 0
    %v10996 = vsub.s32 0, %v4482
    %v10997 = vsel %vm10995, %v10996, %v4482
    %v10998 = vshrl.u32 %v10997, 6
    %v10999 = vand.u32 %v10997, 63
    %v11000 = vsub.s32 0, %v10999
    %v11001 = vsel %vm10995, %v11000, %v10999
    %vm11002 = vcmp.lt.s32.totalorder %v4483, 0
    %v11003 = vsub.s32 0, %v4483
    %v11004 = vsel %vm11002, %v11003, %v4483
    %v11005 = vshrl.u32 %v11004, 6
    %v11006 = vand.u32 %v11004, 63
    %v11007 = vsub.s32 0, %v11006
    %v11008 = vsel %vm11002, %v11007, %v11006
    %vm11009 = vcmp.lt.s32.totalorder %v4484, 0
    %v11010 = vsub.s32 0, %v4484
    %v11011 = vsel %vm11009, %v11010, %v4484
    %v11012 = vshrl.u32 %v11011, 6
    %v11013 = vand.u32 %v11011, 63
    %v11014 = vsub.s32 0, %v11013
    %v11015 = vsel %vm11009, %v11014, %v11013
    %vm11016 = vcmp.lt.s32.totalorder %v4485, 0
    %v11017 = vsub.s32 0, %v4485
    %v11018 = vsel %vm11016, %v11017, %v4485
    %v11019 = vshrl.u32 %v11018, 6
    %v11020 = vand.u32 %v11018, 63
    %v11021 = vsub.s32 0, %v11020
    %v11022 = vsel %vm11016, %v11021, %v11020
    %vm11023 = vcmp.lt.s32.totalorder %v4486, 0
    %v11024 = vsub.s32 0, %v4486
    %v11025 = vsel %vm11023, %v11024, %v4486
    %v11026 = vshrl.u32 %v11025, 6
    %v11027 = vand.u32 %v11025, 63
    %v11028 = vsub.s32 0, %v11027
    %v11029 = vsel %vm11023, %v11028, %v11027
    %vm11030 = vcmp.lt.s32.totalorder %v4487, 0
    %v11031 = vsub.s32 0, %v4487
    %v11032 = vsel %vm11030, %v11031, %v4487
    %v11033 = vshrl.u32 %v11032, 6
    %v11034 = vand.u32 %v11032, 63
    %v11035 = vsub.s32 0, %v11034
    %v11036 = vsel %vm11030, %v11035, %v11034
    %vm11037 = vcmp.lt.s32.totalorder %v4488, 0
    %v11038 = vsub.s32 0, %v4488
    %v11039 = vsel %vm11037, %v11038, %v4488
    %v11040 = vshrl.u32 %v11039, 6
    %v11041 = vand.u32 %v11039, 63
    %v11042 = vsub.s32 0, %v11041
    %v11043 = vsel %vm11037, %v11042, %v11041
    %vm11044 = vcmp.lt.s32.totalorder %v4489, 0
    %v11045 = vsub.s32 0, %v4489
    %v11046 = vsel %vm11044, %v11045, %v4489
    %v11047 = vshrl.u32 %v11046, 6
    %v11048 = vand.u32 %v11046, 63
    %v11049 = vsub.s32 0, %v11048
    %v11050 = vsel %vm11044, %v11049, %v11048
    %vm11051 = vcmp.lt.s32.totalorder %v4490, 0
    %v11052 = vsub.s32 0, %v4490
    %v11053 = vsel %vm11051, %v11052, %v4490
    %v11054 = vshrl.u32 %v11053, 6
    %v11055 = vand.u32 %v11053, 63
    %v11056 = vsub.s32 0, %v11055
    %v11057 = vsel %vm11051, %v11056, %v11055
    %vm11058 = vcmp.lt.s32.totalorder %v4491, 0
    %v11059 = vsub.s32 0, %v4491
    %v11060 = vsel %vm11058, %v11059, %v4491
    %v11061 = vshrl.u32 %v11060, 6
    %v11062 = vand.u32 %v11060, 63
    %v11063 = vsub.s32 0, %v11062
    %v11064 = vsel %vm11058, %v11063, %v11062
    %vm11065 = vcmp.lt.s32.totalorder %v4492, 0
    %v11066 = vsub.s32 0, %v4492
    %v11067 = vsel %vm11065, %v11066, %v4492
    %v11068 = vshrl.u32 %v11067, 6
    %v11069 = vand.u32 %v11067, 63
    %v11070 = vsub.s32 0, %v11069
    %v11071 = vsel %vm11065, %v11070, %v11069
    %vm11072 = vcmp.lt.s32.totalorder %v4493, 0
    %v11073 = vsub.s32 0, %v4493
    %v11074 = vsel %vm11072, %v11073, %v4493
    %v11075 = vshrl.u32 %v11074, 6
    %v11076 = vand.u32 %v11074, 63
    %v11077 = vsub.s32 0, %v11076
    %v11078 = vsel %vm11072, %v11077, %v11076
    %vm11079 = vcmp.lt.s32.totalorder %v4494, 0
    %v11080 = vsub.s32 0, %v4494
    %v11081 = vsel %vm11079, %v11080, %v4494
    %v11082 = vshrl.u32 %v11081, 6
    %v11083 = vand.u32 %v11081, 63
    %v11084 = vsub.s32 0, %v11083
    %v11085 = vsel %vm11079, %v11084, %v11083
    %vm11086 = vcmp.lt.s32.totalorder %v4495, 0
    %v11087 = vsub.s32 0, %v4495
    %v11088 = vsel %vm11086, %v11087, %v4495
    %v11089 = vshrl.u32 %v11088, 6
    %v11090 = vand.u32 %v11088, 63
    %v11091 = vsub.s32 0, %v11090
    %v11092 = vsel %vm11086, %v11091, %v11090
    %vm11093 = vcmp.lt.s32.totalorder %v4496, 0
    %v11094 = vsub.s32 0, %v4496
    %v11095 = vsel %vm11093, %v11094, %v4496
    %v11096 = vshrl.u32 %v11095, 6
    %v11097 = vand.u32 %v11095, 63
    %v11098 = vsub.s32 0, %v11097
    %v11099 = vsel %vm11093, %v11098, %v11097
    %vm11100 = vcmp.ne.s32.totalorder %v10882, 0
    %vm11101 = vcmp.ne.s32.totalorder %v10889, 0
    %vm11102 = vcmp.ne.s32.totalorder %v10896, 0
    %vm11103 = vcmp.ne.s32.totalorder %v10903, 0
    %vm11104 = vcmp.ne.s32.totalorder %v10910, 0
    %vm11105 = vcmp.ne.s32.totalorder %v10917, 0
    %vm11106 = vcmp.ne.s32.totalorder %v10924, 0
    %vm11107 = vcmp.ne.s32.totalorder %v10931, 0
    %vm11108 = vcmp.ne.s32.totalorder %v10938, 0
    %vm11109 = vcmp.ne.s32.totalorder %v10945, 0
    %vm11110 = vcmp.ne.s32.totalorder %v10952, 0
    %vm11111 = vcmp.ne.s32.totalorder %v10959, 0
    %vm11112 = vcmp.ne.s32.totalorder %v10966, 0
    %vm11113 = vcmp.ne.s32.totalorder %v10973, 0
    %vm11114 = vcmp.ne.s32.totalorder %v10980, 0
    %vm11115 = vcmp.ne.s32.totalorder %v10987, 0
    %vm11116 = vcmp.ne.s32.totalorder %v10994, 0
    %vm11117 = vcmp.ne.s32.totalorder %v11001, 0
    %vm11118 = vcmp.ne.s32.totalorder %v11008, 0
    %vm11119 = vcmp.ne.s32.totalorder %v11015, 0
    %vm11120 = vcmp.ne.s32.totalorder %v11022, 0
    %vm11121 = vcmp.ne.s32.totalorder %v11029, 0
    %vm11122 = vcmp.ne.s32.totalorder %v11036, 0
    %vm11123 = vcmp.ne.s32.totalorder %v11043, 0
    %vm11124 = vcmp.ne.s32.totalorder %v11050, 0
    %vm11125 = vcmp.ne.s32.totalorder %v11057, 0
    %vm11126 = vcmp.ne.s32.totalorder %v11064, 0
    %vm11127 = vcmp.ne.s32.totalorder %v11071, 0
    %vm11128 = vcmp.ne.s32.totalorder %v11078, 0
    %vm11129 = vcmp.ne.s32.totalorder %v11085, 0
    %vm11130 = vcmp.ne.s32.totalorder %v11092, 0
    %vm11131 = vcmp.ne.s32.totalorder %v11099, 0
    %vm11132 = vcmp.lt.s32.totalorder %v10882, 0
    %vm11133 = vcmp.lt.s32.totalorder %v10889, 0
    %vm11134 = vcmp.lt.s32.totalorder %v10896, 0
    %vm11135 = vcmp.lt.s32.totalorder %v10903, 0
    %vm11136 = vcmp.lt.s32.totalorder %v10910, 0
    %vm11137 = vcmp.lt.s32.totalorder %v10917, 0
    %vm11138 = vcmp.lt.s32.totalorder %v10924, 0
    %vm11139 = vcmp.lt.s32.totalorder %v10931, 0
    %vm11140 = vcmp.lt.s32.totalorder %v10938, 0
    %vm11141 = vcmp.lt.s32.totalorder %v10945, 0
    %vm11142 = vcmp.lt.s32.totalorder %v10952, 0
    %vm11143 = vcmp.lt.s32.totalorder %v10959, 0
    %vm11144 = vcmp.lt.s32.totalorder %v10966, 0
    %vm11145 = vcmp.lt.s32.totalorder %v10973, 0
    %vm11146 = vcmp.lt.s32.totalorder %v10980, 0
    %vm11147 = vcmp.lt.s32.totalorder %v10987, 0
    %vm11148 = vcmp.lt.s32.totalorder %v10994, 0
    %vm11149 = vcmp.lt.s32.totalorder %v11001, 0
    %vm11150 = vcmp.lt.s32.totalorder %v11008, 0
    %vm11151 = vcmp.lt.s32.totalorder %v11015, 0
    %vm11152 = vcmp.lt.s32.totalorder %v11022, 0
    %vm11153 = vcmp.lt.s32.totalorder %v11029, 0
    %vm11154 = vcmp.lt.s32.totalorder %v11036, 0
    %vm11155 = vcmp.lt.s32.totalorder %v11043, 0
    %vm11156 = vcmp.lt.s32.totalorder %v11050, 0
    %vm11157 = vcmp.lt.s32.totalorder %v11057, 0
    %vm11158 = vcmp.lt.s32.totalorder %v11064, 0
    %vm11159 = vcmp.lt.s32.totalorder %v11071, 0
    %vm11160 = vcmp.lt.s32.totalorder %v11078, 0
    %vm11161 = vcmp.lt.s32.totalorder %v11085, 0
    %vm11162 = vcmp.lt.s32.totalorder %v11092, 0
    %vm11163 = vcmp.lt.s32.totalorder %v11099, 0
    %vm11164 = vmand %vm11132, %vm11100
    %vm11165 = vmand %vm11133, %vm11101
    %vm11166 = vmand %vm11134, %vm11102
    %vm11167 = vmand %vm11135, %vm11103
    %vm11168 = vmand %vm11136, %vm11104
    %vm11169 = vmand %vm11137, %vm11105
    %vm11170 = vmand %vm11138, %vm11106
    %vm11171 = vmand %vm11139, %vm11107
    %vm11172 = vmand %vm11140, %vm11108
    %vm11173 = vmand %vm11141, %vm11109
    %vm11174 = vmand %vm11142, %vm11110
    %vm11175 = vmand %vm11143, %vm11111
    %vm11176 = vmand %vm11144, %vm11112
    %vm11177 = vmand %vm11145, %vm11113
    %vm11178 = vmand %vm11146, %vm11114
    %vm11179 = vmand %vm11147, %vm11115
    %vm11180 = vmand %vm11148, %vm11116
    %vm11181 = vmand %vm11149, %vm11117
    %vm11182 = vmand %vm11150, %vm11118
    %vm11183 = vmand %vm11151, %vm11119
    %vm11184 = vmand %vm11152, %vm11120
    %vm11185 = vmand %vm11153, %vm11121
    %vm11186 = vmand %vm11154, %vm11122
    %vm11187 = vmand %vm11155, %vm11123
    %vm11188 = vmand %vm11156, %vm11124
    %vm11189 = vmand %vm11157, %vm11125
    %vm11190 = vmand %vm11158, %vm11126
    %vm11191 = vmand %vm11159, %vm11127
    %vm11192 = vmand %vm11160, %vm11128
    %vm11193 = vmand %vm11161, %vm11129
    %vm11194 = vmand %vm11162, %vm11130
    %vm11195 = vmand %vm11163, %vm11131
    %v11196 = vadd.s32 %v10882, 64
    %v11197 = vadd.s32 %v10889, 64
    %v11198 = vadd.s32 %v10896, 64
    %v11199 = vadd.s32 %v10903, 64
    %v11200 = vadd.s32 %v10910, 64
    %v11201 = vadd.s32 %v10917, 64
    %v11202 = vadd.s32 %v10924, 64
    %v11203 = vadd.s32 %v10931, 64
    %v11204 = vadd.s32 %v10938, 64
    %v11205 = vadd.s32 %v10945, 64
    %v11206 = vadd.s32 %v10952, 64
    %v11207 = vadd.s32 %v10959, 64
    %v11208 = vadd.s32 %v10966, 64
    %v11209 = vadd.s32 %v10973, 64
    %v11210 = vadd.s32 %v10980, 64
    %v11211 = vadd.s32 %v10987, 64
    %v11212 = vadd.s32 %v10994, 64
    %v11213 = vadd.s32 %v11001, 64
    %v11214 = vadd.s32 %v11008, 64
    %v11215 = vadd.s32 %v11015, 64
    %v11216 = vadd.s32 %v11022, 64
    %v11217 = vadd.s32 %v11029, 64
    %v11218 = vadd.s32 %v11036, 64
    %v11219 = vadd.s32 %v11043, 64
    %v11220 = vadd.s32 %v11050, 64
    %v11221 = vadd.s32 %v11057, 64
    %v11222 = vadd.s32 %v11064, 64
    %v11223 = vadd.s32 %v11071, 64
    %v11224 = vadd.s32 %v11078, 64
    %v11225 = vadd.s32 %v11085, 64
    %v11226 = vadd.s32 %v11092, 64
    %v11227 = vadd.s32 %v11099, 64
    %v11228 = vsel %vm11164, %v11196, %v10882
    %v11229 = vsel %vm11165, %v11197, %v10889
    %v11230 = vsel %vm11166, %v11198, %v10896
    %v11231 = vsel %vm11167, %v11199, %v10903
    %v11232 = vsel %vm11168, %v11200, %v10910
    %v11233 = vsel %vm11169, %v11201, %v10917
    %v11234 = vsel %vm11170, %v11202, %v10924
    %v11235 = vsel %vm11171, %v11203, %v10931
    %v11236 = vsel %vm11172, %v11204, %v10938
    %v11237 = vsel %vm11173, %v11205, %v10945
    %v11238 = vsel %vm11174, %v11206, %v10952
    %v11239 = vsel %vm11175, %v11207, %v10959
    %v11240 = vsel %vm11176, %v11208, %v10966
    %v11241 = vsel %vm11177, %v11209, %v10973
    %v11242 = vsel %vm11178, %v11210, %v10980
    %v11243 = vsel %vm11179, %v11211, %v10987
    %v11244 = vsel %vm11180, %v11212, %v10994
    %v11245 = vsel %vm11181, %v11213, %v11001
    %v11246 = vsel %vm11182, %v11214, %v11008
    %v11247 = vsel %vm11183, %v11215, %v11015
    %v11248 = vsel %vm11184, %v11216, %v11022
    %v11249 = vsel %vm11185, %v11217, %v11029
    %v11250 = vsel %vm11186, %v11218, %v11036
    %v11251 = vsel %vm11187, %v11219, %v11043
    %v11252 = vsel %vm11188, %v11220, %v11050
    %v11253 = vsel %vm11189, %v11221, %v11057
    %v11254 = vsel %vm11190, %v11222, %v11064
    %v11255 = vsel %vm11191, %v11223, %v11071
    %v11256 = vsel %vm11192, %v11224, %v11078
    %v11257 = vsel %vm11193, %v11225, %v11085
    %v11258 = vsel %vm11194, %v11226, %v11092
    %v11259 = vsel %vm11195, %v11227, %v11099
    %vm11260 = vcmp.lt.s32.totalorder %v4882, 0
    %v11261 = vsub.s32 0, %v4882
    %v11262 = vsel %vm11260, %v11261, %v4882
    %v11263 = vshrl.u32 %v11262, 6
    %v11264 = vand.u32 %v11262, 63
    %v11265 = vsub.s32 0, %v11264
    %v11266 = vsel %vm11260, %v11265, %v11264
    %vm11267 = vcmp.lt.s32.totalorder %v4883, 0
    %v11268 = vsub.s32 0, %v4883
    %v11269 = vsel %vm11267, %v11268, %v4883
    %v11270 = vshrl.u32 %v11269, 6
    %v11271 = vand.u32 %v11269, 63
    %v11272 = vsub.s32 0, %v11271
    %v11273 = vsel %vm11267, %v11272, %v11271
    %vm11274 = vcmp.ne.s32.totalorder %v11266, 0
    %vm11275 = vcmp.ne.s32.totalorder %v11273, 0
    %vm11276 = vcmp.lt.s32.totalorder %v11266, 0
    %vm11277 = vcmp.lt.s32.totalorder %v11273, 0
    %vm11278 = vmand %vm11276, %vm11274
    %vm11279 = vmand %vm11277, %vm11275
    %v11280 = vadd.s32 %v11266, 64
    %v11281 = vadd.s32 %v11273, 64
    %v11282 = vsel %vm11278, %v11280, %v11266
    %v11283 = vsel %vm11279, %v11281, %v11273
    %vm11284 = vcmp.eq.s32.totalorder %v11228, %v11282
    %vm11285 = vcmp.eq.s32.totalorder %v11228, %v11283
    %vm11286 = vcmp.eq.s32.totalorder %v11229, %v11282
    %vm11287 = vcmp.eq.s32.totalorder %v11229, %v11283
    %vm11288 = vcmp.eq.s32.totalorder %v11230, %v11282
    %vm11289 = vcmp.eq.s32.totalorder %v11230, %v11283
    %vm11290 = vcmp.eq.s32.totalorder %v11231, %v11282
    %vm11291 = vcmp.eq.s32.totalorder %v11231, %v11283
    %vm11292 = vcmp.eq.s32.totalorder %v11232, %v11282
    %vm11293 = vcmp.eq.s32.totalorder %v11232, %v11283
    %vm11294 = vcmp.eq.s32.totalorder %v11233, %v11282
    %vm11295 = vcmp.eq.s32.totalorder %v11233, %v11283
    %vm11296 = vcmp.eq.s32.totalorder %v11234, %v11282
    %vm11297 = vcmp.eq.s32.totalorder %v11234, %v11283
    %vm11298 = vcmp.eq.s32.totalorder %v11235, %v11282
    %vm11299 = vcmp.eq.s32.totalorder %v11235, %v11283
    %vm11300 = vcmp.eq.s32.totalorder %v11236, %v11282
    %vm11301 = vcmp.eq.s32.totalorder %v11236, %v11283
    %vm11302 = vcmp.eq.s32.totalorder %v11237, %v11282
    %vm11303 = vcmp.eq.s32.totalorder %v11237, %v11283
    %vm11304 = vcmp.eq.s32.totalorder %v11238, %v11282
    %vm11305 = vcmp.eq.s32.totalorder %v11238, %v11283
    %vm11306 = vcmp.eq.s32.totalorder %v11239, %v11282
    %vm11307 = vcmp.eq.s32.totalorder %v11239, %v11283
    %vm11308 = vcmp.eq.s32.totalorder %v11240, %v11282
    %vm11309 = vcmp.eq.s32.totalorder %v11240, %v11283
    %vm11310 = vcmp.eq.s32.totalorder %v11241, %v11282
    %vm11311 = vcmp.eq.s32.totalorder %v11241, %v11283
    %vm11312 = vcmp.eq.s32.totalorder %v11242, %v11282
    %vm11313 = vcmp.eq.s32.totalorder %v11242, %v11283
    %vm11314 = vcmp.eq.s32.totalorder %v11243, %v11282
    %vm11315 = vcmp.eq.s32.totalorder %v11243, %v11283
    %vm11316 = vcmp.eq.s32.totalorder %v11244, %v11282
    %vm11317 = vcmp.eq.s32.totalorder %v11244, %v11283
    %vm11318 = vcmp.eq.s32.totalorder %v11245, %v11282
    %vm11319 = vcmp.eq.s32.totalorder %v11245, %v11283
    %vm11320 = vcmp.eq.s32.totalorder %v11246, %v11282
    %vm11321 = vcmp.eq.s32.totalorder %v11246, %v11283
    %vm11322 = vcmp.eq.s32.totalorder %v11247, %v11282
    %vm11323 = vcmp.eq.s32.totalorder %v11247, %v11283
    %vm11324 = vcmp.eq.s32.totalorder %v11248, %v11282
    %vm11325 = vcmp.eq.s32.totalorder %v11248, %v11283
    %vm11326 = vcmp.eq.s32.totalorder %v11249, %v11282
    %vm11327 = vcmp.eq.s32.totalorder %v11249, %v11283
    %vm11328 = vcmp.eq.s32.totalorder %v11250, %v11282
    %vm11329 = vcmp.eq.s32.totalorder %v11250, %v11283
    %vm11330 = vcmp.eq.s32.totalorder %v11251, %v11282
    %vm11331 = vcmp.eq.s32.totalorder %v11251, %v11283
    %vm11332 = vcmp.eq.s32.totalorder %v11252, %v11282
    %vm11333 = vcmp.eq.s32.totalorder %v11252, %v11283
    %vm11334 = vcmp.eq.s32.totalorder %v11253, %v11282
    %vm11335 = vcmp.eq.s32.totalorder %v11253, %v11283
    %vm11336 = vcmp.eq.s32.totalorder %v11254, %v11282
    %vm11337 = vcmp.eq.s32.totalorder %v11254, %v11283
    %vm11338 = vcmp.eq.s32.totalorder %v11255, %v11282
    %vm11339 = vcmp.eq.s32.totalorder %v11255, %v11283
    %vm11340 = vcmp.eq.s32.totalorder %v11256, %v11282
    %vm11341 = vcmp.eq.s32.totalorder %v11256, %v11283
    %vm11342 = vcmp.eq.s32.totalorder %v11257, %v11282
    %vm11343 = vcmp.eq.s32.totalorder %v11257, %v11283
    %vm11344 = vcmp.eq.s32.totalorder %v11258, %v11282
    %vm11345 = vcmp.eq.s32.totalorder %v11258, %v11283
    %vm11346 = vcmp.eq.s32.totalorder %v11259, %v11282
    %vm11347 = vcmp.eq.s32.totalorder %v11259, %v11283
    %v11348 = vsel %vm11284, 1, 0
    %v11349 = vsel %vm11285, 1, 0
    %v11350 = vsel %vm11286, 1, 0
    %v11351 = vsel %vm11287, 1, 0
    %v11352 = vsel %vm11288, 1, 0
    %v11353 = vsel %vm11289, 1, 0
    %v11354 = vsel %vm11290, 1, 0
    %v11355 = vsel %vm11291, 1, 0
    %v11356 = vsel %vm11292, 1, 0
    %v11357 = vsel %vm11293, 1, 0
    %v11358 = vsel %vm11294, 1, 0
    %v11359 = vsel %vm11295, 1, 0
    %v11360 = vsel %vm11296, 1, 0
    %v11361 = vsel %vm11297, 1, 0
    %v11362 = vsel %vm11298, 1, 0
    %v11363 = vsel %vm11299, 1, 0
    %v11364 = vsel %vm11300, 1, 0
    %v11365 = vsel %vm11301, 1, 0
    %v11366 = vsel %vm11302, 1, 0
    %v11367 = vsel %vm11303, 1, 0
    %v11368 = vsel %vm11304, 1, 0
    %v11369 = vsel %vm11305, 1, 0
    %v11370 = vsel %vm11306, 1, 0
    %v11371 = vsel %vm11307, 1, 0
    %v11372 = vsel %vm11308, 1, 0
    %v11373 = vsel %vm11309, 1, 0
    %v11374 = vsel %vm11310, 1, 0
    %v11375 = vsel %vm11311, 1, 0
    %v11376 = vsel %vm11312, 1, 0
    %v11377 = vsel %vm11313, 1, 0
    %v11378 = vsel %vm11314, 1, 0
    %v11379 = vsel %vm11315, 1, 0
    %v11380 = vsel %vm11316, 1, 0
    %v11381 = vsel %vm11317, 1, 0
    %v11382 = vsel %vm11318, 1, 0
    %v11383 = vsel %vm11319, 1, 0
    %v11384 = vsel %vm11320, 1, 0
    %v11385 = vsel %vm11321, 1, 0
    %v11386 = vsel %vm11322, 1, 0
    %v11387 = vsel %vm11323, 1, 0
    %v11388 = vsel %vm11324, 1, 0
    %v11389 = vsel %vm11325, 1, 0
    %v11390 = vsel %vm11326, 1, 0
    %v11391 = vsel %vm11327, 1, 0
    %v11392 = vsel %vm11328, 1, 0
    %v11393 = vsel %vm11329, 1, 0
    %v11394 = vsel %vm11330, 1, 0
    %v11395 = vsel %vm11331, 1, 0
    %v11396 = vsel %vm11332, 1, 0
    %v11397 = vsel %vm11333, 1, 0
    %v11398 = vsel %vm11334, 1, 0
    %v11399 = vsel %vm11335, 1, 0
    %v11400 = vsel %vm11336, 1, 0
    %v11401 = vsel %vm11337, 1, 0
    %v11402 = vsel %vm11338, 1, 0
    %v11403 = vsel %vm11339, 1, 0
    %v11404 = vsel %vm11340, 1, 0
    %v11405 = vsel %vm11341, 1, 0
    %v11406 = vsel %vm11342, 1, 0
    %v11407 = vsel %vm11343, 1, 0
    %v11408 = vsel %vm11344, 1, 0
    %v11409 = vsel %vm11345, 1, 0
    %v11410 = vsel %vm11346, 1, 0
    %v11411 = vsel %vm11347, 1, 0
    %v11412 = vcvt.s32.f32 %v11348
    %v11413 = vcvt.s32.f32 %v11349
    %v11414 = vcvt.s32.f32 %v11350
    %v11415 = vcvt.s32.f32 %v11351
    %v11416 = vcvt.s32.f32 %v11352
    %v11417 = vcvt.s32.f32 %v11353
    %v11418 = vcvt.s32.f32 %v11354
    %v11419 = vcvt.s32.f32 %v11355
    %v11420 = vcvt.s32.f32 %v11356
    %v11421 = vcvt.s32.f32 %v11357
    %v11422 = vcvt.s32.f32 %v11358
    %v11423 = vcvt.s32.f32 %v11359
    %v11424 = vcvt.s32.f32 %v11360
    %v11425 = vcvt.s32.f32 %v11361
    %v11426 = vcvt.s32.f32 %v11362
    %v11427 = vcvt.s32.f32 %v11363
    %v11428 = vcvt.s32.f32 %v11364
    %v11429 = vcvt.s32.f32 %v11365
    %v11430 = vcvt.s32.f32 %v11366
    %v11431 = vcvt.s32.f32 %v11367
    %v11432 = vcvt.s32.f32 %v11368
    %v11433 = vcvt.s32.f32 %v11369
    %v11434 = vcvt.s32.f32 %v11370
    %v11435 = vcvt.s32.f32 %v11371
    %v11436 = vcvt.s32.f32 %v11372
    %v11437 = vcvt.s32.f32 %v11373
    %v11438 = vcvt.s32.f32 %v11374
    %v11439 = vcvt.s32.f32 %v11375
    %v11440 = vcvt.s32.f32 %v11376
    %v11441 = vcvt.s32.f32 %v11377
    %v11442 = vcvt.s32.f32 %v11378
    %v11443 = vcvt.s32.f32 %v11379
    %v11444 = vcvt.s32.f32 %v11380
    %v11445 = vcvt.s32.f32 %v11381
    %v11446 = vcvt.s32.f32 %v11382
    %v11447 = vcvt.s32.f32 %v11383
    %v11448 = vcvt.s32.f32 %v11384
    %v11449 = vcvt.s32.f32 %v11385
    %v11450 = vcvt.s32.f32 %v11386
    %v11451 = vcvt.s32.f32 %v11387
    %v11452 = vcvt.s32.f32 %v11388
    %v11453 = vcvt.s32.f32 %v11389
    %v11454 = vcvt.s32.f32 %v11390
    %v11455 = vcvt.s32.f32 %v11391
    %v11456 = vcvt.s32.f32 %v11392
    %v11457 = vcvt.s32.f32 %v11393
    %v11458 = vcvt.s32.f32 %v11394
    %v11459 = vcvt.s32.f32 %v11395
    %v11460 = vcvt.s32.f32 %v11396
    %v11461 = vcvt.s32.f32 %v11397
    %v11462 = vcvt.s32.f32 %v11398
    %v11463 = vcvt.s32.f32 %v11399
    %v11464 = vcvt.s32.f32 %v11400
    %v11465 = vcvt.s32.f32 %v11401
    %v11466 = vcvt.s32.f32 %v11402
    %v11467 = vcvt.s32.f32 %v11403
    %v11468 = vcvt.s32.f32 %v11404
    %v11469 = vcvt.s32.f32 %v11405
    %v11470 = vcvt.s32.f32 %v11406
    %v11471 = vcvt.s32.f32 %v11407
    %v11472 = vcvt.s32.f32 %v11408
    %v11473 = vcvt.s32.f32 %v11409
    %v11474 = vcvt.s32.f32 %v11410
    %v11475 = vcvt.s32.f32 %v11411
    %11476 = vmatprep.subr.mxu0 %v11413
    %11477 = vmatpush1.msra.mxu0 %v11412
    %11478 = vmatprep.subr.mxu0 %v11415
    %11479 = vmatpush1.msra.mxu0 %v11414
    %11480 = vmatprep.subr.mxu0 %v11417
    %11481 = vmatpush1.msra.mxu0 %v11416
    %11482 = vmatprep.subr.mxu0 %v11419
    %11483 = vmatpush1.msra.mxu0 %v11418
    %11484 = vmatprep.subr.mxu0 %v11421
    %11485 = vmatpush1.msra.mxu0 %v11420
    %11486 = vmatprep.subr.mxu0 %v11423
    %11487 = vmatpush1.msra.mxu0 %v11422
    %11488 = vmatprep.subr.mxu0 %v11425
    %11489 = vmatpush1.msra.mxu0 %v11424
    %11490 = vmatprep.subr.mxu0 %v11427
    %11491 = vmatpush1.msra.mxu0 %v11426
    %11492 = vmatprep.subr.mxu0 %v11429
    %11493 = vmatpush1.msra.mxu0 %v11428
    %11494 = vmatprep.subr.mxu0 %v11431
    %11495 = vmatpush1.msra.mxu0 %v11430
    %11496 = vmatprep.subr.mxu0 %v11433
    %11497 = vmatpush1.msra.mxu0 %v11432
    %11498 = vmatprep.subr.mxu0 %v11435
    %11499 = vmatpush1.msra.mxu0 %v11434
    %11500 = vmatprep.subr.mxu0 %v11437
    %11501 = vmatpush1.msra.mxu0 %v11436
    %11502 = vmatprep.subr.mxu0 %v11439
    %11503 = vmatpush1.msra.mxu0 %v11438
    %11504 = vmatprep.subr.mxu0 %v11441
    %11505 = vmatpush1.msra.mxu0 %v11440
    %11506 = vmatprep.subr.mxu0 %v11443
    %11507 = vmatpush1.msra.mxu0 %v11442
    %11508 = vmatprep.subr.mxu0 %v11445
    %11509 = vmatpush1.msra.mxu0 %v11444
    %11510 = vmatprep.subr.mxu0 %v11447
    %11511 = vmatpush1.msra.mxu0 %v11446
    %11512 = vmatprep.subr.mxu0 %v11449
    %11513 = vmatpush1.msra.mxu0 %v11448
    %11514 = vmatprep.subr.mxu0 %v11451
    %11515 = vmatpush1.msra.mxu0 %v11450
    %11516 = vmatprep.subr.mxu0 %v11453
    %11517 = vmatpush1.msra.mxu0 %v11452
    %11518 = vmatprep.subr.mxu0 %v11455
    %11519 = vmatpush1.msra.mxu0 %v11454
    %11520 = vmatprep.subr.mxu0 %v11457
    %11521 = vmatpush1.msra.mxu0 %v11456
    %11522 = vmatprep.subr.mxu0 %v11459
    %11523 = vmatpush1.msra.mxu0 %v11458
    %11524 = vmatprep.subr.mxu0 %v11461
    %11525 = vmatpush1.msra.mxu0 %v11460
    %11526 = vmatprep.subr.mxu0 %v11463
    %11527 = vmatpush1.msra.mxu0 %v11462
    %11528 = vmatprep.subr.mxu0 %v11465
    %11529 = vmatpush1.msra.mxu0 %v11464
    %11530 = vmatprep.subr.mxu0 %v11467
    %11531 = vmatpush1.msra.mxu0 %v11466
    %11532 = vmatprep.subr.mxu0 %v11469
    %11533 = vmatpush1.msra.mxu0 %v11468
    %11534 = vmatprep.subr.mxu0 %v11471
    %11535 = vmatpush1.msra.mxu0 %v11470
    %11536 = vmatprep.subr.mxu0 %v11473
    %11537 = vmatpush1.msra.mxu0 %v11472
    %11538 = vmatprep.subr.mxu0 %v11475
    %11539 = vmatpush1.msra.mxu0 %v11474
    %11540 = vmatprep.mubr.f32.mxu0 %v10875
    %11541 = vmatmul.mubr.f32.gmra.mrb[0].mxu0 %v10874
    %v11542 = vpop.f32.mrb[0].mxu0
    %v11543 = vadd.f32 0.0, %v11542
    %v11544 = vpop.f32.mrb[0].mxu0
    %v11545 = vadd.f32 0.0, %v11544
    %11546 = vdwg.mxu0
    %v11547 = vmul.f32 %v11543, 0.03125
    %v11548 = vmul.f32 %v11545, 0.03125
    %v11549 = vmul.f32 %v11547, %v11547
    %v11550 = vmul.f32 %v11548, %v11548
    %v11553 = vrot.slane %v11549, 7
    %v11554 = vrot.slane %v11550, 7
    %v11557 = vsub.f32 %v11547, %v11553
    %v11558 = vsub.f32 %v11548, %v11554
    %v11559 = vlaneseq
    %v11560 = vshrl.u32 %v11559, 7
    %v11561 = vsub.s32 0, %v11560
    %v11562 = vrot.slane %v11547, %v11561
    %v11563 = vlaneseq
    %v11564 = vshrl.u32 %v11563, 7
    %v11565 = vsub.s32 0, %v11564
    %v11566 = vrot.slane %v11548, %v11565
    %v11567 = vsub.f32 %v10534, %v11562
    %v11568 = vsub.f32 %v10535, %v11566
    %v11569 = vsub.f32 %v10536, %v11562
    %v11570 = vsub.f32 %v10537, %v11566
    %v11571 = vsub.f32 %v10538, %v11562
    %v11572 = vsub.f32 %v10539, %v11566
    %v11573 = vsub.f32 %v10540, %v11562
    %v11574 = vsub.f32 %v10541, %v11566
    %v11575 = vsub.f32 %v10542, %v11562
    %v11576 = vsub.f32 %v10543, %v11566
    %v11577 = vsub.f32 %v10544, %v11562
    %v11578 = vsub.f32 %v10545, %v11566
    %v11579 = vsub.f32 %v10546, %v11562
    %v11580 = vsub.f32 %v10547, %v11566
    %v11581 = vsub.f32 %v10548, %v11562
    %v11582 = vsub.f32 %v10549, %v11566
    %v11583 = vsub.f32 %v10550, %v11562
    %v11584 = vsub.f32 %v10551, %v11566
    %v11585 = vsub.f32 %v10552, %v11562
    %v11586 = vsub.f32 %v10553, %v11566
    %v11587 = vsub.f32 %v10554, %v11562
    %v11588 = vsub.f32 %v10555, %v11566
    %v11589 = vsub.f32 %v10556, %v11562
    %v11590 = vsub.f32 %v10557, %v11566
    %v11591 = vsub.f32 %v10558, %v11562
    %v11592 = vsub.f32 %v10559, %v11566
    %v11593 = vsub.f32 %v10560, %v11562
    %v11594 = vsub.f32 %v10561, %v11566
    %v11595 = vsub.f32 %v10562, %v11562
    %v11596 = vsub.f32 %v10563, %v11566
    %v11597 = vsub.f32 %v10564, %v11562
    %v11598 = vsub.f32 %v10565, %v11566
    %v11599 = vsub.f32 %v10566, %v11562
    %v11600 = vsub.f32 %v10567, %v11566
    %v11601 = vsub.f32 %v10568, %v11562
    %v11602 = vsub.f32 %v10569, %v11566
    %v11603 = vsub.f32 %v10570, %v11562
    %v11604 = vsub.f32 %v10571, %v11566
    %v11605 = vsub.f32 %v10572, %v11562
    %v11606 = vsub.f32 %v10573, %v11566
    %v11607 = vadd.f32 %v11557, 1e-05
    %v11608 = vadd.f32 %v11558, 1e-05
    %v11609 = vrsqrt.pop %v11607
    %v11610 = vrsqrt.pop %v11608
    %v11611 = vlaneseq
    %v11612 = vshrl.u32 %v11611, 7
    %v11613 = vsub.s32 1, %v11612
    %v11614 = vrot.slane %v11609, %v11613
    %v11615 = vlaneseq
    %v11616 = vshrl.u32 %v11615, 7
    %v11617 = vsub.s32 1, %v11616
    %v11618 = vrot.slane %v11610, %v11617
    %v11619 = vmul.f32 %v11567, %v11614
    %v11620 = vmul.f32 %v11568, %v11618
    %v11621 = vmul.f32 %v11569, %v11614
    %v11622 = vmul.f32 %v11570, %v11618
    %v11623 = vmul.f32 %v11571, %v11614
    %v11624 = vmul.f32 %v11572, %v11618
    %v11625 = vmul.f32 %v11573, %v11614
    %v11626 = vmul.f32 %v11574, %v11618
    %v11627 = vmul.f32 %v11575, %v11614
    %v11628 = vmul.f32 %v11576, %v11618
    %v11629 = vmul.f32 %v11577, %v11614
    %v11630 = vmul.f32 %v11578, %v11618
    %v11631 = vmul.f32 %v11579, %v11614
    %v11632 = vmul.f32 %v11580, %v11618
    %v11633 = vmul.f32 %v11581, %v11614
    %v11634 = vmul.f32 %v11582, %v11618
    %v11635 = vmul.f32 %v11583, %v11614
    %v11636 = vmul.f32 %v11584, %v11618
    %v11637 = vmul.f32 %v11585, %v11614
    %v11638 = vmul.f32 %v11586, %v11618
    %v11639 = vmul.f32 %v11587, %v11614
    %v11640 = vmul.f32 %v11588, %v11618
    %v11641 = vmul.f32 %v11589, %v11614
    %v11642 = vmul.f32 %v11590, %v11618
    %v11643 = vmul.f32 %v11591, %v11614
    %v11644 = vmul.f32 %v11592, %v11618
    %v11645 = vmul.f32 %v11593, %v11614
    %v11646 = vmul.f32 %v11594, %v11618
    %v11647 = vmul.f32 %v11595, %v11614
    %v11648 = vmul.f32 %v11596, %v11618
    %v11649 = vmul.f32 %v11597, %v11614
    %v11650 = vmul.f32 %v11598, %v11618
    %v11651 = vmul.f32 %v11599, %v11614
    %v11652 = vmul.f32 %v11600, %v11618
    %v11653 = vmul.f32 %v11601, %v11614
    %v11654 = vmul.f32 %v11602, %v11618
    %v11655 = vmul.f32 %v11603, %v11614
    %v11656 = vmul.f32 %v11604, %v11618
    %v11657 = vmul.f32 %v11605, %v11614
    %v11658 = vmul.f32 %v11606, %v11618
    %v11659 = vmul.f32 %v11619, 0.2
    %v11660 = vmul.f32 %v11620, 0.2
    %v11661 = vmul.f32 %v11621, 0.2
    %v11662 = vmul.f32 %v11622, 0.2
    %v11663 = vmul.f32 %v11623, 0.2
    %v11664 = vmul.f32 %v11624, 0.2
    %v11665 = vmul.f32 %v11625, 0.2
    %v11666 = vmul.f32 %v11626, 0.2
    %v11667 = vmul.f32 %v11627, 0.2
    %v11668 = vmul.f32 %v11628, 0.2
    %v11669 = vmul.f32 %v11629, 0.2
    %v11670 = vmul.f32 %v11630, 0.2
    %v11671 = vmul.f32 %v11631, 0.2
    %v11672 = vmul.f32 %v11632, 0.2
    %v11673 = vmul.f32 %v11633, 0.2
    %v11674 = vmul.f32 %v11634, 0.2
    %v11675 = vmul.f32 %v11635, 0.2
    %v11676 = vmul.f32 %v11636, 0.2
    %v11677 = vmul.f32 %v11637, 0.2
    %v11678 = vmul.f32 %v11638, 0.2
    %v11679 = vmul.f32 %v11639, 0.2
    %v11680 = vmul.f32 %v11640, 0.2
    %v11681 = vmul.f32 %v11641, 0.2
    %v11682 = vmul.f32 %v11642, 0.2
    %v11683 = vmul.f32 %v11643, 0.2
    %v11684 = vmul.f32 %v11644, 0.2
    %v11685 = vmul.f32 %v11645, 0.2
    %v11686 = vmul.f32 %v11646, 0.2
    %v11687 = vmul.f32 %v11647, 0.2
    %v11688 = vmul.f32 %v11648, 0.2
    %v11689 = vmul.f32 %v11649, 0.2
    %v11690 = vmul.f32 %v11650, 0.2
    %v11691 = vmul.f32 %v11651, 0.2
    %v11692 = vmul.f32 %v11652, 0.2
    %v11693 = vmul.f32 %v11653, 0.2
    %v11694 = vmul.f32 %v11654, 0.2
    %v11695 = vmul.f32 %v11655, 0.2
    %v11696 = vmul.f32 %v11656, 0.2
    %v11697 = vmul.f32 %v11657, 0.2
    %v11698 = vmul.f32 %v11658, 0.2
    %v11699 = vmax.f32 %v11619, %v11659
    %v11700 = vmax.f32 %v11620, %v11660
    %v11701 = vmax.f32 %v11621, %v11661
    %v11702 = vmax.f32 %v11622, %v11662
    %v11703 = vmax.f32 %v11623, %v11663
    %v11704 = vmax.f32 %v11624, %v11664
    %v11705 = vmax.f32 %v11625, %v11665
    %v11706 = vmax.f32 %v11626, %v11666
    %v11707 = vmax.f32 %v11627, %v11667
    %v11708 = vmax.f32 %v11628, %v11668
    %v11709 = vmax.f32 %v11629, %v11669
    %v11710 = vmax.f32 %v11630, %v11670
    %v11711 = vmax.f32 %v11631, %v11671
    %v11712 = vmax.f32 %v11632, %v11672
    %v11713 = vmax.f32 %v11633, %v11673
    %v11714 = vmax.f32 %v11634, %v11674
    %v11715 = vmax.f32 %v11635, %v11675
    %v11716 = vmax.f32 %v11636, %v11676
    %v11717 = vmax.f32 %v11637, %v11677
    %v11718 = vmax.f32 %v11638, %v11678
    %v11719 = vmax.f32 %v11639, %v11679
    %v11720 = vmax.f32 %v11640, %v11680
    %v11721 = vmax.f32 %v11641, %v11681
    %v11722 = vmax.f32 %v11642, %v11682
    %v11723 = vmax.f32 %v11643, %v11683
    %v11724 = vmax.f32 %v11644, %v11684
    %v11725 = vmax.f32 %v11645, %v11685
    %v11726 = vmax.f32 %v11646, %v11686
    %v11727 = vmax.f32 %v11647, %v11687
    %v11728 = vmax.f32 %v11648, %v11688
    %v11729 = vmax.f32 %v11649, %v11689
    %v11730 = vmax.f32 %v11650, %v11690
    %v11731 = vmax.f32 %v11651, %v11691
    %v11732 = vmax.f32 %v11652, %v11692
    %v11733 = vmax.f32 %v11653, %v11693
    %v11734 = vmax.f32 %v11654, %v11694
    %v11735 = vmax.f32 %v11655, %v11695
    %v11736 = vmax.f32 %v11656, %v11696
    %v11737 = vmax.f32 %v11657, %v11697
    %v11738 = vmax.f32 %v11658, %v11698
    %v11739 = vld [vmem:[%s5] sm:$0xff]
    %v11740 = vld [vmem:[%s5 + $0x8] sm:$0xff]
    %v11741 = vld [vmem:[%s5 + $0x10] sm:$0xff]
    %v11742 = vld [vmem:[%s5 + $0x18] sm:$0xff]
    %v11743 = vld [vmem:[%s5 + $0x20] sm:$0xff]
    %v11744 = vld [vmem:[%s5 + $0x28] sm:$0xff]
    %v11745 = vld [vmem:[%s5 + $0x30] sm:$0xff]
    %v11746 = vld [vmem:[%s5 + $0x38] sm:$0xff]
    %v11747 = vld [vmem:[%s5 + $0x40] sm:$0xff]
    %v11748 = vld [vmem:[%s5 + $0x48] sm:$0xff]
    %v11749 = vld [vmem:[%s5 + $0x50] sm:$0xff]
    %v11750 = vld [vmem:[%s5 + $0x58] sm:$0xff]
    %v11751 = vld [vmem:[%s5 + $0x60] sm:$0xff]
    %v11752 = vld [vmem:[%s5 + $0x68] sm:$0xff]
    %v11753 = vld [vmem:[%s5 + $0x70] sm:$0xff]
    %v11754 = vld [vmem:[%s5 + $0x78] sm:$0xff]
    %v11755 = vld [vmem:[%s5 + $0x80] sm:$0xff]
    %v11756 = vld [vmem:[%s5 + $0x88] sm:$0xff]
    %v11757 = vld [vmem:[%s5 + $0x90] sm:$0xff]
    %v11758 = vld [vmem:[%s5 + $0x98] sm:$0xff]
    %v11759 = vld [vmem:[%s5 + $0xa0] sm:$0xff]
    %v11760 = vld [vmem:[%s5 + $0xa8] sm:$0xff]
    %v11761 = vld [vmem:[%s5 + $0xb0] sm:$0xff]
    %v11762 = vld [vmem:[%s5 + $0xb8] sm:$0xff]
    %v11763 = vld [vmem:[%s5 + $0xc0] sm:$0xff]
    %v11764 = vld [vmem:[%s5 + $0xc8] sm:$0xff]
    %v11765 = vld [vmem:[%s5 + $0xd0] sm:$0xff]
    %v11766 = vld [vmem:[%s5 + $0xd8] sm:$0xff]
    %v11767 = vld [vmem:[%s5 + $0xe0] sm:$0xff]
    %v11768 = vld [vmem:[%s5 + $0xe8] sm:$0xff]
    %v11769 = vld [vmem:[%s5 + $0xf0] sm:$0xff]
    %v11770 = vld [vmem:[%s5 + $0xf8] sm:$0xff]
    %v11771 = vld [vmem:[%s5 + $0x100] sm:$0xff]
    %v11772 = vld [vmem:[%s5 + $0x108] sm:$0xff]
    %v11773 = vld [vmem:[%s5 + $0x110] sm:$0xff]
    %v11774 = vld [vmem:[%s5 + $0x118] sm:$0xff]
    %v11775 = vld [vmem:[%s5 + $0x120] sm:$0xff]
    %v11776 = vld [vmem:[%s5 + $0x128] sm:$0xff]
    %v11777 = vld [vmem:[%s5 + $0x130] sm:$0xff]
    %v11778 = vld [vmem:[%s5 + $0x138] sm:$0xff]
    %v11779 = vmul.f32 %v11699, %v11739
    %v11780 = vmul.f32 %v11700, %v11740
    %v11781 = vmul.f32 %v11701, %v11741
    %v11782 = vmul.f32 %v11702, %v11742
    %v11783 = vmul.f32 %v11703, %v11743
    %v11784 = vmul.f32 %v11704, %v11744
    %v11785 = vmul.f32 %v11705, %v11745
    %v11786 = vmul.f32 %v11706, %v11746
    %v11787 = vmul.f32 %v11707, %v11747
    %v11788 = vmul.f32 %v11708, %v11748
    %v11789 = vmul.f32 %v11709, %v11749
    %v11790 = vmul.f32 %v11710, %v11750
    %v11791 = vmul.f32 %v11711, %v11751
    %v11792 = vmul.f32 %v11712, %v11752
    %v11793 = vmul.f32 %v11713, %v11753
    %v11794 = vmul.f32 %v11714, %v11754
    %v11795 = vmul.f32 %v11715, %v11755
    %v11796 = vmul.f32 %v11716, %v11756
    %v11797 = vmul.f32 %v11717, %v11757
    %v11798 = vmul.f32 %v11718, %v11758
    %v11799 = vmul.f32 %v11719, %v11759
    %v11800 = vmul.f32 %v11720, %v11760
    %v11801 = vmul.f32 %v11721, %v11761
    %v11802 = vmul.f32 %v11722, %v11762
    %v11803 = vmul.f32 %v11723, %v11763
    %v11804 = vmul.f32 %v11724, %v11764
    %v11805 = vmul.f32 %v11725, %v11765
    %v11806 = vmul.f32 %v11726, %v11766
    %v11807 = vmul.f32 %v11727, %v11767
    %v11808 = vmul.f32 %v11728, %v11768
    %v11809 = vmul.f32 %v11729, %v11769
    %v11810 = vmul.f32 %v11730, %v11770
    %v11811 = vmul.f32 %v11731, %v11771
    %v11812 = vmul.f32 %v11732, %v11772
    %v11813 = vmul.f32 %v11733, %v11773
    %v11814 = vmul.f32 %v11734, %v11774
    %v11815 = vmul.f32 %v11735, %v11775
    %v11816 = vmul.f32 %v11736, %v11776
    %v11817 = vmul.f32 %v11737, %v11777
    %v11818 = vmul.f32 %v11738, %v11778
    %v11819 = vld [vmem:[%s6] sm:$0xf]
    %v11822 = vunpack.c.l.s4 1983009808
    %v11823 = vunpack.c.0.s8 %v11822
    %v11824 = vlaneseq
    %v11825 = vshrl.u32 %v11824, 7
    %v11826 = vsub.s32 %v11823, %v11825
    %v11827 = vrot.slane %v11819, %v11826
    %v11828 = vcombine.high %v11827, %v11827
    %vm11830 = vcmask 261120
    %v11831 = vsel %vm11830, %v11828, 0
    %11833 = vmatprep.subr.mxu0 %v11780
    %11834 = vmatpush1.msra.mxu0 %v11779
    %11835 = vmatprep.subr.mxu0 %v11782
    %11836 = vmatpush1.msra.mxu0 %v11781
    %11837 = vmatprep.subr.mxu0 %v11784
    %11838 = vmatpush1.msra.mxu0 %v11783
    %11839 = vmatprep.subr.mxu0 %v11786
    %11840 = vmatpush1.msra.mxu0 %v11785
    %11841 = vmatprep.subr.mxu0 %v11788
    %11842 = vmatpush1.msra.mxu0 %v11787
    %11843 = vmatprep.subr.mxu0 %v11790
    %11844 = vmatpush1.msra.mxu0 %v11789
    %11845 = vmatprep.subr.mxu0 %v11792
    %11846 = vmatpush1.msra.mxu0 %v11791
    %11847 = vmatprep.subr.mxu0 %v11794
    %11848 = vmatpush1.msra.mxu0 %v11793
    %11849 = vmatprep.subr.mxu0 %v11796
    %11850 = vmatpush1.msra.mxu0 %v11795
    %11851 = vmatprep.subr.mxu0 %v11798
    %11852 = vmatpush1.msra.mxu0 %v11797
    %11853 = vmatprep.subr.mxu0 %v11800
    %11854 = vmatpush1.msra.mxu0 %v11799
    %11855 = vmatprep.subr.mxu0 %v11802
    %11856 = vmatpush1.msra.mxu0 %v11801
    %11857 = vmatprep.subr.mxu0 %v11804
    %11858 = vmatpush1.msra.mxu0 %v11803
    %11859 = vmatprep.subr.mxu0 %v11806
    %11860 = vmatpush1.msra.mxu0 %v11805
    %11861 = vmatprep.subr.mxu0 %v11808
    %11862 = vmatpush1.msra.mxu0 %v11807
    %11863 = vmatprep.subr.mxu0 %v11810
    %11864 = vmatpush1.msra.mxu0 %v11809
    %11865 = vmatprep.subr.mxu0 %v11812
    %11866 = vmatpush1.msra.mxu0 %v11811
    %11867 = vmatprep.subr.mxu0 %v11814
    %11868 = vmatpush1.msra.mxu0 %v11813
    %11869 = vmatprep.subr.mxu0 %v11816
    %11870 = vmatpush1.msra.mxu0 %v11815
    %11871 = vmatprep.subr.mxu0 %v11818
    %11872 = vmatpush1.msra.mxu0 %v11817
    %11873 = vmatprep.subr.mxu0 0.0
    %11874 = vmatpush1.msra.mxu0 0.0
    %11875 = vmatprep.subr.mxu0 0.0
    %11876 = vmatpush1.msra.mxu0 0.0
    %11877 = vmatprep.subr.mxu0 0.0
    %11878 = vmatpush1.msra.mxu0 0.0
    %11879 = vmatprep.subr.mxu0 0.0
    %11880 = vmatpush1.msra.mxu0 0.0
    %11881 = vmatprep.subr.mxu0 0.0
    %11882 = vmatpush1.msra.mxu0 0.0
    %11883 = vmatprep.subr.mxu0 0.0
    %11884 = vmatpush1.msra.mxu0 0.0
    %11885 = vmatprep.subr.mxu0 0.0
    %11886 = vmatpush1.msra.mxu0 0.0
    %11887 = vmatprep.subr.mxu0 0.0
    %11888 = vmatpush1.msra.mxu0 0.0
    %11889 = vmatprep.subr.mxu0 0.0
    %11890 = vmatpush1.msra.mxu0 0.0
    %11891 = vmatprep.subr.mxu0 0.0
    %11892 = vmatpush1.msra.mxu0 0.0
    %11893 = vmatprep.subr.mxu0 0.0
    %11894 = vmatpush1.msra.mxu0 0.0
    %11895 = vmatprep.subr.mxu0 0.0
    %11896 = vmatpush1.msra.mxu0 0.0
    %11897 = vmatprep.mubr.f32.mxu0 %v11831
    %11898 = vmatmul.mubr.f32.gmra.mrb[0].mxu0 %v11827
    %v11899 = vpop.f32.mrb[0].mxu0
    %v11900 = vadd.f32 0.0, %v11899
    %v11901 = vpop.f32.mrb[0].mxu0
    %v11902 = vadd.f32 0.0, %v11901
    %11903 = vdwg.mxu0
    %vm11904 = vcmask 1041408
    %v11905 = vsel %vm11904, %v11900, 0.0
    %v11906 = vsel %vm11904, %v11902, 0.0
    %v11907 = vadd.f32 %v11905, %v11906
    %11908 = vadd.xlane.f32.xlu0 %v11907
    %v11909 = vpop.xlane.xlu0 %11908
    %v11910 = vxor.u32 %v11909, 2147483648
    %v11911 = vmul.f32 %v11910, 1.442695
    %v11912 = vpow.pop %v11911
    %v11913 = vadd.f32 %v11912, 1.0
    %v11914 = vrcp.pop %v11913
    %v11915 = vmul.f32 1.0, %v11914
    %vm11916 = vcmask 1024
    %11917 = vst.msk [vmem:[%s11] sm:$0x3] %vm11916, %v11915
    // Predicated region
    $region54: #{forward.1} parent=1 // pred_check
      _
    $region55: #{forward.1} parent=1 // pred_check_branch
      %11919 = sbr.rel (0) target = $region57
    $region56: #{forward.1} parent=1 // pred_region
      _
    $region57: #{forward.1} parent=1 // pred_fallthru
      _
    // Predicated region
    $region58: #{forward.1} parent=1 // pred_check
      _
    $region59: #{forward.1} parent=1 // pred_check_branch
      %11921 = sbr.rel (0) target = $region61
    $region60: #{forward.1} parent=1 // pred_region
      _
    $region61: #{forward.1} parent=1 // pred_fallthru
      _
    %11922 = vsyncpa [#allocation4], 1
    %11923 = vsyncpa [#allocation6], 1

</llo_original>
